<compile_context>
chip_gen: v7x
topology: tpu7x:2x2x1
jax: 0.10.0
libtpu: 0.0.40
codegen_flags: <defaults>
</compile_context>

<pallas_src>
import functools
import math

import jax
import jax.numpy as jnp
from jax.experimental import pallas as pl
from jax.experimental.pallas import tpu as pltpu

_EPS = 1e-6  # every LayerNorm in the reference uses eps=1e-06


# ----------------------------------------------------------------------------
# In-kernel helpers (operate on loaded VMEM values)
# ----------------------------------------------------------------------------

def _gelu(x):
    # exact (erf) gelu, matching torch.nn.functional.gelu default
    return 0.5 * x * (1.0 + jax.lax.erf(x * (1.0 / math.sqrt(2.0))))


def _ln(x, g, b, eps):
    mu = jnp.mean(x, axis=-1, keepdims=True)
    var = jnp.mean(jnp.square(x - mu), axis=-1, keepdims=True)
    return (x - mu) * jax.lax.rsqrt(var + eps) * g + b


def _mha_concat(q, k, v, nhead, dh):
    """Multi-head softmax attention, returning the head-concat [Sq, D] output.

    q is pre-scaled by 1/sqrt(dh).  q: [Sq, D], k/v: [Sk, D].  Heads are static
    lane slices; per-head outputs are concatenated (single output-projection
    matmul is done by the caller).
    TODO(synk): at production D (dh=64) pad/align heads to 128-lane tiles so the
    per-head slices are free.
    """
    outs = []
    for h in range(nhead):
        sl = slice(h * dh, (h + 1) * dh)
        s = jax.lax.dot_general(q[:, sl].astype(jnp.bfloat16),
                                k[:, sl].astype(jnp.bfloat16),
                                (((1,), (1,)), ((), ())),
                                preferred_element_type=jnp.float32)      # [Sq, Sk]
        s = s - jnp.max(s, axis=-1, keepdims=True)
        p = jnp.exp(s)
        p = p * pl.reciprocal(jnp.sum(p, axis=-1, keepdims=True), approx=True)
        outs.append(jnp.dot(p.astype(jnp.bfloat16), v[:, sl].astype(jnp.bfloat16),
                            preferred_element_type=jnp.float32))         # [Sq, dh]
    return jnp.concatenate(outs, axis=-1)                                 # [Sq, D]


# ----------------------------------------------------------------------------
# Fused kernels
# ----------------------------------------------------------------------------

def _encoder_stack_kernel(x_ref, wqkv_ref, bqkv_ref, wo_ref, bo_ref,
                          ln1g_ref, ln1b_ref, w1_ref, b1_ref, w2_ref, b2_ref,
                          ln2g_ref, ln2b_ref, o_ref, *, nhead, d_model, B, S, eps):
    """All TransformerEncoderLayers (post-norm, eval); grid axis = layer index.

    The [B*S, D] activation is resident in o_ref across layers; weights are
    indexed by the layer grid index (leading axis of each stacked weight).
    """
    l = pl.program_id(0)

    @pl.when(l == 0)
    def _():
        o_ref[...] = x_ref[...]

    x = o_ref[...]                                                   # [B*S, D] f32
    dh = d_model // nhead
    scale = 1.0 / math.sqrt(dh)

    qkv = (jnp.dot(x.astype(jnp.bfloat16), wqkv_ref[0],
                   preferred_element_type=jnp.float32) + bqkv_ref[0])
    q = qkv[:, :d_model] * scale                     # scale folded once into q
    k = qkv[:, d_model:2 * d_model]
    v = qkv[:, 2 * d_model:]

    attn_rows = []
    for b in range(B):                               # softmax is per-batch
        rs = slice(b * S, (b + 1) * S)
        attn_rows.append(_mha_concat(q[rs], k[rs], v[rs], nhead, dh))
    attn = jnp.concatenate(attn_rows, axis=0)        # [B*S, D]
    attn = (jnp.dot(attn.astype(jnp.bfloat16), wo_ref[0],
                    preferred_element_type=jnp.float32) + bo_ref[0])

    x = _ln(x + attn, ln1g_ref[0], ln1b_ref[0], eps)
    h = _gelu(jnp.dot(x.astype(jnp.bfloat16), w1_ref[0],
                      preferred_element_type=jnp.float32) + b1_ref[0])
    ffn = (jnp.dot(h.astype(jnp.bfloat16), w2_ref[0],
                   preferred_element_type=jnp.float32) + b2_ref[0])
    o_ref[...] = _ln(x + ffn, ln2g_ref[0], ln2b_ref[0], eps)


def _decoder_stack_kernel(tgt_ref, mem_ref,
                          s_wv_ref, s_bv_ref, s_wo_ref, s_bo_ref, ln1g_ref, ln1b_ref,
                          c_wq_ref, c_bq_ref, c_wkv_ref, c_bkv_ref, c_wo_ref, c_bo_ref,
                          ln2g_ref, ln2b_ref,
                          w1_ref, b1_ref, w2_ref, b2_ref, ln3g_ref, ln3b_ref,
                          nrm_g_ref, nrm_b_ref, voc_wt_ref, voc_b_ref,
                          logits_ref, t_sc, *, nhead, d_model, B, S, eps):
    """All TransformerDecoderLayers (post-norm, eval, step 0 / empty pre_kv),
    plus the final decoder LayerNorm and the vocab logits head.

    Carried state is the tiny [B, D] token activation, kept in VMEM scratch.
    TODO(synk): the reference `Attention` class is undefined in the source; it is
    assumed MultiheadAttention-style.  Only the step-0 / empty-KV path is
    implemented, where softmax over a single key is identity, so self-attention
    reduces to the v projection followed by the output projection.
    TODO(synk): for steps > 0, cache the per-layer cross-attention K/V
    ([S, 2D] per layer) instead of recomputing it every autoregressive step.
    """
    l = pl.program_id(0)
    last = pl.num_programs(0) - 1
    dh = d_model // nhead
    scale = 1.0 / math.sqrt(dh)

    @pl.when(l == 0)
    def _():
        t_sc[...] = tgt_ref[...]

    t = t_sc[...]                                                    # [B, D] f32

    # --- self-attention (step 0, single token, empty KV cache) ---
    v = (jnp.dot(t.astype(jnp.bfloat16), s_wv_ref[0],
                 preferred_element_type=jnp.float32) + s_bv_ref[0])
    sa = (jnp.dot(v.astype(jnp.bfloat16), s_wo_ref[0],
                  preferred_element_type=jnp.float32) + s_bo_ref[0])
    t = _ln(t + sa, ln1g_ref[0], ln1b_ref[0], eps)

    # --- cross-attention over memory ---
    m = mem_ref[...]                                                 # [B*S, D] f32
    q = (jnp.dot(t.astype(jnp.bfloat16), c_wq_ref[0],
                 preferred_element_type=jnp.float32) + c_bq_ref[0]) * scale
    kv = (jnp.dot(m.astype(jnp.bfloat16), c_wkv_ref[0],
                  preferred_element_type=jnp.float32) + c_bkv_ref[0])  # [B*S, 2D]
    k = kv[:, :d_model]
    vv = kv[:, d_model:]
    attn_rows = []
    for b in range(B):
        rs = slice(b * S, (b + 1) * S)
        attn_rows.append(_mha_concat(q[b:b + 1], k[rs], vv[rs], nhead, dh))
    attn = jnp.concatenate(attn_rows, axis=0)                        # [B, D]
    ca = (jnp.dot(attn.astype(jnp.bfloat16), c_wo_ref[0],
                  preferred_element_type=jnp.float32) + c_bo_ref[0])
    t = _ln(t + ca, ln2g_ref[0], ln2b_ref[0], eps)

    # --- gelu FFN ---
    h = _gelu(jnp.dot(t.astype(jnp.bfloat16), w1_ref[0],
                      preferred_element_type=jnp.float32) + b1_ref[0])
    ffn = (jnp.dot(h.astype(jnp.bfloat16), w2_ref[0],
                   preferred_element_type=jnp.float32) + b2_ref[0])
    t = _ln(t + ffn, ln3g_ref[0], ln3b_ref[0], eps)
    t_sc[...] = t

    # --- final decoder norm + vocab head (lane-padded logits) ---
    @pl.when(l == last)
    def _():
        hf = _ln(t, nrm_g_ref[...], nrm_b_ref[...], eps)
        logits_ref[...] = (jnp.dot(hf.astype(jnp.bfloat16), voc_wt_ref[...],
                                   preferred_element_type=jnp.float32)
                           + voc_b_ref[...])


def _encoder_post_kernel(x_ref, pos_ref, wp_ref, bp_ref, lnpg_ref, lnpb_ref,
                         lnmg_ref, lnmb_ref, w1_ref, b1_ref, w2_ref, b2_ref,
                         o_ref, *, eps):
    """memory = LN(proj(x)) + pos ; memory += mlp2(gelu(mlp1(LN(memory))))."""
    x = x_ref[...]                                                   # [tile, D]
    mem = _ln(jnp.dot(x.astype(jnp.bfloat16), wp_ref[...],
                      preferred_element_type=jnp.float32) + bp_ref[...],
              lnpg_ref[...], lnpb_ref[...], eps)
    mem = mem + pos_ref[...]
    h = _ln(mem, lnmg_ref[...], lnmb_ref[...], eps)
    h = _gelu(jnp.dot(h.astype(jnp.bfloat16), w1_ref[...],
                      preferred_element_type=jnp.float32) + b1_ref[...])
    o_ref[...] = mem + (jnp.dot(h.astype(jnp.bfloat16), w2_ref[...],
                                preferred_element_type=jnp.float32) + b2_ref[...])


# ----------------------------------------------------------------------------
# pallas_call wrappers
# ----------------------------------------------------------------------------

def _layer_spec(w):
    """Stacked per-layer weight: block = one layer slice, indexed by grid l."""
    return pl.BlockSpec((1,) + tuple(w.shape[1:]), lambda l: (l, 0, 0))


def _const_spec(w):
    """Full-extent constant-index 2D block (shared weights / LN params)."""
    return pl.BlockSpec(tuple(w.shape), lambda *_: (0, 0))


def encoder_stack_fwd(x, enc, *, nhead, B, S):
    N, D = x.shape
    names = ["wqkv", "bqkv", "wo", "bo", "ln1_g", "ln1_b",
             "w1", "b1", "w2", "b2", "ln2_g", "ln2_b"]
    w_args = [enc[n] for n in names]
    L = w_args[0].shape[0]
    return pl.pallas_call(
        functools.partial(_encoder_stack_kernel, nhead=nhead, d_model=D,
                          B=B, S=S, eps=_EPS),
        out_shape=jax.ShapeDtypeStruct((N, D), jnp.float32),
        grid_spec=pltpu.PrefetchScalarGridSpec(
            num_scalar_prefetch=0,
            grid=(L,),
            in_specs=[pl.BlockSpec((N, D), lambda l: (0, 0))]
                     + [_layer_spec(w) for w in w_args],
            out_specs=pl.BlockSpec((N, D), lambda l: (0, 0)),
        ),
        compiler_params=pltpu.CompilerParams(dimension_semantics=("arbitrary",)),
    )(x, *w_args)


def decoder_stack_fwd(tgt, memory, dec, params, *, nhead, B, S):
    D = tgt.shape[1]
    names = ["s_wv", "s_bv", "s_wo", "s_bo", "ln1_g", "ln1_b",
             "c_wq", "c_bq", "c_wkv", "c_bkv", "c_wo", "c_bo", "ln2_g", "ln2_b",
             "w1", "b1", "w2", "b2", "ln3_g", "ln3_b"]
    lw = [dec[n] for n in names]
    const_args = [params["dec_norm_g"], params["dec_norm_b"],
                  params["vocab_embed_t_pad"], params["vocab_bias_pad"]]
    L = lw[0].shape[0]
    V_pad = params["vocab_embed_t_pad"].shape[1]
    return pl.pallas_call(
        functools.partial(_decoder_stack_kernel, nhead=nhead, d_model=D,
                          B=B, S=S, eps=_EPS),
        out_shape=jax.ShapeDtypeStruct((B, V_pad), jnp.float32),
        grid_spec=pltpu.PrefetchScalarGridSpec(
            num_scalar_prefetch=0,
            grid=(L,),
            in_specs=[pl.BlockSpec((B, D), lambda l: (0, 0)),
                      pl.BlockSpec((B * S, D), lambda l: (0, 0))]
                     + [_layer_spec(w) for w in lw]
                     + [_const_spec(w) for w in const_args],
            out_specs=pl.BlockSpec((B, V_pad), lambda l: (0, 0)),
            scratch_shapes=[pltpu.VMEM((B, D), jnp.float32)],
        ),
        compiler_params=pltpu.CompilerParams(dimension_semantics=("arbitrary",)),
    )(tgt, memory, *lw, *const_args)


def encoder_post_fwd(x, pos, params):
    N, D = x.shape
    # 2-way row-tile split so both v7x TensorCores run this kernel (no-op cost on
    # single-TC v5e/v6e beyond one extra tiny grid step).
    ntiles = 2 if (N % 16 == 0 and N >= 16) else 1
    tile = N // ntiles
    w_args = [params["enc_proj_w"], params["enc_proj_b"],
              params["enc_proj_ln_g"], params["enc_proj_ln_b"],
              params["enc_mlp_ln_g"], params["enc_mlp_ln_b"],
              params["enc_mlp_w1"], params["enc_mlp_b1"],
              params["enc_mlp_w2"], params["enc_mlp_b2"]]
    return pl.pallas_call(
        functools.partial(_encoder_post_kernel, eps=_EPS),
        out_shape=jax.ShapeDtypeStruct((N, D), jnp.float32),
        grid_spec=pltpu.PrefetchScalarGridSpec(
            num_scalar_prefetch=0,
            grid=(ntiles,),
            in_specs=[pl.BlockSpec((tile, D), lambda i: (i, 0)),
                      pl.BlockSpec((tile, D), lambda i: (i, 0))]
                     + [_const_spec(w) for w in w_args],
            out_specs=pl.BlockSpec((tile, D), lambda i: (i, 0)),
        ),
        compiler_params=pltpu.CompilerParams(dimension_semantics=("parallel",)),
    )(x, pos, *w_args)


# ----------------------------------------------------------------------------
# Full forward (eval mode: Dropout / DropPath are identity)
# ----------------------------------------------------------------------------

def transformer_forward(params, src, input_seq, mask, pos_embed, *, nhead, vocab):
    """Eval-mode forward of the pix2seq Transformer (first decode step).

    src: [S, B, D] seq-major; pos_embed: NCHW [B, D, H, W]; mask: [B, H, W]
    (flattened but unused on the eval path, as in the reference); input_seq is
    only used by the training branch.  Returns (memory [S, B, D], step-0
    next-token logits [B, V]).
    """
    S, B, D = src.shape
    del input_seq                                    # training-branch only
    mask = mask.reshape(B, -1)                       # mask.flatten(1); unused at eval
    # internal layout is batch-major rows: [B*S, D]
    pos_bsd = pos_embed.reshape(B, D, -1).transpose(0, 2, 1)        # [B, S, D]
    x = (src.transpose(1, 0, 2) + pos_bsd).reshape(B * S, D)        # src + pos_embed

    x = encoder_stack_fwd(x, params["enc"], nhead=nhead, B=B, S=S)  # [B*S, D]
    memory = encoder_post_fwd(x, pos_bsd.reshape(B * S, D), params)  # [B*S, D]

    # --- decoder: one autoregressive step (step 0, pre_kv empty) ---
    # TODO(synk): the 500-step loop with temperature / top-k / top-p filtering and
    # torch.multinomial sampling is stochastic and not translated; step-0 logits only.
    start = jnp.broadcast_to(params["vocab_embed"][10][None, :], (B, D))
    qpos0 = jnp.broadcast_to(params["query_pos_embed"][0][None, :], (B, D))
    tgt = start + qpos0                                              # [B, D]

    logits_pad = decoder_stack_fwd(tgt, memory, params["dec"], params,
                                   nhead=nhead, B=B, S=S)            # [B, V_pad]
    next_logits = logits_pad[:, :vocab]                              # drop lane pad

    return memory.reshape(B, S, D).transpose(1, 0, 2), next_logits


# ----------------------------------------------------------------------------
# Deterministic parameter init (shapes per module __init__, scaled down)
# ----------------------------------------------------------------------------

def init_params(key, *, d_model, nhead, dff, n_enc, n_dec, vocab, v_pad, max_pos):
    keys = iter(jax.random.split(key, 256))

    def xavier(din, dout):
        limit = math.sqrt(6.0 / (din + dout))
        w = jax.random.uniform(next(keys), (din, dout), jnp.float32, -limit, limit)
        return w.astype(jnp.bfloat16)        # bf16 MXU operands (f32 accumulate)

    def xavier_stack(n, din, dout):
        return jnp.stack([xavier(din, dout) for _ in range(n)], axis=0)

    zeros = lambda *s: jnp.zeros(s, jnp.float32)
    ones = lambda *s: jnp.ones(s, jnp.float32)

    enc = dict(
        wqkv=xavier_stack(n_enc, d_model, 3 * d_model), bqkv=zeros(n_enc, 1, 3 * d_model),
        wo=xavier_stack(n_enc, d_model, d_model), bo=zeros(n_enc, 1, d_model),
        ln1_g=ones(n_enc, 1, d_model), ln1_b=zeros(n_enc, 1, d_model),
        w1=xavier_stack(n_enc, d_model, dff), b1=zeros(n_enc, 1, dff),
        w2=xavier_stack(n_enc, dff, d_model), b2=zeros(n_enc, 1, d_model),
        ln2_g=ones(n_enc, 1, d_model), ln2_b=zeros(n_enc, 1, d_model),
    )

    dec = dict(
        # step-0 self-attention only needs the v-projection + output projection
        s_wv=xavier_stack(n_dec, d_model, d_model), s_bv=zeros(n_dec, 1, d_model),
        s_wo=xavier_stack(n_dec, d_model, d_model), s_bo=zeros(n_dec, 1, d_model),
        ln1_g=ones(n_dec, 1, d_model), ln1_b=zeros(n_dec, 1, d_model),
        c_wq=xavier_stack(n_dec, d_model, d_model), c_bq=zeros(n_dec, 1, d_model),
        c_wkv=xavier_stack(n_dec, d_model, 2 * d_model), c_bkv=zeros(n_dec, 1, 2 * d_model),
        c_wo=xavier_stack(n_dec, d_model, d_model), c_bo=zeros(n_dec, 1, d_model),
        ln2_g=ones(n_dec, 1, d_model), ln2_b=zeros(n_dec, 1, d_model),
        w1=xavier_stack(n_dec, d_model, dff), b1=zeros(n_dec, 1, dff),
        w2=xavier_stack(n_dec, dff, d_model), b2=zeros(n_dec, 1, d_model),
        ln3_g=ones(n_dec, 1, d_model), ln3_b=zeros(n_dec, 1, d_model),
    )

    # created after _reset_parameters in the reference -> default (normal) init
    vocab_embed = jax.random.normal(next(keys), (vocab, d_model), jnp.float32)
    vocab_embed_t_pad = jnp.zeros((d_model, v_pad), jnp.bfloat16)
    vocab_embed_t_pad = vocab_embed_t_pad.at[:, :vocab].set(
        vocab_embed.T.astype(jnp.bfloat16))

    return dict(
        enc=enc, dec=dec,
        enc_proj_w=xavier(d_model, d_model), enc_proj_b=zeros(1, d_model),
        enc_proj_ln_g=ones(1, d_model), enc_proj_ln_b=zeros(1, d_model),
        enc_mlp_ln_g=ones(1, d_model), enc_mlp_ln_b=zeros(1, d_model),
        enc_mlp_w1=xavier(d_model, dff), enc_mlp_b1=zeros(1, dff),
        enc_mlp_w2=xavier(dff, d_model), enc_mlp_b2=zeros(1, d_model),
        dec_norm_g=ones(1, d_model), dec_norm_b=zeros(1, d_model),
        vocab_embed=vocab_embed,
        vocab_embed_t_pad=vocab_embed_t_pad,   # pre-transposed + lane-padded to 128
        vocab_bias_pad=zeros(1, v_pad),
        query_pos_embed=jnp.zeros((max_pos, d_model), jnp.float32),
    )


# ----------------------------------------------------------------------------
# Main
# ----------------------------------------------------------------------------

if __name__ == "__main__":
    D, NHEAD, DFF = 32, 4, 64          # d_model=512, nhead=8, dff=1024 scaled down
    N_ENC, N_DEC = 2, 2                # 6 encoder / 6 decoder layers scaled down
    B, H, W = 2, 4, 4
    S = H * W
    VOCAB, V_PAD, MAX_POS = 64, 128, 16  # 3000 (pad->3072 at prod) / 512 scaled down

    key = jax.random.PRNGKey(0)
    kp, ks, kpos = jax.random.split(key, 3)
    params = init_params(kp, d_model=D, nhead=NHEAD, dff=DFF,
                         n_enc=N_ENC, n_dec=N_DEC, vocab=VOCAB, v_pad=V_PAD,
                         max_pos=MAX_POS)

    src = jax.random.normal(ks, (S, B, D), jnp.float32)             # [S, B, D]
    pos_embed = jax.random.normal(kpos, (B, D, H, W), jnp.float32)  # NCHW
    mask = jnp.zeros((B, H, W), jnp.bool_)
    input_seq = jnp.zeros((B, 1), jnp.int32)                        # unused at eval

    fwd = jax.jit(functools.partial(transformer_forward, nhead=NHEAD, vocab=VOCAB))
    memory, logits = fwd(params, src, input_seq, mask, pos_embed)
    jax.block_until_ready((memory, logits))
    assert memory.shape == (S, B, D) and logits.shape == (B, VOCAB)
    assert bool(jnp.all(jnp.isfinite(memory))) and bool(jnp.all(jnp.isfinite(logits)))
    print("KERNEL_OK")
</pallas_src>

<mosaic_0001>
module attributes {stable_mosaic.version = 11 : i64} {
  func.func @_encoder_stack_kernel(%arg0: i32, %arg1: memref<32x32xf32, #tpu.memory_space<vmem>>, %arg2: memref<1x32x96xbf16, #tpu.memory_space<vmem>>, %arg3: memref<1x1x96xf32, #tpu.memory_space<vmem>>, %arg4: memref<1x32x32xbf16, #tpu.memory_space<vmem>>, %arg5: memref<1x1x32xf32, #tpu.memory_space<vmem>>, %arg6: memref<1x1x32xf32, #tpu.memory_space<vmem>>, %arg7: memref<1x1x32xf32, #tpu.memory_space<vmem>>, %arg8: memref<1x32x64xbf16, #tpu.memory_space<vmem>>, %arg9: memref<1x1x64xf32, #tpu.memory_space<vmem>>, %arg10: memref<1x64x32xbf16, #tpu.memory_space<vmem>>, %arg11: memref<1x1x32xf32, #tpu.memory_space<vmem>>, %arg12: memref<1x1x32xf32, #tpu.memory_space<vmem>>, %arg13: memref<1x1x32xf32, #tpu.memory_space<vmem>>, %arg14: memref<32x32xf32, #tpu.memory_space<vmem>>) attributes {dimension_semantics = [#tpu.dimension_semantics<arbitrary>], iteration_bounds = array<i64: 2>, scalar_prefetch = 0 : i64, scratch_operands = 0 : i64, tpu.core_type = #tpu.core_type<tc>, window_params = [{pipeline_mode = #tpu.pipeline_mode<synchronous>, transform_indices = @transform_0, window_bounds = array<i64: 32, 32>}, {transform_indices = @transform_1, window_bounds = array<i64: 1, 32, 96>}, {transform_indices = @transform_2, window_bounds = array<i64: 1, 1, 96>}, {transform_indices = @transform_3, window_bounds = array<i64: 1, 32, 32>}, {transform_indices = @transform_4, window_bounds = array<i64: 1, 1, 32>}, {transform_indices = @transform_5, window_bounds = array<i64: 1, 1, 32>}, {transform_indices = @transform_6, window_bounds = array<i64: 1, 1, 32>}, {transform_indices = @transform_7, window_bounds = array<i64: 1, 32, 64>}, {transform_indices = @transform_8, window_bounds = array<i64: 1, 1, 64>}, {transform_indices = @transform_9, window_bounds = array<i64: 1, 64, 32>}, {transform_indices = @transform_10, window_bounds = array<i64: 1, 1, 32>}, {transform_indices = @transform_11, window_bounds = array<i64: 1, 1, 32>}, {transform_indices = @transform_12, window_bounds = array<i64: 1, 1, 32>}, {pipeline_mode = #tpu.pipeline_mode<synchronous>, transform_indices = @transform_13, window_bounds = array<i64: 32, 32>}]} {
    %c0_i32 = arith.constant 0 : i32
    %0 = arith.cmpi eq, %arg0, %c0_i32 : i32
    %1 = arith.extui %0 : i1 to i32
    %c0_i32_0 = arith.constant 0 : i32
    %2 = arith.cmpi ne, %1, %c0_i32_0 : i32
    scf.if %2 {
      %c0_89 = arith.constant 0 : index
      %c0_90 = arith.constant 0 : index
      %265 = vector.load %arg1[%c0_89, %c0_90] : memref<32x32xf32, #tpu.memory_space<vmem>>, vector<32x32xf32>
      %c0_91 = arith.constant 0 : index
      %c0_92 = arith.constant 0 : index
      %266 = vector.load %arg14[%c0_91, %c0_92] : memref<32x32xf32, #tpu.memory_space<vmem>>, vector<32x32xf32>
      tpu.vector_store %arg14[%c0_91, %c0_92], %265 {strides = array<i32>} : memref<32x32xf32, #tpu.memory_space<vmem>>, vector<32x32xf32>,
    } else {
    }
    %c0 = arith.constant 0 : index
    %c0_1 = arith.constant 0 : index
    %3 = vector.load %arg14[%c0, %c0_1] : memref<32x32xf32, #tpu.memory_space<vmem>>, vector<32x32xf32>
    %4 = arith.truncf %3 : vector<32x32xf32> to vector<32x32xbf16>
    %c0_2 = arith.constant 0 : index
    %c0_3 = arith.constant 0 : index
    %c0_4 = arith.constant 0 : index
    %5 = vector.load %arg2[%c0_2, %c0_3, %c0_4] : memref<1x32x96xbf16, #tpu.memory_space<vmem>>, vector<1x32x96xbf16>
    %6 = vector.shape_cast %5 : vector<1x32x96xbf16> to vector<32x96xbf16>
    %cst = arith.constant dense<0.000000e+00> : vector<32x96xf32>
    %7 = tpu.matmul %4, %6, %cst {dimension_numbers = #tpu.dot_dimension_numbers<[1], [0], [0], [1], [0, 0, 1, 1], [], []>} : vector<32x32xbf16>, vector<32x96xbf16>, vector<32x96xf32> -> vector<32x96xf32>
    %c0_5 = arith.constant 0 : index
    %c0_6 = arith.constant 0 : index
    %c0_7 = arith.constant 0 : index
    %8 = vector.load %arg3[%c0_5, %c0_6, %c0_7] : memref<1x1x96xf32, #tpu.memory_space<vmem>>, vector<1x1x96xf32>
    %9 = vector.shape_cast %8 : vector<1x1x96xf32> to vector<1x96xf32>
    %10 = vector.broadcast %9 : vector<1x96xf32> to vector<32x96xf32>
    %11 = arith.addf %7, %10 : vector<32x96xf32>
    %12 = vector.extract_strided_slice %11 {offsets = [0, 0], sizes = [32, 32], strides = [1, 1]} : vector<32x96xf32> to vector<32x32xf32>
    %cst_8 = arith.constant 0.353553385 : f32
    %13 = vector.broadcast %cst_8 : f32 to vector<32x32xf32>
    %14 = arith.mulf %12, %13 : vector<32x32xf32>
    %15 = vector.extract_strided_slice %11 {offsets = [0, 32], sizes = [32, 32], strides = [1, 1]} : vector<32x96xf32> to vector<32x32xf32>
    %16 = vector.extract_strided_slice %11 {offsets = [0, 64], sizes = [32, 32], strides = [1, 1]} : vector<32x96xf32> to vector<32x32xf32>
    %17 = vector.extract_strided_slice %14 {offsets = [0, 0], sizes = [16, 32], strides = [1, 1]} : vector<32x32xf32> to vector<16x32xf32>
    %18 = vector.extract_strided_slice %15 {offsets = [0, 0], sizes = [16, 32], strides = [1, 1]} : vector<32x32xf32> to vector<16x32xf32>
    %19 = vector.extract_strided_slice %16 {offsets = [0, 0], sizes = [16, 32], strides = [1, 1]} : vector<32x32xf32> to vector<16x32xf32>
    %20 = vector.extract_strided_slice %17 {offsets = [0, 0], sizes = [16, 8], strides = [1, 1]} : vector<16x32xf32> to vector<16x8xf32>
    %21 = arith.truncf %20 : vector<16x8xf32> to vector<16x8xbf16>
    %22 = vector.extract_strided_slice %18 {offsets = [0, 0], sizes = [16, 8], strides = [1, 1]} : vector<16x32xf32> to vector<16x8xf32>
    %23 = arith.truncf %22 : vector<16x8xf32> to vector<16x8xbf16>
    %cst_9 = arith.constant dense<0.000000e+00> : vector<16x16xf32>
    %24 = tpu.matmul %21, %23, %cst_9 {dimension_numbers = #tpu.dot_dimension_numbers<[1], [1], [0], [0], [0, 0, 1, 0], [], []>} : vector<16x8xbf16>, vector<16x8xbf16>, vector<16x16xf32> -> vector<16x16xf32>
    %cst_10 = arith.constant dense<0xFF800000> : vector<16xf32>
    %25 = vector.multi_reduction <maximumf>, %24, %cst_10 [1] : vector<16x16xf32> to vector<16xf32>
    %26 = vector.shape_cast %25 : vector<16xf32> to vector<16x1xf32>
    %27 = vector.broadcast %26 : vector<16x1xf32> to vector<16x16xf32>
    %28 = arith.subf %24, %27 : vector<16x16xf32>
    %29 = math.exp %28 : vector<16x16xf32>
    %cst_11 = arith.constant dense<0.000000e+00> : vector<16xf32>
    %30 = vector.multi_reduction <add>, %29, %cst_11 [1] : vector<16x16xf32> to vector<16xf32>
    %31 = vector.shape_cast %30 : vector<16xf32> to vector<16x1xf32>
    %32 = tpu.reciprocal %31 {approx = true} : vector<16x1xf32> -> vector<16x1xf32>
    %33 = vector.broadcast %32 : vector<16x1xf32> to vector<16x16xf32>
    %34 = arith.mulf %29, %33 : vector<16x16xf32>
    %35 = arith.truncf %34 : vector<16x16xf32> to vector<16x16xbf16>
    %36 = vector.extract_strided_slice %19 {offsets = [0, 0], sizes = [16, 8], strides = [1, 1]} : vector<16x32xf32> to vector<16x8xf32>
    %37 = arith.truncf %36 : vector<16x8xf32> to vector<16x8xbf16>
    %cst_12 = arith.constant dense<0.000000e+00> : vector<16x8xf32>
    %38 = tpu.matmul %35, %37, %cst_12 {dimension_numbers = #tpu.dot_dimension_numbers<[1], [0], [0], [1], [0, 0, 1, 1], [], []>} : vector<16x16xbf16>, vector<16x8xbf16>, vector<16x8xf32> -> vector<16x8xf32>
    %39 = vector.extract_strided_slice %17 {offsets = [0, 8], sizes = [16, 8], strides = [1, 1]} : vector<16x32xf32> to vector<16x8xf32>
    %40 = arith.truncf %39 : vector<16x8xf32> to vector<16x8xbf16>
    %41 = vector.extract_strided_slice %18 {offsets = [0, 8], sizes = [16, 8], strides = [1, 1]} : vector<16x32xf32> to vector<16x8xf32>
    %42 = arith.truncf %41 : vector<16x8xf32> to vector<16x8xbf16>
    %cst_13 = arith.constant dense<0.000000e+00> : vector<16x16xf32>
    %43 = tpu.matmul %40, %42, %cst_13 {dimension_numbers = #tpu.dot_dimension_numbers<[1], [1], [0], [0], [0, 0, 1, 0], [], []>} : vector<16x8xbf16>, vector<16x8xbf16>, vector<16x16xf32> -> vector<16x16xf32>
    %cst_14 = arith.constant dense<0xFF800000> : vector<16xf32>
    %44 = vector.multi_reduction <maximumf>, %43, %cst_14 [1] : vector<16x16xf32> to vector<16xf32>
    %45 = vector.shape_cast %44 : vector<16xf32> to vector<16x1xf32>
    %46 = vector.broadcast %45 : vector<16x1xf32> to vector<16x16xf32>
    %47 = arith.subf %43, %46 : vector<16x16xf32>
    %48 = math.exp %47 : vector<16x16xf32>
    %cst_15 = arith.constant dense<0.000000e+00> : vector<16xf32>
    %49 = vector.multi_reduction <add>, %48, %cst_15 [1] : vector<16x16xf32> to vector<16xf32>
    %50 = vector.shape_cast %49 : vector<16xf32> to vector<16x1xf32>
    %51 = tpu.reciprocal %50 {approx = true} : vector<16x1xf32> -> vector<16x1xf32>
    %52 = vector.broadcast %51 : vector<16x1xf32> to vector<16x16xf32>
    %53 = arith.mulf %48, %52 : vector<16x16xf32>
    %54 = arith.truncf %53 : vector<16x16xf32> to vector<16x16xbf16>
    %55 = vector.extract_strided_slice %19 {offsets = [0, 8], sizes = [16, 8], strides = [1, 1]} : vector<16x32xf32> to vector<16x8xf32>
    %56 = arith.truncf %55 : vector<16x8xf32> to vector<16x8xbf16>
    %cst_16 = arith.constant dense<0.000000e+00> : vector<16x8xf32>
    %57 = tpu.matmul %54, %56, %cst_16 {dimension_numbers = #tpu.dot_dimension_numbers<[1], [0], [0], [1], [0, 0, 1, 1], [], []>} : vector<16x16xbf16>, vector<16x8xbf16>, vector<16x8xf32> -> vector<16x8xf32>
    %58 = vector.extract_strided_slice %17 {offsets = [0, 16], sizes = [16, 8], strides = [1, 1]} : vector<16x32xf32> to vector<16x8xf32>
    %59 = arith.truncf %58 : vector<16x8xf32> to vector<16x8xbf16>
    %60 = vector.extract_strided_slice %18 {offsets = [0, 16], sizes = [16, 8], strides = [1, 1]} : vector<16x32xf32> to vector<16x8xf32>
    %61 = arith.truncf %60 : vector<16x8xf32> to vector<16x8xbf16>
    %cst_17 = arith.constant dense<0.000000e+00> : vector<16x16xf32>
    %62 = tpu.matmul %59, %61, %cst_17 {dimension_numbers = #tpu.dot_dimension_numbers<[1], [1], [0], [0], [0, 0, 1, 0], [], []>} : vector<16x8xbf16>, vector<16x8xbf16>, vector<16x16xf32> -> vector<16x16xf32>
    %cst_18 = arith.constant dense<0xFF800000> : vector<16xf32>
    %63 = vector.multi_reduction <maximumf>, %62, %cst_18 [1] : vector<16x16xf32> to vector<16xf32>
    %64 = vector.shape_cast %63 : vector<16xf32> to vector<16x1xf32>
    %65 = vector.broadcast %64 : vector<16x1xf32> to vector<16x16xf32>
    %66 = arith.subf %62, %65 : vector<16x16xf32>
    %67 = math.exp %66 : vector<16x16xf32>
    %cst_19 = arith.constant dense<0.000000e+00> : vector<16xf32>
    %68 = vector.multi_reduction <add>, %67, %cst_19 [1] : vector<16x16xf32> to vector<16xf32>
    %69 = vector.shape_cast %68 : vector<16xf32> to vector<16x1xf32>
    %70 = tpu.reciprocal %69 {approx = true} : vector<16x1xf32> -> vector<16x1xf32>
    %71 = vector.broadcast %70 : vector<16x1xf32> to vector<16x16xf32>
    %72 = arith.mulf %67, %71 : vector<16x16xf32>
    %73 = arith.truncf %72 : vector<16x16xf32> to vector<16x16xbf16>
    %74 = vector.extract_strided_slice %19 {offsets = [0, 16], sizes = [16, 8], strides = [1, 1]} : vector<16x32xf32> to vector<16x8xf32>
    %75 = arith.truncf %74 : vector<16x8xf32> to vector<16x8xbf16>
    %cst_20 = arith.constant dense<0.000000e+00> : vector<16x8xf32>
    %76 = tpu.matmul %73, %75, %cst_20 {dimension_numbers = #tpu.dot_dimension_numbers<[1], [0], [0], [1], [0, 0, 1, 1], [], []>} : vector<16x16xbf16>, vector<16x8xbf16>, vector<16x8xf32> -> vector<16x8xf32>
    %77 = vector.extract_strided_slice %17 {offsets = [0, 24], sizes = [16, 8], strides = [1, 1]} : vector<16x32xf32> to vector<16x8xf32>
    %78 = arith.truncf %77 : vector<16x8xf32> to vector<16x8xbf16>
    %79 = vector.extract_strided_slice %18 {offsets = [0, 24], sizes = [16, 8], strides = [1, 1]} : vector<16x32xf32> to vector<16x8xf32>
    %80 = arith.truncf %79 : vector<16x8xf32> to vector<16x8xbf16>
    %cst_21 = arith.constant dense<0.000000e+00> : vector<16x16xf32>
    %81 = tpu.matmul %78, %80, %cst_21 {dimension_numbers = #tpu.dot_dimension_numbers<[1], [1], [0], [0], [0, 0, 1, 0], [], []>} : vector<16x8xbf16>, vector<16x8xbf16>, vector<16x16xf32> -> vector<16x16xf32>
    %cst_22 = arith.constant dense<0xFF800000> : vector<16xf32>
    %82 = vector.multi_reduction <maximumf>, %81, %cst_22 [1] : vector<16x16xf32> to vector<16xf32>
    %83 = vector.shape_cast %82 : vector<16xf32> to vector<16x1xf32>
    %84 = vector.broadcast %83 : vector<16x1xf32> to vector<16x16xf32>
    %85 = arith.subf %81, %84 : vector<16x16xf32>
    %86 = math.exp %85 : vector<16x16xf32>
    %cst_23 = arith.constant dense<0.000000e+00> : vector<16xf32>
    %87 = vector.multi_reduction <add>, %86, %cst_23 [1] : vector<16x16xf32> to vector<16xf32>
    %88 = vector.shape_cast %87 : vector<16xf32> to vector<16x1xf32>
    %89 = tpu.reciprocal %88 {approx = true} : vector<16x1xf32> -> vector<16x1xf32>
    %90 = vector.broadcast %89 : vector<16x1xf32> to vector<16x16xf32>
    %91 = arith.mulf %86, %90 : vector<16x16xf32>
    %92 = arith.truncf %91 : vector<16x16xf32> to vector<16x16xbf16>
    %93 = vector.extract_strided_slice %19 {offsets = [0, 24], sizes = [16, 8], strides = [1, 1]} : vector<16x32xf32> to vector<16x8xf32>
    %94 = arith.truncf %93 : vector<16x8xf32> to vector<16x8xbf16>
    %cst_24 = arith.constant dense<0.000000e+00> : vector<16x8xf32>
    %95 = tpu.matmul %92, %94, %cst_24 {dimension_numbers = #tpu.dot_dimension_numbers<[1], [0], [0], [1], [0, 0, 1, 1], [], []>} : vector<16x16xbf16>, vector<16x8xbf16>, vector<16x8xf32> -> vector<16x8xf32>
    %96 = tpu.concatenate %38, %57, %76, %95 in 1 : vector<16x8xf32>, vector<16x8xf32>, vector<16x8xf32>, vector<16x8xf32> -> vector<16x32xf32>
    %97 = vector.extract_strided_slice %14 {offsets = [16, 0], sizes = [16, 32], strides = [1, 1]} : vector<32x32xf32> to vector<16x32xf32>
    %98 = vector.extract_strided_slice %15 {offsets = [16, 0], sizes = [16, 32], strides = [1, 1]} : vector<32x32xf32> to vector<16x32xf32>
    %99 = vector.extract_strided_slice %16 {offsets = [16, 0], sizes = [16, 32], strides = [1, 1]} : vector<32x32xf32> to vector<16x32xf32>
    %100 = vector.extract_strided_slice %97 {offsets = [0, 0], sizes = [16, 8], strides = [1, 1]} : vector<16x32xf32> to vector<16x8xf32>
    %101 = arith.truncf %100 : vector<16x8xf32> to vector<16x8xbf16>
    %102 = vector.extract_strided_slice %98 {offsets = [0, 0], sizes = [16, 8], strides = [1, 1]} : vector<16x32xf32> to vector<16x8xf32>
    %103 = arith.truncf %102 : vector<16x8xf32> to vector<16x8xbf16>
    %cst_25 = arith.constant dense<0.000000e+00> : vector<16x16xf32>
    %104 = tpu.matmul %101, %103, %cst_25 {dimension_numbers = #tpu.dot_dimension_numbers<[1], [1], [0], [0], [0, 0, 1, 0], [], []>} : vector<16x8xbf16>, vector<16x8xbf16>, vector<16x16xf32> -> vector<16x16xf32>
    %cst_26 = arith.constant dense<0xFF800000> : vector<16xf32>
    %105 = vector.multi_reduction <maximumf>, %104, %cst_26 [1] : vector<16x16xf32> to vector<16xf32>
    %106 = vector.shape_cast %105 : vector<16xf32> to vector<16x1xf32>
    %107 = vector.broadcast %106 : vector<16x1xf32> to vector<16x16xf32>
    %108 = arith.subf %104, %107 : vector<16x16xf32>
    %109 = math.exp %108 : vector<16x16xf32>
    %cst_27 = arith.constant dense<0.000000e+00> : vector<16xf32>
    %110 = vector.multi_reduction <add>, %109, %cst_27 [1] : vector<16x16xf32> to vector<16xf32>
    %111 = vector.shape_cast %110 : vector<16xf32> to vector<16x1xf32>
    %112 = tpu.reciprocal %111 {approx = true} : vector<16x1xf32> -> vector<16x1xf32>
    %113 = vector.broadcast %112 : vector<16x1xf32> to vector<16x16xf32>
    %114 = arith.mulf %109, %113 : vector<16x16xf32>
    %115 = arith.truncf %114 : vector<16x16xf32> to vector<16x16xbf16>
    %116 = vector.extract_strided_slice %99 {offsets = [0, 0], sizes = [16, 8], strides = [1, 1]} : vector<16x32xf32> to vector<16x8xf32>
    %117 = arith.truncf %116 : vector<16x8xf32> to vector<16x8xbf16>
    %cst_28 = arith.constant dense<0.000000e+00> : vector<16x8xf32>
    %118 = tpu.matmul %115, %117, %cst_28 {dimension_numbers = #tpu.dot_dimension_numbers<[1], [0], [0], [1], [0, 0, 1, 1], [], []>} : vector<16x16xbf16>, vector<16x8xbf16>, vector<16x8xf32> -> vector<16x8xf32>
    %119 = vector.extract_strided_slice %97 {offsets = [0, 8], sizes = [16, 8], strides = [1, 1]} : vector<16x32xf32> to vector<16x8xf32>
    %120 = arith.truncf %119 : vector<16x8xf32> to vector<16x8xbf16>
    %121 = vector.extract_strided_slice %98 {offsets = [0, 8], sizes = [16, 8], strides = [1, 1]} : vector<16x32xf32> to vector<16x8xf32>
    %122 = arith.truncf %121 : vector<16x8xf32> to vector<16x8xbf16>
    %cst_29 = arith.constant dense<0.000000e+00> : vector<16x16xf32>
    %123 = tpu.matmul %120, %122, %cst_29 {dimension_numbers = #tpu.dot_dimension_numbers<[1], [1], [0], [0], [0, 0, 1, 0], [], []>} : vector<16x8xbf16>, vector<16x8xbf16>, vector<16x16xf32> -> vector<16x16xf32>
    %cst_30 = arith.constant dense<0xFF800000> : vector<16xf32>
    %124 = vector.multi_reduction <maximumf>, %123, %cst_30 [1] : vector<16x16xf32> to vector<16xf32>
    %125 = vector.shape_cast %124 : vector<16xf32> to vector<16x1xf32>
    %126 = vector.broadcast %125 : vector<16x1xf32> to vector<16x16xf32>
    %127 = arith.subf %123, %126 : vector<16x16xf32>
    %128 = math.exp %127 : vector<16x16xf32>
    %cst_31 = arith.constant dense<0.000000e+00> : vector<16xf32>
    %129 = vector.multi_reduction <add>, %128, %cst_31 [1] : vector<16x16xf32> to vector<16xf32>
    %130 = vector.shape_cast %129 : vector<16xf32> to vector<16x1xf32>
    %131 = tpu.reciprocal %130 {approx = true} : vector<16x1xf32> -> vector<16x1xf32>
    %132 = vector.broadcast %131 : vector<16x1xf32> to vector<16x16xf32>
    %133 = arith.mulf %128, %132 : vector<16x16xf32>
    %134 = arith.truncf %133 : vector<16x16xf32> to vector<16x16xbf16>
    %135 = vector.extract_strided_slice %99 {offsets = [0, 8], sizes = [16, 8], strides = [1, 1]} : vector<16x32xf32> to vector<16x8xf32>
    %136 = arith.truncf %135 : vector<16x8xf32> to vector<16x8xbf16>
    %cst_32 = arith.constant dense<0.000000e+00> : vector<16x8xf32>
    %137 = tpu.matmul %134, %136, %cst_32 {dimension_numbers = #tpu.dot_dimension_numbers<[1], [0], [0], [1], [0, 0, 1, 1], [], []>} : vector<16x16xbf16>, vector<16x8xbf16>, vector<16x8xf32> -> vector<16x8xf32>
    %138 = vector.extract_strided_slice %97 {offsets = [0, 16], sizes = [16, 8], strides = [1, 1]} : vector<16x32xf32> to vector<16x8xf32>
    %139 = arith.truncf %138 : vector<16x8xf32> to vector<16x8xbf16>
    %140 = vector.extract_strided_slice %98 {offsets = [0, 16], sizes = [16, 8], strides = [1, 1]} : vector<16x32xf32> to vector<16x8xf32>
    %141 = arith.truncf %140 : vector<16x8xf32> to vector<16x8xbf16>
    %cst_33 = arith.constant dense<0.000000e+00> : vector<16x16xf32>
    %142 = tpu.matmul %139, %141, %cst_33 {dimension_numbers = #tpu.dot_dimension_numbers<[1], [1], [0], [0], [0, 0, 1, 0], [], []>} : vector<16x8xbf16>, vector<16x8xbf16>, vector<16x16xf32> -> vector<16x16xf32>
    %cst_34 = arith.constant dense<0xFF800000> : vector<16xf32>
    %143 = vector.multi_reduction <maximumf>, %142, %cst_34 [1] : vector<16x16xf32> to vector<16xf32>
    %144 = vector.shape_cast %143 : vector<16xf32> to vector<16x1xf32>
    %145 = vector.broadcast %144 : vector<16x1xf32> to vector<16x16xf32>
    %146 = arith.subf %142, %145 : vector<16x16xf32>
    %147 = math.exp %146 : vector<16x16xf32>
    %cst_35 = arith.constant dense<0.000000e+00> : vector<16xf32>
    %148 = vector.multi_reduction <add>, %147, %cst_35 [1] : vector<16x16xf32> to vector<16xf32>
    %149 = vector.shape_cast %148 : vector<16xf32> to vector<16x1xf32>
    %150 = tpu.reciprocal %149 {approx = true} : vector<16x1xf32> -> vector<16x1xf32>
    %151 = vector.broadcast %150 : vector<16x1xf32> to vector<16x16xf32>
    %152 = arith.mulf %147, %151 : vector<16x16xf32>
    %153 = arith.truncf %152 : vector<16x16xf32> to vector<16x16xbf16>
    %154 = vector.extract_strided_slice %99 {offsets = [0, 16], sizes = [16, 8], strides = [1, 1]} : vector<16x32xf32> to vector<16x8xf32>
    %155 = arith.truncf %154 : vector<16x8xf32> to vector<16x8xbf16>
    %cst_36 = arith.constant dense<0.000000e+00> : vector<16x8xf32>
    %156 = tpu.matmul %153, %155, %cst_36 {dimension_numbers = #tpu.dot_dimension_numbers<[1], [0], [0], [1], [0, 0, 1, 1], [], []>} : vector<16x16xbf16>, vector<16x8xbf16>, vector<16x8xf32> -> vector<16x8xf32>
    %157 = vector.extract_strided_slice %97 {offsets = [0, 24], sizes = [16, 8], strides = [1, 1]} : vector<16x32xf32> to vector<16x8xf32>
    %158 = arith.truncf %157 : vector<16x8xf32> to vector<16x8xbf16>
    %159 = vector.extract_strided_slice %98 {offsets = [0, 24], sizes = [16, 8], strides = [1, 1]} : vector<16x32xf32> to vector<16x8xf32>
    %160 = arith.truncf %159 : vector<16x8xf32> to vector<16x8xbf16>
    %cst_37 = arith.constant dense<0.000000e+00> : vector<16x16xf32>
    %161 = tpu.matmul %158, %160, %cst_37 {dimension_numbers = #tpu.dot_dimension_numbers<[1], [1], [0], [0], [0, 0, 1, 0], [], []>} : vector<16x8xbf16>, vector<16x8xbf16>, vector<16x16xf32> -> vector<16x16xf32>
    %cst_38 = arith.constant dense<0xFF800000> : vector<16xf32>
    %162 = vector.multi_reduction <maximumf>, %161, %cst_38 [1] : vector<16x16xf32> to vector<16xf32>
    %163 = vector.shape_cast %162 : vector<16xf32> to vector<16x1xf32>
    %164 = vector.broadcast %163 : vector<16x1xf32> to vector<16x16xf32>
    %165 = arith.subf %161, %164 : vector<16x16xf32>
    %166 = math.exp %165 : vector<16x16xf32>
    %cst_39 = arith.constant dense<0.000000e+00> : vector<16xf32>
    %167 = vector.multi_reduction <add>, %166, %cst_39 [1] : vector<16x16xf32> to vector<16xf32>
    %168 = vector.shape_cast %167 : vector<16xf32> to vector<16x1xf32>
    %169 = tpu.reciprocal %168 {approx = true} : vector<16x1xf32> -> vector<16x1xf32>
    %170 = vector.broadcast %169 : vector<16x1xf32> to vector<16x16xf32>
    %171 = arith.mulf %166, %170 : vector<16x16xf32>
    %172 = arith.truncf %171 : vector<16x16xf32> to vector<16x16xbf16>
    %173 = vector.extract_strided_slice %99 {offsets = [0, 24], sizes = [16, 8], strides = [1, 1]} : vector<16x32xf32> to vector<16x8xf32>
    %174 = arith.truncf %173 : vector<16x8xf32> to vector<16x8xbf16>
    %cst_40 = arith.constant dense<0.000000e+00> : vector<16x8xf32>
    %175 = tpu.matmul %172, %174, %cst_40 {dimension_numbers = #tpu.dot_dimension_numbers<[1], [0], [0], [1], [0, 0, 1, 1], [], []>} : vector<16x16xbf16>, vector<16x8xbf16>, vector<16x8xf32> -> vector<16x8xf32>
    %176 = tpu.concatenate %118, %137, %156, %175 in 1 : vector<16x8xf32>, vector<16x8xf32>, vector<16x8xf32>, vector<16x8xf32> -> vector<16x32xf32>
    %177 = tpu.concatenate %96, %176 in 0 : vector<16x32xf32>, vector<16x32xf32> -> vector<32x32xf32>
    %178 = arith.truncf %177 : vector<32x32xf32> to vector<32x32xbf16>
    %c0_41 = arith.constant 0 : index
    %c0_42 = arith.constant 0 : index
    %c0_43 = arith.constant 0 : index
    %179 = vector.load %arg4[%c0_41, %c0_42, %c0_43] : memref<1x32x32xbf16, #tpu.memory_space<vmem>>, vector<1x32x32xbf16>
    %180 = vector.shape_cast %179 : vector<1x32x32xbf16> to vector<32x32xbf16>
    %cst_44 = arith.constant dense<0.000000e+00> : vector<32x32xf32>
    %181 = tpu.matmul %178, %180, %cst_44 {dimension_numbers = #tpu.dot_dimension_numbers<[1], [0], [0], [1], [0, 0, 1, 1], [], []>} : vector<32x32xbf16>, vector<32x32xbf16>, vector<32x32xf32> -> vector<32x32xf32>
    %c0_45 = arith.constant 0 : index
    %c0_46 = arith.constant 0 : index
    %c0_47 = arith.constant 0 : index
    %182 = vector.load %arg5[%c0_45, %c0_46, %c0_47] : memref<1x1x32xf32, #tpu.memory_space<vmem>>, vector<1x1x32xf32>
    %183 = vector.shape_cast %182 : vector<1x1x32xf32> to vector<1x32xf32>
    %184 = vector.broadcast %183 : vector<1x32xf32> to vector<32x32xf32>
    %185 = arith.addf %181, %184 : vector<32x32xf32>
    %186 = arith.addf %3, %185 : vector<32x32xf32>
    %c0_48 = arith.constant 0 : index
    %c0_49 = arith.constant 0 : index
    %c0_50 = arith.constant 0 : index
    %187 = vector.load %arg6[%c0_48, %c0_49, %c0_50] : memref<1x1x32xf32, #tpu.memory_space<vmem>>, vector<1x1x32xf32>
    %188 = vector.shape_cast %187 : vector<1x1x32xf32> to vector<1x32xf32>
    %c0_51 = arith.constant 0 : index
    %c0_52 = arith.constant 0 : index
    %c0_53 = arith.constant 0 : index
    %189 = vector.load %arg7[%c0_51, %c0_52, %c0_53] : memref<1x1x32xf32, #tpu.memory_space<vmem>>, vector<1x1x32xf32>
    %190 = vector.shape_cast %189 : vector<1x1x32xf32> to vector<1x32xf32>
    %cst_54 = arith.constant dense<0.000000e+00> : vector<32xf32>
    %191 = vector.multi_reduction <add>, %186, %cst_54 [1] : vector<32x32xf32> to vector<32xf32>
    %192 = vector.shape_cast %191 : vector<32xf32> to vector<32x1xf32>
    %cst_55 = arith.constant 3.200000e+01 : f32
    %193 = vector.broadcast %cst_55 : f32 to vector<32x1xf32>
    %194 = arith.divf %192, %193 : vector<32x1xf32>
    %195 = vector.broadcast %194 : vector<32x1xf32> to vector<32x32xf32>
    %196 = arith.subf %186, %195 : vector<32x32xf32>
    %197 = arith.mulf %196, %196 : vector<32x32xf32>
    %cst_56 = arith.constant dense<0.000000e+00> : vector<32xf32>
    %198 = vector.multi_reduction <add>, %197, %cst_56 [1] : vector<32x32xf32> to vector<32xf32>
    %199 = vector.shape_cast %198 : vector<32xf32> to vector<32x1xf32>
    %cst_57 = arith.constant 3.200000e+01 : f32
    %200 = vector.broadcast %cst_57 : f32 to vector<32x1xf32>
    %201 = arith.divf %199, %200 : vector<32x1xf32>
    %202 = vector.broadcast %194 : vector<32x1xf32> to vector<32x32xf32>
    %203 = arith.subf %186, %202 : vector<32x32xf32>
    %cst_58 = arith.constant 9.99999997E-7 : f32
    %204 = vector.broadcast %cst_58 : f32 to vector<32x1xf32>
    %205 = arith.addf %201, %204 : vector<32x1xf32>
    %206 = math.rsqrt %205 : vector<32x1xf32>
    %207 = vector.broadcast %206 : vector<32x1xf32> to vector<32x32xf32>
    %208 = arith.mulf %203, %207 : vector<32x32xf32>
    %209 = vector.broadcast %188 : vector<1x32xf32> to vector<32x32xf32>
    %210 = arith.mulf %208, %209 : vector<32x32xf32>
    %211 = vector.broadcast %190 : vector<1x32xf32> to vector<32x32xf32>
    %212 = arith.addf %210, %211 : vector<32x32xf32>
    %213 = arith.truncf %212 : vector<32x32xf32> to vector<32x32xbf16>
    %c0_59 = arith.constant 0 : index
    %c0_60 = arith.constant 0 : index
    %c0_61 = arith.constant 0 : index
    %214 = vector.load %arg8[%c0_59, %c0_60, %c0_61] : memref<1x32x64xbf16, #tpu.memory_space<vmem>>, vector<1x32x64xbf16>
    %215 = vector.shape_cast %214 : vector<1x32x64xbf16> to vector<32x64xbf16>
    %cst_62 = arith.constant dense<0.000000e+00> : vector<32x64xf32>
    %216 = tpu.matmul %213, %215, %cst_62 {dimension_numbers = #tpu.dot_dimension_numbers<[1], [0], [0], [1], [0, 0, 1, 1], [], []>} : vector<32x32xbf16>, vector<32x64xbf16>, vector<32x64xf32> -> vector<32x64xf32>
    %c0_63 = arith.constant 0 : index
    %c0_64 = arith.constant 0 : index
    %c0_65 = arith.constant 0 : index
    %217 = vector.load %arg9[%c0_63, %c0_64, %c0_65] : memref<1x1x64xf32, #tpu.memory_space<vmem>>, vector<1x1x64xf32>
    %218 = vector.shape_cast %217 : vector<1x1x64xf32> to vector<1x64xf32>
    %219 = vector.broadcast %218 : vector<1x64xf32> to vector<32x64xf32>
    %220 = arith.addf %216, %219 : vector<32x64xf32>
    %cst_66 = arith.constant 5.000000e-01 : f32
    %221 = vector.broadcast %cst_66 : f32 to vector<32x64xf32>
    %222 = arith.mulf %221, %220 : vector<32x64xf32>
    %cst_67 = arith.constant 0.707106769 : f32
    %223 = vector.broadcast %cst_67 : f32 to vector<32x64xf32>
    %224 = arith.mulf %220, %223 : vector<32x64xf32>
    %225 = math.erf %224 : vector<32x64xf32>
    %cst_68 = arith.constant 1.000000e+00 : f32
    %226 = vector.broadcast %cst_68 : f32 to vector<32x64xf32>
    %227 = arith.addf %226, %225 : vector<32x64xf32>
    %228 = arith.mulf %222, %227 : vector<32x64xf32>
    %229 = arith.truncf %228 : vector<32x64xf32> to vector<32x64xbf16>
    %c0_69 = arith.constant 0 : index
    %c0_70 = arith.constant 0 : index
    %c0_71 = arith.constant 0 : index
    %230 = vector.load %arg10[%c0_69, %c0_70, %c0_71] : memref<1x64x32xbf16, #tpu.memory_space<vmem>>, vector<1x64x32xbf16>
    %231 = vector.shape_cast %230 : vector<1x64x32xbf16> to vector<64x32xbf16>
    %cst_72 = arith.constant dense<0.000000e+00> : vector<32x32xf32>
    %232 = tpu.matmul %229, %231, %cst_72 {dimension_numbers = #tpu.dot_dimension_numbers<[1], [0], [0], [1], [0, 0, 1, 1], [], []>} : vector<32x64xbf16>, vector<64x32xbf16>, vector<32x32xf32> -> vector<32x32xf32>
    %c0_73 = arith.constant 0 : index
    %c0_74 = arith.constant 0 : index
    %c0_75 = arith.constant 0 : index
    %233 = vector.load %arg11[%c0_73, %c0_74, %c0_75] : memref<1x1x32xf32, #tpu.memory_space<vmem>>, vector<1x1x32xf32>
    %234 = vector.shape_cast %233 : vector<1x1x32xf32> to vector<1x32xf32>
    %235 = vector.broadcast %234 : vector<1x32xf32> to vector<32x32xf32>
    %236 = arith.addf %232, %235 : vector<32x32xf32>
    %237 = arith.addf %212, %236 : vector<32x32xf32>
    %c0_76 = arith.constant 0 : index
    %c0_77 = arith.constant 0 : index
    %c0_78 = arith.constant 0 : index
    %238 = vector.load %arg12[%c0_76, %c0_77, %c0_78] : memref<1x1x32xf32, #tpu.memory_space<vmem>>, vector<1x1x32xf32>
    %239 = vector.shape_cast %238 : vector<1x1x32xf32> to vector<1x32xf32>
    %c0_79 = arith.constant 0 : index
    %c0_80 = arith.constant 0 : index
    %c0_81 = arith.constant 0 : index
    %240 = vector.load %arg13[%c0_79, %c0_80, %c0_81] : memref<1x1x32xf32, #tpu.memory_space<vmem>>, vector<1x1x32xf32>
    %241 = vector.shape_cast %240 : vector<1x1x32xf32> to vector<1x32xf32>
    %cst_82 = arith.constant dense<0.000000e+00> : vector<32xf32>
    %242 = vector.multi_reduction <add>, %237, %cst_82 [1] : vector<32x32xf32> to vector<32xf32>
    %243 = vector.shape_cast %242 : vector<32xf32> to vector<32x1xf32>
    %cst_83 = arith.constant 3.200000e+01 : f32
    %244 = vector.broadcast %cst_83 : f32 to vector<32x1xf32>
    %245 = arith.divf %243, %244 : vector<32x1xf32>
    %246 = vector.broadcast %245 : vector<32x1xf32> to vector<32x32xf32>
    %247 = arith.subf %237, %246 : vector<32x32xf32>
    %248 = arith.mulf %247, %247 : vector<32x32xf32>
    %cst_84 = arith.constant dense<0.000000e+00> : vector<32xf32>
    %249 = vector.multi_reduction <add>, %248, %cst_84 [1] : vector<32x32xf32> to vector<32xf32>
    %250 = vector.shape_cast %249 : vector<32xf32> to vector<32x1xf32>
    %cst_85 = arith.constant 3.200000e+01 : f32
    %251 = vector.broadcast %cst_85 : f32 to vector<32x1xf32>
    %252 = arith.divf %250, %251 : vector<32x1xf32>
    %253 = vector.broadcast %245 : vector<32x1xf32> to vector<32x32xf32>
    %254 = arith.subf %237, %253 : vector<32x32xf32>
    %cst_86 = arith.constant 9.99999997E-7 : f32
    %255 = vector.broadcast %cst_86 : f32 to vector<32x1xf32>
    %256 = arith.addf %252, %255 : vector<32x1xf32>
    %257 = math.rsqrt %256 : vector<32x1xf32>
    %258 = vector.broadcast %257 : vector<32x1xf32> to vector<32x32xf32>
    %259 = arith.mulf %254, %258 : vector<32x32xf32>
    %260 = vector.broadcast %239 : vector<1x32xf32> to vector<32x32xf32>
    %261 = arith.mulf %259, %260 : vector<32x32xf32>
    %262 = vector.broadcast %241 : vector<1x32xf32> to vector<32x32xf32>
    %263 = arith.addf %261, %262 : vector<32x32xf32>
    %c0_87 = arith.constant 0 : index
    %c0_88 = arith.constant 0 : index
    %264 = vector.load %arg14[%c0_87, %c0_88] : memref<32x32xf32, #tpu.memory_space<vmem>>, vector<32x32xf32>
    tpu.vector_store %arg14[%c0_87, %c0_88], %263 {strides = array<i32>} : memref<32x32xf32, #tpu.memory_space<vmem>>, vector<32x32xf32>,
    return
  }
  func.func @transform_0(%arg0: i32) -> (i32, i32) {
    %c0_i32 = arith.constant 0 : i32
    %c0_i32_0 = arith.constant 0 : i32
    %c0_i32_1 = arith.constant 0 : i32
    return %c0_i32, %c0_i32_0 : i32, i32
  }
  func.func @transform_1(%arg0: i32) -> (i32, i32, i32) {
    %c0_i32 = arith.constant 0 : i32
    %c0_i32_0 = arith.constant 0 : i32
    %c0_i32_1 = arith.constant 0 : i32
    return %arg0, %c0_i32, %c0_i32_0 : i32, i32, i32
  }
  func.func @transform_2(%arg0: i32) -> (i32, i32, i32) {
    %c0_i32 = arith.constant 0 : i32
    %c0_i32_0 = arith.constant 0 : i32
    %c0_i32_1 = arith.constant 0 : i32
    return %arg0, %c0_i32, %c0_i32_0 : i32, i32, i32
  }
  func.func @transform_3(%arg0: i32) -> (i32, i32, i32) {
    %c0_i32 = arith.constant 0 : i32
    %c0_i32_0 = arith.constant 0 : i32
    %c0_i32_1 = arith.constant 0 : i32
    return %arg0, %c0_i32, %c0_i32_0 : i32, i32, i32
  }
  func.func @transform_4(%arg0: i32) -> (i32, i32, i32) {
    %c0_i32 = arith.constant 0 : i32
    %c0_i32_0 = arith.constant 0 : i32
    %c0_i32_1 = arith.constant 0 : i32
    return %arg0, %c0_i32, %c0_i32_0 : i32, i32, i32
  }
  func.func @transform_5(%arg0: i32) -> (i32, i32, i32) {
    %c0_i32 = arith.constant 0 : i32
    %c0_i32_0 = arith.constant 0 : i32
    %c0_i32_1 = arith.constant 0 : i32
    return %arg0, %c0_i32, %c0_i32_0 : i32, i32, i32
  }
  func.func @transform_6(%arg0: i32) -> (i32, i32, i32) {
    %c0_i32 = arith.constant 0 : i32
    %c0_i32_0 = arith.constant 0 : i32
    %c0_i32_1 = arith.constant 0 : i32
    return %arg0, %c0_i32, %c0_i32_0 : i32, i32, i32
  }
  func.func @transform_7(%arg0: i32) -> (i32, i32, i32) {
    %c0_i32 = arith.constant 0 : i32
    %c0_i32_0 = arith.constant 0 : i32
    %c0_i32_1 = arith.constant 0 : i32
    return %arg0, %c0_i32, %c0_i32_0 : i32, i32, i32
  }
  func.func @transform_8(%arg0: i32) -> (i32, i32, i32) {
    %c0_i32 = arith.constant 0 : i32
    %c0_i32_0 = arith.constant 0 : i32
    %c0_i32_1 = arith.constant 0 : i32
    return %arg0, %c0_i32, %c0_i32_0 : i32, i32, i32
  }
  func.func @transform_9(%arg0: i32) -> (i32, i32, i32) {
    %c0_i32 = arith.constant 0 : i32
    %c0_i32_0 = arith.constant 0 : i32
    %c0_i32_1 = arith.constant 0 : i32
    return %arg0, %c0_i32, %c0_i32_0 : i32, i32, i32
  }
  func.func @transform_10(%arg0: i32) -> (i32, i32, i32) {
    %c0_i32 = arith.constant 0 : i32
    %c0_i32_0 = arith.constant 0 : i32
    %c0_i32_1 = arith.constant 0 : i32
    return %arg0, %c0_i32, %c0_i32_0 : i32, i32, i32
  }
  func.func @transform_11(%arg0: i32) -> (i32, i32, i32) {
    %c0_i32 = arith.constant 0 : i32
    %c0_i32_0 = arith.constant 0 : i32
    %c0_i32_1 = arith.constant 0 : i32
    return %arg0, %c0_i32, %c0_i32_0 : i32, i32, i32
  }
  func.func @transform_12(%arg0: i32) -> (i32, i32, i32) {
    %c0_i32 = arith.constant 0 : i32
    %c0_i32_0 = arith.constant 0 : i32
    %c0_i32_1 = arith.constant 0 : i32
    return %arg0, %c0_i32, %c0_i32_0 : i32, i32, i32
  }
  func.func @transform_13(%arg0: i32) -> (i32, i32) {
    %c0_i32 = arith.constant 0 : i32
    %c0_i32_0 = arith.constant 0 : i32
    %c0_i32_1 = arith.constant 0 : i32
    return %c0_i32, %c0_i32_0 : i32, i32
  }
}

module attributes {stable_mosaic.version = 11 : i64} {
  func.func @_encoder_post_kernel(%arg0: i32, %arg1: memref<16x32xf32, #tpu.memory_space<vmem>>, %arg2: memref<16x32xf32, #tpu.memory_space<vmem>>, %arg3: memref<32x32xbf16, #tpu.memory_space<vmem>>, %arg4: memref<1x32xf32, #tpu.memory_space<vmem>>, %arg5: memref<1x32xf32, #tpu.memory_space<vmem>>, %arg6: memref<1x32xf32, #tpu.memory_space<vmem>>, %arg7: memref<1x32xf32, #tpu.memory_space<vmem>>, %arg8: memref<1x32xf32, #tpu.memory_space<vmem>>, %arg9: memref<32x64xbf16, #tpu.memory_space<vmem>>, %arg10: memref<1x64xf32, #tpu.memory_space<vmem>>, %arg11: memref<64x32xbf16, #tpu.memory_space<vmem>>, %arg12: memref<1x32xf32, #tpu.memory_space<vmem>>, %arg13: memref<16x32xf32, #tpu.memory_space<vmem>>) attributes {dimension_semantics = [#tpu.dimension_semantics<parallel>], iteration_bounds = array<i64: 2>, scalar_prefetch = 0 : i64, scratch_operands = 0 : i64, tpu.core_type = #tpu.core_type<tc>, window_params = [{transform_indices = @transform_0, window_bounds = array<i64: 16, 32>}, {transform_indices = @transform_1, window_bounds = array<i64: 16, 32>}, {pipeline_mode = #tpu.pipeline_mode<synchronous>, transform_indices = @transform_2, window_bounds = array<i64: 32, 32>}, {pipeline_mode = #tpu.pipeline_mode<synchronous>, transform_indices = @transform_3, window_bounds = array<i64: 1, 32>}, {pipeline_mode = #tpu.pipeline_mode<synchronous>, transform_indices = @transform_4, window_bounds = array<i64: 1, 32>}, {pipeline_mode = #tpu.pipeline_mode<synchronous>, transform_indices = @transform_5, window_bounds = array<i64: 1, 32>}, {pipeline_mode = #tpu.pipeline_mode<synchronous>, transform_indices = @transform_6, window_bounds = array<i64: 1, 32>}, {pipeline_mode = #tpu.pipeline_mode<synchronous>, transform_indices = @transform_7, window_bounds = array<i64: 1, 32>}, {pipeline_mode = #tpu.pipeline_mode<synchronous>, transform_indices = @transform_8, window_bounds = array<i64: 32, 64>}, {pipeline_mode = #tpu.pipeline_mode<synchronous>, transform_indices = @transform_9, window_bounds = array<i64: 1, 64>}, {pipeline_mode = #tpu.pipeline_mode<synchronous>, transform_indices = @transform_10, window_bounds = array<i64: 64, 32>}, {pipeline_mode = #tpu.pipeline_mode<synchronous>, transform_indices = @transform_11, window_bounds = array<i64: 1, 32>}, {transform_indices = @transform_12, window_bounds = array<i64: 16, 32>}]} {
    %c0 = arith.constant 0 : index
    %c0_0 = arith.constant 0 : index
    %0 = vector.load %arg1[%c0, %c0_0] : memref<16x32xf32, #tpu.memory_space<vmem>>, vector<16x32xf32>
    %1 = arith.truncf %0 : vector<16x32xf32> to vector<16x32xbf16>
    %c0_1 = arith.constant 0 : index
    %c0_2 = arith.constant 0 : index
    %2 = vector.load %arg3[%c0_1, %c0_2] : memref<32x32xbf16, #tpu.memory_space<vmem>>, vector<32x32xbf16>
    %cst = arith.constant dense<0.000000e+00> : vector<16x32xf32>
    %3 = tpu.matmul %1, %2, %cst {dimension_numbers = #tpu.dot_dimension_numbers<[1], [0], [0], [1], [0, 0, 1, 1], [], []>} : vector<16x32xbf16>, vector<32x32xbf16>, vector<16x32xf32> -> vector<16x32xf32>
    %c0_3 = arith.constant 0 : index
    %c0_4 = arith.constant 0 : index
    %4 = vector.load %arg4[%c0_3, %c0_4] : memref<1x32xf32, #tpu.memory_space<vmem>>, vector<1x32xf32>
    %5 = vector.broadcast %4 : vector<1x32xf32> to vector<16x32xf32>
    %6 = arith.addf %3, %5 : vector<16x32xf32>
    %c0_5 = arith.constant 0 : index
    %c0_6 = arith.constant 0 : index
    %7 = vector.load %arg5[%c0_5, %c0_6] : memref<1x32xf32, #tpu.memory_space<vmem>>, vector<1x32xf32>
    %c0_7 = arith.constant 0 : index
    %c0_8 = arith.constant 0 : index
    %8 = vector.load %arg6[%c0_7, %c0_8] : memref<1x32xf32, #tpu.memory_space<vmem>>, vector<1x32xf32>
    %cst_9 = arith.constant dense<0.000000e+00> : vector<16xf32>
    %9 = vector.multi_reduction <add>, %6, %cst_9 [1] : vector<16x32xf32> to vector<16xf32>
    %10 = vector.shape_cast %9 : vector<16xf32> to vector<16x1xf32>
    %cst_10 = arith.constant 3.200000e+01 : f32
    %11 = vector.broadcast %cst_10 : f32 to vector<16x1xf32>
    %12 = arith.divf %10, %11 : vector<16x1xf32>
    %13 = vector.broadcast %12 : vector<16x1xf32> to vector<16x32xf32>
    %14 = arith.subf %6, %13 : vector<16x32xf32>
    %15 = arith.mulf %14, %14 : vector<16x32xf32>
    %cst_11 = arith.constant dense<0.000000e+00> : vector<16xf32>
    %16 = vector.multi_reduction <add>, %15, %cst_11 [1] : vector<16x32xf32> to vector<16xf32>
    %17 = vector.shape_cast %16 : vector<16xf32> to vector<16x1xf32>
    %cst_12 = arith.constant 3.200000e+01 : f32
    %18 = vector.broadcast %cst_12 : f32 to vector<16x1xf32>
    %19 = arith.divf %17, %18 : vector<16x1xf32>
    %20 = vector.broadcast %12 : vector<16x1xf32> to vector<16x32xf32>
    %21 = arith.subf %6, %20 : vector<16x32xf32>
    %cst_13 = arith.constant 9.99999997E-7 : f32
    %22 = vector.broadcast %cst_13 : f32 to vector<16x1xf32>
    %23 = arith.addf %19, %22 : vector<16x1xf32>
    %24 = math.rsqrt %23 : vector<16x1xf32>
    %25 = vector.broadcast %24 : vector<16x1xf32> to vector<16x32xf32>
    %26 = arith.mulf %21, %25 : vector<16x32xf32>
    %27 = vector.broadcast %7 : vector<1x32xf32> to vector<16x32xf32>
    %28 = arith.mulf %26, %27 : vector<16x32xf32>
    %29 = vector.broadcast %8 : vector<1x32xf32> to vector<16x32xf32>
    %30 = arith.addf %28, %29 : vector<16x32xf32>
    %c0_14 = arith.constant 0 : index
    %c0_15 = arith.constant 0 : index
    %31 = vector.load %arg2[%c0_14, %c0_15] : memref<16x32xf32, #tpu.memory_space<vmem>>, vector<16x32xf32>
    %32 = arith.addf %30, %31 : vector<16x32xf32>
    %c0_16 = arith.constant 0 : index
    %c0_17 = arith.constant 0 : index
    %33 = vector.load %arg7[%c0_16, %c0_17] : memref<1x32xf32, #tpu.memory_space<vmem>>, vector<1x32xf32>
    %c0_18 = arith.constant 0 : index
    %c0_19 = arith.constant 0 : index
    %34 = vector.load %arg8[%c0_18, %c0_19] : memref<1x32xf32, #tpu.memory_space<vmem>>, vector<1x32xf32>
    %cst_20 = arith.constant dense<0.000000e+00> : vector<16xf32>
    %35 = vector.multi_reduction <add>, %32, %cst_20 [1] : vector<16x32xf32> to vector<16xf32>
    %36 = vector.shape_cast %35 : vector<16xf32> to vector<16x1xf32>
    %cst_21 = arith.constant 3.200000e+01 : f32
    %37 = vector.broadcast %cst_21 : f32 to vector<16x1xf32>
    %38 = arith.divf %36, %37 : vector<16x1xf32>
    %39 = vector.broadcast %38 : vector<16x1xf32> to vector<16x32xf32>
    %40 = arith.subf %32, %39 : vector<16x32xf32>
    %41 = arith.mulf %40, %40 : vector<16x32xf32>
    %cst_22 = arith.constant dense<0.000000e+00> : vector<16xf32>
    %42 = vector.multi_reduction <add>, %41, %cst_22 [1] : vector<16x32xf32> to vector<16xf32>
    %43 = vector.shape_cast %42 : vector<16xf32> to vector<16x1xf32>
    %cst_23 = arith.constant 3.200000e+01 : f32
    %44 = vector.broadcast %cst_23 : f32 to vector<16x1xf32>
    %45 = arith.divf %43, %44 : vector<16x1xf32>
    %46 = vector.broadcast %38 : vector<16x1xf32> to vector<16x32xf32>
    %47 = arith.subf %32, %46 : vector<16x32xf32>
    %cst_24 = arith.constant 9.99999997E-7 : f32
    %48 = vector.broadcast %cst_24 : f32 to vector<16x1xf32>
    %49 = arith.addf %45, %48 : vector<16x1xf32>
    %50 = math.rsqrt %49 : vector<16x1xf32>
    %51 = vector.broadcast %50 : vector<16x1xf32> to vector<16x32xf32>
    %52 = arith.mulf %47, %51 : vector<16x32xf32>
    %53 = vector.broadcast %33 : vector<1x32xf32> to vector<16x32xf32>
    %54 = arith.mulf %52, %53 : vector<16x32xf32>
    %55 = vector.broadcast %34 : vector<1x32xf32> to vector<16x32xf32>
    %56 = arith.addf %54, %55 : vector<16x32xf32>
    %57 = arith.truncf %56 : vector<16x32xf32> to vector<16x32xbf16>
    %c0_25 = arith.constant 0 : index
    %c0_26 = arith.constant 0 : index
    %58 = vector.load %arg9[%c0_25, %c0_26] : memref<32x64xbf16, #tpu.memory_space<vmem>>, vector<32x64xbf16>
    %cst_27 = arith.constant dense<0.000000e+00> : vector<16x64xf32>
    %59 = tpu.matmul %57, %58, %cst_27 {dimension_numbers = #tpu.dot_dimension_numbers<[1], [0], [0], [1], [0, 0, 1, 1], [], []>} : vector<16x32xbf16>, vector<32x64xbf16>, vector<16x64xf32> -> vector<16x64xf32>
    %c0_28 = arith.constant 0 : index
    %c0_29 = arith.constant 0 : index
    %60 = vector.load %arg10[%c0_28, %c0_29] : memref<1x64xf32, #tpu.memory_space<vmem>>, vector<1x64xf32>
    %61 = vector.broadcast %60 : vector<1x64xf32> to vector<16x64xf32>
    %62 = arith.addf %59, %61 : vector<16x64xf32>
    %cst_30 = arith.constant 5.000000e-01 : f32
    %63 = vector.broadcast %cst_30 : f32 to vector<16x64xf32>
    %64 = arith.mulf %63, %62 : vector<16x64xf32>
    %cst_31 = arith.constant 0.707106769 : f32
    %65 = vector.broadcast %cst_31 : f32 to vector<16x64xf32>
    %66 = arith.mulf %62, %65 : vector<16x64xf32>
    %67 = math.erf %66 : vector<16x64xf32>
    %cst_32 = arith.constant 1.000000e+00 : f32
    %68 = vector.broadcast %cst_32 : f32 to vector<16x64xf32>
    %69 = arith.addf %68, %67 : vector<16x64xf32>
    %70 = arith.mulf %64, %69 : vector<16x64xf32>
    %71 = arith.truncf %70 : vector<16x64xf32> to vector<16x64xbf16>
    %c0_33 = arith.constant 0 : index
    %c0_34 = arith.constant 0 : index
    %72 = vector.load %arg11[%c0_33, %c0_34] : memref<64x32xbf16, #tpu.memory_space<vmem>>, vector<64x32xbf16>
    %cst_35 = arith.constant dense<0.000000e+00> : vector<16x32xf32>
    %73 = tpu.matmul %71, %72, %cst_35 {dimension_numbers = #tpu.dot_dimension_numbers<[1], [0], [0], [1], [0, 0, 1, 1], [], []>} : vector<16x64xbf16>, vector<64x32xbf16>, vector<16x32xf32> -> vector<16x32xf32>
    %c0_36 = arith.constant 0 : index
    %c0_37 = arith.constant 0 : index
    %74 = vector.load %arg12[%c0_36, %c0_37] : memref<1x32xf32, #tpu.memory_space<vmem>>, vector<1x32xf32>
    %75 = vector.broadcast %74 : vector<1x32xf32> to vector<16x32xf32>
    %76 = arith.addf %73, %75 : vector<16x32xf32>
    %77 = arith.addf %32, %76 : vector<16x32xf32>
    %c0_38 = arith.constant 0 : index
    %c0_39 = arith.constant 0 : index
    %78 = vector.load %arg13[%c0_38, %c0_39] : memref<16x32xf32, #tpu.memory_space<vmem>>, vector<16x32xf32>
    tpu.vector_store %arg13[%c0_38, %c0_39], %77 {strides = array<i32>} : memref<16x32xf32, #tpu.memory_space<vmem>>, vector<16x32xf32>,
    return
  }
  func.func @transform_0(%arg0: i32) -> (i32, i32) {
    %c0_i32 = arith.constant 0 : i32
    %c0_i32_0 = arith.constant 0 : i32
    return %arg0, %c0_i32 : i32, i32
  }
  func.func @transform_1(%arg0: i32) -> (i32, i32) {
    %c0_i32 = arith.constant 0 : i32
    %c0_i32_0 = arith.constant 0 : i32
    return %arg0, %c0_i32 : i32, i32
  }
  func.func @transform_2(%arg0: i32) -> (i32, i32) {
    %c0_i32 = arith.constant 0 : i32
    %c0_i32_0 = arith.constant 0 : i32
    %c0_i32_1 = arith.constant 0 : i32
    return %c0_i32, %c0_i32_0 : i32, i32
  }
  func.func @transform_3(%arg0: i32) -> (i32, i32) {
    %c0_i32 = arith.constant 0 : i32
    %c0_i32_0 = arith.constant 0 : i32
    %c0_i32_1 = arith.constant 0 : i32
    return %c0_i32, %c0_i32_0 : i32, i32
  }
  func.func @transform_4(%arg0: i32) -> (i32, i32) {
    %c0_i32 = arith.constant 0 : i32
    %c0_i32_0 = arith.constant 0 : i32
    %c0_i32_1 = arith.constant 0 : i32
    return %c0_i32, %c0_i32_0 : i32, i32
  }
  func.func @transform_5(%arg0: i32) -> (i32, i32) {
    %c0_i32 = arith.constant 0 : i32
    %c0_i32_0 = arith.constant 0 : i32
    %c0_i32_1 = arith.constant 0 : i32
    return %c0_i32, %c0_i32_0 : i32, i32
  }
  func.func @transform_6(%arg0: i32) -> (i32, i32) {
    %c0_i32 = arith.constant 0 : i32
    %c0_i32_0 = arith.constant 0 : i32
    %c0_i32_1 = arith.constant 0 : i32
    return %c0_i32, %c0_i32_0 : i32, i32
  }
  func.func @transform_7(%arg0: i32) -> (i32, i32) {
    %c0_i32 = arith.constant 0 : i32
    %c0_i32_0 = arith.constant 0 : i32
    %c0_i32_1 = arith.constant 0 : i32
    return %c0_i32, %c0_i32_0 : i32, i32
  }
  func.func @transform_8(%arg0: i32) -> (i32, i32) {
    %c0_i32 = arith.constant 0 : i32
    %c0_i32_0 = arith.constant 0 : i32
    %c0_i32_1 = arith.constant 0 : i32
    return %c0_i32, %c0_i32_0 : i32, i32
  }
  func.func @transform_9(%arg0: i32) -> (i32, i32) {
    %c0_i32 = arith.constant 0 : i32
    %c0_i32_0 = arith.constant 0 : i32
    %c0_i32_1 = arith.constant 0 : i32
    return %c0_i32, %c0_i32_0 : i32, i32
  }
  func.func @transform_10(%arg0: i32) -> (i32, i32) {
    %c0_i32 = arith.constant 0 : i32
    %c0_i32_0 = arith.constant 0 : i32
    %c0_i32_1 = arith.constant 0 : i32
    return %c0_i32, %c0_i32_0 : i32, i32
  }
  func.func @transform_11(%arg0: i32) -> (i32, i32) {
    %c0_i32 = arith.constant 0 : i32
    %c0_i32_0 = arith.constant 0 : i32
    %c0_i32_1 = arith.constant 0 : i32
    return %c0_i32, %c0_i32_0 : i32, i32
  }
  func.func @transform_12(%arg0: i32) -> (i32, i32) {
    %c0_i32 = arith.constant 0 : i32
    %c0_i32_0 = arith.constant 0 : i32
    return %arg0, %c0_i32 : i32, i32
  }
}

module attributes {stable_mosaic.version = 11 : i64} {
  func.func @_decoder_stack_kernel(%arg0: i32, %arg1: memref<2x32xf32, #tpu.memory_space<vmem>>, %arg2: memref<32x32xf32, #tpu.memory_space<vmem>>, %arg3: memref<1x32x32xbf16, #tpu.memory_space<vmem>>, %arg4: memref<1x1x32xf32, #tpu.memory_space<vmem>>, %arg5: memref<1x32x32xbf16, #tpu.memory_space<vmem>>, %arg6: memref<1x1x32xf32, #tpu.memory_space<vmem>>, %arg7: memref<1x1x32xf32, #tpu.memory_space<vmem>>, %arg8: memref<1x1x32xf32, #tpu.memory_space<vmem>>, %arg9: memref<1x32x32xbf16, #tpu.memory_space<vmem>>, %arg10: memref<1x1x32xf32, #tpu.memory_space<vmem>>, %arg11: memref<1x32x64xbf16, #tpu.memory_space<vmem>>, %arg12: memref<1x1x64xf32, #tpu.memory_space<vmem>>, %arg13: memref<1x32x32xbf16, #tpu.memory_space<vmem>>, %arg14: memref<1x1x32xf32, #tpu.memory_space<vmem>>, %arg15: memref<1x1x32xf32, #tpu.memory_space<vmem>>, %arg16: memref<1x1x32xf32, #tpu.memory_space<vmem>>, %arg17: memref<1x32x64xbf16, #tpu.memory_space<vmem>>, %arg18: memref<1x1x64xf32, #tpu.memory_space<vmem>>, %arg19: memref<1x64x32xbf16, #tpu.memory_space<vmem>>, %arg20: memref<1x1x32xf32, #tpu.memory_space<vmem>>, %arg21: memref<1x1x32xf32, #tpu.memory_space<vmem>>, %arg22: memref<1x1x32xf32, #tpu.memory_space<vmem>>, %arg23: memref<1x32xf32, #tpu.memory_space<vmem>>, %arg24: memref<1x32xf32, #tpu.memory_space<vmem>>, %arg25: memref<32x128xbf16, #tpu.memory_space<vmem>>, %arg26: memref<1x128xf32, #tpu.memory_space<vmem>>, %arg27: memref<2x128xf32, #tpu.memory_space<vmem>>, %arg28: memref<2x32xf32, #tpu.memory_space<vmem>>) attributes {dimension_semantics = [#tpu.dimension_semantics<arbitrary>], iteration_bounds = array<i64: 2>, scalar_prefetch = 0 : i64, scratch_operands = 1 : i64, tpu.core_type = #tpu.core_type<tc>, window_params = [{pipeline_mode = #tpu.pipeline_mode<synchronous>, transform_indices = @transform_0, window_bounds = array<i64: 2, 32>}, {pipeline_mode = #tpu.pipeline_mode<synchronous>, transform_indices = @transform_1, window_bounds = array<i64: 32, 32>}, {transform_indices = @transform_2, window_bounds = array<i64: 1, 32, 32>}, {transform_indices = @transform_3, window_bounds = array<i64: 1, 1, 32>}, {transform_indices = @transform_4, window_bounds = array<i64: 1, 32, 32>}, {transform_indices = @transform_5, window_bounds = array<i64: 1, 1, 32>}, {transform_indices = @transform_6, window_bounds = array<i64: 1, 1, 32>}, {transform_indices = @transform_7, window_bounds = array<i64: 1, 1, 32>}, {transform_indices = @transform_8, window_bounds = array<i64: 1, 32, 32>}, {transform_indices = @transform_9, window_bounds = array<i64: 1, 1, 32>}, {transform_indices = @transform_10, window_bounds = array<i64: 1, 32, 64>}, {transform_indices = @transform_11, window_bounds = array<i64: 1, 1, 64>}, {transform_indices = @transform_12, window_bounds = array<i64: 1, 32, 32>}, {transform_indices = @transform_13, window_bounds = array<i64: 1, 1, 32>}, {transform_indices = @transform_14, window_bounds = array<i64: 1, 1, 32>}, {transform_indices = @transform_15, window_bounds = array<i64: 1, 1, 32>}, {transform_indices = @transform_16, window_bounds = array<i64: 1, 32, 64>}, {transform_indices = @transform_17, window_bounds = array<i64: 1, 1, 64>}, {transform_indices = @transform_18, window_bounds = array<i64: 1, 64, 32>}, {transform_indices = @transform_19, window_bounds = array<i64: 1, 1, 32>}, {transform_indices = @transform_20, window_bounds = array<i64: 1, 1, 32>}, {transform_indices = @transform_21, window_bounds = array<i64: 1, 1, 32>}, {pipeline_mode = #tpu.pipeline_mode<synchronous>, transform_indices = @transform_22, window_bounds = array<i64: 1, 32>}, {pipeline_mode = #tpu.pipeline_mode<synchronous>, transform_indices = @transform_23, window_bounds = array<i64: 1, 32>}, {pipeline_mode = #tpu.pipeline_mode<synchronous>, transform_indices = @transform_24, window_bounds = array<i64: 32, 128>}, {pipeline_mode = #tpu.pipeline_mode<synchronous>, transform_indices = @transform_25, window_bounds = array<i64: 1, 128>}, {pipeline_mode = #tpu.pipeline_mode<synchronous>, transform_indices = @transform_26, window_bounds = array<i64: 2, 128>}]} {
    %c0_i32 = arith.constant 0 : i32
    %0 = arith.cmpi eq, %arg0, %c0_i32 : i32
    %1 = arith.extui %0 : i1 to i32
    %c0_i32_0 = arith.constant 0 : i32
    %2 = arith.cmpi ne, %1, %c0_i32_0 : i32
    scf.if %2 {
      %c0_124 = arith.constant 0 : index
      %c0_125 = arith.constant 0 : index
      %319 = vector.load %arg1[%c0_124, %c0_125] : memref<2x32xf32, #tpu.memory_space<vmem>>, vector<2x32xf32>
      %c0_126 = arith.constant 0 : index
      %c0_127 = arith.constant 0 : index
      %320 = vector.load %arg28[%c0_126, %c0_127] : memref<2x32xf32, #tpu.memory_space<vmem>>, vector<2x32xf32>
      tpu.vector_store %arg28[%c0_126, %c0_127], %319 {strides = array<i32>} : memref<2x32xf32, #tpu.memory_space<vmem>>, vector<2x32xf32>,
    } else {
    }
    %c0 = arith.constant 0 : index
    %c0_1 = arith.constant 0 : index
    %3 = vector.load %arg28[%c0, %c0_1] : memref<2x32xf32, #tpu.memory_space<vmem>>, vector<2x32xf32>
    %4 = arith.truncf %3 : vector<2x32xf32> to vector<2x32xbf16>
    %c0_2 = arith.constant 0 : index
    %c0_3 = arith.constant 0 : index
    %c0_4 = arith.constant 0 : index
    %5 = vector.load %arg3[%c0_2, %c0_3, %c0_4] : memref<1x32x32xbf16, #tpu.memory_space<vmem>>, vector<1x32x32xbf16>
    %6 = vector.shape_cast %5 : vector<1x32x32xbf16> to vector<32x32xbf16>
    %cst = arith.constant dense<0.000000e+00> : vector<2x32xf32>
    %7 = tpu.matmul %4, %6, %cst {dimension_numbers = #tpu.dot_dimension_numbers<[1], [0], [0], [1], [0, 0, 1, 1], [], []>} : vector<2x32xbf16>, vector<32x32xbf16>, vector<2x32xf32> -> vector<2x32xf32>
    %c0_5 = arith.constant 0 : index
    %c0_6 = arith.constant 0 : index
    %c0_7 = arith.constant 0 : index
    %8 = vector.load %arg4[%c0_5, %c0_6, %c0_7] : memref<1x1x32xf32, #tpu.memory_space<vmem>>, vector<1x1x32xf32>
    %9 = vector.shape_cast %8 : vector<1x1x32xf32> to vector<1x32xf32>
    %10 = vector.broadcast %9 : vector<1x32xf32> to vector<2x32xf32>
    %11 = arith.addf %7, %10 : vector<2x32xf32>
    %12 = arith.truncf %11 : vector<2x32xf32> to vector<2x32xbf16>
    %c0_8 = arith.constant 0 : index
    %c0_9 = arith.constant 0 : index
    %c0_10 = arith.constant 0 : index
    %13 = vector.load %arg5[%c0_8, %c0_9, %c0_10] : memref<1x32x32xbf16, #tpu.memory_space<vmem>>, vector<1x32x32xbf16>
    %14 = vector.shape_cast %13 : vector<1x32x32xbf16> to vector<32x32xbf16>
    %cst_11 = arith.constant dense<0.000000e+00> : vector<2x32xf32>
    %15 = tpu.matmul %12, %14, %cst_11 {dimension_numbers = #tpu.dot_dimension_numbers<[1], [0], [0], [1], [0, 0, 1, 1], [], []>} : vector<2x32xbf16>, vector<32x32xbf16>, vector<2x32xf32> -> vector<2x32xf32>
    %c0_12 = arith.constant 0 : index
    %c0_13 = arith.constant 0 : index
    %c0_14 = arith.constant 0 : index
    %16 = vector.load %arg6[%c0_12, %c0_13, %c0_14] : memref<1x1x32xf32, #tpu.memory_space<vmem>>, vector<1x1x32xf32>
    %17 = vector.shape_cast %16 : vector<1x1x32xf32> to vector<1x32xf32>
    %18 = vector.broadcast %17 : vector<1x32xf32> to vector<2x32xf32>
    %19 = arith.addf %15, %18 : vector<2x32xf32>
    %20 = arith.addf %3, %19 : vector<2x32xf32>
    %c0_15 = arith.constant 0 : index
    %c0_16 = arith.constant 0 : index
    %c0_17 = arith.constant 0 : index
    %21 = vector.load %arg7[%c0_15, %c0_16, %c0_17] : memref<1x1x32xf32, #tpu.memory_space<vmem>>, vector<1x1x32xf32>
    %22 = vector.shape_cast %21 : vector<1x1x32xf32> to vector<1x32xf32>
    %c0_18 = arith.constant 0 : index
    %c0_19 = arith.constant 0 : index
    %c0_20 = arith.constant 0 : index
    %23 = vector.load %arg8[%c0_18, %c0_19, %c0_20] : memref<1x1x32xf32, #tpu.memory_space<vmem>>, vector<1x1x32xf32>
    %24 = vector.shape_cast %23 : vector<1x1x32xf32> to vector<1x32xf32>
    %cst_21 = arith.constant dense<0.000000e+00> : vector<2xf32>
    %25 = vector.multi_reduction <add>, %20, %cst_21 [1] : vector<2x32xf32> to vector<2xf32>
    %26 = vector.shape_cast %25 : vector<2xf32> to vector<2x1xf32>
    %cst_22 = arith.constant 3.200000e+01 : f32
    %27 = vector.broadcast %cst_22 : f32 to vector<2x1xf32>
    %28 = arith.divf %26, %27 : vector<2x1xf32>
    %29 = vector.broadcast %28 : vector<2x1xf32> to vector<2x32xf32>
    %30 = arith.subf %20, %29 : vector<2x32xf32>
    %31 = arith.mulf %30, %30 : vector<2x32xf32>
    %cst_23 = arith.constant dense<0.000000e+00> : vector<2xf32>
    %32 = vector.multi_reduction <add>, %31, %cst_23 [1] : vector<2x32xf32> to vector<2xf32>
    %33 = vector.shape_cast %32 : vector<2xf32> to vector<2x1xf32>
    %cst_24 = arith.constant 3.200000e+01 : f32
    %34 = vector.broadcast %cst_24 : f32 to vector<2x1xf32>
    %35 = arith.divf %33, %34 : vector<2x1xf32>
    %36 = vector.broadcast %28 : vector<2x1xf32> to vector<2x32xf32>
    %37 = arith.subf %20, %36 : vector<2x32xf32>
    %cst_25 = arith.constant 9.99999997E-7 : f32
    %38 = vector.broadcast %cst_25 : f32 to vector<2x1xf32>
    %39 = arith.addf %35, %38 : vector<2x1xf32>
    %40 = math.rsqrt %39 : vector<2x1xf32>
    %41 = vector.broadcast %40 : vector<2x1xf32> to vector<2x32xf32>
    %42 = arith.mulf %37, %41 : vector<2x32xf32>
    %43 = vector.broadcast %22 : vector<1x32xf32> to vector<2x32xf32>
    %44 = arith.mulf %42, %43 : vector<2x32xf32>
    %45 = vector.broadcast %24 : vector<1x32xf32> to vector<2x32xf32>
    %46 = arith.addf %44, %45 : vector<2x32xf32>
    %c0_26 = arith.constant 0 : index
    %c0_27 = arith.constant 0 : index
    %47 = vector.load %arg2[%c0_26, %c0_27] : memref<32x32xf32, #tpu.memory_space<vmem>>, vector<32x32xf32>
    %48 = arith.truncf %46 : vector<2x32xf32> to vector<2x32xbf16>
    %c0_28 = arith.constant 0 : index
    %c0_29 = arith.constant 0 : index
    %c0_30 = arith.constant 0 : index
    %49 = vector.load %arg9[%c0_28, %c0_29, %c0_30] : memref<1x32x32xbf16, #tpu.memory_space<vmem>>, vector<1x32x32xbf16>
    %50 = vector.shape_cast %49 : vector<1x32x32xbf16> to vector<32x32xbf16>
    %cst_31 = arith.constant dense<0.000000e+00> : vector<2x32xf32>
    %51 = tpu.matmul %48, %50, %cst_31 {dimension_numbers = #tpu.dot_dimension_numbers<[1], [0], [0], [1], [0, 0, 1, 1], [], []>} : vector<2x32xbf16>, vector<32x32xbf16>, vector<2x32xf32> -> vector<2x32xf32>
    %c0_32 = arith.constant 0 : index
    %c0_33 = arith.constant 0 : index
    %c0_34 = arith.constant 0 : index
    %52 = vector.load %arg10[%c0_32, %c0_33, %c0_34] : memref<1x1x32xf32, #tpu.memory_space<vmem>>, vector<1x1x32xf32>
    %53 = vector.shape_cast %52 : vector<1x1x32xf32> to vector<1x32xf32>
    %54 = vector.broadcast %53 : vector<1x32xf32> to vector<2x32xf32>
    %55 = arith.addf %51, %54 : vector<2x32xf32>
    %cst_35 = arith.constant 0.353553385 : f32
    %56 = vector.broadcast %cst_35 : f32 to vector<2x32xf32>
    %57 = arith.mulf %55, %56 : vector<2x32xf32>
    %58 = arith.truncf %47 : vector<32x32xf32> to vector<32x32xbf16>
    %c0_36 = arith.constant 0 : index
    %c0_37 = arith.constant 0 : index
    %c0_38 = arith.constant 0 : index
    %59 = vector.load %arg11[%c0_36, %c0_37, %c0_38] : memref<1x32x64xbf16, #tpu.memory_space<vmem>>, vector<1x32x64xbf16>
    %60 = vector.shape_cast %59 : vector<1x32x64xbf16> to vector<32x64xbf16>
    %cst_39 = arith.constant dense<0.000000e+00> : vector<32x64xf32>
    %61 = tpu.matmul %58, %60, %cst_39 {dimension_numbers = #tpu.dot_dimension_numbers<[1], [0], [0], [1], [0, 0, 1, 1], [], []>} : vector<32x32xbf16>, vector<32x64xbf16>, vector<32x64xf32> -> vector<32x64xf32>
    %c0_40 = arith.constant 0 : index
    %c0_41 = arith.constant 0 : index
    %c0_42 = arith.constant 0 : index
    %62 = vector.load %arg12[%c0_40, %c0_41, %c0_42] : memref<1x1x64xf32, #tpu.memory_space<vmem>>, vector<1x1x64xf32>
    %63 = vector.shape_cast %62 : vector<1x1x64xf32> to vector<1x64xf32>
    %64 = vector.broadcast %63 : vector<1x64xf32> to vector<32x64xf32>
    %65 = arith.addf %61, %64 : vector<32x64xf32>
    %66 = vector.extract_strided_slice %65 {offsets = [0, 0], sizes = [32, 32], strides = [1, 1]} : vector<32x64xf32> to vector<32x32xf32>
    %67 = vector.extract_strided_slice %65 {offsets = [0, 32], sizes = [32, 32], strides = [1, 1]} : vector<32x64xf32> to vector<32x32xf32>
    %68 = vector.extract_strided_slice %57 {offsets = [0, 0], sizes = [1, 32], strides = [1, 1]} : vector<2x32xf32> to vector<1x32xf32>
    %69 = vector.extract_strided_slice %66 {offsets = [0, 0], sizes = [16, 32], strides = [1, 1]} : vector<32x32xf32> to vector<16x32xf32>
    %70 = vector.extract_strided_slice %67 {offsets = [0, 0], sizes = [16, 32], strides = [1, 1]} : vector<32x32xf32> to vector<16x32xf32>
    %71 = vector.extract_strided_slice %68 {offsets = [0, 0], sizes = [1, 8], strides = [1, 1]} : vector<1x32xf32> to vector<1x8xf32>
    %72 = arith.truncf %71 : vector<1x8xf32> to vector<1x8xbf16>
    %73 = vector.extract_strided_slice %69 {offsets = [0, 0], sizes = [16, 8], strides = [1, 1]} : vector<16x32xf32> to vector<16x8xf32>
    %74 = arith.truncf %73 : vector<16x8xf32> to vector<16x8xbf16>
    %cst_43 = arith.constant dense<0.000000e+00> : vector<1x16xf32>
    %75 = tpu.matmul %72, %74, %cst_43 {dimension_numbers = #tpu.dot_dimension_numbers<[1], [1], [0], [0], [0, 0, 1, 0], [], []>} : vector<1x8xbf16>, vector<16x8xbf16>, vector<1x16xf32> -> vector<1x16xf32>
    %cst_44 = arith.constant dense<0xFF800000> : vector<1xf32>
    %76 = vector.multi_reduction <maximumf>, %75, %cst_44 [1] : vector<1x16xf32> to vector<1xf32>
    %77 = vector.shape_cast %76 : vector<1xf32> to vector<1x1xf32>
    %78 = vector.broadcast %77 : vector<1x1xf32> to vector<1x16xf32>
    %79 = arith.subf %75, %78 : vector<1x16xf32>
    %80 = math.exp %79 : vector<1x16xf32>
    %cst_45 = arith.constant dense<0.000000e+00> : vector<1xf32>
    %81 = vector.multi_reduction <add>, %80, %cst_45 [1] : vector<1x16xf32> to vector<1xf32>
    %82 = vector.shape_cast %81 : vector<1xf32> to vector<1x1xf32>
    %83 = tpu.reciprocal %82 {approx = true} : vector<1x1xf32> -> vector<1x1xf32>
    %84 = vector.broadcast %83 : vector<1x1xf32> to vector<1x16xf32>
    %85 = arith.mulf %80, %84 : vector<1x16xf32>
    %86 = arith.truncf %85 : vector<1x16xf32> to vector<1x16xbf16>
    %87 = vector.extract_strided_slice %70 {offsets = [0, 0], sizes = [16, 8], strides = [1, 1]} : vector<16x32xf32> to vector<16x8xf32>
    %88 = arith.truncf %87 : vector<16x8xf32> to vector<16x8xbf16>
    %cst_46 = arith.constant dense<0.000000e+00> : vector<1x8xf32>
    %89 = tpu.matmul %86, %88, %cst_46 {dimension_numbers = #tpu.dot_dimension_numbers<[1], [0], [0], [1], [0, 0, 1, 1], [], []>} : vector<1x16xbf16>, vector<16x8xbf16>, vector<1x8xf32> -> vector<1x8xf32>
    %90 = vector.extract_strided_slice %68 {offsets = [0, 8], sizes = [1, 8], strides = [1, 1]} : vector<1x32xf32> to vector<1x8xf32>
    %91 = arith.truncf %90 : vector<1x8xf32> to vector<1x8xbf16>
    %92 = vector.extract_strided_slice %69 {offsets = [0, 8], sizes = [16, 8], strides = [1, 1]} : vector<16x32xf32> to vector<16x8xf32>
    %93 = arith.truncf %92 : vector<16x8xf32> to vector<16x8xbf16>
    %cst_47 = arith.constant dense<0.000000e+00> : vector<1x16xf32>
    %94 = tpu.matmul %91, %93, %cst_47 {dimension_numbers = #tpu.dot_dimension_numbers<[1], [1], [0], [0], [0, 0, 1, 0], [], []>} : vector<1x8xbf16>, vector<16x8xbf16>, vector<1x16xf32> -> vector<1x16xf32>
    %cst_48 = arith.constant dense<0xFF800000> : vector<1xf32>
    %95 = vector.multi_reduction <maximumf>, %94, %cst_48 [1] : vector<1x16xf32> to vector<1xf32>
    %96 = vector.shape_cast %95 : vector<1xf32> to vector<1x1xf32>
    %97 = vector.broadcast %96 : vector<1x1xf32> to vector<1x16xf32>
    %98 = arith.subf %94, %97 : vector<1x16xf32>
    %99 = math.exp %98 : vector<1x16xf32>
    %cst_49 = arith.constant dense<0.000000e+00> : vector<1xf32>
    %100 = vector.multi_reduction <add>, %99, %cst_49 [1] : vector<1x16xf32> to vector<1xf32>
    %101 = vector.shape_cast %100 : vector<1xf32> to vector<1x1xf32>
    %102 = tpu.reciprocal %101 {approx = true} : vector<1x1xf32> -> vector<1x1xf32>
    %103 = vector.broadcast %102 : vector<1x1xf32> to vector<1x16xf32>
    %104 = arith.mulf %99, %103 : vector<1x16xf32>
    %105 = arith.truncf %104 : vector<1x16xf32> to vector<1x16xbf16>
    %106 = vector.extract_strided_slice %70 {offsets = [0, 8], sizes = [16, 8], strides = [1, 1]} : vector<16x32xf32> to vector<16x8xf32>
    %107 = arith.truncf %106 : vector<16x8xf32> to vector<16x8xbf16>
    %cst_50 = arith.constant dense<0.000000e+00> : vector<1x8xf32>
    %108 = tpu.matmul %105, %107, %cst_50 {dimension_numbers = #tpu.dot_dimension_numbers<[1], [0], [0], [1], [0, 0, 1, 1], [], []>} : vector<1x16xbf16>, vector<16x8xbf16>, vector<1x8xf32> -> vector<1x8xf32>
    %109 = vector.extract_strided_slice %68 {offsets = [0, 16], sizes = [1, 8], strides = [1, 1]} : vector<1x32xf32> to vector<1x8xf32>
    %110 = arith.truncf %109 : vector<1x8xf32> to vector<1x8xbf16>
    %111 = vector.extract_strided_slice %69 {offsets = [0, 16], sizes = [16, 8], strides = [1, 1]} : vector<16x32xf32> to vector<16x8xf32>
    %112 = arith.truncf %111 : vector<16x8xf32> to vector<16x8xbf16>
    %cst_51 = arith.constant dense<0.000000e+00> : vector<1x16xf32>
    %113 = tpu.matmul %110, %112, %cst_51 {dimension_numbers = #tpu.dot_dimension_numbers<[1], [1], [0], [0], [0, 0, 1, 0], [], []>} : vector<1x8xbf16>, vector<16x8xbf16>, vector<1x16xf32> -> vector<1x16xf32>
    %cst_52 = arith.constant dense<0xFF800000> : vector<1xf32>
    %114 = vector.multi_reduction <maximumf>, %113, %cst_52 [1] : vector<1x16xf32> to vector<1xf32>
    %115 = vector.shape_cast %114 : vector<1xf32> to vector<1x1xf32>
    %116 = vector.broadcast %115 : vector<1x1xf32> to vector<1x16xf32>
    %117 = arith.subf %113, %116 : vector<1x16xf32>
    %118 = math.exp %117 : vector<1x16xf32>
    %cst_53 = arith.constant dense<0.000000e+00> : vector<1xf32>
    %119 = vector.multi_reduction <add>, %118, %cst_53 [1] : vector<1x16xf32> to vector<1xf32>
    %120 = vector.shape_cast %119 : vector<1xf32> to vector<1x1xf32>
    %121 = tpu.reciprocal %120 {approx = true} : vector<1x1xf32> -> vector<1x1xf32>
    %122 = vector.broadcast %121 : vector<1x1xf32> to vector<1x16xf32>
    %123 = arith.mulf %118, %122 : vector<1x16xf32>
    %124 = arith.truncf %123 : vector<1x16xf32> to vector<1x16xbf16>
    %125 = vector.extract_strided_slice %70 {offsets = [0, 16], sizes = [16, 8], strides = [1, 1]} : vector<16x32xf32> to vector<16x8xf32>
    %126 = arith.truncf %125 : vector<16x8xf32> to vector<16x8xbf16>
    %cst_54 = arith.constant dense<0.000000e+00> : vector<1x8xf32>
    %127 = tpu.matmul %124, %126, %cst_54 {dimension_numbers = #tpu.dot_dimension_numbers<[1], [0], [0], [1], [0, 0, 1, 1], [], []>} : vector<1x16xbf16>, vector<16x8xbf16>, vector<1x8xf32> -> vector<1x8xf32>
    %128 = vector.extract_strided_slice %68 {offsets = [0, 24], sizes = [1, 8], strides = [1, 1]} : vector<1x32xf32> to vector<1x8xf32>
    %129 = arith.truncf %128 : vector<1x8xf32> to vector<1x8xbf16>
    %130 = vector.extract_strided_slice %69 {offsets = [0, 24], sizes = [16, 8], strides = [1, 1]} : vector<16x32xf32> to vector<16x8xf32>
    %131 = arith.truncf %130 : vector<16x8xf32> to vector<16x8xbf16>
    %cst_55 = arith.constant dense<0.000000e+00> : vector<1x16xf32>
    %132 = tpu.matmul %129, %131, %cst_55 {dimension_numbers = #tpu.dot_dimension_numbers<[1], [1], [0], [0], [0, 0, 1, 0], [], []>} : vector<1x8xbf16>, vector<16x8xbf16>, vector<1x16xf32> -> vector<1x16xf32>
    %cst_56 = arith.constant dense<0xFF800000> : vector<1xf32>
    %133 = vector.multi_reduction <maximumf>, %132, %cst_56 [1] : vector<1x16xf32> to vector<1xf32>
    %134 = vector.shape_cast %133 : vector<1xf32> to vector<1x1xf32>
    %135 = vector.broadcast %134 : vector<1x1xf32> to vector<1x16xf32>
    %136 = arith.subf %132, %135 : vector<1x16xf32>
    %137 = math.exp %136 : vector<1x16xf32>
    %cst_57 = arith.constant dense<0.000000e+00> : vector<1xf32>
    %138 = vector.multi_reduction <add>, %137, %cst_57 [1] : vector<1x16xf32> to vector<1xf32>
    %139 = vector.shape_cast %138 : vector<1xf32> to vector<1x1xf32>
    %140 = tpu.reciprocal %139 {approx = true} : vector<1x1xf32> -> vector<1x1xf32>
    %141 = vector.broadcast %140 : vector<1x1xf32> to vector<1x16xf32>
    %142 = arith.mulf %137, %141 : vector<1x16xf32>
    %143 = arith.truncf %142 : vector<1x16xf32> to vector<1x16xbf16>
    %144 = vector.extract_strided_slice %70 {offsets = [0, 24], sizes = [16, 8], strides = [1, 1]} : vector<16x32xf32> to vector<16x8xf32>
    %145 = arith.truncf %144 : vector<16x8xf32> to vector<16x8xbf16>
    %cst_58 = arith.constant dense<0.000000e+00> : vector<1x8xf32>
    %146 = tpu.matmul %143, %145, %cst_58 {dimension_numbers = #tpu.dot_dimension_numbers<[1], [0], [0], [1], [0, 0, 1, 1], [], []>} : vector<1x16xbf16>, vector<16x8xbf16>, vector<1x8xf32> -> vector<1x8xf32>
    %147 = tpu.concatenate %89, %108, %127, %146 in 1 : vector<1x8xf32>, vector<1x8xf32>, vector<1x8xf32>, vector<1x8xf32> -> vector<1x32xf32>
    %148 = vector.extract_strided_slice %57 {offsets = [1, 0], sizes = [1, 32], strides = [1, 1]} : vector<2x32xf32> to vector<1x32xf32>
    %149 = vector.extract_strided_slice %66 {offsets = [16, 0], sizes = [16, 32], strides = [1, 1]} : vector<32x32xf32> to vector<16x32xf32>
    %150 = vector.extract_strided_slice %67 {offsets = [16, 0], sizes = [16, 32], strides = [1, 1]} : vector<32x32xf32> to vector<16x32xf32>
    %151 = vector.extract_strided_slice %148 {offsets = [0, 0], sizes = [1, 8], strides = [1, 1]} : vector<1x32xf32> to vector<1x8xf32>
    %152 = arith.truncf %151 : vector<1x8xf32> to vector<1x8xbf16>
    %153 = vector.extract_strided_slice %149 {offsets = [0, 0], sizes = [16, 8], strides = [1, 1]} : vector<16x32xf32> to vector<16x8xf32>
    %154 = arith.truncf %153 : vector<16x8xf32> to vector<16x8xbf16>
    %cst_59 = arith.constant dense<0.000000e+00> : vector<1x16xf32>
    %155 = tpu.matmul %152, %154, %cst_59 {dimension_numbers = #tpu.dot_dimension_numbers<[1], [1], [0], [0], [0, 0, 1, 0], [], []>} : vector<1x8xbf16>, vector<16x8xbf16>, vector<1x16xf32> -> vector<1x16xf32>
    %cst_60 = arith.constant dense<0xFF800000> : vector<1xf32>
    %156 = vector.multi_reduction <maximumf>, %155, %cst_60 [1] : vector<1x16xf32> to vector<1xf32>
    %157 = vector.shape_cast %156 : vector<1xf32> to vector<1x1xf32>
    %158 = vector.broadcast %157 : vector<1x1xf32> to vector<1x16xf32>
    %159 = arith.subf %155, %158 : vector<1x16xf32>
    %160 = math.exp %159 : vector<1x16xf32>
    %cst_61 = arith.constant dense<0.000000e+00> : vector<1xf32>
    %161 = vector.multi_reduction <add>, %160, %cst_61 [1] : vector<1x16xf32> to vector<1xf32>
    %162 = vector.shape_cast %161 : vector<1xf32> to vector<1x1xf32>
    %163 = tpu.reciprocal %162 {approx = true} : vector<1x1xf32> -> vector<1x1xf32>
    %164 = vector.broadcast %163 : vector<1x1xf32> to vector<1x16xf32>
    %165 = arith.mulf %160, %164 : vector<1x16xf32>
    %166 = arith.truncf %165 : vector<1x16xf32> to vector<1x16xbf16>
    %167 = vector.extract_strided_slice %150 {offsets = [0, 0], sizes = [16, 8], strides = [1, 1]} : vector<16x32xf32> to vector<16x8xf32>
    %168 = arith.truncf %167 : vector<16x8xf32> to vector<16x8xbf16>
    %cst_62 = arith.constant dense<0.000000e+00> : vector<1x8xf32>
    %169 = tpu.matmul %166, %168, %cst_62 {dimension_numbers = #tpu.dot_dimension_numbers<[1], [0], [0], [1], [0, 0, 1, 1], [], []>} : vector<1x16xbf16>, vector<16x8xbf16>, vector<1x8xf32> -> vector<1x8xf32>
    %170 = vector.extract_strided_slice %148 {offsets = [0, 8], sizes = [1, 8], strides = [1, 1]} : vector<1x32xf32> to vector<1x8xf32>
    %171 = arith.truncf %170 : vector<1x8xf32> to vector<1x8xbf16>
    %172 = vector.extract_strided_slice %149 {offsets = [0, 8], sizes = [16, 8], strides = [1, 1]} : vector<16x32xf32> to vector<16x8xf32>
    %173 = arith.truncf %172 : vector<16x8xf32> to vector<16x8xbf16>
    %cst_63 = arith.constant dense<0.000000e+00> : vector<1x16xf32>
    %174 = tpu.matmul %171, %173, %cst_63 {dimension_numbers = #tpu.dot_dimension_numbers<[1], [1], [0], [0], [0, 0, 1, 0], [], []>} : vector<1x8xbf16>, vector<16x8xbf16>, vector<1x16xf32> -> vector<1x16xf32>
    %cst_64 = arith.constant dense<0xFF800000> : vector<1xf32>
    %175 = vector.multi_reduction <maximumf>, %174, %cst_64 [1] : vector<1x16xf32> to vector<1xf32>
    %176 = vector.shape_cast %175 : vector<1xf32> to vector<1x1xf32>
    %177 = vector.broadcast %176 : vector<1x1xf32> to vector<1x16xf32>
    %178 = arith.subf %174, %177 : vector<1x16xf32>
    %179 = math.exp %178 : vector<1x16xf32>
    %cst_65 = arith.constant dense<0.000000e+00> : vector<1xf32>
    %180 = vector.multi_reduction <add>, %179, %cst_65 [1] : vector<1x16xf32> to vector<1xf32>
    %181 = vector.shape_cast %180 : vector<1xf32> to vector<1x1xf32>
    %182 = tpu.reciprocal %181 {approx = true} : vector<1x1xf32> -> vector<1x1xf32>
    %183 = vector.broadcast %182 : vector<1x1xf32> to vector<1x16xf32>
    %184 = arith.mulf %179, %183 : vector<1x16xf32>
    %185 = arith.truncf %184 : vector<1x16xf32> to vector<1x16xbf16>
    %186 = vector.extract_strided_slice %150 {offsets = [0, 8], sizes = [16, 8], strides = [1, 1]} : vector<16x32xf32> to vector<16x8xf32>
    %187 = arith.truncf %186 : vector<16x8xf32> to vector<16x8xbf16>
    %cst_66 = arith.constant dense<0.000000e+00> : vector<1x8xf32>
    %188 = tpu.matmul %185, %187, %cst_66 {dimension_numbers = #tpu.dot_dimension_numbers<[1], [0], [0], [1], [0, 0, 1, 1], [], []>} : vector<1x16xbf16>, vector<16x8xbf16>, vector<1x8xf32> -> vector<1x8xf32>
    %189 = vector.extract_strided_slice %148 {offsets = [0, 16], sizes = [1, 8], strides = [1, 1]} : vector<1x32xf32> to vector<1x8xf32>
    %190 = arith.truncf %189 : vector<1x8xf32> to vector<1x8xbf16>
    %191 = vector.extract_strided_slice %149 {offsets = [0, 16], sizes = [16, 8], strides = [1, 1]} : vector<16x32xf32> to vector<16x8xf32>
    %192 = arith.truncf %191 : vector<16x8xf32> to vector<16x8xbf16>
    %cst_67 = arith.constant dense<0.000000e+00> : vector<1x16xf32>
    %193 = tpu.matmul %190, %192, %cst_67 {dimension_numbers = #tpu.dot_dimension_numbers<[1], [1], [0], [0], [0, 0, 1, 0], [], []>} : vector<1x8xbf16>, vector<16x8xbf16>, vector<1x16xf32> -> vector<1x16xf32>
    %cst_68 = arith.constant dense<0xFF800000> : vector<1xf32>
    %194 = vector.multi_reduction <maximumf>, %193, %cst_68 [1] : vector<1x16xf32> to vector<1xf32>
    %195 = vector.shape_cast %194 : vector<1xf32> to vector<1x1xf32>
    %196 = vector.broadcast %195 : vector<1x1xf32> to vector<1x16xf32>
    %197 = arith.subf %193, %196 : vector<1x16xf32>
    %198 = math.exp %197 : vector<1x16xf32>
    %cst_69 = arith.constant dense<0.000000e+00> : vector<1xf32>
    %199 = vector.multi_reduction <add>, %198, %cst_69 [1] : vector<1x16xf32> to vector<1xf32>
    %200 = vector.shape_cast %199 : vector<1xf32> to vector<1x1xf32>
    %201 = tpu.reciprocal %200 {approx = true} : vector<1x1xf32> -> vector<1x1xf32>
    %202 = vector.broadcast %201 : vector<1x1xf32> to vector<1x16xf32>
    %203 = arith.mulf %198, %202 : vector<1x16xf32>
    %204 = arith.truncf %203 : vector<1x16xf32> to vector<1x16xbf16>
    %205 = vector.extract_strided_slice %150 {offsets = [0, 16], sizes = [16, 8], strides = [1, 1]} : vector<16x32xf32> to vector<16x8xf32>
    %206 = arith.truncf %205 : vector<16x8xf32> to vector<16x8xbf16>
    %cst_70 = arith.constant dense<0.000000e+00> : vector<1x8xf32>
    %207 = tpu.matmul %204, %206, %cst_70 {dimension_numbers = #tpu.dot_dimension_numbers<[1], [0], [0], [1], [0, 0, 1, 1], [], []>} : vector<1x16xbf16>, vector<16x8xbf16>, vector<1x8xf32> -> vector<1x8xf32>
    %208 = vector.extract_strided_slice %148 {offsets = [0, 24], sizes = [1, 8], strides = [1, 1]} : vector<1x32xf32> to vector<1x8xf32>
    %209 = arith.truncf %208 : vector<1x8xf32> to vector<1x8xbf16>
    %210 = vector.extract_strided_slice %149 {offsets = [0, 24], sizes = [16, 8], strides = [1, 1]} : vector<16x32xf32> to vector<16x8xf32>
    %211 = arith.truncf %210 : vector<16x8xf32> to vector<16x8xbf16>
    %cst_71 = arith.constant dense<0.000000e+00> : vector<1x16xf32>
    %212 = tpu.matmul %209, %211, %cst_71 {dimension_numbers = #tpu.dot_dimension_numbers<[1], [1], [0], [0], [0, 0, 1, 0], [], []>} : vector<1x8xbf16>, vector<16x8xbf16>, vector<1x16xf32> -> vector<1x16xf32>
    %cst_72 = arith.constant dense<0xFF800000> : vector<1xf32>
    %213 = vector.multi_reduction <maximumf>, %212, %cst_72 [1] : vector<1x16xf32> to vector<1xf32>
    %214 = vector.shape_cast %213 : vector<1xf32> to vector<1x1xf32>
    %215 = vector.broadcast %214 : vector<1x1xf32> to vector<1x16xf32>
    %216 = arith.subf %212, %215 : vector<1x16xf32>
    %217 = math.exp %216 : vector<1x16xf32>
    %cst_73 = arith.constant dense<0.000000e+00> : vector<1xf32>
    %218 = vector.multi_reduction <add>, %217, %cst_73 [1] : vector<1x16xf32> to vector<1xf32>
    %219 = vector.shape_cast %218 : vector<1xf32> to vector<1x1xf32>
    %220 = tpu.reciprocal %219 {approx = true} : vector<1x1xf32> -> vector<1x1xf32>
    %221 = vector.broadcast %220 : vector<1x1xf32> to vector<1x16xf32>
    %222 = arith.mulf %217, %221 : vector<1x16xf32>
    %223 = arith.truncf %222 : vector<1x16xf32> to vector<1x16xbf16>
    %224 = vector.extract_strided_slice %150 {offsets = [0, 24], sizes = [16, 8], strides = [1, 1]} : vector<16x32xf32> to vector<16x8xf32>
    %225 = arith.truncf %224 : vector<16x8xf32> to vector<16x8xbf16>
    %cst_74 = arith.constant dense<0.000000e+00> : vector<1x8xf32>
    %226 = tpu.matmul %223, %225, %cst_74 {dimension_numbers = #tpu.dot_dimension_numbers<[1], [0], [0], [1], [0, 0, 1, 1], [], []>} : vector<1x16xbf16>, vector<16x8xbf16>, vector<1x8xf32> -> vector<1x8xf32>
    %227 = tpu.concatenate %169, %188, %207, %226 in 1 : vector<1x8xf32>, vector<1x8xf32>, vector<1x8xf32>, vector<1x8xf32> -> vector<1x32xf32>
    %228 = tpu.concatenate %147, %227 in 0 : vector<1x32xf32>, vector<1x32xf32> -> vector<2x32xf32>
    %229 = arith.truncf %228 : vector<2x32xf32> to vector<2x32xbf16>
    %c0_75 = arith.constant 0 : index
    %c0_76 = arith.constant 0 : index
    %c0_77 = arith.constant 0 : index
    %230 = vector.load %arg13[%c0_75, %c0_76, %c0_77] : memref<1x32x32xbf16, #tpu.memory_space<vmem>>, vector<1x32x32xbf16>
    %231 = vector.shape_cast %230 : vector<1x32x32xbf16> to vector<32x32xbf16>
    %cst_78 = arith.constant dense<0.000000e+00> : vector<2x32xf32>
    %232 = tpu.matmul %229, %231, %cst_78 {dimension_numbers = #tpu.dot_dimension_numbers<[1], [0], [0], [1], [0, 0, 1, 1], [], []>} : vector<2x32xbf16>, vector<32x32xbf16>, vector<2x32xf32> -> vector<2x32xf32>
    %c0_79 = arith.constant 0 : index
    %c0_80 = arith.constant 0 : index
    %c0_81 = arith.constant 0 : index
    %233 = vector.load %arg14[%c0_79, %c0_80, %c0_81] : memref<1x1x32xf32, #tpu.memory_space<vmem>>, vector<1x1x32xf32>
    %234 = vector.shape_cast %233 : vector<1x1x32xf32> to vector<1x32xf32>
    %235 = vector.broadcast %234 : vector<1x32xf32> to vector<2x32xf32>
    %236 = arith.addf %232, %235 : vector<2x32xf32>
    %237 = arith.addf %46, %236 : vector<2x32xf32>
    %c0_82 = arith.constant 0 : index
    %c0_83 = arith.constant 0 : index
    %c0_84 = arith.constant 0 : index
    %238 = vector.load %arg15[%c0_82, %c0_83, %c0_84] : memref<1x1x32xf32, #tpu.memory_space<vmem>>, vector<1x1x32xf32>
    %239 = vector.shape_cast %238 : vector<1x1x32xf32> to vector<1x32xf32>
    %c0_85 = arith.constant 0 : index
    %c0_86 = arith.constant 0 : index
    %c0_87 = arith.constant 0 : index
    %240 = vector.load %arg16[%c0_85, %c0_86, %c0_87] : memref<1x1x32xf32, #tpu.memory_space<vmem>>, vector<1x1x32xf32>
    %241 = vector.shape_cast %240 : vector<1x1x32xf32> to vector<1x32xf32>
    %cst_88 = arith.constant dense<0.000000e+00> : vector<2xf32>
    %242 = vector.multi_reduction <add>, %237, %cst_88 [1] : vector<2x32xf32> to vector<2xf32>
    %243 = vector.shape_cast %242 : vector<2xf32> to vector<2x1xf32>
    %cst_89 = arith.constant 3.200000e+01 : f32
    %244 = vector.broadcast %cst_89 : f32 to vector<2x1xf32>
    %245 = arith.divf %243, %244 : vector<2x1xf32>
    %246 = vector.broadcast %245 : vector<2x1xf32> to vector<2x32xf32>
    %247 = arith.subf %237, %246 : vector<2x32xf32>
    %248 = arith.mulf %247, %247 : vector<2x32xf32>
    %cst_90 = arith.constant dense<0.000000e+00> : vector<2xf32>
    %249 = vector.multi_reduction <add>, %248, %cst_90 [1] : vector<2x32xf32> to vector<2xf32>
    %250 = vector.shape_cast %249 : vector<2xf32> to vector<2x1xf32>
    %cst_91 = arith.constant 3.200000e+01 : f32
    %251 = vector.broadcast %cst_91 : f32 to vector<2x1xf32>
    %252 = arith.divf %250, %251 : vector<2x1xf32>
    %253 = vector.broadcast %245 : vector<2x1xf32> to vector<2x32xf32>
    %254 = arith.subf %237, %253 : vector<2x32xf32>
    %cst_92 = arith.constant 9.99999997E-7 : f32
    %255 = vector.broadcast %cst_92 : f32 to vector<2x1xf32>
    %256 = arith.addf %252, %255 : vector<2x1xf32>
    %257 = math.rsqrt %256 : vector<2x1xf32>
    %258 = vector.broadcast %257 : vector<2x1xf32> to vector<2x32xf32>
    %259 = arith.mulf %254, %258 : vector<2x32xf32>
    %260 = vector.broadcast %239 : vector<1x32xf32> to vector<2x32xf32>
    %261 = arith.mulf %259, %260 : vector<2x32xf32>
    %262 = vector.broadcast %241 : vector<1x32xf32> to vector<2x32xf32>
    %263 = arith.addf %261, %262 : vector<2x32xf32>
    %264 = arith.truncf %263 : vector<2x32xf32> to vector<2x32xbf16>
    %c0_93 = arith.constant 0 : index
    %c0_94 = arith.constant 0 : index
    %c0_95 = arith.constant 0 : index
    %265 = vector.load %arg17[%c0_93, %c0_94, %c0_95] : memref<1x32x64xbf16, #tpu.memory_space<vmem>>, vector<1x32x64xbf16>
    %266 = vector.shape_cast %265 : vector<1x32x64xbf16> to vector<32x64xbf16>
    %cst_96 = arith.constant dense<0.000000e+00> : vector<2x64xf32>
    %267 = tpu.matmul %264, %266, %cst_96 {dimension_numbers = #tpu.dot_dimension_numbers<[1], [0], [0], [1], [0, 0, 1, 1], [], []>} : vector<2x32xbf16>, vector<32x64xbf16>, vector<2x64xf32> -> vector<2x64xf32>
    %c0_97 = arith.constant 0 : index
    %c0_98 = arith.constant 0 : index
    %c0_99 = arith.constant 0 : index
    %268 = vector.load %arg18[%c0_97, %c0_98, %c0_99] : memref<1x1x64xf32, #tpu.memory_space<vmem>>, vector<1x1x64xf32>
    %269 = vector.shape_cast %268 : vector<1x1x64xf32> to vector<1x64xf32>
    %270 = vector.broadcast %269 : vector<1x64xf32> to vector<2x64xf32>
    %271 = arith.addf %267, %270 : vector<2x64xf32>
    %cst_100 = arith.constant 5.000000e-01 : f32
    %272 = vector.broadcast %cst_100 : f32 to vector<2x64xf32>
    %273 = arith.mulf %272, %271 : vector<2x64xf32>
    %cst_101 = arith.constant 0.707106769 : f32
    %274 = vector.broadcast %cst_101 : f32 to vector<2x64xf32>
    %275 = arith.mulf %271, %274 : vector<2x64xf32>
    %276 = math.erf %275 : vector<2x64xf32>
    %cst_102 = arith.constant 1.000000e+00 : f32
    %277 = vector.broadcast %cst_102 : f32 to vector<2x64xf32>
    %278 = arith.addf %277, %276 : vector<2x64xf32>
    %279 = arith.mulf %273, %278 : vector<2x64xf32>
    %280 = arith.truncf %279 : vector<2x64xf32> to vector<2x64xbf16>
    %c0_103 = arith.constant 0 : index
    %c0_104 = arith.constant 0 : index
    %c0_105 = arith.constant 0 : index
    %281 = vector.load %arg19[%c0_103, %c0_104, %c0_105] : memref<1x64x32xbf16, #tpu.memory_space<vmem>>, vector<1x64x32xbf16>
    %282 = vector.shape_cast %281 : vector<1x64x32xbf16> to vector<64x32xbf16>
    %cst_106 = arith.constant dense<0.000000e+00> : vector<2x32xf32>
    %283 = tpu.matmul %280, %282, %cst_106 {dimension_numbers = #tpu.dot_dimension_numbers<[1], [0], [0], [1], [0, 0, 1, 1], [], []>} : vector<2x64xbf16>, vector<64x32xbf16>, vector<2x32xf32> -> vector<2x32xf32>
    %c0_107 = arith.constant 0 : index
    %c0_108 = arith.constant 0 : index
    %c0_109 = arith.constant 0 : index
    %284 = vector.load %arg20[%c0_107, %c0_108, %c0_109] : memref<1x1x32xf32, #tpu.memory_space<vmem>>, vector<1x1x32xf32>
    %285 = vector.shape_cast %284 : vector<1x1x32xf32> to vector<1x32xf32>
    %286 = vector.broadcast %285 : vector<1x32xf32> to vector<2x32xf32>
    %287 = arith.addf %283, %286 : vector<2x32xf32>
    %288 = arith.addf %263, %287 : vector<2x32xf32>
    %c0_110 = arith.constant 0 : index
    %c0_111 = arith.constant 0 : index
    %c0_112 = arith.constant 0 : index
    %289 = vector.load %arg21[%c0_110, %c0_111, %c0_112] : memref<1x1x32xf32, #tpu.memory_space<vmem>>, vector<1x1x32xf32>
    %290 = vector.shape_cast %289 : vector<1x1x32xf32> to vector<1x32xf32>
    %c0_113 = arith.constant 0 : index
    %c0_114 = arith.constant 0 : index
    %c0_115 = arith.constant 0 : index
    %291 = vector.load %arg22[%c0_113, %c0_114, %c0_115] : memref<1x1x32xf32, #tpu.memory_space<vmem>>, vector<1x1x32xf32>
    %292 = vector.shape_cast %291 : vector<1x1x32xf32> to vector<1x32xf32>
    %cst_116 = arith.constant dense<0.000000e+00> : vector<2xf32>
    %293 = vector.multi_reduction <add>, %288, %cst_116 [1] : vector<2x32xf32> to vector<2xf32>
    %294 = vector.shape_cast %293 : vector<2xf32> to vector<2x1xf32>
    %cst_117 = arith.constant 3.200000e+01 : f32
    %295 = vector.broadcast %cst_117 : f32 to vector<2x1xf32>
    %296 = arith.divf %294, %295 : vector<2x1xf32>
    %297 = vector.broadcast %296 : vector<2x1xf32> to vector<2x32xf32>
    %298 = arith.subf %288, %297 : vector<2x32xf32>
    %299 = arith.mulf %298, %298 : vector<2x32xf32>
    %cst_118 = arith.constant dense<0.000000e+00> : vector<2xf32>
    %300 = vector.multi_reduction <add>, %299, %cst_118 [1] : vector<2x32xf32> to vector<2xf32>
    %301 = vector.shape_cast %300 : vector<2xf32> to vector<2x1xf32>
    %cst_119 = arith.constant 3.200000e+01 : f32
    %302 = vector.broadcast %cst_119 : f32 to vector<2x1xf32>
    %303 = arith.divf %301, %302 : vector<2x1xf32>
    %304 = vector.broadcast %296 : vector<2x1xf32> to vector<2x32xf32>
    %305 = arith.subf %288, %304 : vector<2x32xf32>
    %cst_120 = arith.constant 9.99999997E-7 : f32
    %306 = vector.broadcast %cst_120 : f32 to vector<2x1xf32>
    %307 = arith.addf %303, %306 : vector<2x1xf32>
    %308 = math.rsqrt %307 : vector<2x1xf32>
    %309 = vector.broadcast %308 : vector<2x1xf32> to vector<2x32xf32>
    %310 = arith.mulf %305, %309 : vector<2x32xf32>
    %311 = vector.broadcast %290 : vector<1x32xf32> to vector<2x32xf32>
    %312 = arith.mulf %310, %311 : vector<2x32xf32>
    %313 = vector.broadcast %292 : vector<1x32xf32> to vector<2x32xf32>
    %314 = arith.addf %312, %313 : vector<2x32xf32>
    %c0_121 = arith.constant 0 : index
    %c0_122 = arith.constant 0 : index
    %315 = vector.load %arg28[%c0_121, %c0_122] : memref<2x32xf32, #tpu.memory_space<vmem>>, vector<2x32xf32>
    tpu.vector_store %arg28[%c0_121, %c0_122], %314 {strides = array<i32>} : memref<2x32xf32, #tpu.memory_space<vmem>>, vector<2x32xf32>,
    %c1_i32 = arith.constant 1 : i32
    %316 = arith.cmpi eq, %arg0, %c1_i32 : i32
    %317 = arith.extui %316 : i1 to i32
    %c0_i32_123 = arith.constant 0 : i32
    %318 = arith.cmpi ne, %317, %c0_i32_123 : i32
    scf.if %318 {
      %c0_124 = arith.constant 0 : index
      %c0_125 = arith.constant 0 : index
      %319 = vector.load %arg23[%c0_124, %c0_125] : memref<1x32xf32, #tpu.memory_space<vmem>>, vector<1x32xf32>
      %c0_126 = arith.constant 0 : index
      %c0_127 = arith.constant 0 : index
      %320 = vector.load %arg24[%c0_126, %c0_127] : memref<1x32xf32, #tpu.memory_space<vmem>>, vector<1x32xf32>
      %cst_128 = arith.constant dense<0.000000e+00> : vector<2xf32>
      %321 = vector.multi_reduction <add>, %314, %cst_128 [1] : vector<2x32xf32> to vector<2xf32>
      %322 = vector.shape_cast %321 : vector<2xf32> to vector<2x1xf32>
      %cst_129 = arith.constant 3.200000e+01 : f32
      %323 = vector.broadcast %cst_129 : f32 to vector<2x1xf32>
      %324 = arith.divf %322, %323 : vector<2x1xf32>
      %325 = vector.broadcast %324 : vector<2x1xf32> to vector<2x32xf32>
      %326 = arith.subf %314, %325 : vector<2x32xf32>
      %327 = arith.mulf %326, %326 : vector<2x32xf32>
      %cst_130 = arith.constant dense<0.000000e+00> : vector<2xf32>
      %328 = vector.multi_reduction <add>, %327, %cst_130 [1] : vector<2x32xf32> to vector<2xf32>
      %329 = vector.shape_cast %328 : vector<2xf32> to vector<2x1xf32>
      %cst_131 = arith.constant 3.200000e+01 : f32
      %330 = vector.broadcast %cst_131 : f32 to vector<2x1xf32>
      %331 = arith.divf %329, %330 : vector<2x1xf32>
      %332 = vector.broadcast %324 : vector<2x1xf32> to vector<2x32xf32>
      %333 = arith.subf %314, %332 : vector<2x32xf32>
      %cst_132 = arith.constant 9.99999997E-7 : f32
      %334 = vector.broadcast %cst_132 : f32 to vector<2x1xf32>
      %335 = arith.addf %331, %334 : vector<2x1xf32>
      %336 = math.rsqrt %335 : vector<2x1xf32>
      %337 = vector.broadcast %336 : vector<2x1xf32> to vector<2x32xf32>
      %338 = arith.mulf %333, %337 : vector<2x32xf32>
      %339 = vector.broadcast %319 : vector<1x32xf32> to vector<2x32xf32>
      %340 = arith.mulf %338, %339 : vector<2x32xf32>
      %341 = vector.broadcast %320 : vector<1x32xf32> to vector<2x32xf32>
      %342 = arith.addf %340, %341 : vector<2x32xf32>
      %343 = arith.truncf %342 : vector<2x32xf32> to vector<2x32xbf16>
      %c0_133 = arith.constant 0 : index
      %c0_134 = arith.constant 0 : index
      %344 = vector.load %arg25[%c0_133, %c0_134] : memref<32x128xbf16, #tpu.memory_space<vmem>>, vector<32x128xbf16>
      %cst_135 = arith.constant dense<0.000000e+00> : vector<2x128xf32>
      %345 = tpu.matmul %343, %344, %cst_135 {dimension_numbers = #tpu.dot_dimension_numbers<[1], [0], [0], [1], [0, 0, 1, 1], [], []>} : vector<2x32xbf16>, vector<32x128xbf16>, vector<2x128xf32> -> vector<2x128xf32>
      %c0_136 = arith.constant 0 : index
      %c0_137 = arith.constant 0 : index
      %346 = vector.load %arg26[%c0_136, %c0_137] : memref<1x128xf32, #tpu.memory_space<vmem>>, vector<1x128xf32>
      %347 = vector.broadcast %346 : vector<1x128xf32> to vector<2x128xf32>
      %348 = arith.addf %345, %347 : vector<2x128xf32>
      %c0_138 = arith.constant 0 : index
      %c0_139 = arith.constant 0 : index
      %349 = vector.load %arg27[%c0_138, %c0_139] : memref<2x128xf32, #tpu.memory_space<vmem>>, vector<2x128xf32>
      tpu.vector_store %arg27[%c0_138, %c0_139], %348 {strides = array<i32>} : memref<2x128xf32, #tpu.memory_space<vmem>>, vector<2x128xf32>,
    } else {
    }
    return
  }
  func.func @transform_0(%arg0: i32) -> (i32, i32) {
    %c0_i32 = arith.constant 0 : i32
    %c0_i32_0 = arith.constant 0 : i32
    %c0_i32_1 = arith.constant 0 : i32
    return %c0_i32, %c0_i32_0 : i32, i32
  }
  func.func @transform_1(%arg0: i32) -> (i32, i32) {
    %c0_i32 = arith.constant 0 : i32
    %c0_i32_0 = arith.constant 0 : i32
    %c0_i32_1 = arith.constant 0 : i32
    return %c0_i32, %c0_i32_0 : i32, i32
  }
  func.func @transform_2(%arg0: i32) -> (i32, i32, i32) {
    %c0_i32 = arith.constant 0 : i32
    %c0_i32_0 = arith.constant 0 : i32
    %c0_i32_1 = arith.constant 0 : i32
    return %arg0, %c0_i32, %c0_i32_0 : i32, i32, i32
  }
  func.func @transform_3(%arg0: i32) -> (i32, i32, i32) {
    %c0_i32 = arith.constant 0 : i32
    %c0_i32_0 = arith.constant 0 : i32
    %c0_i32_1 = arith.constant 0 : i32
    return %arg0, %c0_i32, %c0_i32_0 : i32, i32, i32
  }
  func.func @transform_4(%arg0: i32) -> (i32, i32, i32) {
    %c0_i32 = arith.constant 0 : i32
    %c0_i32_0 = arith.constant 0 : i32
    %c0_i32_1 = arith.constant 0 : i32
    return %arg0, %c0_i32, %c0_i32_0 : i32, i32, i32
  }
  func.func @transform_5(%arg0: i32) -> (i32, i32, i32) {
    %c0_i32 = arith.constant 0 : i32
    %c0_i32_0 = arith.constant 0 : i32
    %c0_i32_1 = arith.constant 0 : i32
    return %arg0, %c0_i32, %c0_i32_0 : i32, i32, i32
  }
  func.func @transform_6(%arg0: i32) -> (i32, i32, i32) {
    %c0_i32 = arith.constant 0 : i32
    %c0_i32_0 = arith.constant 0 : i32
    %c0_i32_1 = arith.constant 0 : i32
    return %arg0, %c0_i32, %c0_i32_0 : i32, i32, i32
  }
  func.func @transform_7(%arg0: i32) -> (i32, i32, i32) {
    %c0_i32 = arith.constant 0 : i32
    %c0_i32_0 = arith.constant 0 : i32
    %c0_i32_1 = arith.constant 0 : i32
    return %arg0, %c0_i32, %c0_i32_0 : i32, i32, i32
  }
  func.func @transform_8(%arg0: i32) -> (i32, i32, i32) {
    %c0_i32 = arith.constant 0 : i32
    %c0_i32_0 = arith.constant 0 : i32
    %c0_i32_1 = arith.constant 0 : i32
    return %arg0, %c0_i32, %c0_i32_0 : i32, i32, i32
  }
  func.func @transform_9(%arg0: i32) -> (i32, i32, i32) {
    %c0_i32 = arith.constant 0 : i32
    %c0_i32_0 = arith.constant 0 : i32
    %c0_i32_1 = arith.constant 0 : i32
    return %arg0, %c0_i32, %c0_i32_0 : i32, i32, i32
  }
  func.func @transform_10(%arg0: i32) -> (i32, i32, i32) {
    %c0_i32 = arith.constant 0 : i32
    %c0_i32_0 = arith.constant 0 : i32
    %c0_i32_1 = arith.constant 0 : i32
    return %arg0, %c0_i32, %c0_i32_0 : i32, i32, i32
  }
  func.func @transform_11(%arg0: i32) -> (i32, i32, i32) {
    %c0_i32 = arith.constant 0 : i32
    %c0_i32_0 = arith.constant 0 : i32
    %c0_i32_1 = arith.constant 0 : i32
    return %arg0, %c0_i32, %c0_i32_0 : i32, i32, i32
  }
  func.func @transform_12(%arg0: i32) -> (i32, i32, i32) {
    %c0_i32 = arith.constant 0 : i32
    %c0_i32_0 = arith.constant 0 : i32
    %c0_i32_1 = arith.constant 0 : i32
    return %arg0, %c0_i32, %c0_i32_0 : i32, i32, i32
  }
  func.func @transform_13(%arg0: i32) -> (i32, i32, i32) {
    %c0_i32 = arith.constant 0 : i32
    %c0_i32_0 = arith.constant 0 : i32
    %c0_i32_1 = arith.constant 0 : i32
    return %arg0, %c0_i32, %c0_i32_0 : i32, i32, i32
  }
  func.func @transform_14(%arg0: i32) -> (i32, i32, i32) {
    %c0_i32 = arith.constant 0 : i32
    %c0_i32_0 = arith.constant 0 : i32
    %c0_i32_1 = arith.constant 0 : i32
    return %arg0, %c0_i32, %c0_i32_0 : i32, i32, i32
  }
  func.func @transform_15(%arg0: i32) -> (i32, i32, i32) {
    %c0_i32 = arith.constant 0 : i32
    %c0_i32_0 = arith.constant 0 : i32
    %c0_i32_1 = arith.constant 0 : i32
    return %arg0, %c0_i32, %c0_i32_0 : i32, i32, i32
  }
  func.func @transform_16(%arg0: i32) -> (i32, i32, i32) {
    %c0_i32 = arith.constant 0 : i32
    %c0_i32_0 = arith.constant 0 : i32
    %c0_i32_1 = arith.constant 0 : i32
    return %arg0, %c0_i32, %c0_i32_0 : i32, i32, i32
  }
  func.func @transform_17(%arg0: i32) -> (i32, i32, i32) {
    %c0_i32 = arith.constant 0 : i32
    %c0_i32_0 = arith.constant 0 : i32
    %c0_i32_1 = arith.constant 0 : i32
    return %arg0, %c0_i32, %c0_i32_0 : i32, i32, i32
  }
  func.func @transform_18(%arg0: i32) -> (i32, i32, i32) {
    %c0_i32 = arith.constant 0 : i32
    %c0_i32_0 = arith.constant 0 : i32
    %c0_i32_1 = arith.constant 0 : i32
    return %arg0, %c0_i32, %c0_i32_0 : i32, i32, i32
  }
  func.func @transform_19(%arg0: i32) -> (i32, i32, i32) {
    %c0_i32 = arith.constant 0 : i32
    %c0_i32_0 = arith.constant 0 : i32
    %c0_i32_1 = arith.constant 0 : i32
    return %arg0, %c0_i32, %c0_i32_0 : i32, i32, i32
  }
  func.func @transform_20(%arg0: i32) -> (i32, i32, i32) {
    %c0_i32 = arith.constant 0 : i32
    %c0_i32_0 = arith.constant 0 : i32
    %c0_i32_1 = arith.constant 0 : i32
    return %arg0, %c0_i32, %c0_i32_0 : i32, i32, i32
  }
  func.func @transform_21(%arg0: i32) -> (i32, i32, i32) {
    %c0_i32 = arith.constant 0 : i32
    %c0_i32_0 = arith.constant 0 : i32
    %c0_i32_1 = arith.constant 0 : i32
    return %arg0, %c0_i32, %c0_i32_0 : i32, i32, i32
  }
  func.func @transform_22(%arg0: i32) -> (i32, i32) {
    %c0_i32 = arith.constant 0 : i32
    %c0_i32_0 = arith.constant 0 : i32
    %c0_i32_1 = arith.constant 0 : i32
    return %c0_i32, %c0_i32_0 : i32, i32
  }
  func.func @transform_23(%arg0: i32) -> (i32, i32) {
    %c0_i32 = arith.constant 0 : i32
    %c0_i32_0 = arith.constant 0 : i32
    %c0_i32_1 = arith.constant 0 : i32
    return %c0_i32, %c0_i32_0 : i32, i32
  }
  func.func @transform_24(%arg0: i32) -> (i32, i32) {
    %c0_i32 = arith.constant 0 : i32
    %c0_i32_0 = arith.constant 0 : i32
    %c0_i32_1 = arith.constant 0 : i32
    return %c0_i32, %c0_i32_0 : i32, i32
  }
  func.func @transform_25(%arg0: i32) -> (i32, i32) {
    %c0_i32 = arith.constant 0 : i32
    %c0_i32_0 = arith.constant 0 : i32
    %c0_i32_1 = arith.constant 0 : i32
    return %c0_i32, %c0_i32_0 : i32, i32
  }
  func.func @transform_26(%arg0: i32) -> (i32, i32) {
    %c0_i32 = arith.constant 0 : i32
    %c0_i32_0 = arith.constant 0 : i32
    %c0_i32_1 = arith.constant 0 : i32
    return %c0_i32, %c0_i32_0 : i32, i32
  }
}

</mosaic_0001>

<llo_original>
// kernel: transformer_forward.4
$region0: #{transformer_forward.4}
  #allocation0 [shape = 'u32[]', space=smem, size = 0x4, offset = 0x4, fixed_abs, tag = 'smem constant byte address 0x4 - core index']
  #allocation1 [shape = 'u32[144,128]{1,0:T(1,128)}', space=vmem, size = 0x12000, scoped, tag = 'internal scratch']
  %s0 = inlined_call_operand.vmem [shape: f32[32,32], index: 0, kind: input, shape index: {}]
  %s1 = inlined_call_operand.vmem [shape: f32[32,32], index: 1, kind: input, shape index: {}]
  %s2 = inlined_call_operand.vmem [shape: bf16[32,32], index: 2, kind: input, shape index: {}]
  %s3 = inlined_call_operand.vmem [shape: f32[1,32], index: 3, kind: input, shape index: {}]
  %s4 = inlined_call_operand.vmem [shape: f32[1,32], index: 4, kind: input, shape index: {}]
  %s5 = inlined_call_operand.vmem [shape: f32[1,32], index: 5, kind: input, shape index: {}]
  %s6 = inlined_call_operand.vmem [shape: f32[1,32], index: 6, kind: input, shape index: {}]
  %s7 = inlined_call_operand.vmem [shape: f32[1,32], index: 7, kind: input, shape index: {}]
  %s8 = inlined_call_operand.vmem [shape: bf16[32,64], index: 8, kind: input, shape index: {}]
  %s9 = inlined_call_operand.vmem [shape: f32[1,64], index: 9, kind: input, shape index: {}]
  %s10 = inlined_call_operand.vmem [shape: bf16[64,32], index: 10, kind: input, shape index: {}]
  %s11 = inlined_call_operand.vmem [shape: f32[1,32], index: 11, kind: input, shape index: {}]
  %s12 = inlined_call_operand.vmem [shape: f32[32,32], index: 12, kind: output, shape index: {}]
  %s13 = sld [smem:[#allocation0]]
  $region81: #{transformer_forward.4} parent=0
    _
  %s15 = ssub.s32 1, %s13
  %s16 = scalar_select 0, %s15, %s13
  loop: start=0, step=1, limit=4
  $region2: #{transformer_forward.4} parent=0 // loop_pre_header
    _
  $region3: #{transformer_forward.4} parent=0 // loop_header
    %s18 = sphi 0, %s22
    %p19 = scmp.ge.s32.totalorder %s18, 4
    %s28 = sphi 0, %s30
    %s31 = sphi 0, %s28
    %s32 = sphi 0, %s31
    %s48 = sphi 0, %s32
    %s54 = sphi 0, %s56
    %s57 = sphi 0, %s54
    %s58 = sphi 0, %s57
    %s74 = sphi 0, %s58
    %s78 = sphi 0, %s78
    %s80 = sphi 0, %s78
    %s81 = sphi 0, %s80
    %s95 = sphi 0, %s81
    %s99 = sphi 0, %s99
    %s101 = sphi 0, %s99
    %s102 = sphi 0, %s101
    %s116 = sphi 0, %s102
    %s120 = sphi 0, %s120
    %s122 = sphi 0, %s120
    %s123 = sphi 0, %s122
    %s137 = sphi 0, %s123
    %s141 = sphi 0, %s141
    %s143 = sphi 0, %s141
    %s144 = sphi 0, %s143
    %s158 = sphi 0, %s144
    %s162 = sphi 0, %s162
    %s164 = sphi 0, %s162
    %s165 = sphi 0, %s164
    %s179 = sphi 0, %s165
    %s183 = sphi 0, %s183
    %s185 = sphi 0, %s183
    %s186 = sphi 0, %s185
    %s200 = sphi 0, %s186
    %s204 = sphi 0, %s204
    %s206 = sphi 0, %s204
    %s207 = sphi 0, %s206
    %s221 = sphi 0, %s207
    %s225 = sphi 0, %s225
    %s227 = sphi 0, %s225
    %s228 = sphi 0, %s227
    %s242 = sphi 0, %s228
    %s246 = sphi 0, %s246
    %s248 = sphi 0, %s246
    %s249 = sphi 0, %s248
    %s263 = sphi 0, %s249
    %s267 = sphi 0, %s267
    %s269 = sphi 0, %s267
    %s270 = sphi 0, %s269
    %s284 = sphi 0, %s270
    %s290 = sphi 0, %s292
    %s293 = sphi 0, %s290
    %s294 = sphi 0, %s293
    %s310 = sphi 0, %s294
  $region4: #{transformer_forward.4} parent=0 // loop_header_branch
    %21 = sbr.rel (%p19) target = $region8
  $region5: #{transformer_forward.4} parent=0 // loop_body
    %s23 = ssub.s32 %s18, 1
    %s24 = ssub.s32 %s18, 2
    %s25 = sadd.s32 %s18, 1
    %s26 = ssub.s32 %s18, %s25
    %p27 = scmp.eq.s32.totalorder %s26, 0
    %s29 = sadd.s32 %s28, 1
    %s30 = scalar_select %p27, %s28, %s29
    %p33 = pneg %p27
    %p34 = scmp.eq.s32.totalorder %s18, 1
    %p35 = por %p33, %p34
    %p36 = scmp.ne.s32.totalorder %s28, %s31
    %p37 = scmp.eq.s32.totalorder %s18, 0
    %p38 = por %p36, %p37
    %p39 = scmp.ne.s32.totalorder %s28, %s31
    %p40 = scmp.eq.s32.totalorder %s23, 1
    %p41 = por %p39, %p40
    %p42 = scmp.ne.s32.totalorder %s31, %s32
    %p43 = scmp.eq.s32.totalorder %s23, 0
    %p44 = por %p42, %p43
    %p45 = scmp.ne.s32.totalorder %s31, %s32
    %p46 = scmp.eq.s32.totalorder %s24, 1
    %p47 = por %p45, %p46
    %p49 = scmp.ne.s32.totalorder %s32, %s48
    %p50 = scmp.eq.s32.totalorder %s24, 0
    %p51 = por %p49, %p50
    %s52 = ssub.s32 %s18, %s25
    %p53 = scmp.eq.s32.totalorder %s52, 0
    %s55 = sadd.s32 %s54, 1
    %s56 = scalar_select %p53, %s54, %s55
    %p59 = pneg %p53
    %p60 = scmp.eq.s32.totalorder %s18, 1
    %p61 = por %p59, %p60
    %p62 = scmp.ne.s32.totalorder %s54, %s57
    %p63 = scmp.eq.s32.totalorder %s18, 0
    %p64 = por %p62, %p63
    %p65 = scmp.ne.s32.totalorder %s54, %s57
    %p66 = scmp.eq.s32.totalorder %s23, 1
    %p67 = por %p65, %p66
    %p68 = scmp.ne.s32.totalorder %s57, %s58
    %p69 = scmp.eq.s32.totalorder %s23, 0
    %p70 = por %p68, %p69
    %p71 = scmp.ne.s32.totalorder %s57, %s58
    %p72 = scmp.eq.s32.totalorder %s24, 1
    %p73 = por %p71, %p72
    %p75 = scmp.ne.s32.totalorder %s58, %s74
    %p76 = scmp.eq.s32.totalorder %s24, 0
    %p77 = por %p75, %p76
    %s79 = sadd.s32 %s78, 1
    %p82 = scmp.eq.s32.totalorder %s18, 1
    %p83 = scmp.ne.s32.totalorder %s78, %s80
    %p84 = scmp.eq.s32.totalorder %s18, 0
    %p85 = por %p83, %p84
    %p86 = scmp.ne.s32.totalorder %s78, %s80
    %p87 = scmp.eq.s32.totalorder %s23, 1
    %p88 = por %p86, %p87
    %p89 = scmp.ne.s32.totalorder %s80, %s81
    %p90 = scmp.eq.s32.totalorder %s23, 0
    %p91 = por %p89, %p90
    %p92 = scmp.ne.s32.totalorder %s80, %s81
    %p93 = scmp.eq.s32.totalorder %s24, 1
    %p94 = por %p92, %p93
    %p96 = scmp.ne.s32.totalorder %s81, %s95
    %p97 = scmp.eq.s32.totalorder %s24, 0
    %p98 = por %p96, %p97
    %s100 = sadd.s32 %s99, 1
    %p103 = scmp.eq.s32.totalorder %s18, 1
    %p104 = scmp.ne.s32.totalorder %s99, %s101
    %p105 = scmp.eq.s32.totalorder %s18, 0
    %p106 = por %p104, %p105
    %p107 = scmp.ne.s32.totalorder %s99, %s101
    %p108 = scmp.eq.s32.totalorder %s23, 1
    %p109 = por %p107, %p108
    %p110 = scmp.ne.s32.totalorder %s101, %s102
    %p111 = scmp.eq.s32.totalorder %s23, 0
    %p112 = por %p110, %p111
    %p113 = scmp.ne.s32.totalorder %s101, %s102
    %p114 = scmp.eq.s32.totalorder %s24, 1
    %p115 = por %p113, %p114
    %p117 = scmp.ne.s32.totalorder %s102, %s116
    %p118 = scmp.eq.s32.totalorder %s24, 0
    %p119 = por %p117, %p118
    %s121 = sadd.s32 %s120, 1
    %p124 = scmp.eq.s32.totalorder %s18, 1
    %p125 = scmp.ne.s32.totalorder %s120, %s122
    %p126 = scmp.eq.s32.totalorder %s18, 0
    %p127 = por %p125, %p126
    %p128 = scmp.ne.s32.totalorder %s120, %s122
    %p129 = scmp.eq.s32.totalorder %s23, 1
    %p130 = por %p128, %p129
    %p131 = scmp.ne.s32.totalorder %s122, %s123
    %p132 = scmp.eq.s32.totalorder %s23, 0
    %p133 = por %p131, %p132
    %p134 = scmp.ne.s32.totalorder %s122, %s123
    %p135 = scmp.eq.s32.totalorder %s24, 1
    %p136 = por %p134, %p135
    %p138 = scmp.ne.s32.totalorder %s123, %s137
    %p139 = scmp.eq.s32.totalorder %s24, 0
    %p140 = por %p138, %p139
    %s142 = sadd.s32 %s141, 1
    %p145 = scmp.eq.s32.totalorder %s18, 1
    %p146 = scmp.ne.s32.totalorder %s141, %s143
    %p147 = scmp.eq.s32.totalorder %s18, 0
    %p148 = por %p146, %p147
    %p149 = scmp.ne.s32.totalorder %s141, %s143
    %p150 = scmp.eq.s32.totalorder %s23, 1
    %p151 = por %p149, %p150
    %p152 = scmp.ne.s32.totalorder %s143, %s144
    %p153 = scmp.eq.s32.totalorder %s23, 0
    %p154 = por %p152, %p153
    %p155 = scmp.ne.s32.totalorder %s143, %s144
    %p156 = scmp.eq.s32.totalorder %s24, 1
    %p157 = por %p155, %p156
    %p159 = scmp.ne.s32.totalorder %s144, %s158
    %p160 = scmp.eq.s32.totalorder %s24, 0
    %p161 = por %p159, %p160
    %s163 = sadd.s32 %s162, 1
    %p166 = scmp.eq.s32.totalorder %s18, 1
    %p167 = scmp.ne.s32.totalorder %s162, %s164
    %p168 = scmp.eq.s32.totalorder %s18, 0
    %p169 = por %p167, %p168
    %p170 = scmp.ne.s32.totalorder %s162, %s164
    %p171 = scmp.eq.s32.totalorder %s23, 1
    %p172 = por %p170, %p171
    %p173 = scmp.ne.s32.totalorder %s164, %s165
    %p174 = scmp.eq.s32.totalorder %s23, 0
    %p175 = por %p173, %p174
    %p176 = scmp.ne.s32.totalorder %s164, %s165
    %p177 = scmp.eq.s32.totalorder %s24, 1
    %p178 = por %p176, %p177
    %p180 = scmp.ne.s32.totalorder %s165, %s179
    %p181 = scmp.eq.s32.totalorder %s24, 0
    %p182 = por %p180, %p181
    %s184 = sadd.s32 %s183, 1
    %p187 = scmp.eq.s32.totalorder %s18, 1
    %p188 = scmp.ne.s32.totalorder %s183, %s185
    %p189 = scmp.eq.s32.totalorder %s18, 0
    %p190 = por %p188, %p189
    %p191 = scmp.ne.s32.totalorder %s183, %s185
    %p192 = scmp.eq.s32.totalorder %s23, 1
    %p193 = por %p191, %p192
    %p194 = scmp.ne.s32.totalorder %s185, %s186
    %p195 = scmp.eq.s32.totalorder %s23, 0
    %p196 = por %p194, %p195
    %p197 = scmp.ne.s32.totalorder %s185, %s186
    %p198 = scmp.eq.s32.totalorder %s24, 1
    %p199 = por %p197, %p198
    %p201 = scmp.ne.s32.totalorder %s186, %s200
    %p202 = scmp.eq.s32.totalorder %s24, 0
    %p203 = por %p201, %p202
    %s205 = sadd.s32 %s204, 1
    %p208 = scmp.eq.s32.totalorder %s18, 1
    %p209 = scmp.ne.s32.totalorder %s204, %s206
    %p210 = scmp.eq.s32.totalorder %s18, 0
    %p211 = por %p209, %p210
    %p212 = scmp.ne.s32.totalorder %s204, %s206
    %p213 = scmp.eq.s32.totalorder %s23, 1
    %p214 = por %p212, %p213
    %p215 = scmp.ne.s32.totalorder %s206, %s207
    %p216 = scmp.eq.s32.totalorder %s23, 0
    %p217 = por %p215, %p216
    %p218 = scmp.ne.s32.totalorder %s206, %s207
    %p219 = scmp.eq.s32.totalorder %s24, 1
    %p220 = por %p218, %p219
    %p222 = scmp.ne.s32.totalorder %s207, %s221
    %p223 = scmp.eq.s32.totalorder %s24, 0
    %p224 = por %p222, %p223
    %s226 = sadd.s32 %s225, 1
    %p229 = scmp.eq.s32.totalorder %s18, 1
    %p230 = scmp.ne.s32.totalorder %s225, %s227
    %p231 = scmp.eq.s32.totalorder %s18, 0
    %p232 = por %p230, %p231
    %p233 = scmp.ne.s32.totalorder %s225, %s227
    %p234 = scmp.eq.s32.totalorder %s23, 1
    %p235 = por %p233, %p234
    %p236 = scmp.ne.s32.totalorder %s227, %s228
    %p237 = scmp.eq.s32.totalorder %s23, 0
    %p238 = por %p236, %p237
    %p239 = scmp.ne.s32.totalorder %s227, %s228
    %p240 = scmp.eq.s32.totalorder %s24, 1
    %p241 = por %p239, %p240
    %p243 = scmp.ne.s32.totalorder %s228, %s242
    %p244 = scmp.eq.s32.totalorder %s24, 0
    %p245 = por %p243, %p244
    %s247 = sadd.s32 %s246, 1
    %p250 = scmp.eq.s32.totalorder %s18, 1
    %p251 = scmp.ne.s32.totalorder %s246, %s248
    %p252 = scmp.eq.s32.totalorder %s18, 0
    %p253 = por %p251, %p252
    %p254 = scmp.ne.s32.totalorder %s246, %s248
    %p255 = scmp.eq.s32.totalorder %s23, 1
    %p256 = por %p254, %p255
    %p257 = scmp.ne.s32.totalorder %s248, %s249
    %p258 = scmp.eq.s32.totalorder %s23, 0
    %p259 = por %p257, %p258
    %p260 = scmp.ne.s32.totalorder %s248, %s249
    %p261 = scmp.eq.s32.totalorder %s24, 1
    %p262 = por %p260, %p261
    %p264 = scmp.ne.s32.totalorder %s249, %s263
    %p265 = scmp.eq.s32.totalorder %s24, 0
    %p266 = por %p264, %p265
    %s268 = sadd.s32 %s267, 1
    %p271 = scmp.eq.s32.totalorder %s18, 1
    %p272 = scmp.ne.s32.totalorder %s267, %s269
    %p273 = scmp.eq.s32.totalorder %s18, 0
    %p274 = por %p272, %p273
    %p275 = scmp.ne.s32.totalorder %s267, %s269
    %p276 = scmp.eq.s32.totalorder %s23, 1
    %p277 = por %p275, %p276
    %p278 = scmp.ne.s32.totalorder %s269, %s270
    %p279 = scmp.eq.s32.totalorder %s23, 0
    %p280 = por %p278, %p279
    %p281 = scmp.ne.s32.totalorder %s269, %s270
    %p282 = scmp.eq.s32.totalorder %s24, 1
    %p283 = por %p281, %p282
    %p285 = scmp.ne.s32.totalorder %s270, %s284
    %p286 = scmp.eq.s32.totalorder %s24, 0
    %p287 = por %p285, %p286
    %s288 = ssub.s32 %s18, %s25
    %p289 = scmp.eq.s32.totalorder %s288, 0
    %s291 = sadd.s32 %s290, 1
    %s292 = scalar_select %p289, %s290, %s291
    %p295 = pneg %p289
    %p296 = scmp.eq.s32.totalorder %s18, 1
    %p297 = por %p295, %p296
    %p298 = scmp.ne.s32.totalorder %s290, %s293
    %p299 = scmp.eq.s32.totalorder %s18, 0
    %p300 = por %p298, %p299
    %p301 = scmp.ne.s32.totalorder %s290, %s293
    %p302 = scmp.eq.s32.totalorder %s23, 1
    %p303 = por %p301, %p302
    %p304 = scmp.ne.s32.totalorder %s293, %s294
    %p305 = scmp.eq.s32.totalorder %s23, 0
    %p306 = por %p304, %p305
    %p307 = scmp.ne.s32.totalorder %s293, %s294
    %p308 = scmp.eq.s32.totalorder %s24, 1
    %p309 = por %p307, %p308
    %p311 = scmp.ne.s32.totalorder %s294, %s310
    %p312 = scmp.eq.s32.totalorder %s24, 0
    %p313 = por %p311, %p312
    %p314 = scmp.le.s32.totalorder 1, %s18
    %p315 = scmp.lt.s32.totalorder %s18, 3
    %p316 = pnand %p314, %p315
    %p317 = pneg %p316
    // Predicated region
    $region9: #{transformer_forward.4} parent=5 // pred_check
      _
    $region10: #{transformer_forward.4} parent=5 // pred_check_branch
      %319 = sbr.rel (%p316) target = $region12
    $region11: #{transformer_forward.4} parent=5 // pred_region
      %s320 = ssub.s32 %s18, 1
      // Predicated region
      $region13: #{transformer_forward.4} parent=11 // pred_check
        %p321 = pneg %p91
      $region14: #{transformer_forward.4} parent=11 // pred_check_branch
        %323 = sbr.rel (%p321) target = $region16
      $region15: #{transformer_forward.4} parent=11 // pred_region
        _
      $region16: #{transformer_forward.4} parent=11 // pred_fallthru
        _
      // Predicated region
      $region17: #{transformer_forward.4} parent=11 // pred_check
        %p324 = pneg %p112
      $region18: #{transformer_forward.4} parent=11 // pred_check_branch
        %326 = sbr.rel (%p324) target = $region20
      $region19: #{transformer_forward.4} parent=11 // pred_region
        _
      $region20: #{transformer_forward.4} parent=11 // pred_fallthru
        _
      // Predicated region
      $region21: #{transformer_forward.4} parent=11 // pred_check
        %p327 = pneg %p133
      $region22: #{transformer_forward.4} parent=11 // pred_check_branch
        %329 = sbr.rel (%p327) target = $region24
      $region23: #{transformer_forward.4} parent=11 // pred_region
        _
      $region24: #{transformer_forward.4} parent=11 // pred_fallthru
        _
      // Predicated region
      $region25: #{transformer_forward.4} parent=11 // pred_check
        %p330 = pneg %p154
      $region26: #{transformer_forward.4} parent=11 // pred_check_branch
        %332 = sbr.rel (%p330) target = $region28
      $region27: #{transformer_forward.4} parent=11 // pred_region
        _
      $region28: #{transformer_forward.4} parent=11 // pred_fallthru
        _
      // Predicated region
      $region29: #{transformer_forward.4} parent=11 // pred_check
        %p333 = pneg %p175
      $region30: #{transformer_forward.4} parent=11 // pred_check_branch
        %335 = sbr.rel (%p333) target = $region32
      $region31: #{transformer_forward.4} parent=11 // pred_region
        _
      $region32: #{transformer_forward.4} parent=11 // pred_fallthru
        _
      // Predicated region
      $region33: #{transformer_forward.4} parent=11 // pred_check
        %p336 = pneg %p196
      $region34: #{transformer_forward.4} parent=11 // pred_check_branch
        %338 = sbr.rel (%p336) target = $region36
      $region35: #{transformer_forward.4} parent=11 // pred_region
        _
      $region36: #{transformer_forward.4} parent=11 // pred_fallthru
        _
      // Predicated region
      $region37: #{transformer_forward.4} parent=11 // pred_check
        %p339 = pneg %p217
      $region38: #{transformer_forward.4} parent=11 // pred_check_branch
        %341 = sbr.rel (%p339) target = $region40
      $region39: #{transformer_forward.4} parent=11 // pred_region
        _
      $region40: #{transformer_forward.4} parent=11 // pred_fallthru
        _
      // Predicated region
      $region41: #{transformer_forward.4} parent=11 // pred_check
        %p342 = pneg %p238
      $region42: #{transformer_forward.4} parent=11 // pred_check_branch
        %344 = sbr.rel (%p342) target = $region44
      $region43: #{transformer_forward.4} parent=11 // pred_region
        _
      $region44: #{transformer_forward.4} parent=11 // pred_fallthru
        _
      // Predicated region
      $region45: #{transformer_forward.4} parent=11 // pred_check
        %p345 = pneg %p259
      $region46: #{transformer_forward.4} parent=11 // pred_check_branch
        %347 = sbr.rel (%p345) target = $region48
      $region47: #{transformer_forward.4} parent=11 // pred_region
        _
      $region48: #{transformer_forward.4} parent=11 // pred_fallthru
        _
      // Predicated region
      $region49: #{transformer_forward.4} parent=11 // pred_check
        %p348 = pneg %p280
      $region50: #{transformer_forward.4} parent=11 // pred_check_branch
        %350 = sbr.rel (%p348) target = $region52
      $region51: #{transformer_forward.4} parent=11 // pred_region
        _
      $region52: #{transformer_forward.4} parent=11 // pred_fallthru
        _
    $region12: #{transformer_forward.4} parent=5 // pred_fallthru
      _
    %p351 = scmp.lt.s32.totalorder %s18, 2
    // Predicated region
    $region53: #{transformer_forward.4} parent=5 // pred_check
      %p352 = pneg %p351
    $region54: #{transformer_forward.4} parent=5 // pred_check_branch
      %354 = sbr.rel (%p352) target = $region56
    $region55: #{transformer_forward.4} parent=5 // pred_region
      // Predicated region
      $region57: #{transformer_forward.4} parent=55 // pred_check
        %p355 = pneg %p38
      $region58: #{transformer_forward.4} parent=55 // pred_check_branch
        %357 = sbr.rel (%p355) target = $region60
      $region59: #{transformer_forward.4} parent=55 // pred_region
        %s358 = smul.u32 2, %s18
        %p359 = scmp.lt.s32.totalorder %s358, 3
        %s360 = scalar_select %p359, %s358, 3
        %s361 = smul.addr %s360, 8
        %s362 = scalar_lea.vmem %s0, %s361
        %s363 = smul.u32 2, %s18
      $region60: #{transformer_forward.4} parent=55 // pred_fallthru
        _
      // Predicated region
      $region61: #{transformer_forward.4} parent=55 // pred_check
        %p364 = pneg %p64
      $region62: #{transformer_forward.4} parent=55 // pred_check_branch
        %366 = sbr.rel (%p364) target = $region64
      $region63: #{transformer_forward.4} parent=55 // pred_region
        %s367 = smul.u32 2, %s18
        %p368 = scmp.lt.s32.totalorder %s367, 3
        %s369 = scalar_select %p368, %s367, 3
        %s370 = smul.addr %s369, 8
        %s371 = scalar_lea.vmem %s1, %s370
        %s372 = smul.u32 2, %s18
      $region64: #{transformer_forward.4} parent=55 // pred_fallthru
        _
    $region56: #{transformer_forward.4} parent=5 // pred_fallthru
      _
    %p373 = scmp.le.s32.totalorder 1, %s18
    %p374 = scmp.lt.s32.totalorder %s18, 3
    %p375 = pnand %p373, %p374
    %p376 = pneg %p375
    // Predicated region
    $region65: #{transformer_forward.4} parent=5 // pred_check
      _
    $region66: #{transformer_forward.4} parent=5 // pred_check_branch
      %378 = sbr.rel (%p375) target = $region68
    $region67: #{transformer_forward.4} parent=5 // pred_region
      %s379 = ssub.s32 %s18, 1
      %s380 = smul.u32 2, %s23
      %p381 = scmp.lt.s32.totalorder %s380, 3
      %s382 = scalar_select %p381, %s380, 3
      %s383 = smul.addr %s382, 8
      %s384 = scalar_lea.vmem %s0, %s383
      %p385 = pneg %p44
      %p386 = pneg %p41
      %s387 = smul.u32 2, %s23
      %p388 = scmp.lt.s32.totalorder %s387, 3
      %s389 = scalar_select %p388, %s387, 3
      %s390 = smul.addr %s389, 8
      %s391 = scalar_lea.vmem %s1, %s390
      %p392 = pneg %p70
      %p393 = pneg %p67
      %p394 = pneg %p91
      %p395 = pneg %p88
      %p396 = pneg %p112
      %p397 = pneg %p109
      %p398 = pneg %p133
      %p399 = pneg %p130
      %p400 = pneg %p154
      %p401 = pneg %p151
      %p402 = pneg %p175
      %p403 = pneg %p172
      %p404 = pneg %p196
      %p405 = pneg %p193
      %p406 = pneg %p217
      %p407 = pneg %p214
      %p408 = pneg %p238
      %p409 = pneg %p235
      %p410 = pneg %p259
      %p411 = pneg %p256
      %p412 = pneg %p280
      %p413 = pneg %p277
      %p414 = pneg %p306
      %p415 = pneg %p303
      %s416 = smul.u32 2, %s23
      %p417 = scmp.lt.s32.totalorder %s416, 3
      %s418 = scalar_select %p417, %s416, 3
      %s419 = smul.addr %s418, 8
      %s420 = scalar_lea.vmem %s12, %s419
      %s421 = smul.u32 2, %s23
      %p422 = scmp.lt.s32.totalorder %s421, 3
      %s423 = scalar_select %p422, %s421, 3
      %s424 = smul.addr %s423, 8
      %s425 = scalar_lea.vmem %s0, %s424
      %s426 = smul.u32 2, %s23
      %s427 = smul.u32 2, %s23
      %p428 = scmp.lt.s32.totalorder %s427, 3
      %s429 = scalar_select %p428, %s427, 3
      %s430 = smul.addr %s429, 8
      %s431 = scalar_lea.vmem %s1, %s430
      %s432 = smul.u32 2, %s23
      %s433 = smul.u32 2, %s23
      %p434 = scmp.lt.s32.totalorder %s433, 3
      %s435 = scalar_select %p434, %s433, 3
      %s436 = smul.addr %s435, 8
      %s437 = scalar_lea.vmem %s12, %s436
      %s438 = smul.u32 2, %s23
      %v440 = vld [vmem:[%s425] sm:$0xff]
      %v441 = vld [vmem:[%s425 + $0x8] sm:$0xff]
      %v442 = vpack.c.bf16 %v441, %v440
      %v443 = vld [vmem:[%s2] sm:$0xf]
      %v444 = vld [vmem:[%s2 + $0x4] sm:$0xf]
      %v445 = vld [vmem:[%s2 + $0x8] sm:$0xf]
      %v446 = vld [vmem:[%s2 + $0xc] sm:$0xf]
      %v447 = vld [vmem:[%s3] sm:$0x1]
      %v449 = vlaneseq
      %v450 = vshrl.u32 %v449, 7
      %v451 = vsub.s32 0, %v450
      %v452 = vrot.slane %v447, %v451
      %v458 = vunpack.c.l.b16 %v443
      %v459 = vunpack.c.l.b16 %v444
      %v460 = vunpack.c.l.b16 %v445
      %v461 = vunpack.c.l.b16 %v446
      %v462 = vpack.c.b16 %v459, %v458
      %v463 = vpack.c.b16 %v461, %v460
      %vm466 = vcmask 261120
      %v468 = vsel %vm466, %v442, 0
      %470 = vmatprep.subr.bf16.mxu0 0
      %471 = vmatpush1.bf16.msra.mxu0 %v462
      %472 = vmatprep.subr.bf16.mxu0 0
      %473 = vmatpush1.bf16.msra.mxu0 %v463
      %474 = vmatprep.subr.bf16.mxu0 0
      %475 = vmatpush1.bf16.msra.mxu0 0
      %476 = vmatprep.subr.bf16.mxu0 0
      %477 = vmatpush1.bf16.msra.mxu0 0
      %478 = vmatprep.subr.bf16.mxu0 0
      %479 = vmatpush1.bf16.msra.mxu0 0
      %480 = vmatprep.subr.bf16.mxu0 0
      %481 = vmatpush1.bf16.msra.mxu0 0
      %482 = vmatprep.subr.bf16.mxu0 0
      %483 = vmatpush1.bf16.msra.mxu0 0
      %484 = vmatprep.subr.bf16.mxu0 0
      %485 = vmatpush1.bf16.msra.mxu0 0
      %486 = vmatprep.subr.bf16.mxu0 0
      %487 = vmatpush1.bf16.msra.mxu0 0
      %488 = vmatprep.subr.bf16.mxu0 0
      %489 = vmatpush1.bf16.msra.mxu0 0
      %490 = vmatprep.subr.bf16.mxu0 0
      %491 = vmatpush1.bf16.msra.mxu0 0
      %492 = vmatprep.subr.bf16.mxu0 0
      %493 = vmatpush1.bf16.msra.mxu0 0
      %494 = vmatprep.subr.bf16.mxu0 0
      %495 = vmatpush1.bf16.msra.mxu0 0
      %496 = vmatprep.subr.bf16.mxu0 0
      %497 = vmatpush1.bf16.msra.mxu0 0
      %498 = vmatprep.subr.bf16.mxu0 0
      %499 = vmatpush1.bf16.msra.mxu0 0
      %500 = vmatprep.subr.bf16.mxu0 0
      %501 = vmatpush1.bf16.msra.mxu0 0
      %502 = vmatprep.mubr.bf16.mxu0 0
      %503 = vmatmul.mubr.bf16.gmra.mrb[0].mxu0 %v468
      %v504 = vpop.f32.mrb[0].mxu0
      %v505 = vadd.f32 %v452, %v504
      %v506 = vpop.f32.mrb[0].mxu0
      %v507 = vpop.f32.mrb[0].mxu0
      %v508 = vadd.f32 %v452, %v507
      %v509 = vpop.f32.mrb[0].mxu0
      %510 = vdwg.mxu0
      %v511 = vld [vmem:[%s4] sm:$0x1]
      %v512 = vld [vmem:[%s5] sm:$0x1]
      %v513 = vsel %vm466, %v505, 0.0
      %514 = vadd.xlane.f32.xlu0 %v513
      %v515 = vpop.xlane.xlu0 %514
      %v516 = vsel %vm466, %v508, 0.0
      %517 = vadd.xlane.f32.xlu0 %v516
      %v518 = vpop.xlane.xlu0 %517
      %v519 = vrcp.pop 32.0
      %v520 = vmul.f32 %v515, %v519
      %v521 = vmul.f32 %v518, %v519
      %v522 = vsub.f32 %v505, %v520
      %v523 = vsub.f32 %v508, %v521
      %v524 = vmul.f32 %v522, %v522
      %v525 = vmul.f32 %v523, %v523
      %v526 = vsel %vm466, %v524, 0.0
      %527 = vadd.xlane.f32.xlu0 %v526
      %v528 = vpop.xlane.xlu0 %527
      %v529 = vsel %vm466, %v525, 0.0
      %530 = vadd.xlane.f32.xlu0 %v529
      %v531 = vpop.xlane.xlu0 %530
      %v532 = vmul.f32 %v528, %v519
      %v533 = vmul.f32 %v531, %v519
      %v534 = vadd.f32 %v532, 1e-06
      %v535 = vadd.f32 %v533, 1e-06
      %v536 = vrsqrt.pop %v534
      %v537 = vrsqrt.pop %v535
      %v538 = vmul.f32 %v522, %v536
      %v539 = vmul.f32 %v523, %v537
      %v541 = vlaneseq
      %v542 = vshrl.u32 %v541, 7
      %v543 = vsub.s32 0, %v542
      %v544 = vrot.slane %v511, %v543
      %v546 = vmul.f32 %v538, %v544
      %v547 = vmul.f32 %v539, %v544
      %v549 = vlaneseq
      %v550 = vshrl.u32 %v549, 7
      %v551 = vsub.s32 0, %v550
      %v552 = vrot.slane %v512, %v551
      %v554 = vadd.f32 %v546, %v552
      %v555 = vadd.f32 %v547, %v552
      %v556 = vld [vmem:[%s431] sm:$0xff]
      %v557 = vld [vmem:[%s431 + $0x8] sm:$0xff]
      %v558 = vadd.f32 %v554, %v556
      %v559 = vadd.f32 %v555, %v557
      %v560 = vld [vmem:[%s6] sm:$0x1]
      %v561 = vld [vmem:[%s7] sm:$0x1]
      %v562 = vsel %vm466, %v558, 0.0
      %563 = vadd.xlane.f32.xlu0 %v562
      %v564 = vpop.xlane.xlu0 %563
      %v565 = vsel %vm466, %v559, 0.0
      %566 = vadd.xlane.f32.xlu0 %v565
      %v567 = vpop.xlane.xlu0 %566
      %v568 = vmul.f32 %v564, %v519
      %v569 = vmul.f32 %v567, %v519
      %v570 = vsub.f32 %v558, %v568
      %v571 = vsub.f32 %v559, %v569
      %v572 = vmul.f32 %v570, %v570
      %v573 = vmul.f32 %v571, %v571
      %v574 = vsel %vm466, %v572, 0.0
      %575 = vadd.xlane.f32.xlu0 %v574
      %v576 = vpop.xlane.xlu0 %575
      %v577 = vsel %vm466, %v573, 0.0
      %578 = vadd.xlane.f32.xlu0 %v577
      %v579 = vpop.xlane.xlu0 %578
      %v580 = vmul.f32 %v576, %v519
      %v581 = vmul.f32 %v579, %v519
      %v582 = vadd.f32 %v580, 1e-06
      %v583 = vadd.f32 %v581, 1e-06
      %v584 = vrsqrt.pop %v582
      %v585 = vrsqrt.pop %v583
      %v586 = vmul.f32 %v570, %v584
      %v587 = vmul.f32 %v571, %v585
      %v589 = vlaneseq
      %v590 = vshrl.u32 %v589, 7
      %v591 = vsub.s32 0, %v590
      %v592 = vrot.slane %v560, %v591
      %v594 = vmul.f32 %v586, %v592
      %v595 = vmul.f32 %v587, %v592
      %v597 = vlaneseq
      %v598 = vshrl.u32 %v597, 7
      %v599 = vsub.s32 0, %v598
      %v600 = vrot.slane %v561, %v599
      %v602 = vadd.f32 %v594, %v600
      %v603 = vadd.f32 %v595, %v600
      %v604 = vpack.c.bf16 %v603, %v602
      %v605 = vld [vmem:[%s8] sm:$0xf]
      %v606 = vld [vmem:[%s8 + $0x4] sm:$0xf]
      %v607 = vld [vmem:[%s8 + $0x8] sm:$0xf]
      %v608 = vld [vmem:[%s8 + $0xc] sm:$0xf]
      %v609 = vld [vmem:[%s9] sm:$0x1]
      %v611 = vlaneseq
      %v612 = vshrl.u32 %v611, 7
      %v613 = vsub.s32 0, %v612
      %v614 = vrot.slane %v609, %v613
      %v620 = vunpack.c.l.b16 %v605
      %v621 = vunpack.c.l.b16 %v606
      %v622 = vunpack.c.l.b16 %v607
      %v623 = vunpack.c.l.b16 %v608
      %v624 = vpack.c.b16 %v621, %v620
      %v625 = vpack.c.b16 %v623, %v622
      %v629 = vsel %vm466, %v604, 0
      %631 = vmatprep.subr.bf16.mxu0 0
      %632 = vmatpush1.bf16.msra.mxu0 %v624
      %633 = vmatprep.subr.bf16.mxu0 0
      %634 = vmatpush1.bf16.msra.mxu0 %v625
      %635 = vmatprep.subr.bf16.mxu0 0
      %636 = vmatpush1.bf16.msra.mxu0 0
      %637 = vmatprep.subr.bf16.mxu0 0
      %638 = vmatpush1.bf16.msra.mxu0 0
      %639 = vmatprep.subr.bf16.mxu0 0
      %640 = vmatpush1.bf16.msra.mxu0 0
      %641 = vmatprep.subr.bf16.mxu0 0
      %642 = vmatpush1.bf16.msra.mxu0 0
      %643 = vmatprep.subr.bf16.mxu0 0
      %644 = vmatpush1.bf16.msra.mxu0 0
      %645 = vmatprep.subr.bf16.mxu0 0
      %646 = vmatpush1.bf16.msra.mxu0 0
      %647 = vmatprep.subr.bf16.mxu0 0
      %648 = vmatpush1.bf16.msra.mxu0 0
      %649 = vmatprep.subr.bf16.mxu0 0
      %650 = vmatpush1.bf16.msra.mxu0 0
      %651 = vmatprep.subr.bf16.mxu0 0
      %652 = vmatpush1.bf16.msra.mxu0 0
      %653 = vmatprep.subr.bf16.mxu0 0
      %654 = vmatpush1.bf16.msra.mxu0 0
      %655 = vmatprep.subr.bf16.mxu0 0
      %656 = vmatpush1.bf16.msra.mxu0 0
      %657 = vmatprep.subr.bf16.mxu0 0
      %658 = vmatpush1.bf16.msra.mxu0 0
      %659 = vmatprep.subr.bf16.mxu0 0
      %660 = vmatpush1.bf16.msra.mxu0 0
      %661 = vmatprep.subr.bf16.mxu0 0
      %662 = vmatpush1.bf16.msra.mxu0 0
      %663 = vmatprep.mubr.bf16.mxu0 0
      %664 = vmatmul.mubr.bf16.gmra.mrb[0].mxu0 %v629
      %v665 = vpop.f32.mrb[0].mxu0
      %v666 = vadd.f32 %v614, %v665
      %v667 = vpop.f32.mrb[0].mxu0
      %v668 = vpop.f32.mrb[0].mxu0
      %v669 = vadd.f32 %v614, %v668
      %v670 = vpop.f32.mrb[0].mxu0
      %671 = vdwg.mxu0
      %v672 = vmul.f32 %v666, 0.5
      %v673 = vmul.f32 %v669, 0.5
      %v674 = vmul.f32 %v666, 0.70710677
      %v675 = vmul.f32 %v669, 0.70710677
      %v676 = verf.f32.pop %v674
      %v677 = verf.f32.pop %v675
      %v678 = vadd.f32 %v676, 1.0
      %v679 = vadd.f32 %v677, 1.0
      %v680 = vmul.f32 %v672, %v678
      %v681 = vmul.f32 %v673, %v679
      %v682 = vpack.c.bf16 %v681, %v680
      %v683 = vld [vmem:[%s10] sm:$0xf]
      %v684 = vld [vmem:[%s10 + $0x4] sm:$0xf]
      %v685 = vld [vmem:[%s10 + $0x8] sm:$0xf]
      %v686 = vld [vmem:[%s10 + $0xc] sm:$0xf]
      %v687 = vld [vmem:[%s10 + $0x10] sm:$0xf]
      %v688 = vld [vmem:[%s10 + $0x14] sm:$0xf]
      %v689 = vld [vmem:[%s10 + $0x18] sm:$0xf]
      %v690 = vld [vmem:[%s10 + $0x1c] sm:$0xf]
      %v691 = vld [vmem:[%s11] sm:$0x1]
      %v693 = vlaneseq
      %v694 = vshrl.u32 %v693, 7
      %v695 = vsub.s32 0, %v694
      %v696 = vrot.slane %v691, %v695
      %v706 = vunpack.c.l.b16 %v683
      %v707 = vunpack.c.l.b16 %v684
      %v708 = vunpack.c.l.b16 %v685
      %v709 = vunpack.c.l.b16 %v686
      %v710 = vunpack.c.l.b16 %v687
      %v711 = vunpack.c.l.b16 %v688
      %v712 = vunpack.c.l.b16 %v689
      %v713 = vunpack.c.l.b16 %v690
      %v714 = vpack.c.b16 %v707, %v706
      %v715 = vpack.c.b16 %v709, %v708
      %v716 = vpack.c.b16 %v711, %v710
      %v717 = vpack.c.b16 %v713, %v712
      %vm722 = vcmask 523264
      %v724 = vsel %vm722, %v682, 0
      %726 = vmatprep.subr.bf16.mxu0 0
      %727 = vmatpush1.bf16.msra.mxu0 %v714
      %728 = vmatprep.subr.bf16.mxu0 0
      %729 = vmatpush1.bf16.msra.mxu0 %v715
      %730 = vmatprep.subr.bf16.mxu0 0
      %731 = vmatpush1.bf16.msra.mxu0 %v716
      %732 = vmatprep.subr.bf16.mxu0 0
      %733 = vmatpush1.bf16.msra.mxu0 %v717
      %734 = vmatprep.subr.bf16.mxu0 0
      %735 = vmatpush1.bf16.msra.mxu0 0
      %736 = vmatprep.subr.bf16.mxu0 0
      %737 = vmatpush1.bf16.msra.mxu0 0
      %738 = vmatprep.subr.bf16.mxu0 0
      %739 = vmatpush1.bf16.msra.mxu0 0
      %740 = vmatprep.subr.bf16.mxu0 0
      %741 = vmatpush1.bf16.msra.mxu0 0
      %742 = vmatprep.subr.bf16.mxu0 0
      %743 = vmatpush1.bf16.msra.mxu0 0
      %744 = vmatprep.subr.bf16.mxu0 0
      %745 = vmatpush1.bf16.msra.mxu0 0
      %746 = vmatprep.subr.bf16.mxu0 0
      %747 = vmatpush1.bf16.msra.mxu0 0
      %748 = vmatprep.subr.bf16.mxu0 0
      %749 = vmatpush1.bf16.msra.mxu0 0
      %750 = vmatprep.subr.bf16.mxu0 0
      %751 = vmatpush1.bf16.msra.mxu0 0
      %752 = vmatprep.subr.bf16.mxu0 0
      %753 = vmatpush1.bf16.msra.mxu0 0
      %754 = vmatprep.subr.bf16.mxu0 0
      %755 = vmatpush1.bf16.msra.mxu0 0
      %756 = vmatprep.subr.bf16.mxu0 0
      %757 = vmatpush1.bf16.msra.mxu0 0
      %758 = vmatprep.mubr.bf16.mxu0 0
      %759 = vmatmul.mubr.bf16.gmra.mrb[0].mxu0 %v724
      %v760 = vpop.f32.mrb[0].mxu0
      %v761 = vadd.f32 %v696, %v760
      %v762 = vpop.f32.mrb[0].mxu0
      %v763 = vpop.f32.mrb[0].mxu0
      %v764 = vadd.f32 %v696, %v763
      %v765 = vpop.f32.mrb[0].mxu0
      %766 = vdwg.mxu0
      %v767 = vadd.f32 %v558, %v761
      %v768 = vadd.f32 %v559, %v764
      %769 = vst.msk [vmem:[%s437] sm:$0xff] %vm466, %v767
      %770 = vst.msk [vmem:[%s437 + $0x8] sm:$0xff] %vm466, %v768
      %s771 = smul.u32 2, %s23
      %p772 = scmp.lt.s32.totalorder %s771, 3
      %s773 = scalar_select %p772, %s771, 3
      %s774 = smul.addr %s773, 8
      %s775 = scalar_lea.vmem %s12, %s774
      // Predicated region
      $region69: #{transformer_forward.4} parent=67 // pred_check
        %p776 = pneg %p303
      $region70: #{transformer_forward.4} parent=67 // pred_check_branch
        %778 = sbr.rel (%p776) target = $region72
      $region71: #{transformer_forward.4} parent=67 // pred_region
        %s779 = smul.u32 2, %s23
      $region72: #{transformer_forward.4} parent=67 // pred_fallthru
        _
    $region68: #{transformer_forward.4} parent=5 // pred_fallthru
      _
    %p780 = scmp.le.s32.totalorder 2, %s18
    // Predicated region
    $region73: #{transformer_forward.4} parent=5 // pred_check
      %p781 = pneg %p780
    $region74: #{transformer_forward.4} parent=5 // pred_check_branch
      %783 = sbr.rel (%p781) target = $region76
    $region75: #{transformer_forward.4} parent=5 // pred_region
      %s784 = ssub.s32 %s18, 2
      // Predicated region
      $region77: #{transformer_forward.4} parent=75 // pred_check
        %p785 = pneg %p309
      $region78: #{transformer_forward.4} parent=75 // pred_check_branch
        %787 = sbr.rel (%p785) target = $region80
      $region79: #{transformer_forward.4} parent=75 // pred_region
        %s788 = smul.u32 2, %s24
        %p789 = scmp.lt.s32.totalorder %s788, 3
        %s790 = scalar_select %p789, %s788, 3
        %s791 = smul.addr %s790, 8
        %s792 = scalar_lea.vmem %s12, %s791
      $region80: #{transformer_forward.4} parent=75 // pred_fallthru
        _
    $region76: #{transformer_forward.4} parent=5 // pred_fallthru
      _
  $region6: #{transformer_forward.4} parent=0 // loop_footer
    %s22 = sadd.s32 1, %s18
  $region7: #{transformer_forward.4} parent=0 // loop_footer_branch
    %17 = sbr.rel target = $region3
  $region8: #{transformer_forward.4} parent=0 // loop_exit
    _

// kernel: transformer_forward.3
$region0: #{transformer_forward.3}
  #allocation0 [shape = 'u32[]', space=smem, size = 0x4, offset = 0x4, fixed_abs, tag = 'smem constant byte address 0x4 - core index']
  #allocation1 [shape = 'u32[144,128]{1,0:T(1,128)}', space=vmem, size = 0x12000, scoped, tag = 'internal scratch']
  %s0 = inlined_call_operand.vmem [shape: f32[32,32], index: 0, kind: input, shape index: {}]
  %s1 = inlined_call_operand.vmem [shape: bf16[2,32,96], index: 1, kind: input, shape index: {}]
  %s2 = inlined_call_operand.vmem [shape: f32[2,1,96], index: 2, kind: input, shape index: {}]
  %s3 = inlined_call_operand.vmem [shape: bf16[2,32,32], index: 3, kind: input, shape index: {}]
  %s4 = inlined_call_operand.vmem [shape: f32[2,1,32], index: 4, kind: input, shape index: {}]
  %s5 = inlined_call_operand.vmem [shape: f32[2,1,32], index: 5, kind: input, shape index: {}]
  %s6 = inlined_call_operand.vmem [shape: f32[2,1,32], index: 6, kind: input, shape index: {}]
  %s7 = inlined_call_operand.vmem [shape: bf16[2,32,64], index: 7, kind: input, shape index: {}]
  %s8 = inlined_call_operand.vmem [shape: f32[2,1,64], index: 8, kind: input, shape index: {}]
  %s9 = inlined_call_operand.vmem [shape: bf16[2,64,32], index: 9, kind: input, shape index: {}]
  %s10 = inlined_call_operand.vmem [shape: f32[2,1,32], index: 10, kind: input, shape index: {}]
  %s11 = inlined_call_operand.vmem [shape: f32[2,1,32], index: 11, kind: input, shape index: {}]
  %s12 = inlined_call_operand.vmem [shape: f32[2,1,32], index: 12, kind: input, shape index: {}]
  %s13 = inlined_call_operand.vmem [shape: f32[32,32], index: 13, kind: output, shape index: {}]
  %s14 = sld [smem:[#allocation0]]
  $region89: #{transformer_forward.3} parent=0
    _
  %s16 = ssub.s32 1, %s14
  %s17 = scalar_select 0, %s16, %s14
  loop: start=0, step=1, limit=4
  $region2: #{transformer_forward.3} parent=0 // loop_pre_header
    _
  $region3: #{transformer_forward.3} parent=0 // loop_header
    %s19 = sphi 0, %s23
    %p20 = scmp.ge.s32.totalorder %s19, 4
    %s27 = sphi 0, %s27
    %s29 = sphi 0, %s27
    %s30 = sphi 0, %s29
    %s44 = sphi 0, %s30
    %s50 = sphi 0, %s52
    %s53 = sphi 0, %s50
    %s54 = sphi 0, %s53
    %s70 = sphi 0, %s54
    %s76 = sphi 0, %s78
    %s79 = sphi 0, %s76
    %s80 = sphi 0, %s79
    %s96 = sphi 0, %s80
    %s102 = sphi 0, %s104
    %s105 = sphi 0, %s102
    %s106 = sphi 0, %s105
    %s122 = sphi 0, %s106
    %s128 = sphi 0, %s130
    %s131 = sphi 0, %s128
    %s132 = sphi 0, %s131
    %s148 = sphi 0, %s132
    %s154 = sphi 0, %s156
    %s157 = sphi 0, %s154
    %s158 = sphi 0, %s157
    %s174 = sphi 0, %s158
    %s180 = sphi 0, %s182
    %s183 = sphi 0, %s180
    %s184 = sphi 0, %s183
    %s200 = sphi 0, %s184
    %s206 = sphi 0, %s208
    %s209 = sphi 0, %s206
    %s210 = sphi 0, %s209
    %s226 = sphi 0, %s210
    %s232 = sphi 0, %s234
    %s235 = sphi 0, %s232
    %s236 = sphi 0, %s235
    %s252 = sphi 0, %s236
    %s258 = sphi 0, %s260
    %s261 = sphi 0, %s258
    %s262 = sphi 0, %s261
    %s278 = sphi 0, %s262
    %s284 = sphi 0, %s286
    %s287 = sphi 0, %s284
    %s288 = sphi 0, %s287
    %s304 = sphi 0, %s288
    %s310 = sphi 0, %s312
    %s313 = sphi 0, %s310
    %s314 = sphi 0, %s313
    %s330 = sphi 0, %s314
    %s336 = sphi 0, %s338
    %s339 = sphi 0, %s336
    %s340 = sphi 0, %s339
    %s356 = sphi 0, %s340
    %s360 = sphi 0, %s360
    %s362 = sphi 0, %s360
    %s363 = sphi 0, %s362
    %s377 = sphi 0, %s363
  $region4: #{transformer_forward.3} parent=0 // loop_header_branch
    %22 = sbr.rel (%p20) target = $region8
  $region5: #{transformer_forward.3} parent=0 // loop_body
    %s24 = ssub.s32 %s19, 1
    %s25 = ssub.s32 %s19, 2
    %s26 = sadd.s32 %s19, 1
    %s28 = sadd.s32 %s27, 1
    %p31 = scmp.eq.s32.totalorder %s19, 1
    %p32 = scmp.ne.s32.totalorder %s27, %s29
    %p33 = scmp.eq.s32.totalorder %s19, 0
    %p34 = por %p32, %p33
    %p35 = scmp.ne.s32.totalorder %s27, %s29
    %p36 = scmp.eq.s32.totalorder %s24, 1
    %p37 = por %p35, %p36
    %p38 = scmp.ne.s32.totalorder %s29, %s30
    %p39 = scmp.eq.s32.totalorder %s24, 0
    %p40 = por %p38, %p39
    %p41 = scmp.ne.s32.totalorder %s29, %s30
    %p42 = scmp.eq.s32.totalorder %s25, 1
    %p43 = por %p41, %p42
    %p45 = scmp.ne.s32.totalorder %s30, %s44
    %p46 = scmp.eq.s32.totalorder %s25, 0
    %p47 = por %p45, %p46
    %s48 = ssub.s32 %s19, %s26
    %p49 = scmp.eq.s32.totalorder %s48, 0
    %s51 = sadd.s32 %s50, 1
    %s52 = scalar_select %p49, %s50, %s51
    %p55 = pneg %p49
    %p56 = scmp.eq.s32.totalorder %s19, 1
    %p57 = por %p55, %p56
    %p58 = scmp.ne.s32.totalorder %s50, %s53
    %p59 = scmp.eq.s32.totalorder %s19, 0
    %p60 = por %p58, %p59
    %p61 = scmp.ne.s32.totalorder %s50, %s53
    %p62 = scmp.eq.s32.totalorder %s24, 1
    %p63 = por %p61, %p62
    %p64 = scmp.ne.s32.totalorder %s53, %s54
    %p65 = scmp.eq.s32.totalorder %s24, 0
    %p66 = por %p64, %p65
    %p67 = scmp.ne.s32.totalorder %s53, %s54
    %p68 = scmp.eq.s32.totalorder %s25, 1
    %p69 = por %p67, %p68
    %p71 = scmp.ne.s32.totalorder %s54, %s70
    %p72 = scmp.eq.s32.totalorder %s25, 0
    %p73 = por %p71, %p72
    %s74 = ssub.s32 %s19, %s26
    %p75 = scmp.eq.s32.totalorder %s74, 0
    %s77 = sadd.s32 %s76, 1
    %s78 = scalar_select %p75, %s76, %s77
    %p81 = pneg %p75
    %p82 = scmp.eq.s32.totalorder %s19, 1
    %p83 = por %p81, %p82
    %p84 = scmp.ne.s32.totalorder %s76, %s79
    %p85 = scmp.eq.s32.totalorder %s19, 0
    %p86 = por %p84, %p85
    %p87 = scmp.ne.s32.totalorder %s76, %s79
    %p88 = scmp.eq.s32.totalorder %s24, 1
    %p89 = por %p87, %p88
    %p90 = scmp.ne.s32.totalorder %s79, %s80
    %p91 = scmp.eq.s32.totalorder %s24, 0
    %p92 = por %p90, %p91
    %p93 = scmp.ne.s32.totalorder %s79, %s80
    %p94 = scmp.eq.s32.totalorder %s25, 1
    %p95 = por %p93, %p94
    %p97 = scmp.ne.s32.totalorder %s80, %s96
    %p98 = scmp.eq.s32.totalorder %s25, 0
    %p99 = por %p97, %p98
    %s100 = ssub.s32 %s19, %s26
    %p101 = scmp.eq.s32.totalorder %s100, 0
    %s103 = sadd.s32 %s102, 1
    %s104 = scalar_select %p101, %s102, %s103
    %p107 = pneg %p101
    %p108 = scmp.eq.s32.totalorder %s19, 1
    %p109 = por %p107, %p108
    %p110 = scmp.ne.s32.totalorder %s102, %s105
    %p111 = scmp.eq.s32.totalorder %s19, 0
    %p112 = por %p110, %p111
    %p113 = scmp.ne.s32.totalorder %s102, %s105
    %p114 = scmp.eq.s32.totalorder %s24, 1
    %p115 = por %p113, %p114
    %p116 = scmp.ne.s32.totalorder %s105, %s106
    %p117 = scmp.eq.s32.totalorder %s24, 0
    %p118 = por %p116, %p117
    %p119 = scmp.ne.s32.totalorder %s105, %s106
    %p120 = scmp.eq.s32.totalorder %s25, 1
    %p121 = por %p119, %p120
    %p123 = scmp.ne.s32.totalorder %s106, %s122
    %p124 = scmp.eq.s32.totalorder %s25, 0
    %p125 = por %p123, %p124
    %s126 = ssub.s32 %s19, %s26
    %p127 = scmp.eq.s32.totalorder %s126, 0
    %s129 = sadd.s32 %s128, 1
    %s130 = scalar_select %p127, %s128, %s129
    %p133 = pneg %p127
    %p134 = scmp.eq.s32.totalorder %s19, 1
    %p135 = por %p133, %p134
    %p136 = scmp.ne.s32.totalorder %s128, %s131
    %p137 = scmp.eq.s32.totalorder %s19, 0
    %p138 = por %p136, %p137
    %p139 = scmp.ne.s32.totalorder %s128, %s131
    %p140 = scmp.eq.s32.totalorder %s24, 1
    %p141 = por %p139, %p140
    %p142 = scmp.ne.s32.totalorder %s131, %s132
    %p143 = scmp.eq.s32.totalorder %s24, 0
    %p144 = por %p142, %p143
    %p145 = scmp.ne.s32.totalorder %s131, %s132
    %p146 = scmp.eq.s32.totalorder %s25, 1
    %p147 = por %p145, %p146
    %p149 = scmp.ne.s32.totalorder %s132, %s148
    %p150 = scmp.eq.s32.totalorder %s25, 0
    %p151 = por %p149, %p150
    %s152 = ssub.s32 %s19, %s26
    %p153 = scmp.eq.s32.totalorder %s152, 0
    %s155 = sadd.s32 %s154, 1
    %s156 = scalar_select %p153, %s154, %s155
    %p159 = pneg %p153
    %p160 = scmp.eq.s32.totalorder %s19, 1
    %p161 = por %p159, %p160
    %p162 = scmp.ne.s32.totalorder %s154, %s157
    %p163 = scmp.eq.s32.totalorder %s19, 0
    %p164 = por %p162, %p163
    %p165 = scmp.ne.s32.totalorder %s154, %s157
    %p166 = scmp.eq.s32.totalorder %s24, 1
    %p167 = por %p165, %p166
    %p168 = scmp.ne.s32.totalorder %s157, %s158
    %p169 = scmp.eq.s32.totalorder %s24, 0
    %p170 = por %p168, %p169
    %p171 = scmp.ne.s32.totalorder %s157, %s158
    %p172 = scmp.eq.s32.totalorder %s25, 1
    %p173 = por %p171, %p172
    %p175 = scmp.ne.s32.totalorder %s158, %s174
    %p176 = scmp.eq.s32.totalorder %s25, 0
    %p177 = por %p175, %p176
    %s178 = ssub.s32 %s19, %s26
    %p179 = scmp.eq.s32.totalorder %s178, 0
    %s181 = sadd.s32 %s180, 1
    %s182 = scalar_select %p179, %s180, %s181
    %p185 = pneg %p179
    %p186 = scmp.eq.s32.totalorder %s19, 1
    %p187 = por %p185, %p186
    %p188 = scmp.ne.s32.totalorder %s180, %s183
    %p189 = scmp.eq.s32.totalorder %s19, 0
    %p190 = por %p188, %p189
    %p191 = scmp.ne.s32.totalorder %s180, %s183
    %p192 = scmp.eq.s32.totalorder %s24, 1
    %p193 = por %p191, %p192
    %p194 = scmp.ne.s32.totalorder %s183, %s184
    %p195 = scmp.eq.s32.totalorder %s24, 0
    %p196 = por %p194, %p195
    %p197 = scmp.ne.s32.totalorder %s183, %s184
    %p198 = scmp.eq.s32.totalorder %s25, 1
    %p199 = por %p197, %p198
    %p201 = scmp.ne.s32.totalorder %s184, %s200
    %p202 = scmp.eq.s32.totalorder %s25, 0
    %p203 = por %p201, %p202
    %s204 = ssub.s32 %s19, %s26
    %p205 = scmp.eq.s32.totalorder %s204, 0
    %s207 = sadd.s32 %s206, 1
    %s208 = scalar_select %p205, %s206, %s207
    %p211 = pneg %p205
    %p212 = scmp.eq.s32.totalorder %s19, 1
    %p213 = por %p211, %p212
    %p214 = scmp.ne.s32.totalorder %s206, %s209
    %p215 = scmp.eq.s32.totalorder %s19, 0
    %p216 = por %p214, %p215
    %p217 = scmp.ne.s32.totalorder %s206, %s209
    %p218 = scmp.eq.s32.totalorder %s24, 1
    %p219 = por %p217, %p218
    %p220 = scmp.ne.s32.totalorder %s209, %s210
    %p221 = scmp.eq.s32.totalorder %s24, 0
    %p222 = por %p220, %p221
    %p223 = scmp.ne.s32.totalorder %s209, %s210
    %p224 = scmp.eq.s32.totalorder %s25, 1
    %p225 = por %p223, %p224
    %p227 = scmp.ne.s32.totalorder %s210, %s226
    %p228 = scmp.eq.s32.totalorder %s25, 0
    %p229 = por %p227, %p228
    %s230 = ssub.s32 %s19, %s26
    %p231 = scmp.eq.s32.totalorder %s230, 0
    %s233 = sadd.s32 %s232, 1
    %s234 = scalar_select %p231, %s232, %s233
    %p237 = pneg %p231
    %p238 = scmp.eq.s32.totalorder %s19, 1
    %p239 = por %p237, %p238
    %p240 = scmp.ne.s32.totalorder %s232, %s235
    %p241 = scmp.eq.s32.totalorder %s19, 0
    %p242 = por %p240, %p241
    %p243 = scmp.ne.s32.totalorder %s232, %s235
    %p244 = scmp.eq.s32.totalorder %s24, 1
    %p245 = por %p243, %p244
    %p246 = scmp.ne.s32.totalorder %s235, %s236
    %p247 = scmp.eq.s32.totalorder %s24, 0
    %p248 = por %p246, %p247
    %p249 = scmp.ne.s32.totalorder %s235, %s236
    %p250 = scmp.eq.s32.totalorder %s25, 1
    %p251 = por %p249, %p250
    %p253 = scmp.ne.s32.totalorder %s236, %s252
    %p254 = scmp.eq.s32.totalorder %s25, 0
    %p255 = por %p253, %p254
    %s256 = ssub.s32 %s19, %s26
    %p257 = scmp.eq.s32.totalorder %s256, 0
    %s259 = sadd.s32 %s258, 1
    %s260 = scalar_select %p257, %s258, %s259
    %p263 = pneg %p257
    %p264 = scmp.eq.s32.totalorder %s19, 1
    %p265 = por %p263, %p264
    %p266 = scmp.ne.s32.totalorder %s258, %s261
    %p267 = scmp.eq.s32.totalorder %s19, 0
    %p268 = por %p266, %p267
    %p269 = scmp.ne.s32.totalorder %s258, %s261
    %p270 = scmp.eq.s32.totalorder %s24, 1
    %p271 = por %p269, %p270
    %p272 = scmp.ne.s32.totalorder %s261, %s262
    %p273 = scmp.eq.s32.totalorder %s24, 0
    %p274 = por %p272, %p273
    %p275 = scmp.ne.s32.totalorder %s261, %s262
    %p276 = scmp.eq.s32.totalorder %s25, 1
    %p277 = por %p275, %p276
    %p279 = scmp.ne.s32.totalorder %s262, %s278
    %p280 = scmp.eq.s32.totalorder %s25, 0
    %p281 = por %p279, %p280
    %s282 = ssub.s32 %s19, %s26
    %p283 = scmp.eq.s32.totalorder %s282, 0
    %s285 = sadd.s32 %s284, 1
    %s286 = scalar_select %p283, %s284, %s285
    %p289 = pneg %p283
    %p290 = scmp.eq.s32.totalorder %s19, 1
    %p291 = por %p289, %p290
    %p292 = scmp.ne.s32.totalorder %s284, %s287
    %p293 = scmp.eq.s32.totalorder %s19, 0
    %p294 = por %p292, %p293
    %p295 = scmp.ne.s32.totalorder %s284, %s287
    %p296 = scmp.eq.s32.totalorder %s24, 1
    %p297 = por %p295, %p296
    %p298 = scmp.ne.s32.totalorder %s287, %s288
    %p299 = scmp.eq.s32.totalorder %s24, 0
    %p300 = por %p298, %p299
    %p301 = scmp.ne.s32.totalorder %s287, %s288
    %p302 = scmp.eq.s32.totalorder %s25, 1
    %p303 = por %p301, %p302
    %p305 = scmp.ne.s32.totalorder %s288, %s304
    %p306 = scmp.eq.s32.totalorder %s25, 0
    %p307 = por %p305, %p306
    %s308 = ssub.s32 %s19, %s26
    %p309 = scmp.eq.s32.totalorder %s308, 0
    %s311 = sadd.s32 %s310, 1
    %s312 = scalar_select %p309, %s310, %s311
    %p315 = pneg %p309
    %p316 = scmp.eq.s32.totalorder %s19, 1
    %p317 = por %p315, %p316
    %p318 = scmp.ne.s32.totalorder %s310, %s313
    %p319 = scmp.eq.s32.totalorder %s19, 0
    %p320 = por %p318, %p319
    %p321 = scmp.ne.s32.totalorder %s310, %s313
    %p322 = scmp.eq.s32.totalorder %s24, 1
    %p323 = por %p321, %p322
    %p324 = scmp.ne.s32.totalorder %s313, %s314
    %p325 = scmp.eq.s32.totalorder %s24, 0
    %p326 = por %p324, %p325
    %p327 = scmp.ne.s32.totalorder %s313, %s314
    %p328 = scmp.eq.s32.totalorder %s25, 1
    %p329 = por %p327, %p328
    %p331 = scmp.ne.s32.totalorder %s314, %s330
    %p332 = scmp.eq.s32.totalorder %s25, 0
    %p333 = por %p331, %p332
    %s334 = ssub.s32 %s19, %s26
    %p335 = scmp.eq.s32.totalorder %s334, 0
    %s337 = sadd.s32 %s336, 1
    %s338 = scalar_select %p335, %s336, %s337
    %p341 = pneg %p335
    %p342 = scmp.eq.s32.totalorder %s19, 1
    %p343 = por %p341, %p342
    %p344 = scmp.ne.s32.totalorder %s336, %s339
    %p345 = scmp.eq.s32.totalorder %s19, 0
    %p346 = por %p344, %p345
    %p347 = scmp.ne.s32.totalorder %s336, %s339
    %p348 = scmp.eq.s32.totalorder %s24, 1
    %p349 = por %p347, %p348
    %p350 = scmp.ne.s32.totalorder %s339, %s340
    %p351 = scmp.eq.s32.totalorder %s24, 0
    %p352 = por %p350, %p351
    %p353 = scmp.ne.s32.totalorder %s339, %s340
    %p354 = scmp.eq.s32.totalorder %s25, 1
    %p355 = por %p353, %p354
    %p357 = scmp.ne.s32.totalorder %s340, %s356
    %p358 = scmp.eq.s32.totalorder %s25, 0
    %p359 = por %p357, %p358
    %s361 = sadd.s32 %s360, 1
    %p364 = scmp.eq.s32.totalorder %s19, 1
    %p365 = scmp.ne.s32.totalorder %s360, %s362
    %p366 = scmp.eq.s32.totalorder %s19, 0
    %p367 = por %p365, %p366
    %p368 = scmp.ne.s32.totalorder %s360, %s362
    %p369 = scmp.eq.s32.totalorder %s24, 1
    %p370 = por %p368, %p369
    %p371 = scmp.ne.s32.totalorder %s362, %s363
    %p372 = scmp.eq.s32.totalorder %s24, 0
    %p373 = por %p371, %p372
    %p374 = scmp.ne.s32.totalorder %s362, %s363
    %p375 = scmp.eq.s32.totalorder %s25, 1
    %p376 = por %p374, %p375
    %p378 = scmp.ne.s32.totalorder %s363, %s377
    %p379 = scmp.eq.s32.totalorder %s25, 0
    %p380 = por %p378, %p379
    %p381 = scmp.le.s32.totalorder 1, %s19
    %p382 = scmp.lt.s32.totalorder %s19, 3
    %p383 = pnand %p381, %p382
    %p384 = pneg %p383
    // Predicated region
    $region9: #{transformer_forward.3} parent=5 // pred_check
      _
    $region10: #{transformer_forward.3} parent=5 // pred_check_branch
      %386 = sbr.rel (%p383) target = $region12
    $region11: #{transformer_forward.3} parent=5 // pred_region
      %s387 = ssub.s32 %s19, 1
      // Predicated region
      $region13: #{transformer_forward.3} parent=11 // pred_check
        %p388 = pneg %p40
      $region14: #{transformer_forward.3} parent=11 // pred_check_branch
        %390 = sbr.rel (%p388) target = $region16
      $region15: #{transformer_forward.3} parent=11 // pred_region
        _
      $region16: #{transformer_forward.3} parent=11 // pred_fallthru
        _
    $region12: #{transformer_forward.3} parent=5 // pred_fallthru
      _
    %p391 = scmp.lt.s32.totalorder %s19, 2
    // Predicated region
    $region17: #{transformer_forward.3} parent=5 // pred_check
      %p392 = pneg %p391
    $region18: #{transformer_forward.3} parent=5 // pred_check_branch
      %394 = sbr.rel (%p392) target = $region20
    $region19: #{transformer_forward.3} parent=5 // pred_region
      // Predicated region
      $region21: #{transformer_forward.3} parent=19 // pred_check
        %p395 = pneg %p60
      $region22: #{transformer_forward.3} parent=19 // pred_check_branch
        %397 = sbr.rel (%p395) target = $region24
      $region23: #{transformer_forward.3} parent=19 // pred_region
        %p398 = scmp.lt.s32.totalorder %s19, 1
        %s399 = scalar_select %p398, %s19, 1
        %s400 = smul.addr %s399, 4
        %s401 = smul.addr %s400, 4
        %s402 = scalar_lea.vmem %s1, %s401
      $region24: #{transformer_forward.3} parent=19 // pred_fallthru
        _
      // Predicated region
      $region25: #{transformer_forward.3} parent=19 // pred_check
        %p403 = pneg %p86
      $region26: #{transformer_forward.3} parent=19 // pred_check_branch
        %405 = sbr.rel (%p403) target = $region28
      $region27: #{transformer_forward.3} parent=19 // pred_region
        %p406 = scmp.lt.s32.totalorder %s19, 1
        %s407 = scalar_select %p406, %s19, 1
        %s408 = scalar_lea.vmem %s2, %s407
      $region28: #{transformer_forward.3} parent=19 // pred_fallthru
        _
      // Predicated region
      $region29: #{transformer_forward.3} parent=19 // pred_check
        %p409 = pneg %p112
      $region30: #{transformer_forward.3} parent=19 // pred_check_branch
        %411 = sbr.rel (%p409) target = $region32
      $region31: #{transformer_forward.3} parent=19 // pred_region
        %p412 = scmp.lt.s32.totalorder %s19, 1
        %s413 = scalar_select %p412, %s19, 1
        %s414 = smul.addr %s413, 4
        %s415 = smul.addr %s414, 4
        %s416 = scalar_lea.vmem %s3, %s415
      $region32: #{transformer_forward.3} parent=19 // pred_fallthru
        _
      // Predicated region
      $region33: #{transformer_forward.3} parent=19 // pred_check
        %p417 = pneg %p138
      $region34: #{transformer_forward.3} parent=19 // pred_check_branch
        %419 = sbr.rel (%p417) target = $region36
      $region35: #{transformer_forward.3} parent=19 // pred_region
        %p420 = scmp.lt.s32.totalorder %s19, 1
        %s421 = scalar_select %p420, %s19, 1
        %s422 = scalar_lea.vmem %s4, %s421
      $region36: #{transformer_forward.3} parent=19 // pred_fallthru
        _
      // Predicated region
      $region37: #{transformer_forward.3} parent=19 // pred_check
        %p423 = pneg %p164
      $region38: #{transformer_forward.3} parent=19 // pred_check_branch
        %425 = sbr.rel (%p423) target = $region40
      $region39: #{transformer_forward.3} parent=19 // pred_region
        %p426 = scmp.lt.s32.totalorder %s19, 1
        %s427 = scalar_select %p426, %s19, 1
        %s428 = scalar_lea.vmem %s5, %s427
      $region40: #{transformer_forward.3} parent=19 // pred_fallthru
        _
      // Predicated region
      $region41: #{transformer_forward.3} parent=19 // pred_check
        %p429 = pneg %p190
      $region42: #{transformer_forward.3} parent=19 // pred_check_branch
        %431 = sbr.rel (%p429) target = $region44
      $region43: #{transformer_forward.3} parent=19 // pred_region
        %p432 = scmp.lt.s32.totalorder %s19, 1
        %s433 = scalar_select %p432, %s19, 1
        %s434 = scalar_lea.vmem %s6, %s433
      $region44: #{transformer_forward.3} parent=19 // pred_fallthru
        _
      // Predicated region
      $region45: #{transformer_forward.3} parent=19 // pred_check
        %p435 = pneg %p216
      $region46: #{transformer_forward.3} parent=19 // pred_check_branch
        %437 = sbr.rel (%p435) target = $region48
      $region47: #{transformer_forward.3} parent=19 // pred_region
        %p438 = scmp.lt.s32.totalorder %s19, 1
        %s439 = scalar_select %p438, %s19, 1
        %s440 = smul.addr %s439, 4
        %s441 = smul.addr %s440, 4
        %s442 = scalar_lea.vmem %s7, %s441
      $region48: #{transformer_forward.3} parent=19 // pred_fallthru
        _
      // Predicated region
      $region49: #{transformer_forward.3} parent=19 // pred_check
        %p443 = pneg %p242
      $region50: #{transformer_forward.3} parent=19 // pred_check_branch
        %445 = sbr.rel (%p443) target = $region52
      $region51: #{transformer_forward.3} parent=19 // pred_region
        %p446 = scmp.lt.s32.totalorder %s19, 1
        %s447 = scalar_select %p446, %s19, 1
        %s448 = scalar_lea.vmem %s8, %s447
      $region52: #{transformer_forward.3} parent=19 // pred_fallthru
        _
      // Predicated region
      $region53: #{transformer_forward.3} parent=19 // pred_check
        %p449 = pneg %p268
      $region54: #{transformer_forward.3} parent=19 // pred_check_branch
        %451 = sbr.rel (%p449) target = $region56
      $region55: #{transformer_forward.3} parent=19 // pred_region
        %p452 = scmp.lt.s32.totalorder %s19, 1
        %s453 = scalar_select %p452, %s19, 1
        %s454 = smul.addr %s453, 8
        %s455 = smul.addr %s454, 4
        %s456 = scalar_lea.vmem %s9, %s455
      $region56: #{transformer_forward.3} parent=19 // pred_fallthru
        _
      // Predicated region
      $region57: #{transformer_forward.3} parent=19 // pred_check
        %p457 = pneg %p294
      $region58: #{transformer_forward.3} parent=19 // pred_check_branch
        %459 = sbr.rel (%p457) target = $region60
      $region59: #{transformer_forward.3} parent=19 // pred_region
        %p460 = scmp.lt.s32.totalorder %s19, 1
        %s461 = scalar_select %p460, %s19, 1
        %s462 = scalar_lea.vmem %s10, %s461
      $region60: #{transformer_forward.3} parent=19 // pred_fallthru
        _
      // Predicated region
      $region61: #{transformer_forward.3} parent=19 // pred_check
        %p463 = pneg %p320
      $region62: #{transformer_forward.3} parent=19 // pred_check_branch
        %465 = sbr.rel (%p463) target = $region64
      $region63: #{transformer_forward.3} parent=19 // pred_region
        %p466 = scmp.lt.s32.totalorder %s19, 1
        %s467 = scalar_select %p466, %s19, 1
        %s468 = scalar_lea.vmem %s11, %s467
      $region64: #{transformer_forward.3} parent=19 // pred_fallthru
        _
      // Predicated region
      $region65: #{transformer_forward.3} parent=19 // pred_check
        %p469 = pneg %p346
      $region66: #{transformer_forward.3} parent=19 // pred_check_branch
        %471 = sbr.rel (%p469) target = $region68
      $region67: #{transformer_forward.3} parent=19 // pred_region
        %p472 = scmp.lt.s32.totalorder %s19, 1
        %s473 = scalar_select %p472, %s19, 1
        %s474 = scalar_lea.vmem %s12, %s473
      $region68: #{transformer_forward.3} parent=19 // pred_fallthru
        _
    $region20: #{transformer_forward.3} parent=5 // pred_fallthru
      _
    %p475 = scmp.le.s32.totalorder 1, %s19
    %p476 = scmp.lt.s32.totalorder %s19, 3
    %p477 = pnand %p475, %p476
    %p478 = pneg %p477
    // Predicated region
    $region69: #{transformer_forward.3} parent=5 // pred_check
      _
    $region70: #{transformer_forward.3} parent=5 // pred_check_branch
      %480 = sbr.rel (%p477) target = $region72
    $region71: #{transformer_forward.3} parent=5 // pred_region
      %s481 = ssub.s32 %s19, 1
      %p482 = pneg %p40
      %p483 = pneg %p37
      %p484 = scmp.lt.s32.totalorder %s24, 1
      %s485 = scalar_select %p484, %s24, 1
      %s486 = smul.addr %s485, 4
      %s487 = smul.addr %s486, 4
      %s488 = scalar_lea.vmem %s1, %s487
      %p489 = pneg %p66
      %p490 = pneg %p63
      %p491 = scmp.lt.s32.totalorder %s24, 1
      %s492 = scalar_select %p491, %s24, 1
      %s493 = scalar_lea.vmem %s2, %s492
      %p494 = pneg %p92
      %p495 = pneg %p89
      %p496 = scmp.lt.s32.totalorder %s24, 1
      %s497 = scalar_select %p496, %s24, 1
      %s498 = smul.addr %s497, 4
      %s499 = smul.addr %s498, 4
      %s500 = scalar_lea.vmem %s3, %s499
      %p501 = pneg %p118
      %p502 = pneg %p115
      %p503 = scmp.lt.s32.totalorder %s24, 1
      %s504 = scalar_select %p503, %s24, 1
      %s505 = scalar_lea.vmem %s4, %s504
      %p506 = pneg %p144
      %p507 = pneg %p141
      %p508 = scmp.lt.s32.totalorder %s24, 1
      %s509 = scalar_select %p508, %s24, 1
      %s510 = scalar_lea.vmem %s5, %s509
      %p511 = pneg %p170
      %p512 = pneg %p167
      %p513 = scmp.lt.s32.totalorder %s24, 1
      %s514 = scalar_select %p513, %s24, 1
      %s515 = scalar_lea.vmem %s6, %s514
      %p516 = pneg %p196
      %p517 = pneg %p193
      %p518 = scmp.lt.s32.totalorder %s24, 1
      %s519 = scalar_select %p518, %s24, 1
      %s520 = smul.addr %s519, 4
      %s521 = smul.addr %s520, 4
      %s522 = scalar_lea.vmem %s7, %s521
      %p523 = pneg %p222
      %p524 = pneg %p219
      %p525 = scmp.lt.s32.totalorder %s24, 1
      %s526 = scalar_select %p525, %s24, 1
      %s527 = scalar_lea.vmem %s8, %s526
      %p528 = pneg %p248
      %p529 = pneg %p245
      %p530 = scmp.lt.s32.totalorder %s24, 1
      %s531 = scalar_select %p530, %s24, 1
      %s532 = smul.addr %s531, 8
      %s533 = smul.addr %s532, 4
      %s534 = scalar_lea.vmem %s9, %s533
      %p535 = pneg %p274
      %p536 = pneg %p271
      %p537 = scmp.lt.s32.totalorder %s24, 1
      %s538 = scalar_select %p537, %s24, 1
      %s539 = scalar_lea.vmem %s10, %s538
      %p540 = pneg %p300
      %p541 = pneg %p297
      %p542 = scmp.lt.s32.totalorder %s24, 1
      %s543 = scalar_select %p542, %s24, 1
      %s544 = scalar_lea.vmem %s11, %s543
      %p545 = pneg %p326
      %p546 = pneg %p323
      %p547 = scmp.lt.s32.totalorder %s24, 1
      %s548 = scalar_select %p547, %s24, 1
      %s549 = scalar_lea.vmem %s12, %s548
      %p550 = pneg %p352
      %p551 = pneg %p349
      %p552 = pneg %p373
      %p553 = pneg %p370
      %p554 = scmp.lt.s32.totalorder %s24, 1
      %s555 = scalar_select %p554, %s24, 1
      %s556 = smul.addr %s555, 4
      %s557 = smul.addr %s556, 4
      %s558 = scalar_lea.vmem %s1, %s557
      %p559 = scmp.lt.s32.totalorder %s24, 1
      %s560 = scalar_select %p559, %s24, 1
      %s561 = scalar_lea.vmem %s2, %s560
      %p562 = scmp.lt.s32.totalorder %s24, 1
      %s563 = scalar_select %p562, %s24, 1
      %s564 = smul.addr %s563, 4
      %s565 = smul.addr %s564, 4
      %s566 = scalar_lea.vmem %s3, %s565
      %p567 = scmp.lt.s32.totalorder %s24, 1
      %s568 = scalar_select %p567, %s24, 1
      %s569 = scalar_lea.vmem %s4, %s568
      %p570 = scmp.lt.s32.totalorder %s24, 1
      %s571 = scalar_select %p570, %s24, 1
      %s572 = scalar_lea.vmem %s5, %s571
      %p573 = scmp.lt.s32.totalorder %s24, 1
      %s574 = scalar_select %p573, %s24, 1
      %s575 = scalar_lea.vmem %s6, %s574
      %p576 = scmp.lt.s32.totalorder %s24, 1
      %s577 = scalar_select %p576, %s24, 1
      %s578 = smul.addr %s577, 4
      %s579 = smul.addr %s578, 4
      %s580 = scalar_lea.vmem %s7, %s579
      %p581 = scmp.lt.s32.totalorder %s24, 1
      %s582 = scalar_select %p581, %s24, 1
      %s583 = scalar_lea.vmem %s8, %s582
      %p584 = scmp.lt.s32.totalorder %s24, 1
      %s585 = scalar_select %p584, %s24, 1
      %s586 = smul.addr %s585, 8
      %s587 = smul.addr %s586, 4
      %s588 = scalar_lea.vmem %s9, %s587
      %p589 = scmp.lt.s32.totalorder %s24, 1
      %s590 = scalar_select %p589, %s24, 1
      %s591 = scalar_lea.vmem %s10, %s590
      %p592 = scmp.lt.s32.totalorder %s24, 1
      %s593 = scalar_select %p592, %s24, 1
      %s594 = scalar_lea.vmem %s11, %s593
      %p595 = scmp.lt.s32.totalorder %s24, 1
      %s596 = scalar_select %p595, %s24, 1
      %s597 = scalar_lea.vmem %s12, %s596
      %p599 = scmp.eq.s32.totalorder %s24, 0
      // Predicated region
      $region73: #{transformer_forward.3} parent=71 // pred_check
        %p600 = pneg %p599
      $region74: #{transformer_forward.3} parent=71 // pred_check_branch
        %602 = sbr.rel (%p600) target = $region76
      $region75: #{transformer_forward.3} parent=71 // pred_region
        %v603 = vld [vmem:[%s0] sm:$0xff]
        %v604 = vld [vmem:[%s0 + $0x8] sm:$0xff]
        %v605 = vld [vmem:[%s0 + $0x10] sm:$0xff]
        %v606 = vld [vmem:[%s0 + $0x18] sm:$0xff]
        %vm607 = vcmask 261120
        %608 = vst.msk [vmem:[%s13] sm:$0xff] %vm607, %v603
        %609 = vst.msk [vmem:[%s13 + $0x8] sm:$0xff] %vm607, %v604
        %610 = vst.msk [vmem:[%s13 + $0x10] sm:$0xff] %vm607, %v605
        %611 = vst.msk [vmem:[%s13 + $0x18] sm:$0xff] %vm607, %v606
      $region76: #{transformer_forward.3} parent=71 // pred_fallthru
        _
      %v612 = vld [vmem:[%s13] sm:$0xff]
      %v613 = vld [vmem:[%s13 + $0x8] sm:$0xff]
      %v614 = vld [vmem:[%s13 + $0x10] sm:$0xff]
      %v615 = vld [vmem:[%s13 + $0x18] sm:$0xff]
      %v616 = vpack.c.bf16 %v613, %v612
      %v617 = vpack.c.bf16 %v615, %v614
      %v618 = vld [vmem:[%s558] sm:$0xf]
      %v619 = vld [vmem:[%s558 + $0x4] sm:$0xf]
      %v620 = vld [vmem:[%s558 + $0x8] sm:$0xf]
      %v621 = vld [vmem:[%s558 + $0xc] sm:$0xf]
      %v622 = vld [vmem:[%s561] sm:$0x1]
      %v624 = vlaneseq
      %v625 = vshrl.u32 %v624, 7
      %v626 = vsub.s32 0, %v625
      %v627 = vrot.slane %v622, %v626
      %v633 = vunpack.c.l.b16 %v618
      %v634 = vunpack.c.l.b16 %v619
      %v635 = vunpack.c.l.b16 %v620
      %v636 = vunpack.c.l.b16 %v621
      %v637 = vpack.c.b16 %v634, %v633
      %v638 = vpack.c.b16 %v636, %v635
      %vm641 = vcmask 261120
      %v643 = vsel %vm641, %v616, 0
      %v646 = vsel %vm641, %v617, 0
      %648 = vmatprep.subr.bf16.mxu0 0
      %649 = vmatpush1.bf16.msra.mxu0 %v637
      %650 = vmatprep.subr.bf16.mxu0 0
      %651 = vmatpush1.bf16.msra.mxu0 %v638
      %652 = vmatprep.subr.bf16.mxu0 0
      %653 = vmatpush1.bf16.msra.mxu0 0
      %654 = vmatprep.subr.bf16.mxu0 0
      %655 = vmatpush1.bf16.msra.mxu0 0
      %656 = vmatprep.subr.bf16.mxu0 0
      %657 = vmatpush1.bf16.msra.mxu0 0
      %658 = vmatprep.subr.bf16.mxu0 0
      %659 = vmatpush1.bf16.msra.mxu0 0
      %660 = vmatprep.subr.bf16.mxu0 0
      %661 = vmatpush1.bf16.msra.mxu0 0
      %662 = vmatprep.subr.bf16.mxu0 0
      %663 = vmatpush1.bf16.msra.mxu0 0
      %664 = vmatprep.subr.bf16.mxu0 0
      %665 = vmatpush1.bf16.msra.mxu0 0
      %666 = vmatprep.subr.bf16.mxu0 0
      %667 = vmatpush1.bf16.msra.mxu0 0
      %668 = vmatprep.subr.bf16.mxu0 0
      %669 = vmatpush1.bf16.msra.mxu0 0
      %670 = vmatprep.subr.bf16.mxu0 0
      %671 = vmatpush1.bf16.msra.mxu0 0
      %672 = vmatprep.subr.bf16.mxu0 0
      %673 = vmatpush1.bf16.msra.mxu0 0
      %674 = vmatprep.subr.bf16.mxu0 0
      %675 = vmatpush1.bf16.msra.mxu0 0
      %676 = vmatprep.subr.bf16.mxu0 0
      %677 = vmatpush1.bf16.msra.mxu0 0
      %678 = vmatprep.subr.bf16.mxu0 0
      %679 = vmatpush1.bf16.msra.mxu0 0
      %680 = vmatprep.mubr.bf16.mxu0 0
      %681 = vmatmul.mubr.bf16.gmra.mrb[0].mxu0 %v643
      %v682 = vpop.f32.mrb[0].mxu0
      %v683 = vadd.f32 %v627, %v682
      %v684 = vpop.f32.mrb[0].mxu0
      %v685 = vpop.f32.mrb[0].mxu0
      %v686 = vadd.f32 %v627, %v685
      %v687 = vpop.f32.mrb[0].mxu0
      %688 = vmatprep.mubr.bf16.mxu0 0
      %689 = vmatmul.mubr.bf16.gmra.mrb[0].mxu0 %v646
      %v690 = vpop.f32.mrb[0].mxu0
      %v691 = vadd.f32 %v627, %v690
      %v692 = vpop.f32.mrb[0].mxu0
      %v693 = vpop.f32.mrb[0].mxu0
      %v694 = vadd.f32 %v627, %v693
      %v695 = vpop.f32.mrb[0].mxu0
      %696 = vdwg.mxu0
      %v697 = vmul.f32 %v683, 0.35355338
      %v698 = vmul.f32 %v686, 0.35355338
      %v699 = vmul.f32 %v691, 0.35355338
      %v700 = vmul.f32 %v694, 0.35355338
      %v701 = vpack.c.bf16 %v698, %v697
      %v702 = vpack.c.bf16 %v686, %v683
      %704 = vrot.lane.b32.xlu0 %v702, 96
      %v705 = vpop.permute.xlu0 %704
      %vm706 = vcmask 64512
      %v708 = vsel %vm706, %v701, 0
      %v711 = vsel %vm706, %v705, 0
      %713 = vmatprep.subr.bf16.mxu0 0
      %714 = vmatpush1.bf16.xpose.msra.mxu0 %v711
      %715 = vmatprep.subr.bf16.mxu0 0
      %716 = vmatpush1.bf16.xpose.msra.mxu0 0
      %717 = vmatprep.subr.bf16.mxu0 0
      %718 = vmatpush1.bf16.xpose.msra.mxu0 0
      %719 = vmatprep.subr.bf16.mxu0 0
      %720 = vmatpush1.bf16.xpose.msra.mxu0 0
      %721 = vmatprep.subr.bf16.mxu0 0
      %722 = vmatpush1.bf16.xpose.msra.mxu0 0
      %723 = vmatprep.subr.bf16.mxu0 0
      %724 = vmatpush1.bf16.xpose.msra.mxu0 0
      %725 = vmatprep.subr.bf16.mxu0 0
      %726 = vmatpush1.bf16.xpose.msra.mxu0 0
      %727 = vmatprep.subr.bf16.mxu0 0
      %728 = vmatpush1.bf16.xpose.msra.mxu0 0
      %729 = vmatprep.subr.bf16.mxu0 0
      %730 = vmatpush1.bf16.xpose.msra.mxu0 0
      %731 = vmatprep.subr.bf16.mxu0 0
      %732 = vmatpush1.bf16.xpose.msra.mxu0 0
      %733 = vmatprep.subr.bf16.mxu0 0
      %734 = vmatpush1.bf16.xpose.msra.mxu0 0
      %735 = vmatprep.subr.bf16.mxu0 0
      %736 = vmatpush1.bf16.xpose.msra.mxu0 0
      %737 = vmatprep.subr.bf16.mxu0 0
      %738 = vmatpush1.bf16.xpose.msra.mxu0 0
      %739 = vmatprep.subr.bf16.mxu0 0
      %740 = vmatpush1.bf16.xpose.msra.mxu0 0
      %741 = vmatprep.subr.bf16.mxu0 0
      %742 = vmatpush1.bf16.xpose.msra.mxu0 0
      %743 = vmatprep.subr.bf16.mxu0 0
      %744 = vmatpush1.bf16.xpose.msra.mxu0 0
      %745 = vmatprep.mubr.bf16.mxu0 0
      %746 = vmatmul.mubr.bf16.gmra.mrb[0].mxu0 %v708
      %v747 = vpop.f32.mrb[0].mxu0
      %v748 = vadd.f32 0.0, %v747
      %v749 = vpop.f32.mrb[0].mxu0
      %v750 = vpop.f32.mrb[0].mxu0
      %v751 = vadd.f32 0.0, %v750
      %v752 = vpop.f32.mrb[0].mxu0
      %753 = vdwg.mxu0
      %vm754 = vcmask 130048
      %v755 = vsel %vm754, %v748, -inf
      %756 = vmax.xlane.f32.xlu0 %v755
      %v757 = vpop.xlane.xlu0 %756
      %v758 = vsel %vm754, %v751, -inf
      %759 = vmax.xlane.f32.xlu0 %v758
      %v760 = vpop.xlane.xlu0 %759
      %v761 = vsub.f32 %v748, %v757
      %v762 = vsub.f32 %v751, %v760
      %v763 = vmul.f32 %v761, 1.442695
      %v764 = vpow.pop %v763
      %v765 = vmul.f32 %v762, 1.442695
      %v766 = vpow.pop %v765
      %v767 = vsel %vm754, %v764, 0.0
      %768 = vadd.xlane.f32.xlu0 %v767
      %v769 = vpop.xlane.xlu0 %768
      %v770 = vsel %vm754, %v766, 0.0
      %771 = vadd.xlane.f32.xlu0 %v770
      %v772 = vpop.xlane.xlu0 %771
      %v773 = vrcp.pop %v769
      %v774 = vrcp.pop %v772
      %v775 = vmul.f32 %v764, %v773
      %v776 = vmul.f32 %v766, %v774
      %v777 = vpack.c.bf16 %v776, %v775
      %778 = vrot.lane.b32.xlu0 %v702, 64
      %v779 = vpop.permute.xlu0 %778
      %v782 = vsel %vm754, %v777, 0
      %784 = vmatprep.subr.bf16.mxu0 0
      %785 = vmatpush1.bf16.msra.mxu0 %v779
      %786 = vmatprep.subr.bf16.mxu0 0
      %787 = vmatpush1.bf16.msra.mxu0 0
      %788 = vmatprep.subr.bf16.mxu0 0
      %789 = vmatpush1.bf16.msra.mxu0 0
      %790 = vmatprep.subr.bf16.mxu0 0
      %791 = vmatpush1.bf16.msra.mxu0 0
      %792 = vmatprep.subr.bf16.mxu0 0
      %793 = vmatpush1.bf16.msra.mxu0 0
      %794 = vmatprep.subr.bf16.mxu0 0
      %795 = vmatpush1.bf16.msra.mxu0 0
      %796 = vmatprep.subr.bf16.mxu0 0
      %797 = vmatpush1.bf16.msra.mxu0 0
      %798 = vmatprep.subr.bf16.mxu0 0
      %799 = vmatpush1.bf16.msra.mxu0 0
      %800 = vmatprep.subr.bf16.mxu0 0
      %801 = vmatpush1.bf16.msra.mxu0 0
      %802 = vmatprep.subr.bf16.mxu0 0
      %803 = vmatpush1.bf16.msra.mxu0 0
      %804 = vmatprep.subr.bf16.mxu0 0
      %805 = vmatpush1.bf16.msra.mxu0 0
      %806 = vmatprep.subr.bf16.mxu0 0
      %807 = vmatpush1.bf16.msra.mxu0 0
      %808 = vmatprep.subr.bf16.mxu0 0
      %809 = vmatpush1.bf16.msra.mxu0 0
      %810 = vmatprep.subr.bf16.mxu0 0
      %811 = vmatpush1.bf16.msra.mxu0 0
      %812 = vmatprep.subr.bf16.mxu0 0
      %813 = vmatpush1.bf16.msra.mxu0 0
      %814 = vmatprep.subr.bf16.mxu0 0
      %815 = vmatpush1.bf16.msra.mxu0 0
      %816 = vmatprep.mubr.bf16.mxu0 0
      %817 = vmatmul.mubr.bf16.gmra.mrb[0].mxu0 %v782
      %v818 = vpop.f32.mrb[0].mxu0
      %v819 = vadd.f32 0.0, %v818
      %v820 = vpop.f32.mrb[0].mxu0
      %v821 = vpop.f32.mrb[0].mxu0
      %v822 = vadd.f32 0.0, %v821
      %v823 = vpop.f32.mrb[0].mxu0
      %824 = vdwg.mxu0
      %826 = vrot.lane.b32.xlu0 %v701, 120
      %v827 = vpop.permute.xlu0 %826
      %828 = vrot.lane.b32.xlu0 %v702, 88
      %v829 = vpop.permute.xlu0 %828
      %v831 = vsel %vm706, %v827, 0
      %v834 = vsel %vm706, %v829, 0
      %836 = vmatprep.subr.bf16.mxu0 0
      %837 = vmatpush1.bf16.xpose.msra.mxu0 %v834
      %838 = vmatprep.subr.bf16.mxu0 0
      %839 = vmatpush1.bf16.xpose.msra.mxu0 0
      %840 = vmatprep.subr.bf16.mxu0 0
      %841 = vmatpush1.bf16.xpose.msra.mxu0 0
      %842 = vmatprep.subr.bf16.mxu0 0
      %843 = vmatpush1.bf16.xpose.msra.mxu0 0
      %844 = vmatprep.subr.bf16.mxu0 0
      %845 = vmatpush1.bf16.xpose.msra.mxu0 0
      %846 = vmatprep.subr.bf16.mxu0 0
      %847 = vmatpush1.bf16.xpose.msra.mxu0 0
      %848 = vmatprep.subr.bf16.mxu0 0
      %849 = vmatpush1.bf16.xpose.msra.mxu0 0
      %850 = vmatprep.subr.bf16.mxu0 0
      %851 = vmatpush1.bf16.xpose.msra.mxu0 0
      %852 = vmatprep.subr.bf16.mxu0 0
      %853 = vmatpush1.bf16.xpose.msra.mxu0 0
      %854 = vmatprep.subr.bf16.mxu0 0
      %855 = vmatpush1.bf16.xpose.msra.mxu0 0
      %856 = vmatprep.subr.bf16.mxu0 0
      %857 = vmatpush1.bf16.xpose.msra.mxu0 0
      %858 = vmatprep.subr.bf16.mxu0 0
      %859 = vmatpush1.bf16.xpose.msra.mxu0 0
      %860 = vmatprep.subr.bf16.mxu0 0
      %861 = vmatpush1.bf16.xpose.msra.mxu0 0
      %862 = vmatprep.subr.bf16.mxu0 0
      %863 = vmatpush1.bf16.xpose.msra.mxu0 0
      %864 = vmatprep.subr.bf16.mxu0 0
      %865 = vmatpush1.bf16.xpose.msra.mxu0 0
      %866 = vmatprep.subr.bf16.mxu0 0
      %867 = vmatpush1.bf16.xpose.msra.mxu0 0
      %868 = vmatprep.mubr.bf16.mxu0 0
      %869 = vmatmul.mubr.bf16.gmra.mrb[0].mxu0 %v831
      %v870 = vpop.f32.mrb[0].mxu0
      %v871 = vadd.f32 0.0, %v870
      %v872 = vpop.f32.mrb[0].mxu0
      %v873 = vpop.f32.mrb[0].mxu0
      %v874 = vadd.f32 0.0, %v873
      %v875 = vpop.f32.mrb[0].mxu0
      %876 = vdwg.mxu0
      %v877 = vsel %vm754, %v871, -inf
      %878 = vmax.xlane.f32.xlu0 %v877
      %v879 = vpop.xlane.xlu0 %878
      %v880 = vsel %vm754, %v874, -inf
      %881 = vmax.xlane.f32.xlu0 %v880
      %v882 = vpop.xlane.xlu0 %881
      %v883 = vsub.f32 %v871, %v879
      %v884 = vsub.f32 %v874, %v882
      %v885 = vmul.f32 %v883, 1.442695
      %v886 = vpow.pop %v885
      %v887 = vmul.f32 %v884, 1.442695
      %v888 = vpow.pop %v887
      %v889 = vsel %vm754, %v886, 0.0
      %890 = vadd.xlane.f32.xlu0 %v889
      %v891 = vpop.xlane.xlu0 %890
      %v892 = vsel %vm754, %v888, 0.0
      %893 = vadd.xlane.f32.xlu0 %v892
      %v894 = vpop.xlane.xlu0 %893
      %v895 = vrcp.pop %v891
      %v896 = vrcp.pop %v894
      %v897 = vmul.f32 %v886, %v895
      %v898 = vmul.f32 %v888, %v896
      %v899 = vpack.c.bf16 %v898, %v897
      %900 = vrot.lane.b32.xlu0 %v702, 56
      %v901 = vpop.permute.xlu0 %900
      %v904 = vsel %vm754, %v899, 0
      %906 = vmatprep.subr.bf16.mxu0 0
      %907 = vmatpush1.bf16.msra.mxu0 %v901
      %908 = vmatprep.subr.bf16.mxu0 0
      %909 = vmatpush1.bf16.msra.mxu0 0
      %910 = vmatprep.subr.bf16.mxu0 0
      %911 = vmatpush1.bf16.msra.mxu0 0
      %912 = vmatprep.subr.bf16.mxu0 0
      %913 = vmatpush1.bf16.msra.mxu0 0
      %914 = vmatprep.subr.bf16.mxu0 0
      %915 = vmatpush1.bf16.msra.mxu0 0
      %916 = vmatprep.subr.bf16.mxu0 0
      %917 = vmatpush1.bf16.msra.mxu0 0
      %918 = vmatprep.subr.bf16.mxu0 0
      %919 = vmatpush1.bf16.msra.mxu0 0
      %920 = vmatprep.subr.bf16.mxu0 0
      %921 = vmatpush1.bf16.msra.mxu0 0
      %922 = vmatprep.subr.bf16.mxu0 0
      %923 = vmatpush1.bf16.msra.mxu0 0
      %924 = vmatprep.subr.bf16.mxu0 0
      %925 = vmatpush1.bf16.msra.mxu0 0
      %926 = vmatprep.subr.bf16.mxu0 0
      %927 = vmatpush1.bf16.msra.mxu0 0
      %928 = vmatprep.subr.bf16.mxu0 0
      %929 = vmatpush1.bf16.msra.mxu0 0
      %930 = vmatprep.subr.bf16.mxu0 0
      %931 = vmatpush1.bf16.msra.mxu0 0
      %932 = vmatprep.subr.bf16.mxu0 0
      %933 = vmatpush1.bf16.msra.mxu0 0
      %934 = vmatprep.subr.bf16.mxu0 0
      %935 = vmatpush1.bf16.msra.mxu0 0
      %936 = vmatprep.subr.bf16.mxu0 0
      %937 = vmatpush1.bf16.msra.mxu0 0
      %938 = vmatprep.mubr.bf16.mxu0 0
      %939 = vmatmul.mubr.bf16.gmra.mrb[0].mxu0 %v904
      %v940 = vpop.f32.mrb[0].mxu0
      %v941 = vadd.f32 0.0, %v940
      %v942 = vpop.f32.mrb[0].mxu0
      %v943 = vpop.f32.mrb[0].mxu0
      %v944 = vadd.f32 0.0, %v943
      %v945 = vpop.f32.mrb[0].mxu0
      %946 = vdwg.mxu0
      %947 = vrot.lane.b32.xlu0 %v701, 112
      %v948 = vpop.permute.xlu0 %947
      %949 = vrot.lane.b32.xlu0 %v702, 80
      %v950 = vpop.permute.xlu0 %949
      %v952 = vsel %vm706, %v948, 0
      %v955 = vsel %vm706, %v950, 0
      %957 = vmatprep.subr.bf16.mxu0 0
      %958 = vmatpush1.bf16.xpose.msra.mxu0 %v955
      %959 = vmatprep.subr.bf16.mxu0 0
      %960 = vmatpush1.bf16.xpose.msra.mxu0 0
      %961 = vmatprep.subr.bf16.mxu0 0
      %962 = vmatpush1.bf16.xpose.msra.mxu0 0
      %963 = vmatprep.subr.bf16.mxu0 0
      %964 = vmatpush1.bf16.xpose.msra.mxu0 0
      %965 = vmatprep.subr.bf16.mxu0 0
      %966 = vmatpush1.bf16.xpose.msra.mxu0 0
      %967 = vmatprep.subr.bf16.mxu0 0
      %968 = vmatpush1.bf16.xpose.msra.mxu0 0
      %969 = vmatprep.subr.bf16.mxu0 0
      %970 = vmatpush1.bf16.xpose.msra.mxu0 0
      %971 = vmatprep.subr.bf16.mxu0 0
      %972 = vmatpush1.bf16.xpose.msra.mxu0 0
      %973 = vmatprep.subr.bf16.mxu0 0
      %974 = vmatpush1.bf16.xpose.msra.mxu0 0
      %975 = vmatprep.subr.bf16.mxu0 0
      %976 = vmatpush1.bf16.xpose.msra.mxu0 0
      %977 = vmatprep.subr.bf16.mxu0 0
      %978 = vmatpush1.bf16.xpose.msra.mxu0 0
      %979 = vmatprep.subr.bf16.mxu0 0
      %980 = vmatpush1.bf16.xpose.msra.mxu0 0
      %981 = vmatprep.subr.bf16.mxu0 0
      %982 = vmatpush1.bf16.xpose.msra.mxu0 0
      %983 = vmatprep.subr.bf16.mxu0 0
      %984 = vmatpush1.bf16.xpose.msra.mxu0 0
      %985 = vmatprep.subr.bf16.mxu0 0
      %986 = vmatpush1.bf16.xpose.msra.mxu0 0
      %987 = vmatprep.subr.bf16.mxu0 0
      %988 = vmatpush1.bf16.xpose.msra.mxu0 0
      %989 = vmatprep.mubr.bf16.mxu0 0
      %990 = vmatmul.mubr.bf16.gmra.mrb[0].mxu0 %v952
      %v991 = vpop.f32.mrb[0].mxu0
      %v992 = vadd.f32 0.0, %v991
      %v993 = vpop.f32.mrb[0].mxu0
      %v994 = vpop.f32.mrb[0].mxu0
      %v995 = vadd.f32 0.0, %v994
      %v996 = vpop.f32.mrb[0].mxu0
      %997 = vdwg.mxu0
      %v998 = vsel %vm754, %v992, -inf
      %999 = vmax.xlane.f32.xlu0 %v998
      %v1000 = vpop.xlane.xlu0 %999
      %v1001 = vsel %vm754, %v995, -inf
      %1002 = vmax.xlane.f32.xlu0 %v1001
      %v1003 = vpop.xlane.xlu0 %1002
      %v1004 = vsub.f32 %v992, %v1000
      %v1005 = vsub.f32 %v995, %v1003
      %v1006 = vmul.f32 %v1004, 1.442695
      %v1007 = vpow.pop %v1006
      %v1008 = vmul.f32 %v1005, 1.442695
      %v1009 = vpow.pop %v1008
      %v1010 = vsel %vm754, %v1007, 0.0
      %1011 = vadd.xlane.f32.xlu0 %v1010
      %v1012 = vpop.xlane.xlu0 %1011
      %v1013 = vsel %vm754, %v1009, 0.0
      %1014 = vadd.xlane.f32.xlu0 %v1013
      %v1015 = vpop.xlane.xlu0 %1014
      %v1016 = vrcp.pop %v1012
      %v1017 = vrcp.pop %v1015
      %v1018 = vmul.f32 %v1007, %v1016
      %v1019 = vmul.f32 %v1009, %v1017
      %v1020 = vpack.c.bf16 %v1019, %v1018
      %1021 = vrot.lane.b32.xlu0 %v702, 48
      %v1022 = vpop.permute.xlu0 %1021
      %v1025 = vsel %vm754, %v1020, 0
      %1027 = vmatprep.subr.bf16.mxu0 0
      %1028 = vmatpush1.bf16.msra.mxu0 %v1022
      %1029 = vmatprep.subr.bf16.mxu0 0
      %1030 = vmatpush1.bf16.msra.mxu0 0
      %1031 = vmatprep.subr.bf16.mxu0 0
      %1032 = vmatpush1.bf16.msra.mxu0 0
      %1033 = vmatprep.subr.bf16.mxu0 0
      %1034 = vmatpush1.bf16.msra.mxu0 0
      %1035 = vmatprep.subr.bf16.mxu0 0
      %1036 = vmatpush1.bf16.msra.mxu0 0
      %1037 = vmatprep.subr.bf16.mxu0 0
      %1038 = vmatpush1.bf16.msra.mxu0 0
      %1039 = vmatprep.subr.bf16.mxu0 0
      %1040 = vmatpush1.bf16.msra.mxu0 0
      %1041 = vmatprep.subr.bf16.mxu0 0
      %1042 = vmatpush1.bf16.msra.mxu0 0
      %1043 = vmatprep.subr.bf16.mxu0 0
      %1044 = vmatpush1.bf16.msra.mxu0 0
      %1045 = vmatprep.subr.bf16.mxu0 0
      %1046 = vmatpush1.bf16.msra.mxu0 0
      %1047 = vmatprep.subr.bf16.mxu0 0
      %1048 = vmatpush1.bf16.msra.mxu0 0
      %1049 = vmatprep.subr.bf16.mxu0 0
      %1050 = vmatpush1.bf16.msra.mxu0 0
      %1051 = vmatprep.subr.bf16.mxu0 0
      %1052 = vmatpush1.bf16.msra.mxu0 0
      %1053 = vmatprep.subr.bf16.mxu0 0
      %1054 = vmatpush1.bf16.msra.mxu0 0
      %1055 = vmatprep.subr.bf16.mxu0 0
      %1056 = vmatpush1.bf16.msra.mxu0 0
      %1057 = vmatprep.subr.bf16.mxu0 0
      %1058 = vmatpush1.bf16.msra.mxu0 0
      %1059 = vmatprep.mubr.bf16.mxu0 0
      %1060 = vmatmul.mubr.bf16.gmra.mrb[0].mxu0 %v1025
      %v1061 = vpop.f32.mrb[0].mxu0
      %v1062 = vadd.f32 0.0, %v1061
      %v1063 = vpop.f32.mrb[0].mxu0
      %v1064 = vpop.f32.mrb[0].mxu0
      %v1065 = vadd.f32 0.0, %v1064
      %v1066 = vpop.f32.mrb[0].mxu0
      %1067 = vdwg.mxu0
      %1068 = vrot.lane.b32.xlu0 %v701, 104
      %v1069 = vpop.permute.xlu0 %1068
      %1070 = vrot.lane.b32.xlu0 %v702, 72
      %v1071 = vpop.permute.xlu0 %1070
      %v1073 = vsel %vm706, %v1069, 0
      %v1076 = vsel %vm706, %v1071, 0
      %1078 = vmatprep.subr.bf16.mxu0 0
      %1079 = vmatpush1.bf16.xpose.msra.mxu0 %v1076
      %1080 = vmatprep.subr.bf16.mxu0 0
      %1081 = vmatpush1.bf16.xpose.msra.mxu0 0
      %1082 = vmatprep.subr.bf16.mxu0 0
      %1083 = vmatpush1.bf16.xpose.msra.mxu0 0
      %1084 = vmatprep.subr.bf16.mxu0 0
      %1085 = vmatpush1.bf16.xpose.msra.mxu0 0
      %1086 = vmatprep.subr.bf16.mxu0 0
      %1087 = vmatpush1.bf16.xpose.msra.mxu0 0
      %1088 = vmatprep.subr.bf16.mxu0 0
      %1089 = vmatpush1.bf16.xpose.msra.mxu0 0
      %1090 = vmatprep.subr.bf16.mxu0 0
      %1091 = vmatpush1.bf16.xpose.msra.mxu0 0
      %1092 = vmatprep.subr.bf16.mxu0 0
      %1093 = vmatpush1.bf16.xpose.msra.mxu0 0
      %1094 = vmatprep.subr.bf16.mxu0 0
      %1095 = vmatpush1.bf16.xpose.msra.mxu0 0
      %1096 = vmatprep.subr.bf16.mxu0 0
      %1097 = vmatpush1.bf16.xpose.msra.mxu0 0
      %1098 = vmatprep.subr.bf16.mxu0 0
      %1099 = vmatpush1.bf16.xpose.msra.mxu0 0
      %1100 = vmatprep.subr.bf16.mxu0 0
      %1101 = vmatpush1.bf16.xpose.msra.mxu0 0
      %1102 = vmatprep.subr.bf16.mxu0 0
      %1103 = vmatpush1.bf16.xpose.msra.mxu0 0
      %1104 = vmatprep.subr.bf16.mxu0 0
      %1105 = vmatpush1.bf16.xpose.msra.mxu0 0
      %1106 = vmatprep.subr.bf16.mxu0 0
      %1107 = vmatpush1.bf16.xpose.msra.mxu0 0
      %1108 = vmatprep.subr.bf16.mxu0 0
      %1109 = vmatpush1.bf16.xpose.msra.mxu0 0
      %1110 = vmatprep.mubr.bf16.mxu0 0
      %1111 = vmatmul.mubr.bf16.gmra.mrb[0].mxu0 %v1073
      %v1112 = vpop.f32.mrb[0].mxu0
      %v1113 = vadd.f32 0.0, %v1112
      %v1114 = vpop.f32.mrb[0].mxu0
      %v1115 = vpop.f32.mrb[0].mxu0
      %v1116 = vadd.f32 0.0, %v1115
      %v1117 = vpop.f32.mrb[0].mxu0
      %1118 = vdwg.mxu0
      %v1119 = vsel %vm754, %v1113, -inf
      %1120 = vmax.xlane.f32.xlu0 %v1119
      %v1121 = vpop.xlane.xlu0 %1120
      %v1122 = vsel %vm754, %v1116, -inf
      %1123 = vmax.xlane.f32.xlu0 %v1122
      %v1124 = vpop.xlane.xlu0 %1123
      %v1125 = vsub.f32 %v1113, %v1121
      %v1126 = vsub.f32 %v1116, %v1124
      %v1127 = vmul.f32 %v1125, 1.442695
      %v1128 = vpow.pop %v1127
      %v1129 = vmul.f32 %v1126, 1.442695
      %v1130 = vpow.pop %v1129
      %v1131 = vsel %vm754, %v1128, 0.0
      %1132 = vadd.xlane.f32.xlu0 %v1131
      %v1133 = vpop.xlane.xlu0 %1132
      %v1134 = vsel %vm754, %v1130, 0.0
      %1135 = vadd.xlane.f32.xlu0 %v1134
      %v1136 = vpop.xlane.xlu0 %1135
      %v1137 = vrcp.pop %v1133
      %v1138 = vrcp.pop %v1136
      %v1139 = vmul.f32 %v1128, %v1137
      %v1140 = vmul.f32 %v1130, %v1138
      %v1141 = vpack.c.bf16 %v1140, %v1139
      %1142 = vrot.lane.b32.xlu0 %v702, 40
      %v1143 = vpop.permute.xlu0 %1142
      %v1146 = vsel %vm754, %v1141, 0
      %1148 = vmatprep.subr.bf16.mxu0 0
      %1149 = vmatpush1.bf16.msra.mxu0 %v1143
      %1150 = vmatprep.subr.bf16.mxu0 0
      %1151 = vmatpush1.bf16.msra.mxu0 0
      %1152 = vmatprep.subr.bf16.mxu0 0
      %1153 = vmatpush1.bf16.msra.mxu0 0
      %1154 = vmatprep.subr.bf16.mxu0 0
      %1155 = vmatpush1.bf16.msra.mxu0 0
      %1156 = vmatprep.subr.bf16.mxu0 0
      %1157 = vmatpush1.bf16.msra.mxu0 0
      %1158 = vmatprep.subr.bf16.mxu0 0
      %1159 = vmatpush1.bf16.msra.mxu0 0
      %1160 = vmatprep.subr.bf16.mxu0 0
      %1161 = vmatpush1.bf16.msra.mxu0 0
      %1162 = vmatprep.subr.bf16.mxu0 0
      %1163 = vmatpush1.bf16.msra.mxu0 0
      %1164 = vmatprep.subr.bf16.mxu0 0
      %1165 = vmatpush1.bf16.msra.mxu0 0
      %1166 = vmatprep.subr.bf16.mxu0 0
      %1167 = vmatpush1.bf16.msra.mxu0 0
      %1168 = vmatprep.subr.bf16.mxu0 0
      %1169 = vmatpush1.bf16.msra.mxu0 0
      %1170 = vmatprep.subr.bf16.mxu0 0
      %1171 = vmatpush1.bf16.msra.mxu0 0
      %1172 = vmatprep.subr.bf16.mxu0 0
      %1173 = vmatpush1.bf16.msra.mxu0 0
      %1174 = vmatprep.subr.bf16.mxu0 0
      %1175 = vmatpush1.bf16.msra.mxu0 0
      %1176 = vmatprep.subr.bf16.mxu0 0
      %1177 = vmatpush1.bf16.msra.mxu0 0
      %1178 = vmatprep.subr.bf16.mxu0 0
      %1179 = vmatpush1.bf16.msra.mxu0 0
      %1180 = vmatprep.mubr.bf16.mxu0 0
      %1181 = vmatmul.mubr.bf16.gmra.mrb[0].mxu0 %v1146
      %v1182 = vpop.f32.mrb[0].mxu0
      %v1183 = vadd.f32 0.0, %v1182
      %v1184 = vpop.f32.mrb[0].mxu0
      %v1185 = vpop.f32.mrb[0].mxu0
      %v1186 = vadd.f32 0.0, %v1185
      %v1187 = vpop.f32.mrb[0].mxu0
      %1188 = vdwg.mxu0
      %1191 = vrot.lane.b32.xlu0 %v941, 8
      %v1192 = vpop.permute.xlu0 %1191
      %1193 = vrot.lane.b32.xlu0 %v944, 8
      %v1194 = vpop.permute.xlu0 %1193
      %1199 = vrot.lane.b32.xlu0 %v1062, 16
      %v1200 = vpop.permute.xlu0 %1199
      %1201 = vrot.lane.b32.xlu0 %v1065, 16
      %v1202 = vpop.permute.xlu0 %1201
      %1207 = vrot.lane.b32.xlu0 %v1183, 24
      %v1208 = vpop.permute.xlu0 %1207
      %1209 = vrot.lane.b32.xlu0 %v1186, 24
      %v1210 = vpop.permute.xlu0 %1209
      %v1213 = vsel %vm706, %v819, %v1192
      %v1214 = vsel %vm706, %v822, %v1194
      %v1215 = vsel %vm754, %v1213, %v1200
      %v1216 = vsel %vm754, %v1214, %v1202
      %vm1217 = vcmask 195584
      %v1218 = vsel %vm1217, %v1215, %v1208
      %v1219 = vsel %vm1217, %v1216, %v1210
      %v1220 = vpack.c.bf16 %v700, %v699
      %v1221 = vpack.c.bf16 %v694, %v691
      %1223 = vrot.lane.b32.xlu0 %v1221, 96
      %v1224 = vpop.permute.xlu0 %1223
      %v1226 = vsel %vm706, %v1220, 0
      %v1229 = vsel %vm706, %v1224, 0
      %1231 = vmatprep.subr.bf16.mxu0 0
      %1232 = vmatpush1.bf16.xpose.msra.mxu0 %v1229
      %1233 = vmatprep.subr.bf16.mxu0 0
      %1234 = vmatpush1.bf16.xpose.msra.mxu0 0
      %1235 = vmatprep.subr.bf16.mxu0 0
      %1236 = vmatpush1.bf16.xpose.msra.mxu0 0
      %1237 = vmatprep.subr.bf16.mxu0 0
      %1238 = vmatpush1.bf16.xpose.msra.mxu0 0
      %1239 = vmatprep.subr.bf16.mxu0 0
      %1240 = vmatpush1.bf16.xpose.msra.mxu0 0
      %1241 = vmatprep.subr.bf16.mxu0 0
      %1242 = vmatpush1.bf16.xpose.msra.mxu0 0
      %1243 = vmatprep.subr.bf16.mxu0 0
      %1244 = vmatpush1.bf16.xpose.msra.mxu0 0
      %1245 = vmatprep.subr.bf16.mxu0 0
      %1246 = vmatpush1.bf16.xpose.msra.mxu0 0
      %1247 = vmatprep.subr.bf16.mxu0 0
      %1248 = vmatpush1.bf16.xpose.msra.mxu0 0
      %1249 = vmatprep.subr.bf16.mxu0 0
      %1250 = vmatpush1.bf16.xpose.msra.mxu0 0
      %1251 = vmatprep.subr.bf16.mxu0 0
      %1252 = vmatpush1.bf16.xpose.msra.mxu0 0
      %1253 = vmatprep.subr.bf16.mxu0 0
      %1254 = vmatpush1.bf16.xpose.msra.mxu0 0
      %1255 = vmatprep.subr.bf16.mxu0 0
      %1256 = vmatpush1.bf16.xpose.msra.mxu0 0
      %1257 = vmatprep.subr.bf16.mxu0 0
      %1258 = vmatpush1.bf16.xpose.msra.mxu0 0
      %1259 = vmatprep.subr.bf16.mxu0 0
      %1260 = vmatpush1.bf16.xpose.msra.mxu0 0
      %1261 = vmatprep.subr.bf16.mxu0 0
      %1262 = vmatpush1.bf16.xpose.msra.mxu0 0
      %1263 = vmatprep.mubr.bf16.mxu0 0
      %1264 = vmatmul.mubr.bf16.gmra.mrb[0].mxu0 %v1226
      %v1265 = vpop.f32.mrb[0].mxu0
      %v1266 = vadd.f32 0.0, %v1265
      %v1267 = vpop.f32.mrb[0].mxu0
      %v1268 = vpop.f32.mrb[0].mxu0
      %v1269 = vadd.f32 0.0, %v1268
      %v1270 = vpop.f32.mrb[0].mxu0
      %1271 = vdwg.mxu0
      %v1272 = vsel %vm754, %v1266, -inf
      %1273 = vmax.xlane.f32.xlu0 %v1272
      %v1274 = vpop.xlane.xlu0 %1273
      %v1275 = vsel %vm754, %v1269, -inf
      %1276 = vmax.xlane.f32.xlu0 %v1275
      %v1277 = vpop.xlane.xlu0 %1276
      %v1278 = vsub.f32 %v1266, %v1274
      %v1279 = vsub.f32 %v1269, %v1277
      %v1280 = vmul.f32 %v1278, 1.442695
      %v1281 = vpow.pop %v1280
      %v1282 = vmul.f32 %v1279, 1.442695
      %v1283 = vpow.pop %v1282
      %v1284 = vsel %vm754, %v1281, 0.0
      %1285 = vadd.xlane.f32.xlu0 %v1284
      %v1286 = vpop.xlane.xlu0 %1285
      %v1287 = vsel %vm754, %v1283, 0.0
      %1288 = vadd.xlane.f32.xlu0 %v1287
      %v1289 = vpop.xlane.xlu0 %1288
      %v1290 = vrcp.pop %v1286
      %v1291 = vrcp.pop %v1289
      %v1292 = vmul.f32 %v1281, %v1290
      %v1293 = vmul.f32 %v1283, %v1291
      %v1294 = vpack.c.bf16 %v1293, %v1292
      %1295 = vrot.lane.b32.xlu0 %v1221, 64
      %v1296 = vpop.permute.xlu0 %1295
      %v1299 = vsel %vm754, %v1294, 0
      %1301 = vmatprep.subr.bf16.mxu0 0
      %1302 = vmatpush1.bf16.msra.mxu0 %v1296
      %1303 = vmatprep.subr.bf16.mxu0 0
      %1304 = vmatpush1.bf16.msra.mxu0 0
      %1305 = vmatprep.subr.bf16.mxu0 0
      %1306 = vmatpush1.bf16.msra.mxu0 0
      %1307 = vmatprep.subr.bf16.mxu0 0
      %1308 = vmatpush1.bf16.msra.mxu0 0
      %1309 = vmatprep.subr.bf16.mxu0 0
      %1310 = vmatpush1.bf16.msra.mxu0 0
      %1311 = vmatprep.subr.bf16.mxu0 0
      %1312 = vmatpush1.bf16.msra.mxu0 0
      %1313 = vmatprep.subr.bf16.mxu0 0
      %1314 = vmatpush1.bf16.msra.mxu0 0
      %1315 = vmatprep.subr.bf16.mxu0 0
      %1316 = vmatpush1.bf16.msra.mxu0 0
      %1317 = vmatprep.subr.bf16.mxu0 0
      %1318 = vmatpush1.bf16.msra.mxu0 0
      %1319 = vmatprep.subr.bf16.mxu0 0
      %1320 = vmatpush1.bf16.msra.mxu0 0
      %1321 = vmatprep.subr.bf16.mxu0 0
      %1322 = vmatpush1.bf16.msra.mxu0 0
      %1323 = vmatprep.subr.bf16.mxu0 0
      %1324 = vmatpush1.bf16.msra.mxu0 0
      %1325 = vmatprep.subr.bf16.mxu0 0
      %1326 = vmatpush1.bf16.msra.mxu0 0
      %1327 = vmatprep.subr.bf16.mxu0 0
      %1328 = vmatpush1.bf16.msra.mxu0 0
      %1329 = vmatprep.subr.bf16.mxu0 0
      %1330 = vmatpush1.bf16.msra.mxu0 0
      %1331 = vmatprep.subr.bf16.mxu0 0
      %1332 = vmatpush1.bf16.msra.mxu0 0
      %1333 = vmatprep.mubr.bf16.mxu0 0
      %1334 = vmatmul.mubr.bf16.gmra.mrb[0].mxu0 %v1299
      %v1335 = vpop.f32.mrb[0].mxu0
      %v1336 = vadd.f32 0.0, %v1335
      %v1337 = vpop.f32.mrb[0].mxu0
      %v1338 = vpop.f32.mrb[0].mxu0
      %v1339 = vadd.f32 0.0, %v1338
      %v1340 = vpop.f32.mrb[0].mxu0
      %1341 = vdwg.mxu0
      %1343 = vrot.lane.b32.xlu0 %v1220, 120
      %v1344 = vpop.permute.xlu0 %1343
      %1345 = vrot.lane.b32.xlu0 %v1221, 88
      %v1346 = vpop.permute.xlu0 %1345
      %v1348 = vsel %vm706, %v1344, 0
      %v1351 = vsel %vm706, %v1346, 0
      %1353 = vmatprep.subr.bf16.mxu0 0
      %1354 = vmatpush1.bf16.xpose.msra.mxu0 %v1351
      %1355 = vmatprep.subr.bf16.mxu0 0
      %1356 = vmatpush1.bf16.xpose.msra.mxu0 0
      %1357 = vmatprep.subr.bf16.mxu0 0
      %1358 = vmatpush1.bf16.xpose.msra.mxu0 0
      %1359 = vmatprep.subr.bf16.mxu0 0
      %1360 = vmatpush1.bf16.xpose.msra.mxu0 0
      %1361 = vmatprep.subr.bf16.mxu0 0
      %1362 = vmatpush1.bf16.xpose.msra.mxu0 0
      %1363 = vmatprep.subr.bf16.mxu0 0
      %1364 = vmatpush1.bf16.xpose.msra.mxu0 0
      %1365 = vmatprep.subr.bf16.mxu0 0
      %1366 = vmatpush1.bf16.xpose.msra.mxu0 0
      %1367 = vmatprep.subr.bf16.mxu0 0
      %1368 = vmatpush1.bf16.xpose.msra.mxu0 0
      %1369 = vmatprep.subr.bf16.mxu0 0
      %1370 = vmatpush1.bf16.xpose.msra.mxu0 0
      %1371 = vmatprep.subr.bf16.mxu0 0
      %1372 = vmatpush1.bf16.xpose.msra.mxu0 0
      %1373 = vmatprep.subr.bf16.mxu0 0
      %1374 = vmatpush1.bf16.xpose.msra.mxu0 0
      %1375 = vmatprep.subr.bf16.mxu0 0
      %1376 = vmatpush1.bf16.xpose.msra.mxu0 0
      %1377 = vmatprep.subr.bf16.mxu0 0
      %1378 = vmatpush1.bf16.xpose.msra.mxu0 0
      %1379 = vmatprep.subr.bf16.mxu0 0
      %1380 = vmatpush1.bf16.xpose.msra.mxu0 0
      %1381 = vmatprep.subr.bf16.mxu0 0
      %1382 = vmatpush1.bf16.xpose.msra.mxu0 0
      %1383 = vmatprep.subr.bf16.mxu0 0
      %1384 = vmatpush1.bf16.xpose.msra.mxu0 0
      %1385 = vmatprep.mubr.bf16.mxu0 0
      %1386 = vmatmul.mubr.bf16.gmra.mrb[0].mxu0 %v1348
      %v1387 = vpop.f32.mrb[0].mxu0
      %v1388 = vadd.f32 0.0, %v1387
      %v1389 = vpop.f32.mrb[0].mxu0
      %v1390 = vpop.f32.mrb[0].mxu0
      %v1391 = vadd.f32 0.0, %v1390
      %v1392 = vpop.f32.mrb[0].mxu0
      %1393 = vdwg.mxu0
      %v1394 = vsel %vm754, %v1388, -inf
      %1395 = vmax.xlane.f32.xlu0 %v1394
      %v1396 = vpop.xlane.xlu0 %1395
      %v1397 = vsel %vm754, %v1391, -inf
      %1398 = vmax.xlane.f32.xlu0 %v1397
      %v1399 = vpop.xlane.xlu0 %1398
      %v1400 = vsub.f32 %v1388, %v1396
      %v1401 = vsub.f32 %v1391, %v1399
      %v1402 = vmul.f32 %v1400, 1.442695
      %v1403 = vpow.pop %v1402
      %v1404 = vmul.f32 %v1401, 1.442695
      %v1405 = vpow.pop %v1404
      %v1406 = vsel %vm754, %v1403, 0.0
      %1407 = vadd.xlane.f32.xlu0 %v1406
      %v1408 = vpop.xlane.xlu0 %1407
      %v1409 = vsel %vm754, %v1405, 0.0
      %1410 = vadd.xlane.f32.xlu0 %v1409
      %v1411 = vpop.xlane.xlu0 %1410
      %v1412 = vrcp.pop %v1408
      %v1413 = vrcp.pop %v1411
      %v1414 = vmul.f32 %v1403, %v1412
      %v1415 = vmul.f32 %v1405, %v1413
      %v1416 = vpack.c.bf16 %v1415, %v1414
      %1417 = vrot.lane.b32.xlu0 %v1221, 56
      %v1418 = vpop.permute.xlu0 %1417
      %v1421 = vsel %vm754, %v1416, 0
      %1423 = vmatprep.subr.bf16.mxu0 0
      %1424 = vmatpush1.bf16.msra.mxu0 %v1418
      %1425 = vmatprep.subr.bf16.mxu0 0
      %1426 = vmatpush1.bf16.msra.mxu0 0
      %1427 = vmatprep.subr.bf16.mxu0 0
      %1428 = vmatpush1.bf16.msra.mxu0 0
      %1429 = vmatprep.subr.bf16.mxu0 0
      %1430 = vmatpush1.bf16.msra.mxu0 0
      %1431 = vmatprep.subr.bf16.mxu0 0
      %1432 = vmatpush1.bf16.msra.mxu0 0
      %1433 = vmatprep.subr.bf16.mxu0 0
      %1434 = vmatpush1.bf16.msra.mxu0 0
      %1435 = vmatprep.subr.bf16.mxu0 0
      %1436 = vmatpush1.bf16.msra.mxu0 0
      %1437 = vmatprep.subr.bf16.mxu0 0
      %1438 = vmatpush1.bf16.msra.mxu0 0
      %1439 = vmatprep.subr.bf16.mxu0 0
      %1440 = vmatpush1.bf16.msra.mxu0 0
      %1441 = vmatprep.subr.bf16.mxu0 0
      %1442 = vmatpush1.bf16.msra.mxu0 0
      %1443 = vmatprep.subr.bf16.mxu0 0
      %1444 = vmatpush1.bf16.msra.mxu0 0
      %1445 = vmatprep.subr.bf16.mxu0 0
      %1446 = vmatpush1.bf16.msra.mxu0 0
      %1447 = vmatprep.subr.bf16.mxu0 0
      %1448 = vmatpush1.bf16.msra.mxu0 0
      %1449 = vmatprep.subr.bf16.mxu0 0
      %1450 = vmatpush1.bf16.msra.mxu0 0
      %1451 = vmatprep.subr.bf16.mxu0 0
      %1452 = vmatpush1.bf16.msra.mxu0 0
      %1453 = vmatprep.subr.bf16.mxu0 0
      %1454 = vmatpush1.bf16.msra.mxu0 0
      %1455 = vmatprep.mubr.bf16.mxu0 0
      %1456 = vmatmul.mubr.bf16.gmra.mrb[0].mxu0 %v1421
      %v1457 = vpop.f32.mrb[0].mxu0
      %v1458 = vadd.f32 0.0, %v1457
      %v1459 = vpop.f32.mrb[0].mxu0
      %v1460 = vpop.f32.mrb[0].mxu0
      %v1461 = vadd.f32 0.0, %v1460
      %v1462 = vpop.f32.mrb[0].mxu0
      %1463 = vdwg.mxu0
      %1464 = vrot.lane.b32.xlu0 %v1220, 112
      %v1465 = vpop.permute.xlu0 %1464
      %1466 = vrot.lane.b32.xlu0 %v1221, 80
      %v1467 = vpop.permute.xlu0 %1466
      %v1469 = vsel %vm706, %v1465, 0
      %v1472 = vsel %vm706, %v1467, 0
      %1474 = vmatprep.subr.bf16.mxu0 0
      %1475 = vmatpush1.bf16.xpose.msra.mxu0 %v1472
      %1476 = vmatprep.subr.bf16.mxu0 0
      %1477 = vmatpush1.bf16.xpose.msra.mxu0 0
      %1478 = vmatprep.subr.bf16.mxu0 0
      %1479 = vmatpush1.bf16.xpose.msra.mxu0 0
      %1480 = vmatprep.subr.bf16.mxu0 0
      %1481 = vmatpush1.bf16.xpose.msra.mxu0 0
      %1482 = vmatprep.subr.bf16.mxu0 0
      %1483 = vmatpush1.bf16.xpose.msra.mxu0 0
      %1484 = vmatprep.subr.bf16.mxu0 0
      %1485 = vmatpush1.bf16.xpose.msra.mxu0 0
      %1486 = vmatprep.subr.bf16.mxu0 0
      %1487 = vmatpush1.bf16.xpose.msra.mxu0 0
      %1488 = vmatprep.subr.bf16.mxu0 0
      %1489 = vmatpush1.bf16.xpose.msra.mxu0 0
      %1490 = vmatprep.subr.bf16.mxu0 0
      %1491 = vmatpush1.bf16.xpose.msra.mxu0 0
      %1492 = vmatprep.subr.bf16.mxu0 0
      %1493 = vmatpush1.bf16.xpose.msra.mxu0 0
      %1494 = vmatprep.subr.bf16.mxu0 0
      %1495 = vmatpush1.bf16.xpose.msra.mxu0 0
      %1496 = vmatprep.subr.bf16.mxu0 0
      %1497 = vmatpush1.bf16.xpose.msra.mxu0 0
      %1498 = vmatprep.subr.bf16.mxu0 0
      %1499 = vmatpush1.bf16.xpose.msra.mxu0 0
      %1500 = vmatprep.subr.bf16.mxu0 0
      %1501 = vmatpush1.bf16.xpose.msra.mxu0 0
      %1502 = vmatprep.subr.bf16.mxu0 0
      %1503 = vmatpush1.bf16.xpose.msra.mxu0 0
      %1504 = vmatprep.subr.bf16.mxu0 0
      %1505 = vmatpush1.bf16.xpose.msra.mxu0 0
      %1506 = vmatprep.mubr.bf16.mxu0 0
      %1507 = vmatmul.mubr.bf16.gmra.mrb[0].mxu0 %v1469
      %v1508 = vpop.f32.mrb[0].mxu0
      %v1509 = vadd.f32 0.0, %v1508
      %v1510 = vpop.f32.mrb[0].mxu0
      %v1511 = vpop.f32.mrb[0].mxu0
      %v1512 = vadd.f32 0.0, %v1511
      %v1513 = vpop.f32.mrb[0].mxu0
      %1514 = vdwg.mxu0
      %v1515 = vsel %vm754, %v1509, -inf
      %1516 = vmax.xlane.f32.xlu0 %v1515
      %v1517 = vpop.xlane.xlu0 %1516
      %v1518 = vsel %vm754, %v1512, -inf
      %1519 = vmax.xlane.f32.xlu0 %v1518
      %v1520 = vpop.xlane.xlu0 %1519
      %v1521 = vsub.f32 %v1509, %v1517
      %v1522 = vsub.f32 %v1512, %v1520
      %v1523 = vmul.f32 %v1521, 1.442695
      %v1524 = vpow.pop %v1523
      %v1525 = vmul.f32 %v1522, 1.442695
      %v1526 = vpow.pop %v1525
      %v1527 = vsel %vm754, %v1524, 0.0
      %1528 = vadd.xlane.f32.xlu0 %v1527
      %v1529 = vpop.xlane.xlu0 %1528
      %v1530 = vsel %vm754, %v1526, 0.0
      %1531 = vadd.xlane.f32.xlu0 %v1530
      %v1532 = vpop.xlane.xlu0 %1531
      %v1533 = vrcp.pop %v1529
      %v1534 = vrcp.pop %v1532
      %v1535 = vmul.f32 %v1524, %v1533
      %v1536 = vmul.f32 %v1526, %v1534
      %v1537 = vpack.c.bf16 %v1536, %v1535
      %1538 = vrot.lane.b32.xlu0 %v1221, 48
      %v1539 = vpop.permute.xlu0 %1538
      %v1542 = vsel %vm754, %v1537, 0
      %1544 = vmatprep.subr.bf16.mxu0 0
      %1545 = vmatpush1.bf16.msra.mxu0 %v1539
      %1546 = vmatprep.subr.bf16.mxu0 0
      %1547 = vmatpush1.bf16.msra.mxu0 0
      %1548 = vmatprep.subr.bf16.mxu0 0
      %1549 = vmatpush1.bf16.msra.mxu0 0
      %1550 = vmatprep.subr.bf16.mxu0 0
      %1551 = vmatpush1.bf16.msra.mxu0 0
      %1552 = vmatprep.subr.bf16.mxu0 0
      %1553 = vmatpush1.bf16.msra.mxu0 0
      %1554 = vmatprep.subr.bf16.mxu0 0
      %1555 = vmatpush1.bf16.msra.mxu0 0
      %1556 = vmatprep.subr.bf16.mxu0 0
      %1557 = vmatpush1.bf16.msra.mxu0 0
      %1558 = vmatprep.subr.bf16.mxu0 0
      %1559 = vmatpush1.bf16.msra.mxu0 0
      %1560 = vmatprep.subr.bf16.mxu0 0
      %1561 = vmatpush1.bf16.msra.mxu0 0
      %1562 = vmatprep.subr.bf16.mxu0 0
      %1563 = vmatpush1.bf16.msra.mxu0 0
      %1564 = vmatprep.subr.bf16.mxu0 0
      %1565 = vmatpush1.bf16.msra.mxu0 0
      %1566 = vmatprep.subr.bf16.mxu0 0
      %1567 = vmatpush1.bf16.msra.mxu0 0
      %1568 = vmatprep.subr.bf16.mxu0 0
      %1569 = vmatpush1.bf16.msra.mxu0 0
      %1570 = vmatprep.subr.bf16.mxu0 0
      %1571 = vmatpush1.bf16.msra.mxu0 0
      %1572 = vmatprep.subr.bf16.mxu0 0
      %1573 = vmatpush1.bf16.msra.mxu0 0
      %1574 = vmatprep.subr.bf16.mxu0 0
      %1575 = vmatpush1.bf16.msra.mxu0 0
      %1576 = vmatprep.mubr.bf16.mxu0 0
      %1577 = vmatmul.mubr.bf16.gmra.mrb[0].mxu0 %v1542
      %v1578 = vpop.f32.mrb[0].mxu0
      %v1579 = vadd.f32 0.0, %v1578
      %v1580 = vpop.f32.mrb[0].mxu0
      %v1581 = vpop.f32.mrb[0].mxu0
      %v1582 = vadd.f32 0.0, %v1581
      %v1583 = vpop.f32.mrb[0].mxu0
      %1584 = vdwg.mxu0
      %1585 = vrot.lane.b32.xlu0 %v1220, 104
      %v1586 = vpop.permute.xlu0 %1585
      %1587 = vrot.lane.b32.xlu0 %v1221, 72
      %v1588 = vpop.permute.xlu0 %1587
      %v1590 = vsel %vm706, %v1586, 0
      %v1593 = vsel %vm706, %v1588, 0
      %1595 = vmatprep.subr.bf16.mxu0 0
      %1596 = vmatpush1.bf16.xpose.msra.mxu0 %v1593
      %1597 = vmatprep.subr.bf16.mxu0 0
      %1598 = vmatpush1.bf16.xpose.msra.mxu0 0
      %1599 = vmatprep.subr.bf16.mxu0 0
      %1600 = vmatpush1.bf16.xpose.msra.mxu0 0
      %1601 = vmatprep.subr.bf16.mxu0 0
      %1602 = vmatpush1.bf16.xpose.msra.mxu0 0
      %1603 = vmatprep.subr.bf16.mxu0 0
      %1604 = vmatpush1.bf16.xpose.msra.mxu0 0
      %1605 = vmatprep.subr.bf16.mxu0 0
      %1606 = vmatpush1.bf16.xpose.msra.mxu0 0
      %1607 = vmatprep.subr.bf16.mxu0 0
      %1608 = vmatpush1.bf16.xpose.msra.mxu0 0
      %1609 = vmatprep.subr.bf16.mxu0 0
      %1610 = vmatpush1.bf16.xpose.msra.mxu0 0
      %1611 = vmatprep.subr.bf16.mxu0 0
      %1612 = vmatpush1.bf16.xpose.msra.mxu0 0
      %1613 = vmatprep.subr.bf16.mxu0 0
      %1614 = vmatpush1.bf16.xpose.msra.mxu0 0
      %1615 = vmatprep.subr.bf16.mxu0 0
      %1616 = vmatpush1.bf16.xpose.msra.mxu0 0
      %1617 = vmatprep.subr.bf16.mxu0 0
      %1618 = vmatpush1.bf16.xpose.msra.mxu0 0
      %1619 = vmatprep.subr.bf16.mxu0 0
      %1620 = vmatpush1.bf16.xpose.msra.mxu0 0
      %1621 = vmatprep.subr.bf16.mxu0 0
      %1622 = vmatpush1.bf16.xpose.msra.mxu0 0
      %1623 = vmatprep.subr.bf16.mxu0 0
      %1624 = vmatpush1.bf16.xpose.msra.mxu0 0
      %1625 = vmatprep.subr.bf16.mxu0 0
      %1626 = vmatpush1.bf16.xpose.msra.mxu0 0
      %1627 = vmatprep.mubr.bf16.mxu0 0
      %1628 = vmatmul.mubr.bf16.gmra.mrb[0].mxu0 %v1590
      %v1629 = vpop.f32.mrb[0].mxu0
      %v1630 = vadd.f32 0.0, %v1629
      %v1631 = vpop.f32.mrb[0].mxu0
      %v1632 = vpop.f32.mrb[0].mxu0
      %v1633 = vadd.f32 0.0, %v1632
      %v1634 = vpop.f32.mrb[0].mxu0
      %1635 = vdwg.mxu0
      %v1636 = vsel %vm754, %v1630, -inf
      %1637 = vmax.xlane.f32.xlu0 %v1636
      %v1638 = vpop.xlane.xlu0 %1637
      %v1639 = vsel %vm754, %v1633, -inf
      %1640 = vmax.xlane.f32.xlu0 %v1639
      %v1641 = vpop.xlane.xlu0 %1640
      %v1642 = vsub.f32 %v1630, %v1638
      %v1643 = vsub.f32 %v1633, %v1641
      %v1644 = vmul.f32 %v1642, 1.442695
      %v1645 = vpow.pop %v1644
      %v1646 = vmul.f32 %v1643, 1.442695
      %v1647 = vpow.pop %v1646
      %v1648 = vsel %vm754, %v1645, 0.0
      %1649 = vadd.xlane.f32.xlu0 %v1648
      %v1650 = vpop.xlane.xlu0 %1649
      %v1651 = vsel %vm754, %v1647, 0.0
      %1652 = vadd.xlane.f32.xlu0 %v1651
      %v1653 = vpop.xlane.xlu0 %1652
      %v1654 = vrcp.pop %v1650
      %v1655 = vrcp.pop %v1653
      %v1656 = vmul.f32 %v1645, %v1654
      %v1657 = vmul.f32 %v1647, %v1655
      %v1658 = vpack.c.bf16 %v1657, %v1656
      %1659 = vrot.lane.b32.xlu0 %v1221, 40
      %v1660 = vpop.permute.xlu0 %1659
      %v1663 = vsel %vm754, %v1658, 0
      %1665 = vmatprep.subr.bf16.mxu0 0
      %1666 = vmatpush1.bf16.msra.mxu0 %v1660
      %1667 = vmatprep.subr.bf16.mxu0 0
      %1668 = vmatpush1.bf16.msra.mxu0 0
      %1669 = vmatprep.subr.bf16.mxu0 0
      %1670 = vmatpush1.bf16.msra.mxu0 0
      %1671 = vmatprep.subr.bf16.mxu0 0
      %1672 = vmatpush1.bf16.msra.mxu0 0
      %1673 = vmatprep.subr.bf16.mxu0 0
      %1674 = vmatpush1.bf16.msra.mxu0 0
      %1675 = vmatprep.subr.bf16.mxu0 0
      %1676 = vmatpush1.bf16.msra.mxu0 0
      %1677 = vmatprep.subr.bf16.mxu0 0
      %1678 = vmatpush1.bf16.msra.mxu0 0
      %1679 = vmatprep.subr.bf16.mxu0 0
      %1680 = vmatpush1.bf16.msra.mxu0 0
      %1681 = vmatprep.subr.bf16.mxu0 0
      %1682 = vmatpush1.bf16.msra.mxu0 0
      %1683 = vmatprep.subr.bf16.mxu0 0
      %1684 = vmatpush1.bf16.msra.mxu0 0
      %1685 = vmatprep.subr.bf16.mxu0 0
      %1686 = vmatpush1.bf16.msra.mxu0 0
      %1687 = vmatprep.subr.bf16.mxu0 0
      %1688 = vmatpush1.bf16.msra.mxu0 0
      %1689 = vmatprep.subr.bf16.mxu0 0
      %1690 = vmatpush1.bf16.msra.mxu0 0
      %1691 = vmatprep.subr.bf16.mxu0 0
      %1692 = vmatpush1.bf16.msra.mxu0 0
      %1693 = vmatprep.subr.bf16.mxu0 0
      %1694 = vmatpush1.bf16.msra.mxu0 0
      %1695 = vmatprep.subr.bf16.mxu0 0
      %1696 = vmatpush1.bf16.msra.mxu0 0
      %1697 = vmatprep.mubr.bf16.mxu0 0
      %1698 = vmatmul.mubr.bf16.gmra.mrb[0].mxu0 %v1663
      %v1699 = vpop.f32.mrb[0].mxu0
      %v1700 = vadd.f32 0.0, %v1699
      %v1701 = vpop.f32.mrb[0].mxu0
      %v1702 = vpop.f32.mrb[0].mxu0
      %v1703 = vadd.f32 0.0, %v1702
      %v1704 = vpop.f32.mrb[0].mxu0
      %1705 = vdwg.mxu0
      %1708 = vrot.lane.b32.xlu0 %v1458, 8
      %v1709 = vpop.permute.xlu0 %1708
      %1710 = vrot.lane.b32.xlu0 %v1461, 8
      %v1711 = vpop.permute.xlu0 %1710
      %1716 = vrot.lane.b32.xlu0 %v1579, 16
      %v1717 = vpop.permute.xlu0 %1716
      %1718 = vrot.lane.b32.xlu0 %v1582, 16
      %v1719 = vpop.permute.xlu0 %1718
      %1724 = vrot.lane.b32.xlu0 %v1700, 24
      %v1725 = vpop.permute.xlu0 %1724
      %1726 = vrot.lane.b32.xlu0 %v1703, 24
      %v1727 = vpop.permute.xlu0 %1726
      %v1730 = vsel %vm706, %v1336, %v1709
      %v1731 = vsel %vm706, %v1339, %v1711
      %v1732 = vsel %vm754, %v1730, %v1717
      %v1733 = vsel %vm754, %v1731, %v1719
      %v1734 = vsel %vm1217, %v1732, %v1725
      %v1735 = vsel %vm1217, %v1733, %v1727
      %v1736 = vpack.c.bf16 %v1219, %v1218
      %v1737 = vpack.c.bf16 %v1735, %v1734
      %v1738 = vld [vmem:[%s566] sm:$0xf]
      %v1739 = vld [vmem:[%s566 + $0x4] sm:$0xf]
      %v1740 = vld [vmem:[%s566 + $0x8] sm:$0xf]
      %v1741 = vld [vmem:[%s566 + $0xc] sm:$0xf]
      %v1742 = vld [vmem:[%s569] sm:$0x1]
      %v1744 = vlaneseq
      %v1745 = vshrl.u32 %v1744, 7
      %v1746 = vsub.s32 0, %v1745
      %v1747 = vrot.slane %v1742, %v1746
      %v1753 = vunpack.c.l.b16 %v1738
      %v1754 = vunpack.c.l.b16 %v1739
      %v1755 = vunpack.c.l.b16 %v1740
      %v1756 = vunpack.c.l.b16 %v1741
      %v1757 = vpack.c.b16 %v1754, %v1753
      %v1758 = vpack.c.b16 %v1756, %v1755
      %v1762 = vsel %vm641, %v1736, 0
      %v1765 = vsel %vm641, %v1737, 0
      %1767 = vmatprep.subr.bf16.mxu0 0
      %1768 = vmatpush1.bf16.msra.mxu0 %v1757
      %1769 = vmatprep.subr.bf16.mxu0 0
      %1770 = vmatpush1.bf16.msra.mxu0 %v1758
      %1771 = vmatprep.subr.bf16.mxu0 0
      %1772 = vmatpush1.bf16.msra.mxu0 0
      %1773 = vmatprep.subr.bf16.mxu0 0
      %1774 = vmatpush1.bf16.msra.mxu0 0
      %1775 = vmatprep.subr.bf16.mxu0 0
      %1776 = vmatpush1.bf16.msra.mxu0 0
      %1777 = vmatprep.subr.bf16.mxu0 0
      %1778 = vmatpush1.bf16.msra.mxu0 0
      %1779 = vmatprep.subr.bf16.mxu0 0
      %1780 = vmatpush1.bf16.msra.mxu0 0
      %1781 = vmatprep.subr.bf16.mxu0 0
      %1782 = vmatpush1.bf16.msra.mxu0 0
      %1783 = vmatprep.subr.bf16.mxu0 0
      %1784 = vmatpush1.bf16.msra.mxu0 0
      %1785 = vmatprep.subr.bf16.mxu0 0
      %1786 = vmatpush1.bf16.msra.mxu0 0
      %1787 = vmatprep.subr.bf16.mxu0 0
      %1788 = vmatpush1.bf16.msra.mxu0 0
      %1789 = vmatprep.subr.bf16.mxu0 0
      %1790 = vmatpush1.bf16.msra.mxu0 0
      %1791 = vmatprep.subr.bf16.mxu0 0
      %1792 = vmatpush1.bf16.msra.mxu0 0
      %1793 = vmatprep.subr.bf16.mxu0 0
      %1794 = vmatpush1.bf16.msra.mxu0 0
      %1795 = vmatprep.subr.bf16.mxu0 0
      %1796 = vmatpush1.bf16.msra.mxu0 0
      %1797 = vmatprep.subr.bf16.mxu0 0
      %1798 = vmatpush1.bf16.msra.mxu0 0
      %1799 = vmatprep.mubr.bf16.mxu0 0
      %1800 = vmatmul.mubr.bf16.gmra.mrb[0].mxu0 %v1762
      %v1801 = vpop.f32.mrb[0].mxu0
      %v1802 = vadd.f32 %v1747, %v1801
      %v1803 = vpop.f32.mrb[0].mxu0
      %v1804 = vpop.f32.mrb[0].mxu0
      %v1805 = vadd.f32 %v1747, %v1804
      %v1806 = vpop.f32.mrb[0].mxu0
      %1807 = vmatprep.mubr.bf16.mxu0 0
      %1808 = vmatmul.mubr.bf16.gmra.mrb[0].mxu0 %v1765
      %v1809 = vpop.f32.mrb[0].mxu0
      %v1810 = vadd.f32 %v1747, %v1809
      %v1811 = vpop.f32.mrb[0].mxu0
      %v1812 = vpop.f32.mrb[0].mxu0
      %v1813 = vadd.f32 %v1747, %v1812
      %v1814 = vpop.f32.mrb[0].mxu0
      %1815 = vdwg.mxu0
      %v1816 = vadd.f32 %v612, %v1802
      %v1817 = vadd.f32 %v613, %v1805
      %v1818 = vadd.f32 %v614, %v1810
      %v1819 = vadd.f32 %v615, %v1813
      %v1820 = vld [vmem:[%s572] sm:$0x1]
      %v1821 = vld [vmem:[%s575] sm:$0x1]
      %v1822 = vsel %vm641, %v1816, 0.0
      %1823 = vadd.xlane.f32.xlu0 %v1822
      %v1824 = vpop.xlane.xlu0 %1823
      %v1825 = vsel %vm641, %v1817, 0.0
      %1826 = vadd.xlane.f32.xlu0 %v1825
      %v1827 = vpop.xlane.xlu0 %1826
      %v1828 = vsel %vm641, %v1818, 0.0
      %1829 = vadd.xlane.f32.xlu0 %v1828
      %v1830 = vpop.xlane.xlu0 %1829
      %v1831 = vsel %vm641, %v1819, 0.0
      %1832 = vadd.xlane.f32.xlu0 %v1831
      %v1833 = vpop.xlane.xlu0 %1832
      %v1834 = vrcp.pop 32.0
      %v1835 = vmul.f32 %v1824, %v1834
      %v1836 = vmul.f32 %v1827, %v1834
      %v1837 = vmul.f32 %v1830, %v1834
      %v1838 = vmul.f32 %v1833, %v1834
      %v1839 = vsub.f32 %v1816, %v1835
      %v1840 = vsub.f32 %v1817, %v1836
      %v1841 = vsub.f32 %v1818, %v1837
      %v1842 = vsub.f32 %v1819, %v1838
      %v1843 = vmul.f32 %v1839, %v1839
      %v1844 = vmul.f32 %v1840, %v1840
      %v1845 = vmul.f32 %v1841, %v1841
      %v1846 = vmul.f32 %v1842, %v1842
      %v1847 = vsel %vm641, %v1843, 0.0
      %1848 = vadd.xlane.f32.xlu0 %v1847
      %v1849 = vpop.xlane.xlu0 %1848
      %v1850 = vsel %vm641, %v1844, 0.0
      %1851 = vadd.xlane.f32.xlu0 %v1850
      %v1852 = vpop.xlane.xlu0 %1851
      %v1853 = vsel %vm641, %v1845, 0.0
      %1854 = vadd.xlane.f32.xlu0 %v1853
      %v1855 = vpop.xlane.xlu0 %1854
      %v1856 = vsel %vm641, %v1846, 0.0
      %1857 = vadd.xlane.f32.xlu0 %v1856
      %v1858 = vpop.xlane.xlu0 %1857
      %v1859 = vmul.f32 %v1849, %v1834
      %v1860 = vmul.f32 %v1852, %v1834
      %v1861 = vmul.f32 %v1855, %v1834
      %v1862 = vmul.f32 %v1858, %v1834
      %v1863 = vadd.f32 %v1859, 1e-06
      %v1864 = vadd.f32 %v1860, 1e-06
      %v1865 = vadd.f32 %v1861, 1e-06
      %v1866 = vadd.f32 %v1862, 1e-06
      %v1867 = vrsqrt.pop %v1863
      %v1868 = vrsqrt.pop %v1864
      %v1869 = vrsqrt.pop %v1865
      %v1870 = vrsqrt.pop %v1866
      %v1871 = vmul.f32 %v1839, %v1867
      %v1872 = vmul.f32 %v1840, %v1868
      %v1873 = vmul.f32 %v1841, %v1869
      %v1874 = vmul.f32 %v1842, %v1870
      %v1876 = vlaneseq
      %v1877 = vshrl.u32 %v1876, 7
      %v1878 = vsub.s32 0, %v1877
      %v1879 = vrot.slane %v1820, %v1878
      %v1881 = vmul.f32 %v1871, %v1879
      %v1882 = vmul.f32 %v1872, %v1879
      %v1883 = vmul.f32 %v1873, %v1879
      %v1884 = vmul.f32 %v1874, %v1879
      %v1886 = vlaneseq
      %v1887 = vshrl.u32 %v1886, 7
      %v1888 = vsub.s32 0, %v1887
      %v1889 = vrot.slane %v1821, %v1888
      %v1891 = vadd.f32 %v1881, %v1889
      %v1892 = vadd.f32 %v1882, %v1889
      %v1893 = vadd.f32 %v1883, %v1889
      %v1894 = vadd.f32 %v1884, %v1889
      %v1895 = vpack.c.bf16 %v1892, %v1891
      %v1896 = vpack.c.bf16 %v1894, %v1893
      %v1897 = vld [vmem:[%s580] sm:$0xf]
      %v1898 = vld [vmem:[%s580 + $0x4] sm:$0xf]
      %v1899 = vld [vmem:[%s580 + $0x8] sm:$0xf]
      %v1900 = vld [vmem:[%s580 + $0xc] sm:$0xf]
      %v1901 = vld [vmem:[%s583] sm:$0x1]
      %v1903 = vlaneseq
      %v1904 = vshrl.u32 %v1903, 7
      %v1905 = vsub.s32 0, %v1904
      %v1906 = vrot.slane %v1901, %v1905
      %v1912 = vunpack.c.l.b16 %v1897
      %v1913 = vunpack.c.l.b16 %v1898
      %v1914 = vunpack.c.l.b16 %v1899
      %v1915 = vunpack.c.l.b16 %v1900
      %v1916 = vpack.c.b16 %v1913, %v1912
      %v1917 = vpack.c.b16 %v1915, %v1914
      %v1921 = vsel %vm641, %v1895, 0
      %v1924 = vsel %vm641, %v1896, 0
      %1926 = vmatprep.subr.bf16.mxu0 0
      %1927 = vmatpush1.bf16.msra.mxu0 %v1916
      %1928 = vmatprep.subr.bf16.mxu0 0
      %1929 = vmatpush1.bf16.msra.mxu0 %v1917
      %1930 = vmatprep.subr.bf16.mxu0 0
      %1931 = vmatpush1.bf16.msra.mxu0 0
      %1932 = vmatprep.subr.bf16.mxu0 0
      %1933 = vmatpush1.bf16.msra.mxu0 0
      %1934 = vmatprep.subr.bf16.mxu0 0
      %1935 = vmatpush1.bf16.msra.mxu0 0
      %1936 = vmatprep.subr.bf16.mxu0 0
      %1937 = vmatpush1.bf16.msra.mxu0 0
      %1938 = vmatprep.subr.bf16.mxu0 0
      %1939 = vmatpush1.bf16.msra.mxu0 0
      %1940 = vmatprep.subr.bf16.mxu0 0
      %1941 = vmatpush1.bf16.msra.mxu0 0
      %1942 = vmatprep.subr.bf16.mxu0 0
      %1943 = vmatpush1.bf16.msra.mxu0 0
      %1944 = vmatprep.subr.bf16.mxu0 0
      %1945 = vmatpush1.bf16.msra.mxu0 0
      %1946 = vmatprep.subr.bf16.mxu0 0
      %1947 = vmatpush1.bf16.msra.mxu0 0
      %1948 = vmatprep.subr.bf16.mxu0 0
      %1949 = vmatpush1.bf16.msra.mxu0 0
      %1950 = vmatprep.subr.bf16.mxu0 0
      %1951 = vmatpush1.bf16.msra.mxu0 0
      %1952 = vmatprep.subr.bf16.mxu0 0
      %1953 = vmatpush1.bf16.msra.mxu0 0
      %1954 = vmatprep.subr.bf16.mxu0 0
      %1955 = vmatpush1.bf16.msra.mxu0 0
      %1956 = vmatprep.subr.bf16.mxu0 0
      %1957 = vmatpush1.bf16.msra.mxu0 0
      %1958 = vmatprep.mubr.bf16.mxu0 0
      %1959 = vmatmul.mubr.bf16.gmra.mrb[0].mxu0 %v1921
      %v1960 = vpop.f32.mrb[0].mxu0
      %v1961 = vadd.f32 %v1906, %v1960
      %v1962 = vpop.f32.mrb[0].mxu0
      %v1963 = vpop.f32.mrb[0].mxu0
      %v1964 = vadd.f32 %v1906, %v1963
      %v1965 = vpop.f32.mrb[0].mxu0
      %1966 = vmatprep.mubr.bf16.mxu0 0
      %1967 = vmatmul.mubr.bf16.gmra.mrb[0].mxu0 %v1924
      %v1968 = vpop.f32.mrb[0].mxu0
      %v1969 = vadd.f32 %v1906, %v1968
      %v1970 = vpop.f32.mrb[0].mxu0
      %v1971 = vpop.f32.mrb[0].mxu0
      %v1972 = vadd.f32 %v1906, %v1971
      %v1973 = vpop.f32.mrb[0].mxu0
      %1974 = vdwg.mxu0
      %v1975 = vmul.f32 %v1961, 0.5
      %v1976 = vmul.f32 %v1964, 0.5
      %v1977 = vmul.f32 %v1969, 0.5
      %v1978 = vmul.f32 %v1972, 0.5
      %v1979 = vmul.f32 %v1961, 0.70710677
      %v1980 = vmul.f32 %v1964, 0.70710677
      %v1981 = vmul.f32 %v1969, 0.70710677
      %v1982 = vmul.f32 %v1972, 0.70710677
      %v1983 = verf.f32.pop %v1979
      %v1984 = verf.f32.pop %v1980
      %v1985 = verf.f32.pop %v1981
      %v1986 = verf.f32.pop %v1982
      %v1987 = vadd.f32 %v1983, 1.0
      %v1988 = vadd.f32 %v1984, 1.0
      %v1989 = vadd.f32 %v1985, 1.0
      %v1990 = vadd.f32 %v1986, 1.0
      %v1991 = vmul.f32 %v1975, %v1987
      %v1992 = vmul.f32 %v1976, %v1988
      %v1993 = vmul.f32 %v1977, %v1989
      %v1994 = vmul.f32 %v1978, %v1990
      %v1995 = vpack.c.bf16 %v1992, %v1991
      %v1996 = vpack.c.bf16 %v1994, %v1993
      %v1997 = vld [vmem:[%s588] sm:$0xf]
      %v1998 = vld [vmem:[%s588 + $0x4] sm:$0xf]
      %v1999 = vld [vmem:[%s588 + $0x8] sm:$0xf]
      %v2000 = vld [vmem:[%s588 + $0xc] sm:$0xf]
      %v2001 = vld [vmem:[%s588 + $0x10] sm:$0xf]
      %v2002 = vld [vmem:[%s588 + $0x14] sm:$0xf]
      %v2003 = vld [vmem:[%s588 + $0x18] sm:$0xf]
      %v2004 = vld [vmem:[%s588 + $0x1c] sm:$0xf]
      %v2005 = vld [vmem:[%s591] sm:$0x1]
      %v2007 = vlaneseq
      %v2008 = vshrl.u32 %v2007, 7
      %v2009 = vsub.s32 0, %v2008
      %v2010 = vrot.slane %v2005, %v2009
      %v2020 = vunpack.c.l.b16 %v1997
      %v2021 = vunpack.c.l.b16 %v1998
      %v2022 = vunpack.c.l.b16 %v1999
      %v2023 = vunpack.c.l.b16 %v2000
      %v2024 = vunpack.c.l.b16 %v2001
      %v2025 = vunpack.c.l.b16 %v2002
      %v2026 = vunpack.c.l.b16 %v2003
      %v2027 = vunpack.c.l.b16 %v2004
      %v2028 = vpack.c.b16 %v2021, %v2020
      %v2029 = vpack.c.b16 %v2023, %v2022
      %v2030 = vpack.c.b16 %v2025, %v2024
      %v2031 = vpack.c.b16 %v2027, %v2026
      %vm2036 = vcmask 523264
      %v2038 = vsel %vm2036, %v1995, 0
      %v2041 = vsel %vm2036, %v1996, 0
      %2043 = vmatprep.subr.bf16.mxu0 0
      %2044 = vmatpush1.bf16.msra.mxu0 %v2028
      %2045 = vmatprep.subr.bf16.mxu0 0
      %2046 = vmatpush1.bf16.msra.mxu0 %v2029
      %2047 = vmatprep.subr.bf16.mxu0 0
      %2048 = vmatpush1.bf16.msra.mxu0 %v2030
      %2049 = vmatprep.subr.bf16.mxu0 0
      %2050 = vmatpush1.bf16.msra.mxu0 %v2031
      %2051 = vmatprep.subr.bf16.mxu0 0
      %2052 = vmatpush1.bf16.msra.mxu0 0
      %2053 = vmatprep.subr.bf16.mxu0 0
      %2054 = vmatpush1.bf16.msra.mxu0 0
      %2055 = vmatprep.subr.bf16.mxu0 0
      %2056 = vmatpush1.bf16.msra.mxu0 0
      %2057 = vmatprep.subr.bf16.mxu0 0
      %2058 = vmatpush1.bf16.msra.mxu0 0
      %2059 = vmatprep.subr.bf16.mxu0 0
      %2060 = vmatpush1.bf16.msra.mxu0 0
      %2061 = vmatprep.subr.bf16.mxu0 0
      %2062 = vmatpush1.bf16.msra.mxu0 0
      %2063 = vmatprep.subr.bf16.mxu0 0
      %2064 = vmatpush1.bf16.msra.mxu0 0
      %2065 = vmatprep.subr.bf16.mxu0 0
      %2066 = vmatpush1.bf16.msra.mxu0 0
      %2067 = vmatprep.subr.bf16.mxu0 0
      %2068 = vmatpush1.bf16.msra.mxu0 0
      %2069 = vmatprep.subr.bf16.mxu0 0
      %2070 = vmatpush1.bf16.msra.mxu0 0
      %2071 = vmatprep.subr.bf16.mxu0 0
      %2072 = vmatpush1.bf16.msra.mxu0 0
      %2073 = vmatprep.subr.bf16.mxu0 0
      %2074 = vmatpush1.bf16.msra.mxu0 0
      %2075 = vmatprep.mubr.bf16.mxu0 0
      %2076 = vmatmul.mubr.bf16.gmra.mrb[0].mxu0 %v2038
      %v2077 = vpop.f32.mrb[0].mxu0
      %v2078 = vadd.f32 %v2010, %v2077
      %v2079 = vpop.f32.mrb[0].mxu0
      %v2080 = vpop.f32.mrb[0].mxu0
      %v2081 = vadd.f32 %v2010, %v2080
      %v2082 = vpop.f32.mrb[0].mxu0
      %2083 = vmatprep.mubr.bf16.mxu0 0
      %2084 = vmatmul.mubr.bf16.gmra.mrb[0].mxu0 %v2041
      %v2085 = vpop.f32.mrb[0].mxu0
      %v2086 = vadd.f32 %v2010, %v2085
      %v2087 = vpop.f32.mrb[0].mxu0
      %v2088 = vpop.f32.mrb[0].mxu0
      %v2089 = vadd.f32 %v2010, %v2088
      %v2090 = vpop.f32.mrb[0].mxu0
      %2091 = vdwg.mxu0
      %v2092 = vadd.f32 %v1891, %v2078
      %v2093 = vadd.f32 %v1892, %v2081
      %v2094 = vadd.f32 %v1893, %v2086
      %v2095 = vadd.f32 %v1894, %v2089
      %v2096 = vld [vmem:[%s594] sm:$0x1]
      %v2097 = vld [vmem:[%s597] sm:$0x1]
      %v2098 = vsel %vm641, %v2092, 0.0
      %2099 = vadd.xlane.f32.xlu0 %v2098
      %v2100 = vpop.xlane.xlu0 %2099
      %v2101 = vsel %vm641, %v2093, 0.0
      %2102 = vadd.xlane.f32.xlu0 %v2101
      %v2103 = vpop.xlane.xlu0 %2102
      %v2104 = vsel %vm641, %v2094, 0.0
      %2105 = vadd.xlane.f32.xlu0 %v2104
      %v2106 = vpop.xlane.xlu0 %2105
      %v2107 = vsel %vm641, %v2095, 0.0
      %2108 = vadd.xlane.f32.xlu0 %v2107
      %v2109 = vpop.xlane.xlu0 %2108
      %v2110 = vmul.f32 %v2100, %v1834
      %v2111 = vmul.f32 %v2103, %v1834
      %v2112 = vmul.f32 %v2106, %v1834
      %v2113 = vmul.f32 %v2109, %v1834
      %v2114 = vsub.f32 %v2092, %v2110
      %v2115 = vsub.f32 %v2093, %v2111
      %v2116 = vsub.f32 %v2094, %v2112
      %v2117 = vsub.f32 %v2095, %v2113
      %v2118 = vmul.f32 %v2114, %v2114
      %v2119 = vmul.f32 %v2115, %v2115
      %v2120 = vmul.f32 %v2116, %v2116
      %v2121 = vmul.f32 %v2117, %v2117
      %v2122 = vsel %vm641, %v2118, 0.0
      %2123 = vadd.xlane.f32.xlu0 %v2122
      %v2124 = vpop.xlane.xlu0 %2123
      %v2125 = vsel %vm641, %v2119, 0.0
      %2126 = vadd.xlane.f32.xlu0 %v2125
      %v2127 = vpop.xlane.xlu0 %2126
      %v2128 = vsel %vm641, %v2120, 0.0
      %2129 = vadd.xlane.f32.xlu0 %v2128
      %v2130 = vpop.xlane.xlu0 %2129
      %v2131 = vsel %vm641, %v2121, 0.0
      %2132 = vadd.xlane.f32.xlu0 %v2131
      %v2133 = vpop.xlane.xlu0 %2132
      %v2134 = vmul.f32 %v2124, %v1834
      %v2135 = vmul.f32 %v2127, %v1834
      %v2136 = vmul.f32 %v2130, %v1834
      %v2137 = vmul.f32 %v2133, %v1834
      %v2138 = vadd.f32 %v2134, 1e-06
      %v2139 = vadd.f32 %v2135, 1e-06
      %v2140 = vadd.f32 %v2136, 1e-06
      %v2141 = vadd.f32 %v2137, 1e-06
      %v2142 = vrsqrt.pop %v2138
      %v2143 = vrsqrt.pop %v2139
      %v2144 = vrsqrt.pop %v2140
      %v2145 = vrsqrt.pop %v2141
      %v2146 = vmul.f32 %v2114, %v2142
      %v2147 = vmul.f32 %v2115, %v2143
      %v2148 = vmul.f32 %v2116, %v2144
      %v2149 = vmul.f32 %v2117, %v2145
      %v2151 = vlaneseq
      %v2152 = vshrl.u32 %v2151, 7
      %v2153 = vsub.s32 0, %v2152
      %v2154 = vrot.slane %v2096, %v2153
      %v2156 = vmul.f32 %v2146, %v2154
      %v2157 = vmul.f32 %v2147, %v2154
      %v2158 = vmul.f32 %v2148, %v2154
      %v2159 = vmul.f32 %v2149, %v2154
      %v2161 = vlaneseq
      %v2162 = vshrl.u32 %v2161, 7
      %v2163 = vsub.s32 0, %v2162
      %v2164 = vrot.slane %v2097, %v2163
      %v2166 = vadd.f32 %v2156, %v2164
      %v2167 = vadd.f32 %v2157, %v2164
      %v2168 = vadd.f32 %v2158, %v2164
      %v2169 = vadd.f32 %v2159, %v2164
      %2170 = vst.msk [vmem:[%s13] sm:$0xff] %vm641, %v2166
      %2171 = vst.msk [vmem:[%s13 + $0x8] sm:$0xff] %vm641, %v2167
      %2172 = vst.msk [vmem:[%s13 + $0x10] sm:$0xff] %vm641, %v2168
      %2173 = vst.msk [vmem:[%s13 + $0x18] sm:$0xff] %vm641, %v2169
      // Predicated region
      $region77: #{transformer_forward.3} parent=71 // pred_check
        %p2174 = pneg %p370
      $region78: #{transformer_forward.3} parent=71 // pred_check_branch
        %2176 = sbr.rel (%p2174) target = $region80
      $region79: #{transformer_forward.3} parent=71 // pred_region
        _
      $region80: #{transformer_forward.3} parent=71 // pred_fallthru
        _
      // Predicated region
      $region81: #{transformer_forward.3} parent=71 // pred_check
        %p2177 = pneg %p370
      $region82: #{transformer_forward.3} parent=71 // pred_check_branch
        %2179 = sbr.rel (%p2177) target = $region84
      $region83: #{transformer_forward.3} parent=71 // pred_region
        _
      $region84: #{transformer_forward.3} parent=71 // pred_fallthru
        _
    $region72: #{transformer_forward.3} parent=5 // pred_fallthru
      _
    %p2180 = scmp.le.s32.totalorder 2, %s19
    // Predicated region
    $region85: #{transformer_forward.3} parent=5 // pred_check
      %p2181 = pneg %p2180
    $region86: #{transformer_forward.3} parent=5 // pred_check_branch
      %2183 = sbr.rel (%p2181) target = $region88
    $region87: #{transformer_forward.3} parent=5 // pred_region
      %s2184 = ssub.s32 %s19, 2
    $region88: #{transformer_forward.3} parent=5 // pred_fallthru
      _
  $region6: #{transformer_forward.3} parent=0 // loop_footer
    %s23 = sadd.s32 1, %s19
  $region7: #{transformer_forward.3} parent=0 // loop_footer_branch
    %18 = sbr.rel target = $region3
  $region8: #{transformer_forward.3} parent=0 // loop_exit
    _

// kernel: transformer_forward.5
$region0: #{transformer_forward.5}
  #allocation0 [shape = 'u32[]', space=smem, size = 0x4, offset = 0x4, fixed_abs, tag = 'smem constant byte address 0x4 - core index']
  #allocation1 [shape = 'u32[144,128]{1,0:T(1,128)}', space=vmem, size = 0x12000, scoped, tag = 'internal scratch']
  #allocation2 [shape = 'f32[2,32]{1,0:T(2,128)}', space=vmem, size = 0x400, scoped, tag = 'scratch operand']
  %s0 = inlined_call_operand.vmem [shape: f32[2,32], index: 0, kind: input, shape index: {}]
  %s1 = inlined_call_operand.vmem [shape: f32[32,32], index: 1, kind: input, shape index: {}]
  %s2 = inlined_call_operand.vmem [shape: bf16[2,32,32], index: 2, kind: input, shape index: {}]
  %s3 = inlined_call_operand.vmem [shape: f32[2,1,32], index: 3, kind: input, shape index: {}]
  %s4 = inlined_call_operand.vmem [shape: bf16[2,32,32], index: 4, kind: input, shape index: {}]
  %s5 = inlined_call_operand.vmem [shape: f32[2,1,32], index: 5, kind: input, shape index: {}]
  %s6 = inlined_call_operand.vmem [shape: f32[2,1,32], index: 6, kind: input, shape index: {}]
  %s7 = inlined_call_operand.vmem [shape: f32[2,1,32], index: 7, kind: input, shape index: {}]
  %s8 = inlined_call_operand.vmem [shape: bf16[2,32,32], index: 8, kind: input, shape index: {}]
  %s9 = inlined_call_operand.vmem [shape: f32[2,1,32], index: 9, kind: input, shape index: {}]
  %s10 = inlined_call_operand.vmem [shape: bf16[2,32,64], index: 10, kind: input, shape index: {}]
  %s11 = inlined_call_operand.vmem [shape: f32[2,1,64], index: 11, kind: input, shape index: {}]
  %s12 = inlined_call_operand.vmem [shape: bf16[2,32,32], index: 12, kind: input, shape index: {}]
  %s13 = inlined_call_operand.vmem [shape: f32[2,1,32], index: 13, kind: input, shape index: {}]
  %s14 = inlined_call_operand.vmem [shape: f32[2,1,32], index: 14, kind: input, shape index: {}]
  %s15 = inlined_call_operand.vmem [shape: f32[2,1,32], index: 15, kind: input, shape index: {}]
  %s16 = inlined_call_operand.vmem [shape: bf16[2,32,64], index: 16, kind: input, shape index: {}]
  %s17 = inlined_call_operand.vmem [shape: f32[2,1,64], index: 17, kind: input, shape index: {}]
  %s18 = inlined_call_operand.vmem [shape: bf16[2,64,32], index: 18, kind: input, shape index: {}]
  %s19 = inlined_call_operand.vmem [shape: f32[2,1,32], index: 19, kind: input, shape index: {}]
  %s20 = inlined_call_operand.vmem [shape: f32[2,1,32], index: 20, kind: input, shape index: {}]
  %s21 = inlined_call_operand.vmem [shape: f32[2,1,32], index: 21, kind: input, shape index: {}]
  %s22 = inlined_call_operand.vmem [shape: f32[1,32], index: 22, kind: input, shape index: {}]
  %s23 = inlined_call_operand.vmem [shape: f32[1,32], index: 23, kind: input, shape index: {}]
  %s24 = inlined_call_operand.vmem [shape: bf16[32,128], index: 24, kind: input, shape index: {}]
  %s25 = inlined_call_operand.vmem [shape: f32[1,128], index: 25, kind: input, shape index: {}]
  %s26 = inlined_call_operand.hbm [shape: f32[2,128], index: 26, kind: output, shape index: {}]
  %s27 = sld [smem:[#allocation0]]
  $region145: #{transformer_forward.5} parent=0
    _
  %s29 = ssub.s32 1, %s27
  %s30 = scalar_select 0, %s29, %s27
  $region1: #{transformer_forward.5} parent=0
    #allocation3 [shape = 'u8[1024]{0}', space=vmem, size = 0x400, scoped, tag = 'output window, operand 0, single buffered']
    #allocation4 [shape = 's32[2]{0}', space=sflag, size = 0x8, scoped, tag = 'scoped memory for transformer_forward.5']
    %31 = vsyncpa [#allocation4], 0
    loop: start=0, step=1, limit=4
    $region2: #{transformer_forward.5} parent=1 // loop_pre_header
      _
    $region3: #{transformer_forward.5} parent=1 // loop_header
      %s33 = sphi 0, %s37
      %p34 = scmp.ge.s32.totalorder %s33, 4
      %s41 = sphi 0, %s41
      %s43 = sphi 0, %s41
      %s44 = sphi 0, %s43
      %s58 = sphi 0, %s44
      %s62 = sphi 0, %s62
      %s64 = sphi 0, %s62
      %s65 = sphi 0, %s64
      %s79 = sphi 0, %s65
      %s85 = sphi 0, %s87
      %s88 = sphi 0, %s85
      %s89 = sphi 0, %s88
      %s105 = sphi 0, %s89
      %s111 = sphi 0, %s113
      %s114 = sphi 0, %s111
      %s115 = sphi 0, %s114
      %s131 = sphi 0, %s115
      %s137 = sphi 0, %s139
      %s140 = sphi 0, %s137
      %s141 = sphi 0, %s140
      %s157 = sphi 0, %s141
      %s163 = sphi 0, %s165
      %s166 = sphi 0, %s163
      %s167 = sphi 0, %s166
      %s183 = sphi 0, %s167
      %s189 = sphi 0, %s191
      %s192 = sphi 0, %s189
      %s193 = sphi 0, %s192
      %s209 = sphi 0, %s193
      %s215 = sphi 0, %s217
      %s218 = sphi 0, %s215
      %s219 = sphi 0, %s218
      %s235 = sphi 0, %s219
      %s241 = sphi 0, %s243
      %s244 = sphi 0, %s241
      %s245 = sphi 0, %s244
      %s261 = sphi 0, %s245
      %s267 = sphi 0, %s269
      %s270 = sphi 0, %s267
      %s271 = sphi 0, %s270
      %s287 = sphi 0, %s271
      %s293 = sphi 0, %s295
      %s296 = sphi 0, %s293
      %s297 = sphi 0, %s296
      %s313 = sphi 0, %s297
      %s319 = sphi 0, %s321
      %s322 = sphi 0, %s319
      %s323 = sphi 0, %s322
      %s339 = sphi 0, %s323
      %s345 = sphi 0, %s347
      %s348 = sphi 0, %s345
      %s349 = sphi 0, %s348
      %s365 = sphi 0, %s349
      %s371 = sphi 0, %s373
      %s374 = sphi 0, %s371
      %s375 = sphi 0, %s374
      %s391 = sphi 0, %s375
      %s397 = sphi 0, %s399
      %s400 = sphi 0, %s397
      %s401 = sphi 0, %s400
      %s417 = sphi 0, %s401
      %s423 = sphi 0, %s425
      %s426 = sphi 0, %s423
      %s427 = sphi 0, %s426
      %s443 = sphi 0, %s427
      %s449 = sphi 0, %s451
      %s452 = sphi 0, %s449
      %s453 = sphi 0, %s452
      %s469 = sphi 0, %s453
      %s475 = sphi 0, %s477
      %s478 = sphi 0, %s475
      %s479 = sphi 0, %s478
      %s495 = sphi 0, %s479
      %s501 = sphi 0, %s503
      %s504 = sphi 0, %s501
      %s505 = sphi 0, %s504
      %s521 = sphi 0, %s505
      %s527 = sphi 0, %s529
      %s530 = sphi 0, %s527
      %s531 = sphi 0, %s530
      %s547 = sphi 0, %s531
      %s553 = sphi 0, %s555
      %s556 = sphi 0, %s553
      %s557 = sphi 0, %s556
      %s573 = sphi 0, %s557
      %s579 = sphi 0, %s581
      %s582 = sphi 0, %s579
      %s583 = sphi 0, %s582
      %s599 = sphi 0, %s583
      %s603 = sphi 0, %s603
      %s605 = sphi 0, %s603
      %s606 = sphi 0, %s605
      %s620 = sphi 0, %s606
      %s624 = sphi 0, %s624
      %s626 = sphi 0, %s624
      %s627 = sphi 0, %s626
      %s641 = sphi 0, %s627
      %s645 = sphi 0, %s645
      %s647 = sphi 0, %s645
      %s648 = sphi 0, %s647
      %s662 = sphi 0, %s648
      %s666 = sphi 0, %s666
      %s668 = sphi 0, %s666
      %s669 = sphi 0, %s668
      %s683 = sphi 0, %s669
      %s687 = sphi 0, %s687
      %s689 = sphi 0, %s687
      %s690 = sphi 0, %s689
      %s704 = sphi 0, %s690
    $region4: #{transformer_forward.5} parent=1 // loop_header_branch
      %36 = sbr.rel (%p34) target = $region8
    $region5: #{transformer_forward.5} parent=1 // loop_body
      %s38 = ssub.s32 %s33, 1
      %s39 = ssub.s32 %s33, 2
      %s40 = sadd.s32 %s33, 1
      %s42 = sadd.s32 %s41, 1
      %p45 = scmp.eq.s32.totalorder %s33, 1
      %p46 = scmp.ne.s32.totalorder %s41, %s43
      %p47 = scmp.eq.s32.totalorder %s33, 0
      %p48 = por %p46, %p47
      %p49 = scmp.ne.s32.totalorder %s41, %s43
      %p50 = scmp.eq.s32.totalorder %s38, 1
      %p51 = por %p49, %p50
      %p52 = scmp.ne.s32.totalorder %s43, %s44
      %p53 = scmp.eq.s32.totalorder %s38, 0
      %p54 = por %p52, %p53
      %p55 = scmp.ne.s32.totalorder %s43, %s44
      %p56 = scmp.eq.s32.totalorder %s39, 1
      %p57 = por %p55, %p56
      %p59 = scmp.ne.s32.totalorder %s44, %s58
      %p60 = scmp.eq.s32.totalorder %s39, 0
      %p61 = por %p59, %p60
      %s63 = sadd.s32 %s62, 1
      %p66 = scmp.eq.s32.totalorder %s33, 1
      %p67 = scmp.ne.s32.totalorder %s62, %s64
      %p68 = scmp.eq.s32.totalorder %s33, 0
      %p69 = por %p67, %p68
      %p70 = scmp.ne.s32.totalorder %s62, %s64
      %p71 = scmp.eq.s32.totalorder %s38, 1
      %p72 = por %p70, %p71
      %p73 = scmp.ne.s32.totalorder %s64, %s65
      %p74 = scmp.eq.s32.totalorder %s38, 0
      %p75 = por %p73, %p74
      %p76 = scmp.ne.s32.totalorder %s64, %s65
      %p77 = scmp.eq.s32.totalorder %s39, 1
      %p78 = por %p76, %p77
      %p80 = scmp.ne.s32.totalorder %s65, %s79
      %p81 = scmp.eq.s32.totalorder %s39, 0
      %p82 = por %p80, %p81
      %s83 = ssub.s32 %s33, %s40
      %p84 = scmp.eq.s32.totalorder %s83, 0
      %s86 = sadd.s32 %s85, 1
      %s87 = scalar_select %p84, %s85, %s86
      %p90 = pneg %p84
      %p91 = scmp.eq.s32.totalorder %s33, 1
      %p92 = por %p90, %p91
      %p93 = scmp.ne.s32.totalorder %s85, %s88
      %p94 = scmp.eq.s32.totalorder %s33, 0
      %p95 = por %p93, %p94
      %p96 = scmp.ne.s32.totalorder %s85, %s88
      %p97 = scmp.eq.s32.totalorder %s38, 1
      %p98 = por %p96, %p97
      %p99 = scmp.ne.s32.totalorder %s88, %s89
      %p100 = scmp.eq.s32.totalorder %s38, 0
      %p101 = por %p99, %p100
      %p102 = scmp.ne.s32.totalorder %s88, %s89
      %p103 = scmp.eq.s32.totalorder %s39, 1
      %p104 = por %p102, %p103
      %p106 = scmp.ne.s32.totalorder %s89, %s105
      %p107 = scmp.eq.s32.totalorder %s39, 0
      %p108 = por %p106, %p107
      %s109 = ssub.s32 %s33, %s40
      %p110 = scmp.eq.s32.totalorder %s109, 0
      %s112 = sadd.s32 %s111, 1
      %s113 = scalar_select %p110, %s111, %s112
      %p116 = pneg %p110
      %p117 = scmp.eq.s32.totalorder %s33, 1
      %p118 = por %p116, %p117
      %p119 = scmp.ne.s32.totalorder %s111, %s114
      %p120 = scmp.eq.s32.totalorder %s33, 0
      %p121 = por %p119, %p120
      %p122 = scmp.ne.s32.totalorder %s111, %s114
      %p123 = scmp.eq.s32.totalorder %s38, 1
      %p124 = por %p122, %p123
      %p125 = scmp.ne.s32.totalorder %s114, %s115
      %p126 = scmp.eq.s32.totalorder %s38, 0
      %p127 = por %p125, %p126
      %p128 = scmp.ne.s32.totalorder %s114, %s115
      %p129 = scmp.eq.s32.totalorder %s39, 1
      %p130 = por %p128, %p129
      %p132 = scmp.ne.s32.totalorder %s115, %s131
      %p133 = scmp.eq.s32.totalorder %s39, 0
      %p134 = por %p132, %p133
      %s135 = ssub.s32 %s33, %s40
      %p136 = scmp.eq.s32.totalorder %s135, 0
      %s138 = sadd.s32 %s137, 1
      %s139 = scalar_select %p136, %s137, %s138
      %p142 = pneg %p136
      %p143 = scmp.eq.s32.totalorder %s33, 1
      %p144 = por %p142, %p143
      %p145 = scmp.ne.s32.totalorder %s137, %s140
      %p146 = scmp.eq.s32.totalorder %s33, 0
      %p147 = por %p145, %p146
      %p148 = scmp.ne.s32.totalorder %s137, %s140
      %p149 = scmp.eq.s32.totalorder %s38, 1
      %p150 = por %p148, %p149
      %p151 = scmp.ne.s32.totalorder %s140, %s141
      %p152 = scmp.eq.s32.totalorder %s38, 0
      %p153 = por %p151, %p152
      %p154 = scmp.ne.s32.totalorder %s140, %s141
      %p155 = scmp.eq.s32.totalorder %s39, 1
      %p156 = por %p154, %p155
      %p158 = scmp.ne.s32.totalorder %s141, %s157
      %p159 = scmp.eq.s32.totalorder %s39, 0
      %p160 = por %p158, %p159
      %s161 = ssub.s32 %s33, %s40
      %p162 = scmp.eq.s32.totalorder %s161, 0
      %s164 = sadd.s32 %s163, 1
      %s165 = scalar_select %p162, %s163, %s164
      %p168 = pneg %p162
      %p169 = scmp.eq.s32.totalorder %s33, 1
      %p170 = por %p168, %p169
      %p171 = scmp.ne.s32.totalorder %s163, %s166
      %p172 = scmp.eq.s32.totalorder %s33, 0
      %p173 = por %p171, %p172
      %p174 = scmp.ne.s32.totalorder %s163, %s166
      %p175 = scmp.eq.s32.totalorder %s38, 1
      %p176 = por %p174, %p175
      %p177 = scmp.ne.s32.totalorder %s166, %s167
      %p178 = scmp.eq.s32.totalorder %s38, 0
      %p179 = por %p177, %p178
      %p180 = scmp.ne.s32.totalorder %s166, %s167
      %p181 = scmp.eq.s32.totalorder %s39, 1
      %p182 = por %p180, %p181
      %p184 = scmp.ne.s32.totalorder %s167, %s183
      %p185 = scmp.eq.s32.totalorder %s39, 0
      %p186 = por %p184, %p185
      %s187 = ssub.s32 %s33, %s40
      %p188 = scmp.eq.s32.totalorder %s187, 0
      %s190 = sadd.s32 %s189, 1
      %s191 = scalar_select %p188, %s189, %s190
      %p194 = pneg %p188
      %p195 = scmp.eq.s32.totalorder %s33, 1
      %p196 = por %p194, %p195
      %p197 = scmp.ne.s32.totalorder %s189, %s192
      %p198 = scmp.eq.s32.totalorder %s33, 0
      %p199 = por %p197, %p198
      %p200 = scmp.ne.s32.totalorder %s189, %s192
      %p201 = scmp.eq.s32.totalorder %s38, 1
      %p202 = por %p200, %p201
      %p203 = scmp.ne.s32.totalorder %s192, %s193
      %p204 = scmp.eq.s32.totalorder %s38, 0
      %p205 = por %p203, %p204
      %p206 = scmp.ne.s32.totalorder %s192, %s193
      %p207 = scmp.eq.s32.totalorder %s39, 1
      %p208 = por %p206, %p207
      %p210 = scmp.ne.s32.totalorder %s193, %s209
      %p211 = scmp.eq.s32.totalorder %s39, 0
      %p212 = por %p210, %p211
      %s213 = ssub.s32 %s33, %s40
      %p214 = scmp.eq.s32.totalorder %s213, 0
      %s216 = sadd.s32 %s215, 1
      %s217 = scalar_select %p214, %s215, %s216
      %p220 = pneg %p214
      %p221 = scmp.eq.s32.totalorder %s33, 1
      %p222 = por %p220, %p221
      %p223 = scmp.ne.s32.totalorder %s215, %s218
      %p224 = scmp.eq.s32.totalorder %s33, 0
      %p225 = por %p223, %p224
      %p226 = scmp.ne.s32.totalorder %s215, %s218
      %p227 = scmp.eq.s32.totalorder %s38, 1
      %p228 = por %p226, %p227
      %p229 = scmp.ne.s32.totalorder %s218, %s219
      %p230 = scmp.eq.s32.totalorder %s38, 0
      %p231 = por %p229, %p230
      %p232 = scmp.ne.s32.totalorder %s218, %s219
      %p233 = scmp.eq.s32.totalorder %s39, 1
      %p234 = por %p232, %p233
      %p236 = scmp.ne.s32.totalorder %s219, %s235
      %p237 = scmp.eq.s32.totalorder %s39, 0
      %p238 = por %p236, %p237
      %s239 = ssub.s32 %s33, %s40
      %p240 = scmp.eq.s32.totalorder %s239, 0
      %s242 = sadd.s32 %s241, 1
      %s243 = scalar_select %p240, %s241, %s242
      %p246 = pneg %p240
      %p247 = scmp.eq.s32.totalorder %s33, 1
      %p248 = por %p246, %p247
      %p249 = scmp.ne.s32.totalorder %s241, %s244
      %p250 = scmp.eq.s32.totalorder %s33, 0
      %p251 = por %p249, %p250
      %p252 = scmp.ne.s32.totalorder %s241, %s244
      %p253 = scmp.eq.s32.totalorder %s38, 1
      %p254 = por %p252, %p253
      %p255 = scmp.ne.s32.totalorder %s244, %s245
      %p256 = scmp.eq.s32.totalorder %s38, 0
      %p257 = por %p255, %p256
      %p258 = scmp.ne.s32.totalorder %s244, %s245
      %p259 = scmp.eq.s32.totalorder %s39, 1
      %p260 = por %p258, %p259
      %p262 = scmp.ne.s32.totalorder %s245, %s261
      %p263 = scmp.eq.s32.totalorder %s39, 0
      %p264 = por %p262, %p263
      %s265 = ssub.s32 %s33, %s40
      %p266 = scmp.eq.s32.totalorder %s265, 0
      %s268 = sadd.s32 %s267, 1
      %s269 = scalar_select %p266, %s267, %s268
      %p272 = pneg %p266
      %p273 = scmp.eq.s32.totalorder %s33, 1
      %p274 = por %p272, %p273
      %p275 = scmp.ne.s32.totalorder %s267, %s270
      %p276 = scmp.eq.s32.totalorder %s33, 0
      %p277 = por %p275, %p276
      %p278 = scmp.ne.s32.totalorder %s267, %s270
      %p279 = scmp.eq.s32.totalorder %s38, 1
      %p280 = por %p278, %p279
      %p281 = scmp.ne.s32.totalorder %s270, %s271
      %p282 = scmp.eq.s32.totalorder %s38, 0
      %p283 = por %p281, %p282
      %p284 = scmp.ne.s32.totalorder %s270, %s271
      %p285 = scmp.eq.s32.totalorder %s39, 1
      %p286 = por %p284, %p285
      %p288 = scmp.ne.s32.totalorder %s271, %s287
      %p289 = scmp.eq.s32.totalorder %s39, 0
      %p290 = por %p288, %p289
      %s291 = ssub.s32 %s33, %s40
      %p292 = scmp.eq.s32.totalorder %s291, 0
      %s294 = sadd.s32 %s293, 1
      %s295 = scalar_select %p292, %s293, %s294
      %p298 = pneg %p292
      %p299 = scmp.eq.s32.totalorder %s33, 1
      %p300 = por %p298, %p299
      %p301 = scmp.ne.s32.totalorder %s293, %s296
      %p302 = scmp.eq.s32.totalorder %s33, 0
      %p303 = por %p301, %p302
      %p304 = scmp.ne.s32.totalorder %s293, %s296
      %p305 = scmp.eq.s32.totalorder %s38, 1
      %p306 = por %p304, %p305
      %p307 = scmp.ne.s32.totalorder %s296, %s297
      %p308 = scmp.eq.s32.totalorder %s38, 0
      %p309 = por %p307, %p308
      %p310 = scmp.ne.s32.totalorder %s296, %s297
      %p311 = scmp.eq.s32.totalorder %s39, 1
      %p312 = por %p310, %p311
      %p314 = scmp.ne.s32.totalorder %s297, %s313
      %p315 = scmp.eq.s32.totalorder %s39, 0
      %p316 = por %p314, %p315
      %s317 = ssub.s32 %s33, %s40
      %p318 = scmp.eq.s32.totalorder %s317, 0
      %s320 = sadd.s32 %s319, 1
      %s321 = scalar_select %p318, %s319, %s320
      %p324 = pneg %p318
      %p325 = scmp.eq.s32.totalorder %s33, 1
      %p326 = por %p324, %p325
      %p327 = scmp.ne.s32.totalorder %s319, %s322
      %p328 = scmp.eq.s32.totalorder %s33, 0
      %p329 = por %p327, %p328
      %p330 = scmp.ne.s32.totalorder %s319, %s322
      %p331 = scmp.eq.s32.totalorder %s38, 1
      %p332 = por %p330, %p331
      %p333 = scmp.ne.s32.totalorder %s322, %s323
      %p334 = scmp.eq.s32.totalorder %s38, 0
      %p335 = por %p333, %p334
      %p336 = scmp.ne.s32.totalorder %s322, %s323
      %p337 = scmp.eq.s32.totalorder %s39, 1
      %p338 = por %p336, %p337
      %p340 = scmp.ne.s32.totalorder %s323, %s339
      %p341 = scmp.eq.s32.totalorder %s39, 0
      %p342 = por %p340, %p341
      %s343 = ssub.s32 %s33, %s40
      %p344 = scmp.eq.s32.totalorder %s343, 0
      %s346 = sadd.s32 %s345, 1
      %s347 = scalar_select %p344, %s345, %s346
      %p350 = pneg %p344
      %p351 = scmp.eq.s32.totalorder %s33, 1
      %p352 = por %p350, %p351
      %p353 = scmp.ne.s32.totalorder %s345, %s348
      %p354 = scmp.eq.s32.totalorder %s33, 0
      %p355 = por %p353, %p354
      %p356 = scmp.ne.s32.totalorder %s345, %s348
      %p357 = scmp.eq.s32.totalorder %s38, 1
      %p358 = por %p356, %p357
      %p359 = scmp.ne.s32.totalorder %s348, %s349
      %p360 = scmp.eq.s32.totalorder %s38, 0
      %p361 = por %p359, %p360
      %p362 = scmp.ne.s32.totalorder %s348, %s349
      %p363 = scmp.eq.s32.totalorder %s39, 1
      %p364 = por %p362, %p363
      %p366 = scmp.ne.s32.totalorder %s349, %s365
      %p367 = scmp.eq.s32.totalorder %s39, 0
      %p368 = por %p366, %p367
      %s369 = ssub.s32 %s33, %s40
      %p370 = scmp.eq.s32.totalorder %s369, 0
      %s372 = sadd.s32 %s371, 1
      %s373 = scalar_select %p370, %s371, %s372
      %p376 = pneg %p370
      %p377 = scmp.eq.s32.totalorder %s33, 1
      %p378 = por %p376, %p377
      %p379 = scmp.ne.s32.totalorder %s371, %s374
      %p380 = scmp.eq.s32.totalorder %s33, 0
      %p381 = por %p379, %p380
      %p382 = scmp.ne.s32.totalorder %s371, %s374
      %p383 = scmp.eq.s32.totalorder %s38, 1
      %p384 = por %p382, %p383
      %p385 = scmp.ne.s32.totalorder %s374, %s375
      %p386 = scmp.eq.s32.totalorder %s38, 0
      %p387 = por %p385, %p386
      %p388 = scmp.ne.s32.totalorder %s374, %s375
      %p389 = scmp.eq.s32.totalorder %s39, 1
      %p390 = por %p388, %p389
      %p392 = scmp.ne.s32.totalorder %s375, %s391
      %p393 = scmp.eq.s32.totalorder %s39, 0
      %p394 = por %p392, %p393
      %s395 = ssub.s32 %s33, %s40
      %p396 = scmp.eq.s32.totalorder %s395, 0
      %s398 = sadd.s32 %s397, 1
      %s399 = scalar_select %p396, %s397, %s398
      %p402 = pneg %p396
      %p403 = scmp.eq.s32.totalorder %s33, 1
      %p404 = por %p402, %p403
      %p405 = scmp.ne.s32.totalorder %s397, %s400
      %p406 = scmp.eq.s32.totalorder %s33, 0
      %p407 = por %p405, %p406
      %p408 = scmp.ne.s32.totalorder %s397, %s400
      %p409 = scmp.eq.s32.totalorder %s38, 1
      %p410 = por %p408, %p409
      %p411 = scmp.ne.s32.totalorder %s400, %s401
      %p412 = scmp.eq.s32.totalorder %s38, 0
      %p413 = por %p411, %p412
      %p414 = scmp.ne.s32.totalorder %s400, %s401
      %p415 = scmp.eq.s32.totalorder %s39, 1
      %p416 = por %p414, %p415
      %p418 = scmp.ne.s32.totalorder %s401, %s417
      %p419 = scmp.eq.s32.totalorder %s39, 0
      %p420 = por %p418, %p419
      %s421 = ssub.s32 %s33, %s40
      %p422 = scmp.eq.s32.totalorder %s421, 0
      %s424 = sadd.s32 %s423, 1
      %s425 = scalar_select %p422, %s423, %s424
      %p428 = pneg %p422
      %p429 = scmp.eq.s32.totalorder %s33, 1
      %p430 = por %p428, %p429
      %p431 = scmp.ne.s32.totalorder %s423, %s426
      %p432 = scmp.eq.s32.totalorder %s33, 0
      %p433 = por %p431, %p432
      %p434 = scmp.ne.s32.totalorder %s423, %s426
      %p435 = scmp.eq.s32.totalorder %s38, 1
      %p436 = por %p434, %p435
      %p437 = scmp.ne.s32.totalorder %s426, %s427
      %p438 = scmp.eq.s32.totalorder %s38, 0
      %p439 = por %p437, %p438
      %p440 = scmp.ne.s32.totalorder %s426, %s427
      %p441 = scmp.eq.s32.totalorder %s39, 1
      %p442 = por %p440, %p441
      %p444 = scmp.ne.s32.totalorder %s427, %s443
      %p445 = scmp.eq.s32.totalorder %s39, 0
      %p446 = por %p444, %p445
      %s447 = ssub.s32 %s33, %s40
      %p448 = scmp.eq.s32.totalorder %s447, 0
      %s450 = sadd.s32 %s449, 1
      %s451 = scalar_select %p448, %s449, %s450
      %p454 = pneg %p448
      %p455 = scmp.eq.s32.totalorder %s33, 1
      %p456 = por %p454, %p455
      %p457 = scmp.ne.s32.totalorder %s449, %s452
      %p458 = scmp.eq.s32.totalorder %s33, 0
      %p459 = por %p457, %p458
      %p460 = scmp.ne.s32.totalorder %s449, %s452
      %p461 = scmp.eq.s32.totalorder %s38, 1
      %p462 = por %p460, %p461
      %p463 = scmp.ne.s32.totalorder %s452, %s453
      %p464 = scmp.eq.s32.totalorder %s38, 0
      %p465 = por %p463, %p464
      %p466 = scmp.ne.s32.totalorder %s452, %s453
      %p467 = scmp.eq.s32.totalorder %s39, 1
      %p468 = por %p466, %p467
      %p470 = scmp.ne.s32.totalorder %s453, %s469
      %p471 = scmp.eq.s32.totalorder %s39, 0
      %p472 = por %p470, %p471
      %s473 = ssub.s32 %s33, %s40
      %p474 = scmp.eq.s32.totalorder %s473, 0
      %s476 = sadd.s32 %s475, 1
      %s477 = scalar_select %p474, %s475, %s476
      %p480 = pneg %p474
      %p481 = scmp.eq.s32.totalorder %s33, 1
      %p482 = por %p480, %p481
      %p483 = scmp.ne.s32.totalorder %s475, %s478
      %p484 = scmp.eq.s32.totalorder %s33, 0
      %p485 = por %p483, %p484
      %p486 = scmp.ne.s32.totalorder %s475, %s478
      %p487 = scmp.eq.s32.totalorder %s38, 1
      %p488 = por %p486, %p487
      %p489 = scmp.ne.s32.totalorder %s478, %s479
      %p490 = scmp.eq.s32.totalorder %s38, 0
      %p491 = por %p489, %p490
      %p492 = scmp.ne.s32.totalorder %s478, %s479
      %p493 = scmp.eq.s32.totalorder %s39, 1
      %p494 = por %p492, %p493
      %p496 = scmp.ne.s32.totalorder %s479, %s495
      %p497 = scmp.eq.s32.totalorder %s39, 0
      %p498 = por %p496, %p497
      %s499 = ssub.s32 %s33, %s40
      %p500 = scmp.eq.s32.totalorder %s499, 0
      %s502 = sadd.s32 %s501, 1
      %s503 = scalar_select %p500, %s501, %s502
      %p506 = pneg %p500
      %p507 = scmp.eq.s32.totalorder %s33, 1
      %p508 = por %p506, %p507
      %p509 = scmp.ne.s32.totalorder %s501, %s504
      %p510 = scmp.eq.s32.totalorder %s33, 0
      %p511 = por %p509, %p510
      %p512 = scmp.ne.s32.totalorder %s501, %s504
      %p513 = scmp.eq.s32.totalorder %s38, 1
      %p514 = por %p512, %p513
      %p515 = scmp.ne.s32.totalorder %s504, %s505
      %p516 = scmp.eq.s32.totalorder %s38, 0
      %p517 = por %p515, %p516
      %p518 = scmp.ne.s32.totalorder %s504, %s505
      %p519 = scmp.eq.s32.totalorder %s39, 1
      %p520 = por %p518, %p519
      %p522 = scmp.ne.s32.totalorder %s505, %s521
      %p523 = scmp.eq.s32.totalorder %s39, 0
      %p524 = por %p522, %p523
      %s525 = ssub.s32 %s33, %s40
      %p526 = scmp.eq.s32.totalorder %s525, 0
      %s528 = sadd.s32 %s527, 1
      %s529 = scalar_select %p526, %s527, %s528
      %p532 = pneg %p526
      %p533 = scmp.eq.s32.totalorder %s33, 1
      %p534 = por %p532, %p533
      %p535 = scmp.ne.s32.totalorder %s527, %s530
      %p536 = scmp.eq.s32.totalorder %s33, 0
      %p537 = por %p535, %p536
      %p538 = scmp.ne.s32.totalorder %s527, %s530
      %p539 = scmp.eq.s32.totalorder %s38, 1
      %p540 = por %p538, %p539
      %p541 = scmp.ne.s32.totalorder %s530, %s531
      %p542 = scmp.eq.s32.totalorder %s38, 0
      %p543 = por %p541, %p542
      %p544 = scmp.ne.s32.totalorder %s530, %s531
      %p545 = scmp.eq.s32.totalorder %s39, 1
      %p546 = por %p544, %p545
      %p548 = scmp.ne.s32.totalorder %s531, %s547
      %p549 = scmp.eq.s32.totalorder %s39, 0
      %p550 = por %p548, %p549
      %s551 = ssub.s32 %s33, %s40
      %p552 = scmp.eq.s32.totalorder %s551, 0
      %s554 = sadd.s32 %s553, 1
      %s555 = scalar_select %p552, %s553, %s554
      %p558 = pneg %p552
      %p559 = scmp.eq.s32.totalorder %s33, 1
      %p560 = por %p558, %p559
      %p561 = scmp.ne.s32.totalorder %s553, %s556
      %p562 = scmp.eq.s32.totalorder %s33, 0
      %p563 = por %p561, %p562
      %p564 = scmp.ne.s32.totalorder %s553, %s556
      %p565 = scmp.eq.s32.totalorder %s38, 1
      %p566 = por %p564, %p565
      %p567 = scmp.ne.s32.totalorder %s556, %s557
      %p568 = scmp.eq.s32.totalorder %s38, 0
      %p569 = por %p567, %p568
      %p570 = scmp.ne.s32.totalorder %s556, %s557
      %p571 = scmp.eq.s32.totalorder %s39, 1
      %p572 = por %p570, %p571
      %p574 = scmp.ne.s32.totalorder %s557, %s573
      %p575 = scmp.eq.s32.totalorder %s39, 0
      %p576 = por %p574, %p575
      %s577 = ssub.s32 %s33, %s40
      %p578 = scmp.eq.s32.totalorder %s577, 0
      %s580 = sadd.s32 %s579, 1
      %s581 = scalar_select %p578, %s579, %s580
      %p584 = pneg %p578
      %p585 = scmp.eq.s32.totalorder %s33, 1
      %p586 = por %p584, %p585
      %p587 = scmp.ne.s32.totalorder %s579, %s582
      %p588 = scmp.eq.s32.totalorder %s33, 0
      %p589 = por %p587, %p588
      %p590 = scmp.ne.s32.totalorder %s579, %s582
      %p591 = scmp.eq.s32.totalorder %s38, 1
      %p592 = por %p590, %p591
      %p593 = scmp.ne.s32.totalorder %s582, %s583
      %p594 = scmp.eq.s32.totalorder %s38, 0
      %p595 = por %p593, %p594
      %p596 = scmp.ne.s32.totalorder %s582, %s583
      %p597 = scmp.eq.s32.totalorder %s39, 1
      %p598 = por %p596, %p597
      %p600 = scmp.ne.s32.totalorder %s583, %s599
      %p601 = scmp.eq.s32.totalorder %s39, 0
      %p602 = por %p600, %p601
      %s604 = sadd.s32 %s603, 1
      %p607 = scmp.eq.s32.totalorder %s33, 1
      %p608 = scmp.ne.s32.totalorder %s603, %s605
      %p609 = scmp.eq.s32.totalorder %s33, 0
      %p610 = por %p608, %p609
      %p611 = scmp.ne.s32.totalorder %s603, %s605
      %p612 = scmp.eq.s32.totalorder %s38, 1
      %p613 = por %p611, %p612
      %p614 = scmp.ne.s32.totalorder %s605, %s606
      %p615 = scmp.eq.s32.totalorder %s38, 0
      %p616 = por %p614, %p615
      %p617 = scmp.ne.s32.totalorder %s605, %s606
      %p618 = scmp.eq.s32.totalorder %s39, 1
      %p619 = por %p617, %p618
      %p621 = scmp.ne.s32.totalorder %s606, %s620
      %p622 = scmp.eq.s32.totalorder %s39, 0
      %p623 = por %p621, %p622
      %s625 = sadd.s32 %s624, 1
      %p628 = scmp.eq.s32.totalorder %s33, 1
      %p629 = scmp.ne.s32.totalorder %s624, %s626
      %p630 = scmp.eq.s32.totalorder %s33, 0
      %p631 = por %p629, %p630
      %p632 = scmp.ne.s32.totalorder %s624, %s626
      %p633 = scmp.eq.s32.totalorder %s38, 1
      %p634 = por %p632, %p633
      %p635 = scmp.ne.s32.totalorder %s626, %s627
      %p636 = scmp.eq.s32.totalorder %s38, 0
      %p637 = por %p635, %p636
      %p638 = scmp.ne.s32.totalorder %s626, %s627
      %p639 = scmp.eq.s32.totalorder %s39, 1
      %p640 = por %p638, %p639
      %p642 = scmp.ne.s32.totalorder %s627, %s641
      %p643 = scmp.eq.s32.totalorder %s39, 0
      %p644 = por %p642, %p643
      %s646 = sadd.s32 %s645, 1
      %p649 = scmp.eq.s32.totalorder %s33, 1
      %p650 = scmp.ne.s32.totalorder %s645, %s647
      %p651 = scmp.eq.s32.totalorder %s33, 0
      %p652 = por %p650, %p651
      %p653 = scmp.ne.s32.totalorder %s645, %s647
      %p654 = scmp.eq.s32.totalorder %s38, 1
      %p655 = por %p653, %p654
      %p656 = scmp.ne.s32.totalorder %s647, %s648
      %p657 = scmp.eq.s32.totalorder %s38, 0
      %p658 = por %p656, %p657
      %p659 = scmp.ne.s32.totalorder %s647, %s648
      %p660 = scmp.eq.s32.totalorder %s39, 1
      %p661 = por %p659, %p660
      %p663 = scmp.ne.s32.totalorder %s648, %s662
      %p664 = scmp.eq.s32.totalorder %s39, 0
      %p665 = por %p663, %p664
      %s667 = sadd.s32 %s666, 1
      %p670 = scmp.eq.s32.totalorder %s33, 1
      %p671 = scmp.ne.s32.totalorder %s666, %s668
      %p672 = scmp.eq.s32.totalorder %s33, 0
      %p673 = por %p671, %p672
      %p674 = scmp.ne.s32.totalorder %s666, %s668
      %p675 = scmp.eq.s32.totalorder %s38, 1
      %p676 = por %p674, %p675
      %p677 = scmp.ne.s32.totalorder %s668, %s669
      %p678 = scmp.eq.s32.totalorder %s38, 0
      %p679 = por %p677, %p678
      %p680 = scmp.ne.s32.totalorder %s668, %s669
      %p681 = scmp.eq.s32.totalorder %s39, 1
      %p682 = por %p680, %p681
      %p684 = scmp.ne.s32.totalorder %s669, %s683
      %p685 = scmp.eq.s32.totalorder %s39, 0
      %p686 = por %p684, %p685
      %s688 = sadd.s32 %s687, 1
      %p691 = scmp.eq.s32.totalorder %s33, 1
      %p692 = scmp.ne.s32.totalorder %s687, %s689
      %p693 = scmp.eq.s32.totalorder %s33, 0
      %p694 = por %p692, %p693
      %p695 = scmp.ne.s32.totalorder %s687, %s689
      %p696 = scmp.eq.s32.totalorder %s38, 1
      %p697 = por %p695, %p696
      %p698 = scmp.ne.s32.totalorder %s689, %s690
      %p699 = scmp.eq.s32.totalorder %s38, 0
      %p700 = por %p698, %p699
      %p701 = scmp.ne.s32.totalorder %s689, %s690
      %p702 = scmp.eq.s32.totalorder %s39, 1
      %p703 = por %p701, %p702
      %p705 = scmp.ne.s32.totalorder %s690, %s704
      %p706 = scmp.eq.s32.totalorder %s39, 0
      %p707 = por %p705, %p706
      %p708 = scmp.le.s32.totalorder 1, %s33
      %p709 = scmp.lt.s32.totalorder %s33, 3
      %p710 = pnand %p708, %p709
      %p711 = pneg %p710
      // Predicated region
      $region9: #{transformer_forward.5} parent=5 // pred_check
        _
      $region10: #{transformer_forward.5} parent=5 // pred_check_branch
        %713 = sbr.rel (%p710) target = $region12
      $region11: #{transformer_forward.5} parent=5 // pred_region
        %s714 = ssub.s32 %s33, 1
        // Predicated region
        $region13: #{transformer_forward.5} parent=11 // pred_check
          %p715 = pneg %p54
        $region14: #{transformer_forward.5} parent=11 // pred_check_branch
          %717 = sbr.rel (%p715) target = $region16
        $region15: #{transformer_forward.5} parent=11 // pred_region
          _
        $region16: #{transformer_forward.5} parent=11 // pred_fallthru
          _
        // Predicated region
        $region17: #{transformer_forward.5} parent=11 // pred_check
          %p718 = pneg %p75
        $region18: #{transformer_forward.5} parent=11 // pred_check_branch
          %720 = sbr.rel (%p718) target = $region20
        $region19: #{transformer_forward.5} parent=11 // pred_region
          _
        $region20: #{transformer_forward.5} parent=11 // pred_fallthru
          _
        // Predicated region
        $region21: #{transformer_forward.5} parent=11 // pred_check
          %p721 = pneg %p616
        $region22: #{transformer_forward.5} parent=11 // pred_check_branch
          %723 = sbr.rel (%p721) target = $region24
        $region23: #{transformer_forward.5} parent=11 // pred_region
          _
        $region24: #{transformer_forward.5} parent=11 // pred_fallthru
          _
        // Predicated region
        $region25: #{transformer_forward.5} parent=11 // pred_check
          %p724 = pneg %p637
        $region26: #{transformer_forward.5} parent=11 // pred_check_branch
          %726 = sbr.rel (%p724) target = $region28
        $region27: #{transformer_forward.5} parent=11 // pred_region
          _
        $region28: #{transformer_forward.5} parent=11 // pred_fallthru
          _
        // Predicated region
        $region29: #{transformer_forward.5} parent=11 // pred_check
          %p727 = pneg %p658
        $region30: #{transformer_forward.5} parent=11 // pred_check_branch
          %729 = sbr.rel (%p727) target = $region32
        $region31: #{transformer_forward.5} parent=11 // pred_region
          _
        $region32: #{transformer_forward.5} parent=11 // pred_fallthru
          _
        // Predicated region
        $region33: #{transformer_forward.5} parent=11 // pred_check
          %p730 = pneg %p679
        $region34: #{transformer_forward.5} parent=11 // pred_check_branch
          %732 = sbr.rel (%p730) target = $region36
        $region35: #{transformer_forward.5} parent=11 // pred_region
          _
        $region36: #{transformer_forward.5} parent=11 // pred_fallthru
          _
      $region12: #{transformer_forward.5} parent=5 // pred_fallthru
        _
      %p733 = scmp.lt.s32.totalorder %s33, 2
      // Predicated region
      $region37: #{transformer_forward.5} parent=5 // pred_check
        %p734 = pneg %p733
      $region38: #{transformer_forward.5} parent=5 // pred_check_branch
        %736 = sbr.rel (%p734) target = $region40
      $region39: #{transformer_forward.5} parent=5 // pred_region
        // Predicated region
        $region41: #{transformer_forward.5} parent=39 // pred_check
          %p737 = pneg %p95
        $region42: #{transformer_forward.5} parent=39 // pred_check_branch
          %739 = sbr.rel (%p737) target = $region44
        $region43: #{transformer_forward.5} parent=39 // pred_region
          %p740 = scmp.lt.s32.totalorder %s33, 1
          %s741 = scalar_select %p740, %s33, 1
          %s742 = smul.addr %s741, 4
          %s743 = smul.addr %s742, 4
          %s744 = scalar_lea.vmem %s2, %s743
        $region44: #{transformer_forward.5} parent=39 // pred_fallthru
          _
        // Predicated region
        $region45: #{transformer_forward.5} parent=39 // pred_check
          %p745 = pneg %p121
        $region46: #{transformer_forward.5} parent=39 // pred_check_branch
          %747 = sbr.rel (%p745) target = $region48
        $region47: #{transformer_forward.5} parent=39 // pred_region
          %p748 = scmp.lt.s32.totalorder %s33, 1
          %s749 = scalar_select %p748, %s33, 1
          %s750 = scalar_lea.vmem %s3, %s749
        $region48: #{transformer_forward.5} parent=39 // pred_fallthru
          _
        // Predicated region
        $region49: #{transformer_forward.5} parent=39 // pred_check
          %p751 = pneg %p147
        $region50: #{transformer_forward.5} parent=39 // pred_check_branch
          %753 = sbr.rel (%p751) target = $region52
        $region51: #{transformer_forward.5} parent=39 // pred_region
          %p754 = scmp.lt.s32.totalorder %s33, 1
          %s755 = scalar_select %p754, %s33, 1
          %s756 = smul.addr %s755, 4
          %s757 = smul.addr %s756, 4
          %s758 = scalar_lea.vmem %s4, %s757
        $region52: #{transformer_forward.5} parent=39 // pred_fallthru
          _
        // Predicated region
        $region53: #{transformer_forward.5} parent=39 // pred_check
          %p759 = pneg %p173
        $region54: #{transformer_forward.5} parent=39 // pred_check_branch
          %761 = sbr.rel (%p759) target = $region56
        $region55: #{transformer_forward.5} parent=39 // pred_region
          %p762 = scmp.lt.s32.totalorder %s33, 1
          %s763 = scalar_select %p762, %s33, 1
          %s764 = scalar_lea.vmem %s5, %s763
        $region56: #{transformer_forward.5} parent=39 // pred_fallthru
          _
        // Predicated region
        $region57: #{transformer_forward.5} parent=39 // pred_check
          %p765 = pneg %p199
        $region58: #{transformer_forward.5} parent=39 // pred_check_branch
          %767 = sbr.rel (%p765) target = $region60
        $region59: #{transformer_forward.5} parent=39 // pred_region
          %p768 = scmp.lt.s32.totalorder %s33, 1
          %s769 = scalar_select %p768, %s33, 1
          %s770 = scalar_lea.vmem %s6, %s769
        $region60: #{transformer_forward.5} parent=39 // pred_fallthru
          _
        // Predicated region
        $region61: #{transformer_forward.5} parent=39 // pred_check
          %p771 = pneg %p225
        $region62: #{transformer_forward.5} parent=39 // pred_check_branch
          %773 = sbr.rel (%p771) target = $region64
        $region63: #{transformer_forward.5} parent=39 // pred_region
          %p774 = scmp.lt.s32.totalorder %s33, 1
          %s775 = scalar_select %p774, %s33, 1
          %s776 = scalar_lea.vmem %s7, %s775
        $region64: #{transformer_forward.5} parent=39 // pred_fallthru
          _
        // Predicated region
        $region65: #{transformer_forward.5} parent=39 // pred_check
          %p777 = pneg %p251
        $region66: #{transformer_forward.5} parent=39 // pred_check_branch
          %779 = sbr.rel (%p777) target = $region68
        $region67: #{transformer_forward.5} parent=39 // pred_region
          %p780 = scmp.lt.s32.totalorder %s33, 1
          %s781 = scalar_select %p780, %s33, 1
          %s782 = smul.addr %s781, 4
          %s783 = smul.addr %s782, 4
          %s784 = scalar_lea.vmem %s8, %s783
        $region68: #{transformer_forward.5} parent=39 // pred_fallthru
          _
        // Predicated region
        $region69: #{transformer_forward.5} parent=39 // pred_check
          %p785 = pneg %p277
        $region70: #{transformer_forward.5} parent=39 // pred_check_branch
          %787 = sbr.rel (%p785) target = $region72
        $region71: #{transformer_forward.5} parent=39 // pred_region
          %p788 = scmp.lt.s32.totalorder %s33, 1
          %s789 = scalar_select %p788, %s33, 1
          %s790 = scalar_lea.vmem %s9, %s789
        $region72: #{transformer_forward.5} parent=39 // pred_fallthru
          _
        // Predicated region
        $region73: #{transformer_forward.5} parent=39 // pred_check
          %p791 = pneg %p303
        $region74: #{transformer_forward.5} parent=39 // pred_check_branch
          %793 = sbr.rel (%p791) target = $region76
        $region75: #{transformer_forward.5} parent=39 // pred_region
          %p794 = scmp.lt.s32.totalorder %s33, 1
          %s795 = scalar_select %p794, %s33, 1
          %s796 = smul.addr %s795, 4
          %s797 = smul.addr %s796, 4
          %s798 = scalar_lea.vmem %s10, %s797
        $region76: #{transformer_forward.5} parent=39 // pred_fallthru
          _
        // Predicated region
        $region77: #{transformer_forward.5} parent=39 // pred_check
          %p799 = pneg %p329
        $region78: #{transformer_forward.5} parent=39 // pred_check_branch
          %801 = sbr.rel (%p799) target = $region80
        $region79: #{transformer_forward.5} parent=39 // pred_region
          %p802 = scmp.lt.s32.totalorder %s33, 1
          %s803 = scalar_select %p802, %s33, 1
          %s804 = scalar_lea.vmem %s11, %s803
        $region80: #{transformer_forward.5} parent=39 // pred_fallthru
          _
        // Predicated region
        $region81: #{transformer_forward.5} parent=39 // pred_check
          %p805 = pneg %p355
        $region82: #{transformer_forward.5} parent=39 // pred_check_branch
          %807 = sbr.rel (%p805) target = $region84
        $region83: #{transformer_forward.5} parent=39 // pred_region
          %p808 = scmp.lt.s32.totalorder %s33, 1
          %s809 = scalar_select %p808, %s33, 1
          %s810 = smul.addr %s809, 4
          %s811 = smul.addr %s810, 4
          %s812 = scalar_lea.vmem %s12, %s811
        $region84: #{transformer_forward.5} parent=39 // pred_fallthru
          _
        // Predicated region
        $region85: #{transformer_forward.5} parent=39 // pred_check
          %p813 = pneg %p381
        $region86: #{transformer_forward.5} parent=39 // pred_check_branch
          %815 = sbr.rel (%p813) target = $region88
        $region87: #{transformer_forward.5} parent=39 // pred_region
          %p816 = scmp.lt.s32.totalorder %s33, 1
          %s817 = scalar_select %p816, %s33, 1
          %s818 = scalar_lea.vmem %s13, %s817
        $region88: #{transformer_forward.5} parent=39 // pred_fallthru
          _
        // Predicated region
        $region89: #{transformer_forward.5} parent=39 // pred_check
          %p819 = pneg %p407
        $region90: #{transformer_forward.5} parent=39 // pred_check_branch
          %821 = sbr.rel (%p819) target = $region92
        $region91: #{transformer_forward.5} parent=39 // pred_region
          %p822 = scmp.lt.s32.totalorder %s33, 1
          %s823 = scalar_select %p822, %s33, 1
          %s824 = scalar_lea.vmem %s14, %s823
        $region92: #{transformer_forward.5} parent=39 // pred_fallthru
          _
        // Predicated region
        $region93: #{transformer_forward.5} parent=39 // pred_check
          %p825 = pneg %p433
        $region94: #{transformer_forward.5} parent=39 // pred_check_branch
          %827 = sbr.rel (%p825) target = $region96
        $region95: #{transformer_forward.5} parent=39 // pred_region
          %p828 = scmp.lt.s32.totalorder %s33, 1
          %s829 = scalar_select %p828, %s33, 1
          %s830 = scalar_lea.vmem %s15, %s829
        $region96: #{transformer_forward.5} parent=39 // pred_fallthru
          _
        // Predicated region
        $region97: #{transformer_forward.5} parent=39 // pred_check
          %p831 = pneg %p459
        $region98: #{transformer_forward.5} parent=39 // pred_check_branch
          %833 = sbr.rel (%p831) target = $region100
        $region99: #{transformer_forward.5} parent=39 // pred_region
          %p834 = scmp.lt.s32.totalorder %s33, 1
          %s835 = scalar_select %p834, %s33, 1
          %s836 = smul.addr %s835, 4
          %s837 = smul.addr %s836, 4
          %s838 = scalar_lea.vmem %s16, %s837
        $region100: #{transformer_forward.5} parent=39 // pred_fallthru
          _
        // Predicated region
        $region101: #{transformer_forward.5} parent=39 // pred_check
          %p839 = pneg %p485
        $region102: #{transformer_forward.5} parent=39 // pred_check_branch
          %841 = sbr.rel (%p839) target = $region104
        $region103: #{transformer_forward.5} parent=39 // pred_region
          %p842 = scmp.lt.s32.totalorder %s33, 1
          %s843 = scalar_select %p842, %s33, 1
          %s844 = scalar_lea.vmem %s17, %s843
        $region104: #{transformer_forward.5} parent=39 // pred_fallthru
          _
        // Predicated region
        $region105: #{transformer_forward.5} parent=39 // pred_check
          %p845 = pneg %p511
        $region106: #{transformer_forward.5} parent=39 // pred_check_branch
          %847 = sbr.rel (%p845) target = $region108
        $region107: #{transformer_forward.5} parent=39 // pred_region
          %p848 = scmp.lt.s32.totalorder %s33, 1
          %s849 = scalar_select %p848, %s33, 1
          %s850 = smul.addr %s849, 8
          %s851 = smul.addr %s850, 4
          %s852 = scalar_lea.vmem %s18, %s851
        $region108: #{transformer_forward.5} parent=39 // pred_fallthru
          _
        // Predicated region
        $region109: #{transformer_forward.5} parent=39 // pred_check
          %p853 = pneg %p537
        $region110: #{transformer_forward.5} parent=39 // pred_check_branch
          %855 = sbr.rel (%p853) target = $region112
        $region111: #{transformer_forward.5} parent=39 // pred_region
          %p856 = scmp.lt.s32.totalorder %s33, 1
          %s857 = scalar_select %p856, %s33, 1
          %s858 = scalar_lea.vmem %s19, %s857
        $region112: #{transformer_forward.5} parent=39 // pred_fallthru
          _
        // Predicated region
        $region113: #{transformer_forward.5} parent=39 // pred_check
          %p859 = pneg %p563
        $region114: #{transformer_forward.5} parent=39 // pred_check_branch
          %861 = sbr.rel (%p859) target = $region116
        $region115: #{transformer_forward.5} parent=39 // pred_region
          %p862 = scmp.lt.s32.totalorder %s33, 1
          %s863 = scalar_select %p862, %s33, 1
          %s864 = scalar_lea.vmem %s20, %s863
        $region116: #{transformer_forward.5} parent=39 // pred_fallthru
          _
        // Predicated region
        $region117: #{transformer_forward.5} parent=39 // pred_check
          %p865 = pneg %p589
        $region118: #{transformer_forward.5} parent=39 // pred_check_branch
          %867 = sbr.rel (%p865) target = $region120
        $region119: #{transformer_forward.5} parent=39 // pred_region
          %p868 = scmp.lt.s32.totalorder %s33, 1
          %s869 = scalar_select %p868, %s33, 1
          %s870 = scalar_lea.vmem %s21, %s869
        $region120: #{transformer_forward.5} parent=39 // pred_fallthru
          _
      $region40: #{transformer_forward.5} parent=5 // pred_fallthru
        _
      %p871 = scmp.le.s32.totalorder 1, %s33
      %p872 = scmp.lt.s32.totalorder %s33, 3
      %p873 = pnand %p871, %p872
      %p874 = pneg %p873
      // Predicated region
      $region121: #{transformer_forward.5} parent=5 // pred_check
        _
      $region122: #{transformer_forward.5} parent=5 // pred_check_branch
        %876 = sbr.rel (%p873) target = $region124
      $region123: #{transformer_forward.5} parent=5 // pred_region
        %s877 = ssub.s32 %s33, 1
        %p878 = pneg %p54
        %p879 = pneg %p51
        %p880 = pneg %p75
        %p881 = pneg %p72
        %p882 = scmp.lt.s32.totalorder %s38, 1
        %s883 = scalar_select %p882, %s38, 1
        %s884 = smul.addr %s883, 4
        %s885 = smul.addr %s884, 4
        %s886 = scalar_lea.vmem %s2, %s885
        %p887 = pneg %p101
        %p888 = pneg %p98
        %p889 = scmp.lt.s32.totalorder %s38, 1
        %s890 = scalar_select %p889, %s38, 1
        %s891 = scalar_lea.vmem %s3, %s890
        %p892 = pneg %p127
        %p893 = pneg %p124
        %p894 = scmp.lt.s32.totalorder %s38, 1
        %s895 = scalar_select %p894, %s38, 1
        %s896 = smul.addr %s895, 4
        %s897 = smul.addr %s896, 4
        %s898 = scalar_lea.vmem %s4, %s897
        %p899 = pneg %p153
        %p900 = pneg %p150
        %p901 = scmp.lt.s32.totalorder %s38, 1
        %s902 = scalar_select %p901, %s38, 1
        %s903 = scalar_lea.vmem %s5, %s902
        %p904 = pneg %p179
        %p905 = pneg %p176
        %p906 = scmp.lt.s32.totalorder %s38, 1
        %s907 = scalar_select %p906, %s38, 1
        %s908 = scalar_lea.vmem %s6, %s907
        %p909 = pneg %p205
        %p910 = pneg %p202
        %p911 = scmp.lt.s32.totalorder %s38, 1
        %s912 = scalar_select %p911, %s38, 1
        %s913 = scalar_lea.vmem %s7, %s912
        %p914 = pneg %p231
        %p915 = pneg %p228
        %p916 = scmp.lt.s32.totalorder %s38, 1
        %s917 = scalar_select %p916, %s38, 1
        %s918 = smul.addr %s917, 4
        %s919 = smul.addr %s918, 4
        %s920 = scalar_lea.vmem %s8, %s919
        %p921 = pneg %p257
        %p922 = pneg %p254
        %p923 = scmp.lt.s32.totalorder %s38, 1
        %s924 = scalar_select %p923, %s38, 1
        %s925 = scalar_lea.vmem %s9, %s924
        %p926 = pneg %p283
        %p927 = pneg %p280
        %p928 = scmp.lt.s32.totalorder %s38, 1
        %s929 = scalar_select %p928, %s38, 1
        %s930 = smul.addr %s929, 4
        %s931 = smul.addr %s930, 4
        %s932 = scalar_lea.vmem %s10, %s931
        %p933 = pneg %p309
        %p934 = pneg %p306
        %p935 = scmp.lt.s32.totalorder %s38, 1
        %s936 = scalar_select %p935, %s38, 1
        %s937 = scalar_lea.vmem %s11, %s936
        %p938 = pneg %p335
        %p939 = pneg %p332
        %p940 = scmp.lt.s32.totalorder %s38, 1
        %s941 = scalar_select %p940, %s38, 1
        %s942 = smul.addr %s941, 4
        %s943 = smul.addr %s942, 4
        %s944 = scalar_lea.vmem %s12, %s943
        %p945 = pneg %p361
        %p946 = pneg %p358
        %p947 = scmp.lt.s32.totalorder %s38, 1
        %s948 = scalar_select %p947, %s38, 1
        %s949 = scalar_lea.vmem %s13, %s948
        %p950 = pneg %p387
        %p951 = pneg %p384
        %p952 = scmp.lt.s32.totalorder %s38, 1
        %s953 = scalar_select %p952, %s38, 1
        %s954 = scalar_lea.vmem %s14, %s953
        %p955 = pneg %p413
        %p956 = pneg %p410
        %p957 = scmp.lt.s32.totalorder %s38, 1
        %s958 = scalar_select %p957, %s38, 1
        %s959 = scalar_lea.vmem %s15, %s958
        %p960 = pneg %p439
        %p961 = pneg %p436
        %p962 = scmp.lt.s32.totalorder %s38, 1
        %s963 = scalar_select %p962, %s38, 1
        %s964 = smul.addr %s963, 4
        %s965 = smul.addr %s964, 4
        %s966 = scalar_lea.vmem %s16, %s965
        %p967 = pneg %p465
        %p968 = pneg %p462
        %p969 = scmp.lt.s32.totalorder %s38, 1
        %s970 = scalar_select %p969, %s38, 1
        %s971 = scalar_lea.vmem %s17, %s970
        %p972 = pneg %p491
        %p973 = pneg %p488
        %p974 = scmp.lt.s32.totalorder %s38, 1
        %s975 = scalar_select %p974, %s38, 1
        %s976 = smul.addr %s975, 8
        %s977 = smul.addr %s976, 4
        %s978 = scalar_lea.vmem %s18, %s977
        %p979 = pneg %p517
        %p980 = pneg %p514
        %p981 = scmp.lt.s32.totalorder %s38, 1
        %s982 = scalar_select %p981, %s38, 1
        %s983 = scalar_lea.vmem %s19, %s982
        %p984 = pneg %p543
        %p985 = pneg %p540
        %p986 = scmp.lt.s32.totalorder %s38, 1
        %s987 = scalar_select %p986, %s38, 1
        %s988 = scalar_lea.vmem %s20, %s987
        %p989 = pneg %p569
        %p990 = pneg %p566
        %p991 = scmp.lt.s32.totalorder %s38, 1
        %s992 = scalar_select %p991, %s38, 1
        %s993 = scalar_lea.vmem %s21, %s992
        %p994 = pneg %p595
        %p995 = pneg %p592
        %p996 = pneg %p616
        %p997 = pneg %p613
        %p998 = pneg %p637
        %p999 = pneg %p634
        %p1000 = pneg %p658
        %p1001 = pneg %p655
        %p1002 = pneg %p679
        %p1003 = pneg %p676
        %p1004 = pneg %p700
        %p1005 = pneg %p697
        %p1006 = scmp.lt.s32.totalorder %s38, 1
        %s1007 = scalar_select %p1006, %s38, 1
        %s1008 = smul.addr %s1007, 4
        %s1009 = smul.addr %s1008, 4
        %s1010 = scalar_lea.vmem %s2, %s1009
        %p1011 = scmp.lt.s32.totalorder %s38, 1
        %s1012 = scalar_select %p1011, %s38, 1
        %s1013 = scalar_lea.vmem %s3, %s1012
        %p1014 = scmp.lt.s32.totalorder %s38, 1
        %s1015 = scalar_select %p1014, %s38, 1
        %s1016 = smul.addr %s1015, 4
        %s1017 = smul.addr %s1016, 4
        %s1018 = scalar_lea.vmem %s4, %s1017
        %p1019 = scmp.lt.s32.totalorder %s38, 1
        %s1020 = scalar_select %p1019, %s38, 1
        %s1021 = scalar_lea.vmem %s5, %s1020
        %p1022 = scmp.lt.s32.totalorder %s38, 1
        %s1023 = scalar_select %p1022, %s38, 1
        %s1024 = scalar_lea.vmem %s6, %s1023
        %p1025 = scmp.lt.s32.totalorder %s38, 1
        %s1026 = scalar_select %p1025, %s38, 1
        %s1027 = scalar_lea.vmem %s7, %s1026
        %p1028 = scmp.lt.s32.totalorder %s38, 1
        %s1029 = scalar_select %p1028, %s38, 1
        %s1030 = smul.addr %s1029, 4
        %s1031 = smul.addr %s1030, 4
        %s1032 = scalar_lea.vmem %s8, %s1031
        %p1033 = scmp.lt.s32.totalorder %s38, 1
        %s1034 = scalar_select %p1033, %s38, 1
        %s1035 = scalar_lea.vmem %s9, %s1034
        %p1036 = scmp.lt.s32.totalorder %s38, 1
        %s1037 = scalar_select %p1036, %s38, 1
        %s1038 = smul.addr %s1037, 4
        %s1039 = smul.addr %s1038, 4
        %s1040 = scalar_lea.vmem %s10, %s1039
        %p1041 = scmp.lt.s32.totalorder %s38, 1
        %s1042 = scalar_select %p1041, %s38, 1
        %s1043 = scalar_lea.vmem %s11, %s1042
        %p1044 = scmp.lt.s32.totalorder %s38, 1
        %s1045 = scalar_select %p1044, %s38, 1
        %s1046 = smul.addr %s1045, 4
        %s1047 = smul.addr %s1046, 4
        %s1048 = scalar_lea.vmem %s12, %s1047
        %p1049 = scmp.lt.s32.totalorder %s38, 1
        %s1050 = scalar_select %p1049, %s38, 1
        %s1051 = scalar_lea.vmem %s13, %s1050
        %p1052 = scmp.lt.s32.totalorder %s38, 1
        %s1053 = scalar_select %p1052, %s38, 1
        %s1054 = scalar_lea.vmem %s14, %s1053
        %p1055 = scmp.lt.s32.totalorder %s38, 1
        %s1056 = scalar_select %p1055, %s38, 1
        %s1057 = scalar_lea.vmem %s15, %s1056
        %p1058 = scmp.lt.s32.totalorder %s38, 1
        %s1059 = scalar_select %p1058, %s38, 1
        %s1060 = smul.addr %s1059, 4
        %s1061 = smul.addr %s1060, 4
        %s1062 = scalar_lea.vmem %s16, %s1061
        %p1063 = scmp.lt.s32.totalorder %s38, 1
        %s1064 = scalar_select %p1063, %s38, 1
        %s1065 = scalar_lea.vmem %s17, %s1064
        %p1066 = scmp.lt.s32.totalorder %s38, 1
        %s1067 = scalar_select %p1066, %s38, 1
        %s1068 = smul.addr %s1067, 8
        %s1069 = smul.addr %s1068, 4
        %s1070 = scalar_lea.vmem %s18, %s1069
        %p1071 = scmp.lt.s32.totalorder %s38, 1
        %s1072 = scalar_select %p1071, %s38, 1
        %s1073 = scalar_lea.vmem %s19, %s1072
        %p1074 = scmp.lt.s32.totalorder %s38, 1
        %s1075 = scalar_select %p1074, %s38, 1
        %s1076 = scalar_lea.vmem %s20, %s1075
        %p1077 = scmp.lt.s32.totalorder %s38, 1
        %s1078 = scalar_select %p1077, %s38, 1
        %s1079 = scalar_lea.vmem %s21, %s1078
        %p1081 = scmp.eq.s32.totalorder %s38, 0
        // Predicated region
        $region125: #{transformer_forward.5} parent=123 // pred_check
          %p1082 = pneg %p1081
        $region126: #{transformer_forward.5} parent=123 // pred_check_branch
          %1084 = sbr.rel (%p1082) target = $region128
        $region127: #{transformer_forward.5} parent=123 // pred_region
          %v1085 = vld [vmem:[%s0] sm:$0x3]
          %vm1086 = vcmask 254976
          %1087 = vst.msk [vmem:[#allocation2] sm:$0x3] %vm1086, %v1085
        $region128: #{transformer_forward.5} parent=123 // pred_fallthru
          _
        %v1088 = vld [vmem:[#allocation2] sm:$0x3]
        %v1089 = vpack.c.bf16 %v1088, %v1088
        %v1090 = vld [vmem:[%s1010] sm:$0xf]
        %v1091 = vld [vmem:[%s1010 + $0x4] sm:$0xf]
        %v1092 = vld [vmem:[%s1010 + $0x8] sm:$0xf]
        %v1093 = vld [vmem:[%s1010 + $0xc] sm:$0xf]
        %v1094 = vld [vmem:[%s1013] sm:$0x1]
        %v1096 = vlaneseq
        %v1097 = vshrl.u32 %v1096, 7
        %v1098 = vsub.s32 0, %v1097
        %v1099 = vrot.slane %v1094, %v1098
        %v1105 = vunpack.c.l.b16 %v1090
        %v1106 = vunpack.c.l.b16 %v1091
        %v1107 = vunpack.c.l.b16 %v1092
        %v1108 = vunpack.c.l.b16 %v1093
        %v1109 = vpack.c.b16 %v1106, %v1105
        %v1110 = vpack.c.b16 %v1108, %v1107
        %vm1113 = vcmask 261120
        %v1115 = vsel %vm1113, %v1089, 0
        %1117 = vmatprep.subr.bf16.mxu0 0
        %1118 = vmatpush1.bf16.msra.mxu0 %v1109
        %1119 = vmatprep.subr.bf16.mxu0 0
        %1120 = vmatpush1.bf16.msra.mxu0 %v1110
        %1121 = vmatprep.subr.bf16.mxu0 0
        %1122 = vmatpush1.bf16.msra.mxu0 0
        %1123 = vmatprep.subr.bf16.mxu0 0
        %1124 = vmatpush1.bf16.msra.mxu0 0
        %1125 = vmatprep.subr.bf16.mxu0 0
        %1126 = vmatpush1.bf16.msra.mxu0 0
        %1127 = vmatprep.subr.bf16.mxu0 0
        %1128 = vmatpush1.bf16.msra.mxu0 0
        %1129 = vmatprep.subr.bf16.mxu0 0
        %1130 = vmatpush1.bf16.msra.mxu0 0
        %1131 = vmatprep.subr.bf16.mxu0 0
        %1132 = vmatpush1.bf16.msra.mxu0 0
        %1133 = vmatprep.subr.bf16.mxu0 0
        %1134 = vmatpush1.bf16.msra.mxu0 0
        %1135 = vmatprep.subr.bf16.mxu0 0
        %1136 = vmatpush1.bf16.msra.mxu0 0
        %1137 = vmatprep.subr.bf16.mxu0 0
        %1138 = vmatpush1.bf16.msra.mxu0 0
        %1139 = vmatprep.subr.bf16.mxu0 0
        %1140 = vmatpush1.bf16.msra.mxu0 0
        %1141 = vmatprep.subr.bf16.mxu0 0
        %1142 = vmatpush1.bf16.msra.mxu0 0
        %1143 = vmatprep.subr.bf16.mxu0 0
        %1144 = vmatpush1.bf16.msra.mxu0 0
        %1145 = vmatprep.subr.bf16.mxu0 0
        %1146 = vmatpush1.bf16.msra.mxu0 0
        %1147 = vmatprep.subr.bf16.mxu0 0
        %1148 = vmatpush1.bf16.msra.mxu0 0
        %1149 = vmatprep.mubr.bf16.mxu0 0
        %1150 = vmatmul.mubr.bf16.gmra.mrb[0].mxu0 %v1115
        %v1151 = vpop.f32.mrb[0].mxu0
        %v1152 = vadd.f32 %v1099, %v1151
        %v1153 = vpop.f32.mrb[0].mxu0
        %v1154 = vpop.f32.mrb[0].mxu0
        %v1155 = vpop.f32.mrb[0].mxu0
        %1156 = vdwg.mxu0
        %v1157 = vpack.c.bf16 %v1152, %v1152
        %v1158 = vld [vmem:[%s1018] sm:$0xf]
        %v1159 = vld [vmem:[%s1018 + $0x4] sm:$0xf]
        %v1160 = vld [vmem:[%s1018 + $0x8] sm:$0xf]
        %v1161 = vld [vmem:[%s1018 + $0xc] sm:$0xf]
        %v1162 = vld [vmem:[%s1021] sm:$0x1]
        %v1164 = vlaneseq
        %v1165 = vshrl.u32 %v1164, 7
        %v1166 = vsub.s32 0, %v1165
        %v1167 = vrot.slane %v1162, %v1166
        %v1173 = vunpack.c.l.b16 %v1158
        %v1174 = vunpack.c.l.b16 %v1159
        %v1175 = vunpack.c.l.b16 %v1160
        %v1176 = vunpack.c.l.b16 %v1161
        %v1177 = vpack.c.b16 %v1174, %v1173
        %v1178 = vpack.c.b16 %v1176, %v1175
        %v1182 = vsel %vm1113, %v1157, 0
        %1184 = vmatprep.subr.bf16.mxu0 0
        %1185 = vmatpush1.bf16.msra.mxu0 %v1177
        %1186 = vmatprep.subr.bf16.mxu0 0
        %1187 = vmatpush1.bf16.msra.mxu0 %v1178
        %1188 = vmatprep.subr.bf16.mxu0 0
        %1189 = vmatpush1.bf16.msra.mxu0 0
        %1190 = vmatprep.subr.bf16.mxu0 0
        %1191 = vmatpush1.bf16.msra.mxu0 0
        %1192 = vmatprep.subr.bf16.mxu0 0
        %1193 = vmatpush1.bf16.msra.mxu0 0
        %1194 = vmatprep.subr.bf16.mxu0 0
        %1195 = vmatpush1.bf16.msra.mxu0 0
        %1196 = vmatprep.subr.bf16.mxu0 0
        %1197 = vmatpush1.bf16.msra.mxu0 0
        %1198 = vmatprep.subr.bf16.mxu0 0
        %1199 = vmatpush1.bf16.msra.mxu0 0
        %1200 = vmatprep.subr.bf16.mxu0 0
        %1201 = vmatpush1.bf16.msra.mxu0 0
        %1202 = vmatprep.subr.bf16.mxu0 0
        %1203 = vmatpush1.bf16.msra.mxu0 0
        %1204 = vmatprep.subr.bf16.mxu0 0
        %1205 = vmatpush1.bf16.msra.mxu0 0
        %1206 = vmatprep.subr.bf16.mxu0 0
        %1207 = vmatpush1.bf16.msra.mxu0 0
        %1208 = vmatprep.subr.bf16.mxu0 0
        %1209 = vmatpush1.bf16.msra.mxu0 0
        %1210 = vmatprep.subr.bf16.mxu0 0
        %1211 = vmatpush1.bf16.msra.mxu0 0
        %1212 = vmatprep.subr.bf16.mxu0 0
        %1213 = vmatpush1.bf16.msra.mxu0 0
        %1214 = vmatprep.subr.bf16.mxu0 0
        %1215 = vmatpush1.bf16.msra.mxu0 0
        %1216 = vmatprep.mubr.bf16.mxu0 0
        %1217 = vmatmul.mubr.bf16.gmra.mrb[0].mxu0 %v1182
        %v1218 = vpop.f32.mrb[0].mxu0
        %v1219 = vadd.f32 %v1167, %v1218
        %v1220 = vpop.f32.mrb[0].mxu0
        %v1221 = vpop.f32.mrb[0].mxu0
        %v1222 = vpop.f32.mrb[0].mxu0
        %1223 = vdwg.mxu0
        %v1224 = vadd.f32 %v1088, %v1219
        %v1225 = vld [vmem:[%s1024] sm:$0x1]
        %v1226 = vld [vmem:[%s1027] sm:$0x1]
        %vm1227 = vcmask 254976
        %v1228 = vsel %vm1227, %v1224, 0.0
        %1229 = vadd.xlane.f32.xlu0 %v1228
        %v1230 = vpop.xlane.xlu0 %1229
        %v1231 = vrcp.pop 32.0
        %v1232 = vmul.f32 %v1230, %v1231
        %v1233 = vsub.f32 %v1224, %v1232
        %v1234 = vmul.f32 %v1233, %v1233
        %v1235 = vsel %vm1227, %v1234, 0.0
        %1236 = vadd.xlane.f32.xlu0 %v1235
        %v1237 = vpop.xlane.xlu0 %1236
        %v1238 = vmul.f32 %v1237, %v1231
        %v1239 = vadd.f32 %v1238, 1e-06
        %v1240 = vrsqrt.pop %v1239
        %v1241 = vmul.f32 %v1233, %v1240
        %v1243 = vlaneseq
        %v1244 = vshrl.u32 %v1243, 7
        %v1245 = vsub.s32 0, %v1244
        %v1246 = vrot.slane %v1225, %v1245
        %v1248 = vmul.f32 %v1241, %v1246
        %v1250 = vlaneseq
        %v1251 = vshrl.u32 %v1250, 7
        %v1252 = vsub.s32 0, %v1251
        %v1253 = vrot.slane %v1226, %v1252
        %v1255 = vadd.f32 %v1248, %v1253
        %v1256 = vld [vmem:[%s1] sm:$0xff]
        %v1257 = vld [vmem:[%s1 + $0x8] sm:$0xff]
        %v1258 = vld [vmem:[%s1 + $0x10] sm:$0xff]
        %v1259 = vld [vmem:[%s1 + $0x18] sm:$0xff]
        %v1260 = vpack.c.bf16 %v1255, %v1255
        %v1261 = vld [vmem:[%s1032] sm:$0xf]
        %v1262 = vld [vmem:[%s1032 + $0x4] sm:$0xf]
        %v1263 = vld [vmem:[%s1032 + $0x8] sm:$0xf]
        %v1264 = vld [vmem:[%s1032 + $0xc] sm:$0xf]
        %v1265 = vld [vmem:[%s1035] sm:$0x1]
        %v1267 = vlaneseq
        %v1268 = vshrl.u32 %v1267, 7
        %v1269 = vsub.s32 0, %v1268
        %v1270 = vrot.slane %v1265, %v1269
        %v1276 = vunpack.c.l.b16 %v1261
        %v1277 = vunpack.c.l.b16 %v1262
        %v1278 = vunpack.c.l.b16 %v1263
        %v1279 = vunpack.c.l.b16 %v1264
        %v1280 = vpack.c.b16 %v1277, %v1276
        %v1281 = vpack.c.b16 %v1279, %v1278
        %v1285 = vsel %vm1113, %v1260, 0
        %1287 = vmatprep.subr.bf16.mxu0 0
        %1288 = vmatpush1.bf16.msra.mxu0 %v1280
        %1289 = vmatprep.subr.bf16.mxu0 0
        %1290 = vmatpush1.bf16.msra.mxu0 %v1281
        %1291 = vmatprep.subr.bf16.mxu0 0
        %1292 = vmatpush1.bf16.msra.mxu0 0
        %1293 = vmatprep.subr.bf16.mxu0 0
        %1294 = vmatpush1.bf16.msra.mxu0 0
        %1295 = vmatprep.subr.bf16.mxu0 0
        %1296 = vmatpush1.bf16.msra.mxu0 0
        %1297 = vmatprep.subr.bf16.mxu0 0
        %1298 = vmatpush1.bf16.msra.mxu0 0
        %1299 = vmatprep.subr.bf16.mxu0 0
        %1300 = vmatpush1.bf16.msra.mxu0 0
        %1301 = vmatprep.subr.bf16.mxu0 0
        %1302 = vmatpush1.bf16.msra.mxu0 0
        %1303 = vmatprep.subr.bf16.mxu0 0
        %1304 = vmatpush1.bf16.msra.mxu0 0
        %1305 = vmatprep.subr.bf16.mxu0 0
        %1306 = vmatpush1.bf16.msra.mxu0 0
        %1307 = vmatprep.subr.bf16.mxu0 0
        %1308 = vmatpush1.bf16.msra.mxu0 0
        %1309 = vmatprep.subr.bf16.mxu0 0
        %1310 = vmatpush1.bf16.msra.mxu0 0
        %1311 = vmatprep.subr.bf16.mxu0 0
        %1312 = vmatpush1.bf16.msra.mxu0 0
        %1313 = vmatprep.subr.bf16.mxu0 0
        %1314 = vmatpush1.bf16.msra.mxu0 0
        %1315 = vmatprep.subr.bf16.mxu0 0
        %1316 = vmatpush1.bf16.msra.mxu0 0
        %1317 = vmatprep.subr.bf16.mxu0 0
        %1318 = vmatpush1.bf16.msra.mxu0 0
        %1319 = vmatprep.mubr.bf16.mxu0 0
        %1320 = vmatmul.mubr.bf16.gmra.mrb[0].mxu0 %v1285
        %v1321 = vpop.f32.mrb[0].mxu0
        %v1322 = vadd.f32 %v1270, %v1321
        %v1323 = vpop.f32.mrb[0].mxu0
        %v1324 = vpop.f32.mrb[0].mxu0
        %v1325 = vpop.f32.mrb[0].mxu0
        %1326 = vdwg.mxu0
        %v1327 = vmul.f32 %v1322, 0.35355338
        %v1328 = vpack.c.bf16 %v1257, %v1256
        %v1329 = vpack.c.bf16 %v1259, %v1258
        %v1330 = vld [vmem:[%s1040] sm:$0xf]
        %v1331 = vld [vmem:[%s1040 + $0x4] sm:$0xf]
        %v1332 = vld [vmem:[%s1040 + $0x8] sm:$0xf]
        %v1333 = vld [vmem:[%s1040 + $0xc] sm:$0xf]
        %v1334 = vld [vmem:[%s1043] sm:$0x1]
        %v1336 = vlaneseq
        %v1337 = vshrl.u32 %v1336, 7
        %v1338 = vsub.s32 0, %v1337
        %v1339 = vrot.slane %v1334, %v1338
        %v1345 = vunpack.c.l.b16 %v1330
        %v1346 = vunpack.c.l.b16 %v1331
        %v1347 = vunpack.c.l.b16 %v1332
        %v1348 = vunpack.c.l.b16 %v1333
        %v1349 = vpack.c.b16 %v1346, %v1345
        %v1350 = vpack.c.b16 %v1348, %v1347
        %v1354 = vsel %vm1113, %v1328, 0
        %v1357 = vsel %vm1113, %v1329, 0
        %1359 = vmatprep.subr.bf16.mxu0 0
        %1360 = vmatpush1.bf16.msra.mxu0 %v1349
        %1361 = vmatprep.subr.bf16.mxu0 0
        %1362 = vmatpush1.bf16.msra.mxu0 %v1350
        %1363 = vmatprep.subr.bf16.mxu0 0
        %1364 = vmatpush1.bf16.msra.mxu0 0
        %1365 = vmatprep.subr.bf16.mxu0 0
        %1366 = vmatpush1.bf16.msra.mxu0 0
        %1367 = vmatprep.subr.bf16.mxu0 0
        %1368 = vmatpush1.bf16.msra.mxu0 0
        %1369 = vmatprep.subr.bf16.mxu0 0
        %1370 = vmatpush1.bf16.msra.mxu0 0
        %1371 = vmatprep.subr.bf16.mxu0 0
        %1372 = vmatpush1.bf16.msra.mxu0 0
        %1373 = vmatprep.subr.bf16.mxu0 0
        %1374 = vmatpush1.bf16.msra.mxu0 0
        %1375 = vmatprep.subr.bf16.mxu0 0
        %1376 = vmatpush1.bf16.msra.mxu0 0
        %1377 = vmatprep.subr.bf16.mxu0 0
        %1378 = vmatpush1.bf16.msra.mxu0 0
        %1379 = vmatprep.subr.bf16.mxu0 0
        %1380 = vmatpush1.bf16.msra.mxu0 0
        %1381 = vmatprep.subr.bf16.mxu0 0
        %1382 = vmatpush1.bf16.msra.mxu0 0
        %1383 = vmatprep.subr.bf16.mxu0 0
        %1384 = vmatpush1.bf16.msra.mxu0 0
        %1385 = vmatprep.subr.bf16.mxu0 0
        %1386 = vmatpush1.bf16.msra.mxu0 0
        %1387 = vmatprep.subr.bf16.mxu0 0
        %1388 = vmatpush1.bf16.msra.mxu0 0
        %1389 = vmatprep.subr.bf16.mxu0 0
        %1390 = vmatpush1.bf16.msra.mxu0 0
        %1391 = vmatprep.mubr.bf16.mxu0 0
        %1392 = vmatmul.mubr.bf16.gmra.mrb[0].mxu0 %v1354
        %v1393 = vpop.f32.mrb[0].mxu0
        %v1394 = vadd.f32 %v1339, %v1393
        %v1395 = vpop.f32.mrb[0].mxu0
        %v1396 = vpop.f32.mrb[0].mxu0
        %v1397 = vadd.f32 %v1339, %v1396
        %v1398 = vpop.f32.mrb[0].mxu0
        %1399 = vmatprep.mubr.bf16.mxu0 0
        %1400 = vmatmul.mubr.bf16.gmra.mrb[0].mxu0 %v1357
        %v1401 = vpop.f32.mrb[0].mxu0
        %v1402 = vadd.f32 %v1339, %v1401
        %v1403 = vpop.f32.mrb[0].mxu0
        %v1404 = vpop.f32.mrb[0].mxu0
        %v1405 = vadd.f32 %v1339, %v1404
        %v1406 = vpop.f32.mrb[0].mxu0
        %1407 = vdwg.mxu0
        %v1408 = vpack.c.bf16 %v1327, %v1327
        %v1409 = vpack.c.bf16 %v1397, %v1394
        %vm1410 = vcmask 64512
        %v1412 = vsel %vm1410, %v1408, 0
        %v1415 = vsel %vm1410, %v1409, 0
        %1417 = vmatprep.subr.bf16.mxu0 0
        %1418 = vmatpush1.bf16.xpose.msra.mxu0 %v1415
        %1419 = vmatprep.subr.bf16.mxu0 0
        %1420 = vmatpush1.bf16.xpose.msra.mxu0 0
        %1421 = vmatprep.subr.bf16.mxu0 0
        %1422 = vmatpush1.bf16.xpose.msra.mxu0 0
        %1423 = vmatprep.subr.bf16.mxu0 0
        %1424 = vmatpush1.bf16.xpose.msra.mxu0 0
        %1425 = vmatprep.subr.bf16.mxu0 0
        %1426 = vmatpush1.bf16.xpose.msra.mxu0 0
        %1427 = vmatprep.subr.bf16.mxu0 0
        %1428 = vmatpush1.bf16.xpose.msra.mxu0 0
        %1429 = vmatprep.subr.bf16.mxu0 0
        %1430 = vmatpush1.bf16.xpose.msra.mxu0 0
        %1431 = vmatprep.subr.bf16.mxu0 0
        %1432 = vmatpush1.bf16.xpose.msra.mxu0 0
        %1433 = vmatprep.subr.bf16.mxu0 0
        %1434 = vmatpush1.bf16.xpose.msra.mxu0 0
        %1435 = vmatprep.subr.bf16.mxu0 0
        %1436 = vmatpush1.bf16.xpose.msra.mxu0 0
        %1437 = vmatprep.subr.bf16.mxu0 0
        %1438 = vmatpush1.bf16.xpose.msra.mxu0 0
        %1439 = vmatprep.subr.bf16.mxu0 0
        %1440 = vmatpush1.bf16.xpose.msra.mxu0 0
        %1441 = vmatprep.subr.bf16.mxu0 0
        %1442 = vmatpush1.bf16.xpose.msra.mxu0 0
        %1443 = vmatprep.subr.bf16.mxu0 0
        %1444 = vmatpush1.bf16.xpose.msra.mxu0 0
        %1445 = vmatprep.subr.bf16.mxu0 0
        %1446 = vmatpush1.bf16.xpose.msra.mxu0 0
        %1447 = vmatprep.subr.bf16.mxu0 0
        %1448 = vmatpush1.bf16.xpose.msra.mxu0 0
        %1449 = vmatprep.mubr.bf16.mxu0 0
        %1450 = vmatmul.mubr.bf16.gmra.mrb[0].mxu0 %v1412
        %v1451 = vpop.f32.mrb[0].mxu0
        %v1452 = vadd.f32 0.0, %v1451
        %v1453 = vpop.f32.mrb[0].mxu0
        %v1454 = vpop.f32.mrb[0].mxu0
        %v1455 = vpop.f32.mrb[0].mxu0
        %1456 = vdwg.mxu0
        %vm1457 = vcmask 122880
        %v1458 = vsel %vm1457, %v1452, -inf
        %1459 = vmax.xlane.f32.xlu0 %v1458
        %v1460 = vpop.xlane.xlu0 %1459
        %v1461 = vsub.f32 %v1452, %v1460
        %v1462 = vmul.f32 %v1461, 1.442695
        %v1463 = vpow.pop %v1462
        %v1464 = vsel %vm1457, %v1463, 0.0
        %1465 = vadd.xlane.f32.xlu0 %v1464
        %v1466 = vpop.xlane.xlu0 %1465
        %v1467 = vrcp.pop %v1466
        %v1468 = vmul.f32 %v1463, %v1467
        %v1469 = vpack.c.bf16 %v1468, %v1468
        %1471 = vrot.lane.b32.xlu0 %v1409, 96
        %v1472 = vpop.permute.xlu0 %1471
        %vm1474 = vcmask 130048
        %v1476 = vsel %vm1474, %v1469, 0
        %1478 = vmatprep.subr.bf16.mxu0 0
        %1479 = vmatpush1.bf16.msra.mxu0 %v1472
        %1480 = vmatprep.subr.bf16.mxu0 0
        %1481 = vmatpush1.bf16.msra.mxu0 0
        %1482 = vmatprep.subr.bf16.mxu0 0
        %1483 = vmatpush1.bf16.msra.mxu0 0
        %1484 = vmatprep.subr.bf16.mxu0 0
        %1485 = vmatpush1.bf16.msra.mxu0 0
        %1486 = vmatprep.subr.bf16.mxu0 0
        %1487 = vmatpush1.bf16.msra.mxu0 0
        %1488 = vmatprep.subr.bf16.mxu0 0
        %1489 = vmatpush1.bf16.msra.mxu0 0
        %1490 = vmatprep.subr.bf16.mxu0 0
        %1491 = vmatpush1.bf16.msra.mxu0 0
        %1492 = vmatprep.subr.bf16.mxu0 0
        %1493 = vmatpush1.bf16.msra.mxu0 0
        %1494 = vmatprep.subr.bf16.mxu0 0
        %1495 = vmatpush1.bf16.msra.mxu0 0
        %1496 = vmatprep.subr.bf16.mxu0 0
        %1497 = vmatpush1.bf16.msra.mxu0 0
        %1498 = vmatprep.subr.bf16.mxu0 0
        %1499 = vmatpush1.bf16.msra.mxu0 0
        %1500 = vmatprep.subr.bf16.mxu0 0
        %1501 = vmatpush1.bf16.msra.mxu0 0
        %1502 = vmatprep.subr.bf16.mxu0 0
        %1503 = vmatpush1.bf16.msra.mxu0 0
        %1504 = vmatprep.subr.bf16.mxu0 0
        %1505 = vmatpush1.bf16.msra.mxu0 0
        %1506 = vmatprep.subr.bf16.mxu0 0
        %1507 = vmatpush1.bf16.msra.mxu0 0
        %1508 = vmatprep.subr.bf16.mxu0 0
        %1509 = vmatpush1.bf16.msra.mxu0 0
        %1510 = vmatprep.mubr.bf16.mxu0 0
        %1511 = vmatmul.mubr.bf16.gmra.mrb[0].mxu0 %v1476
        %v1512 = vpop.f32.mrb[0].mxu0
        %v1513 = vadd.f32 0.0, %v1512
        %v1514 = vpop.f32.mrb[0].mxu0
        %v1515 = vpop.f32.mrb[0].mxu0
        %v1516 = vpop.f32.mrb[0].mxu0
        %1517 = vdwg.mxu0
        %1519 = vrot.lane.b32.xlu0 %v1408, 120
        %v1520 = vpop.permute.xlu0 %1519
        %1521 = vrot.lane.b32.xlu0 %v1409, 120
        %v1522 = vpop.permute.xlu0 %1521
        %v1524 = vsel %vm1410, %v1520, 0
        %v1527 = vsel %vm1410, %v1522, 0
        %1529 = vmatprep.subr.bf16.mxu0 0
        %1530 = vmatpush1.bf16.xpose.msra.mxu0 %v1527
        %1531 = vmatprep.subr.bf16.mxu0 0
        %1532 = vmatpush1.bf16.xpose.msra.mxu0 0
        %1533 = vmatprep.subr.bf16.mxu0 0
        %1534 = vmatpush1.bf16.xpose.msra.mxu0 0
        %1535 = vmatprep.subr.bf16.mxu0 0
        %1536 = vmatpush1.bf16.xpose.msra.mxu0 0
        %1537 = vmatprep.subr.bf16.mxu0 0
        %1538 = vmatpush1.bf16.xpose.msra.mxu0 0
        %1539 = vmatprep.subr.bf16.mxu0 0
        %1540 = vmatpush1.bf16.xpose.msra.mxu0 0
        %1541 = vmatprep.subr.bf16.mxu0 0
        %1542 = vmatpush1.bf16.xpose.msra.mxu0 0
        %1543 = vmatprep.subr.bf16.mxu0 0
        %1544 = vmatpush1.bf16.xpose.msra.mxu0 0
        %1545 = vmatprep.subr.bf16.mxu0 0
        %1546 = vmatpush1.bf16.xpose.msra.mxu0 0
        %1547 = vmatprep.subr.bf16.mxu0 0
        %1548 = vmatpush1.bf16.xpose.msra.mxu0 0
        %1549 = vmatprep.subr.bf16.mxu0 0
        %1550 = vmatpush1.bf16.xpose.msra.mxu0 0
        %1551 = vmatprep.subr.bf16.mxu0 0
        %1552 = vmatpush1.bf16.xpose.msra.mxu0 0
        %1553 = vmatprep.subr.bf16.mxu0 0
        %1554 = vmatpush1.bf16.xpose.msra.mxu0 0
        %1555 = vmatprep.subr.bf16.mxu0 0
        %1556 = vmatpush1.bf16.xpose.msra.mxu0 0
        %1557 = vmatprep.subr.bf16.mxu0 0
        %1558 = vmatpush1.bf16.xpose.msra.mxu0 0
        %1559 = vmatprep.subr.bf16.mxu0 0
        %1560 = vmatpush1.bf16.xpose.msra.mxu0 0
        %1561 = vmatprep.mubr.bf16.mxu0 0
        %1562 = vmatmul.mubr.bf16.gmra.mrb[0].mxu0 %v1524
        %v1563 = vpop.f32.mrb[0].mxu0
        %v1564 = vadd.f32 0.0, %v1563
        %v1565 = vpop.f32.mrb[0].mxu0
        %v1566 = vpop.f32.mrb[0].mxu0
        %v1567 = vpop.f32.mrb[0].mxu0
        %1568 = vdwg.mxu0
        %v1569 = vsel %vm1457, %v1564, -inf
        %1570 = vmax.xlane.f32.xlu0 %v1569
        %v1571 = vpop.xlane.xlu0 %1570
        %v1572 = vsub.f32 %v1564, %v1571
        %v1573 = vmul.f32 %v1572, 1.442695
        %v1574 = vpow.pop %v1573
        %v1575 = vsel %vm1457, %v1574, 0.0
        %1576 = vadd.xlane.f32.xlu0 %v1575
        %v1577 = vpop.xlane.xlu0 %1576
        %v1578 = vrcp.pop %v1577
        %v1579 = vmul.f32 %v1574, %v1578
        %v1580 = vpack.c.bf16 %v1579, %v1579
        %1581 = vrot.lane.b32.xlu0 %v1409, 88
        %v1582 = vpop.permute.xlu0 %1581
        %v1585 = vsel %vm1474, %v1580, 0
        %1587 = vmatprep.subr.bf16.mxu0 0
        %1588 = vmatpush1.bf16.msra.mxu0 %v1582
        %1589 = vmatprep.subr.bf16.mxu0 0
        %1590 = vmatpush1.bf16.msra.mxu0 0
        %1591 = vmatprep.subr.bf16.mxu0 0
        %1592 = vmatpush1.bf16.msra.mxu0 0
        %1593 = vmatprep.subr.bf16.mxu0 0
        %1594 = vmatpush1.bf16.msra.mxu0 0
        %1595 = vmatprep.subr.bf16.mxu0 0
        %1596 = vmatpush1.bf16.msra.mxu0 0
        %1597 = vmatprep.subr.bf16.mxu0 0
        %1598 = vmatpush1.bf16.msra.mxu0 0
        %1599 = vmatprep.subr.bf16.mxu0 0
        %1600 = vmatpush1.bf16.msra.mxu0 0
        %1601 = vmatprep.subr.bf16.mxu0 0
        %1602 = vmatpush1.bf16.msra.mxu0 0
        %1603 = vmatprep.subr.bf16.mxu0 0
        %1604 = vmatpush1.bf16.msra.mxu0 0
        %1605 = vmatprep.subr.bf16.mxu0 0
        %1606 = vmatpush1.bf16.msra.mxu0 0
        %1607 = vmatprep.subr.bf16.mxu0 0
        %1608 = vmatpush1.bf16.msra.mxu0 0
        %1609 = vmatprep.subr.bf16.mxu0 0
        %1610 = vmatpush1.bf16.msra.mxu0 0
        %1611 = vmatprep.subr.bf16.mxu0 0
        %1612 = vmatpush1.bf16.msra.mxu0 0
        %1613 = vmatprep.subr.bf16.mxu0 0
        %1614 = vmatpush1.bf16.msra.mxu0 0
        %1615 = vmatprep.subr.bf16.mxu0 0
        %1616 = vmatpush1.bf16.msra.mxu0 0
        %1617 = vmatprep.subr.bf16.mxu0 0
        %1618 = vmatpush1.bf16.msra.mxu0 0
        %1619 = vmatprep.mubr.bf16.mxu0 0
        %1620 = vmatmul.mubr.bf16.gmra.mrb[0].mxu0 %v1585
        %v1621 = vpop.f32.mrb[0].mxu0
        %v1622 = vadd.f32 0.0, %v1621
        %v1623 = vpop.f32.mrb[0].mxu0
        %v1624 = vpop.f32.mrb[0].mxu0
        %v1625 = vpop.f32.mrb[0].mxu0
        %1626 = vdwg.mxu0
        %1627 = vrot.lane.b32.xlu0 %v1408, 112
        %v1628 = vpop.permute.xlu0 %1627
        %1629 = vrot.lane.b32.xlu0 %v1409, 112
        %v1630 = vpop.permute.xlu0 %1629
        %v1632 = vsel %vm1410, %v1628, 0
        %v1635 = vsel %vm1410, %v1630, 0
        %1637 = vmatprep.subr.bf16.mxu0 0
        %1638 = vmatpush1.bf16.xpose.msra.mxu0 %v1635
        %1639 = vmatprep.subr.bf16.mxu0 0
        %1640 = vmatpush1.bf16.xpose.msra.mxu0 0
        %1641 = vmatprep.subr.bf16.mxu0 0
        %1642 = vmatpush1.bf16.xpose.msra.mxu0 0
        %1643 = vmatprep.subr.bf16.mxu0 0
        %1644 = vmatpush1.bf16.xpose.msra.mxu0 0
        %1645 = vmatprep.subr.bf16.mxu0 0
        %1646 = vmatpush1.bf16.xpose.msra.mxu0 0
        %1647 = vmatprep.subr.bf16.mxu0 0
        %1648 = vmatpush1.bf16.xpose.msra.mxu0 0
        %1649 = vmatprep.subr.bf16.mxu0 0
        %1650 = vmatpush1.bf16.xpose.msra.mxu0 0
        %1651 = vmatprep.subr.bf16.mxu0 0
        %1652 = vmatpush1.bf16.xpose.msra.mxu0 0
        %1653 = vmatprep.subr.bf16.mxu0 0
        %1654 = vmatpush1.bf16.xpose.msra.mxu0 0
        %1655 = vmatprep.subr.bf16.mxu0 0
        %1656 = vmatpush1.bf16.xpose.msra.mxu0 0
        %1657 = vmatprep.subr.bf16.mxu0 0
        %1658 = vmatpush1.bf16.xpose.msra.mxu0 0
        %1659 = vmatprep.subr.bf16.mxu0 0
        %1660 = vmatpush1.bf16.xpose.msra.mxu0 0
        %1661 = vmatprep.subr.bf16.mxu0 0
        %1662 = vmatpush1.bf16.xpose.msra.mxu0 0
        %1663 = vmatprep.subr.bf16.mxu0 0
        %1664 = vmatpush1.bf16.xpose.msra.mxu0 0
        %1665 = vmatprep.subr.bf16.mxu0 0
        %1666 = vmatpush1.bf16.xpose.msra.mxu0 0
        %1667 = vmatprep.subr.bf16.mxu0 0
        %1668 = vmatpush1.bf16.xpose.msra.mxu0 0
        %1669 = vmatprep.mubr.bf16.mxu0 0
        %1670 = vmatmul.mubr.bf16.gmra.mrb[0].mxu0 %v1632
        %v1671 = vpop.f32.mrb[0].mxu0
        %v1672 = vadd.f32 0.0, %v1671
        %v1673 = vpop.f32.mrb[0].mxu0
        %v1674 = vpop.f32.mrb[0].mxu0
        %v1675 = vpop.f32.mrb[0].mxu0
        %1676 = vdwg.mxu0
        %v1677 = vsel %vm1457, %v1672, -inf
        %1678 = vmax.xlane.f32.xlu0 %v1677
        %v1679 = vpop.xlane.xlu0 %1678
        %v1680 = vsub.f32 %v1672, %v1679
        %v1681 = vmul.f32 %v1680, 1.442695
        %v1682 = vpow.pop %v1681
        %v1683 = vsel %vm1457, %v1682, 0.0
        %1684 = vadd.xlane.f32.xlu0 %v1683
        %v1685 = vpop.xlane.xlu0 %1684
        %v1686 = vrcp.pop %v1685
        %v1687 = vmul.f32 %v1682, %v1686
        %v1688 = vpack.c.bf16 %v1687, %v1687
        %1689 = vrot.lane.b32.xlu0 %v1409, 80
        %v1690 = vpop.permute.xlu0 %1689
        %v1693 = vsel %vm1474, %v1688, 0
        %1695 = vmatprep.subr.bf16.mxu0 0
        %1696 = vmatpush1.bf16.msra.mxu0 %v1690
        %1697 = vmatprep.subr.bf16.mxu0 0
        %1698 = vmatpush1.bf16.msra.mxu0 0
        %1699 = vmatprep.subr.bf16.mxu0 0
        %1700 = vmatpush1.bf16.msra.mxu0 0
        %1701 = vmatprep.subr.bf16.mxu0 0
        %1702 = vmatpush1.bf16.msra.mxu0 0
        %1703 = vmatprep.subr.bf16.mxu0 0
        %1704 = vmatpush1.bf16.msra.mxu0 0
        %1705 = vmatprep.subr.bf16.mxu0 0
        %1706 = vmatpush1.bf16.msra.mxu0 0
        %1707 = vmatprep.subr.bf16.mxu0 0
        %1708 = vmatpush1.bf16.msra.mxu0 0
        %1709 = vmatprep.subr.bf16.mxu0 0
        %1710 = vmatpush1.bf16.msra.mxu0 0
        %1711 = vmatprep.subr.bf16.mxu0 0
        %1712 = vmatpush1.bf16.msra.mxu0 0
        %1713 = vmatprep.subr.bf16.mxu0 0
        %1714 = vmatpush1.bf16.msra.mxu0 0
        %1715 = vmatprep.subr.bf16.mxu0 0
        %1716 = vmatpush1.bf16.msra.mxu0 0
        %1717 = vmatprep.subr.bf16.mxu0 0
        %1718 = vmatpush1.bf16.msra.mxu0 0
        %1719 = vmatprep.subr.bf16.mxu0 0
        %1720 = vmatpush1.bf16.msra.mxu0 0
        %1721 = vmatprep.subr.bf16.mxu0 0
        %1722 = vmatpush1.bf16.msra.mxu0 0
        %1723 = vmatprep.subr.bf16.mxu0 0
        %1724 = vmatpush1.bf16.msra.mxu0 0
        %1725 = vmatprep.subr.bf16.mxu0 0
        %1726 = vmatpush1.bf16.msra.mxu0 0
        %1727 = vmatprep.mubr.bf16.mxu0 0
        %1728 = vmatmul.mubr.bf16.gmra.mrb[0].mxu0 %v1693
        %v1729 = vpop.f32.mrb[0].mxu0
        %v1730 = vadd.f32 0.0, %v1729
        %v1731 = vpop.f32.mrb[0].mxu0
        %v1732 = vpop.f32.mrb[0].mxu0
        %v1733 = vpop.f32.mrb[0].mxu0
        %1734 = vdwg.mxu0
        %1735 = vrot.lane.b32.xlu0 %v1408, 104
        %v1736 = vpop.permute.xlu0 %1735
        %1737 = vrot.lane.b32.xlu0 %v1409, 104
        %v1738 = vpop.permute.xlu0 %1737
        %v1740 = vsel %vm1410, %v1736, 0
        %v1743 = vsel %vm1410, %v1738, 0
        %1745 = vmatprep.subr.bf16.mxu0 0
        %1746 = vmatpush1.bf16.xpose.msra.mxu0 %v1743
        %1747 = vmatprep.subr.bf16.mxu0 0
        %1748 = vmatpush1.bf16.xpose.msra.mxu0 0
        %1749 = vmatprep.subr.bf16.mxu0 0
        %1750 = vmatpush1.bf16.xpose.msra.mxu0 0
        %1751 = vmatprep.subr.bf16.mxu0 0
        %1752 = vmatpush1.bf16.xpose.msra.mxu0 0
        %1753 = vmatprep.subr.bf16.mxu0 0
        %1754 = vmatpush1.bf16.xpose.msra.mxu0 0
        %1755 = vmatprep.subr.bf16.mxu0 0
        %1756 = vmatpush1.bf16.xpose.msra.mxu0 0
        %1757 = vmatprep.subr.bf16.mxu0 0
        %1758 = vmatpush1.bf16.xpose.msra.mxu0 0
        %1759 = vmatprep.subr.bf16.mxu0 0
        %1760 = vmatpush1.bf16.xpose.msra.mxu0 0
        %1761 = vmatprep.subr.bf16.mxu0 0
        %1762 = vmatpush1.bf16.xpose.msra.mxu0 0
        %1763 = vmatprep.subr.bf16.mxu0 0
        %1764 = vmatpush1.bf16.xpose.msra.mxu0 0
        %1765 = vmatprep.subr.bf16.mxu0 0
        %1766 = vmatpush1.bf16.xpose.msra.mxu0 0
        %1767 = vmatprep.subr.bf16.mxu0 0
        %1768 = vmatpush1.bf16.xpose.msra.mxu0 0
        %1769 = vmatprep.subr.bf16.mxu0 0
        %1770 = vmatpush1.bf16.xpose.msra.mxu0 0
        %1771 = vmatprep.subr.bf16.mxu0 0
        %1772 = vmatpush1.bf16.xpose.msra.mxu0 0
        %1773 = vmatprep.subr.bf16.mxu0 0
        %1774 = vmatpush1.bf16.xpose.msra.mxu0 0
        %1775 = vmatprep.subr.bf16.mxu0 0
        %1776 = vmatpush1.bf16.xpose.msra.mxu0 0
        %1777 = vmatprep.mubr.bf16.mxu0 0
        %1778 = vmatmul.mubr.bf16.gmra.mrb[0].mxu0 %v1740
        %v1779 = vpop.f32.mrb[0].mxu0
        %v1780 = vadd.f32 0.0, %v1779
        %v1781 = vpop.f32.mrb[0].mxu0
        %v1782 = vpop.f32.mrb[0].mxu0
        %v1783 = vpop.f32.mrb[0].mxu0
        %1784 = vdwg.mxu0
        %v1785 = vsel %vm1457, %v1780, -inf
        %1786 = vmax.xlane.f32.xlu0 %v1785
        %v1787 = vpop.xlane.xlu0 %1786
        %v1788 = vsub.f32 %v1780, %v1787
        %v1789 = vmul.f32 %v1788, 1.442695
        %v1790 = vpow.pop %v1789
        %v1791 = vsel %vm1457, %v1790, 0.0
        %1792 = vadd.xlane.f32.xlu0 %v1791
        %v1793 = vpop.xlane.xlu0 %1792
        %v1794 = vrcp.pop %v1793
        %v1795 = vmul.f32 %v1790, %v1794
        %v1796 = vpack.c.bf16 %v1795, %v1795
        %1797 = vrot.lane.b32.xlu0 %v1409, 72
        %v1798 = vpop.permute.xlu0 %1797
        %v1801 = vsel %vm1474, %v1796, 0
        %1803 = vmatprep.subr.bf16.mxu0 0
        %1804 = vmatpush1.bf16.msra.mxu0 %v1798
        %1805 = vmatprep.subr.bf16.mxu0 0
        %1806 = vmatpush1.bf16.msra.mxu0 0
        %1807 = vmatprep.subr.bf16.mxu0 0
        %1808 = vmatpush1.bf16.msra.mxu0 0
        %1809 = vmatprep.subr.bf16.mxu0 0
        %1810 = vmatpush1.bf16.msra.mxu0 0
        %1811 = vmatprep.subr.bf16.mxu0 0
        %1812 = vmatpush1.bf16.msra.mxu0 0
        %1813 = vmatprep.subr.bf16.mxu0 0
        %1814 = vmatpush1.bf16.msra.mxu0 0
        %1815 = vmatprep.subr.bf16.mxu0 0
        %1816 = vmatpush1.bf16.msra.mxu0 0
        %1817 = vmatprep.subr.bf16.mxu0 0
        %1818 = vmatpush1.bf16.msra.mxu0 0
        %1819 = vmatprep.subr.bf16.mxu0 0
        %1820 = vmatpush1.bf16.msra.mxu0 0
        %1821 = vmatprep.subr.bf16.mxu0 0
        %1822 = vmatpush1.bf16.msra.mxu0 0
        %1823 = vmatprep.subr.bf16.mxu0 0
        %1824 = vmatpush1.bf16.msra.mxu0 0
        %1825 = vmatprep.subr.bf16.mxu0 0
        %1826 = vmatpush1.bf16.msra.mxu0 0
        %1827 = vmatprep.subr.bf16.mxu0 0
        %1828 = vmatpush1.bf16.msra.mxu0 0
        %1829 = vmatprep.subr.bf16.mxu0 0
        %1830 = vmatpush1.bf16.msra.mxu0 0
        %1831 = vmatprep.subr.bf16.mxu0 0
        %1832 = vmatpush1.bf16.msra.mxu0 0
        %1833 = vmatprep.subr.bf16.mxu0 0
        %1834 = vmatpush1.bf16.msra.mxu0 0
        %1835 = vmatprep.mubr.bf16.mxu0 0
        %1836 = vmatmul.mubr.bf16.gmra.mrb[0].mxu0 %v1801
        %v1837 = vpop.f32.mrb[0].mxu0
        %v1838 = vadd.f32 0.0, %v1837
        %v1839 = vpop.f32.mrb[0].mxu0
        %v1840 = vpop.f32.mrb[0].mxu0
        %v1841 = vpop.f32.mrb[0].mxu0
        %1842 = vdwg.mxu0
        %1844 = vrot.lane.b32.xlu0 %v1622, 8
        %v1845 = vpop.permute.xlu0 %1844
        %1848 = vrot.lane.b32.xlu0 %v1730, 16
        %v1849 = vpop.permute.xlu0 %1848
        %1852 = vrot.lane.b32.xlu0 %v1838, 24
        %v1853 = vpop.permute.xlu0 %1852
        %v1855 = vsel %vm1410, %v1513, %v1845
        %v1856 = vsel %vm1474, %v1855, %v1849
        %vm1857 = vcmask 195584
        %v1858 = vsel %vm1857, %v1856, %v1853
        %v1859 = vpack.c.bf16 %v1405, %v1402
        %v1860 = vshrl.u32 %v1408, 16
        %v1863 = vsel %vm1410, %v1860, 0
        %v1866 = vsel %vm1410, %v1859, 0
        %1868 = vmatprep.subr.bf16.mxu0 0
        %1869 = vmatpush1.bf16.xpose.msra.mxu0 %v1866
        %1870 = vmatprep.subr.bf16.mxu0 0
        %1871 = vmatpush1.bf16.xpose.msra.mxu0 0
        %1872 = vmatprep.subr.bf16.mxu0 0
        %1873 = vmatpush1.bf16.xpose.msra.mxu0 0
        %1874 = vmatprep.subr.bf16.mxu0 0
        %1875 = vmatpush1.bf16.xpose.msra.mxu0 0
        %1876 = vmatprep.subr.bf16.mxu0 0
        %1877 = vmatpush1.bf16.xpose.msra.mxu0 0
        %1878 = vmatprep.subr.bf16.mxu0 0
        %1879 = vmatpush1.bf16.xpose.msra.mxu0 0
        %1880 = vmatprep.subr.bf16.mxu0 0
        %1881 = vmatpush1.bf16.xpose.msra.mxu0 0
        %1882 = vmatprep.subr.bf16.mxu0 0
        %1883 = vmatpush1.bf16.xpose.msra.mxu0 0
        %1884 = vmatprep.subr.bf16.mxu0 0
        %1885 = vmatpush1.bf16.xpose.msra.mxu0 0
        %1886 = vmatprep.subr.bf16.mxu0 0
        %1887 = vmatpush1.bf16.xpose.msra.mxu0 0
        %1888 = vmatprep.subr.bf16.mxu0 0
        %1889 = vmatpush1.bf16.xpose.msra.mxu0 0
        %1890 = vmatprep.subr.bf16.mxu0 0
        %1891 = vmatpush1.bf16.xpose.msra.mxu0 0
        %1892 = vmatprep.subr.bf16.mxu0 0
        %1893 = vmatpush1.bf16.xpose.msra.mxu0 0
        %1894 = vmatprep.subr.bf16.mxu0 0
        %1895 = vmatpush1.bf16.xpose.msra.mxu0 0
        %1896 = vmatprep.subr.bf16.mxu0 0
        %1897 = vmatpush1.bf16.xpose.msra.mxu0 0
        %1898 = vmatprep.subr.bf16.mxu0 0
        %1899 = vmatpush1.bf16.xpose.msra.mxu0 0
        %1900 = vmatprep.mubr.bf16.mxu0 0
        %1901 = vmatmul.mubr.bf16.gmra.mrb[0].mxu0 %v1863
        %v1902 = vpop.f32.mrb[0].mxu0
        %v1903 = vadd.f32 0.0, %v1902
        %v1904 = vpop.f32.mrb[0].mxu0
        %v1905 = vpop.f32.mrb[0].mxu0
        %v1906 = vpop.f32.mrb[0].mxu0
        %1907 = vdwg.mxu0
        %v1908 = vsel %vm1457, %v1903, -inf
        %1909 = vmax.xlane.f32.xlu0 %v1908
        %v1910 = vpop.xlane.xlu0 %1909
        %v1911 = vsub.f32 %v1903, %v1910
        %v1912 = vmul.f32 %v1911, 1.442695
        %v1913 = vpow.pop %v1912
        %v1914 = vsel %vm1457, %v1913, 0.0
        %1915 = vadd.xlane.f32.xlu0 %v1914
        %v1916 = vpop.xlane.xlu0 %1915
        %v1917 = vrcp.pop %v1916
        %v1918 = vmul.f32 %v1913, %v1917
        %v1919 = vpack.c.bf16 %v1918, %v1918
        %1921 = vrot.lane.b32.xlu0 %v1859, 96
        %v1922 = vpop.permute.xlu0 %1921
        %v1925 = vsel %vm1474, %v1919, 0
        %1927 = vmatprep.subr.bf16.mxu0 0
        %1928 = vmatpush1.bf16.msra.mxu0 %v1922
        %1929 = vmatprep.subr.bf16.mxu0 0
        %1930 = vmatpush1.bf16.msra.mxu0 0
        %1931 = vmatprep.subr.bf16.mxu0 0
        %1932 = vmatpush1.bf16.msra.mxu0 0
        %1933 = vmatprep.subr.bf16.mxu0 0
        %1934 = vmatpush1.bf16.msra.mxu0 0
        %1935 = vmatprep.subr.bf16.mxu0 0
        %1936 = vmatpush1.bf16.msra.mxu0 0
        %1937 = vmatprep.subr.bf16.mxu0 0
        %1938 = vmatpush1.bf16.msra.mxu0 0
        %1939 = vmatprep.subr.bf16.mxu0 0
        %1940 = vmatpush1.bf16.msra.mxu0 0
        %1941 = vmatprep.subr.bf16.mxu0 0
        %1942 = vmatpush1.bf16.msra.mxu0 0
        %1943 = vmatprep.subr.bf16.mxu0 0
        %1944 = vmatpush1.bf16.msra.mxu0 0
        %1945 = vmatprep.subr.bf16.mxu0 0
        %1946 = vmatpush1.bf16.msra.mxu0 0
        %1947 = vmatprep.subr.bf16.mxu0 0
        %1948 = vmatpush1.bf16.msra.mxu0 0
        %1949 = vmatprep.subr.bf16.mxu0 0
        %1950 = vmatpush1.bf16.msra.mxu0 0
        %1951 = vmatprep.subr.bf16.mxu0 0
        %1952 = vmatpush1.bf16.msra.mxu0 0
        %1953 = vmatprep.subr.bf16.mxu0 0
        %1954 = vmatpush1.bf16.msra.mxu0 0
        %1955 = vmatprep.subr.bf16.mxu0 0
        %1956 = vmatpush1.bf16.msra.mxu0 0
        %1957 = vmatprep.subr.bf16.mxu0 0
        %1958 = vmatpush1.bf16.msra.mxu0 0
        %1959 = vmatprep.mubr.bf16.mxu0 0
        %1960 = vmatmul.mubr.bf16.gmra.mrb[0].mxu0 %v1925
        %v1961 = vpop.f32.mrb[0].mxu0
        %v1962 = vadd.f32 0.0, %v1961
        %v1963 = vpop.f32.mrb[0].mxu0
        %v1964 = vpop.f32.mrb[0].mxu0
        %v1965 = vpop.f32.mrb[0].mxu0
        %1966 = vdwg.mxu0
        %1967 = vrot.lane.b32.xlu0 %v1860, 120
        %v1968 = vpop.permute.xlu0 %1967
        %1969 = vrot.lane.b32.xlu0 %v1859, 120
        %v1970 = vpop.permute.xlu0 %1969
        %v1972 = vsel %vm1410, %v1968, 0
        %v1975 = vsel %vm1410, %v1970, 0
        %1977 = vmatprep.subr.bf16.mxu0 0
        %1978 = vmatpush1.bf16.xpose.msra.mxu0 %v1975
        %1979 = vmatprep.subr.bf16.mxu0 0
        %1980 = vmatpush1.bf16.xpose.msra.mxu0 0
        %1981 = vmatprep.subr.bf16.mxu0 0
        %1982 = vmatpush1.bf16.xpose.msra.mxu0 0
        %1983 = vmatprep.subr.bf16.mxu0 0
        %1984 = vmatpush1.bf16.xpose.msra.mxu0 0
        %1985 = vmatprep.subr.bf16.mxu0 0
        %1986 = vmatpush1.bf16.xpose.msra.mxu0 0
        %1987 = vmatprep.subr.bf16.mxu0 0
        %1988 = vmatpush1.bf16.xpose.msra.mxu0 0
        %1989 = vmatprep.subr.bf16.mxu0 0
        %1990 = vmatpush1.bf16.xpose.msra.mxu0 0
        %1991 = vmatprep.subr.bf16.mxu0 0
        %1992 = vmatpush1.bf16.xpose.msra.mxu0 0
        %1993 = vmatprep.subr.bf16.mxu0 0
        %1994 = vmatpush1.bf16.xpose.msra.mxu0 0
        %1995 = vmatprep.subr.bf16.mxu0 0
        %1996 = vmatpush1.bf16.xpose.msra.mxu0 0
        %1997 = vmatprep.subr.bf16.mxu0 0
        %1998 = vmatpush1.bf16.xpose.msra.mxu0 0
        %1999 = vmatprep.subr.bf16.mxu0 0
        %2000 = vmatpush1.bf16.xpose.msra.mxu0 0
        %2001 = vmatprep.subr.bf16.mxu0 0
        %2002 = vmatpush1.bf16.xpose.msra.mxu0 0
        %2003 = vmatprep.subr.bf16.mxu0 0
        %2004 = vmatpush1.bf16.xpose.msra.mxu0 0
        %2005 = vmatprep.subr.bf16.mxu0 0
        %2006 = vmatpush1.bf16.xpose.msra.mxu0 0
        %2007 = vmatprep.subr.bf16.mxu0 0
        %2008 = vmatpush1.bf16.xpose.msra.mxu0 0
        %2009 = vmatprep.mubr.bf16.mxu0 0
        %2010 = vmatmul.mubr.bf16.gmra.mrb[0].mxu0 %v1972
        %v2011 = vpop.f32.mrb[0].mxu0
        %v2012 = vadd.f32 0.0, %v2011
        %v2013 = vpop.f32.mrb[0].mxu0
        %v2014 = vpop.f32.mrb[0].mxu0
        %v2015 = vpop.f32.mrb[0].mxu0
        %2016 = vdwg.mxu0
        %v2017 = vsel %vm1457, %v2012, -inf
        %2018 = vmax.xlane.f32.xlu0 %v2017
        %v2019 = vpop.xlane.xlu0 %2018
        %v2020 = vsub.f32 %v2012, %v2019
        %v2021 = vmul.f32 %v2020, 1.442695
        %v2022 = vpow.pop %v2021
        %v2023 = vsel %vm1457, %v2022, 0.0
        %2024 = vadd.xlane.f32.xlu0 %v2023
        %v2025 = vpop.xlane.xlu0 %2024
        %v2026 = vrcp.pop %v2025
        %v2027 = vmul.f32 %v2022, %v2026
        %v2028 = vpack.c.bf16 %v2027, %v2027
        %2029 = vrot.lane.b32.xlu0 %v1859, 88
        %v2030 = vpop.permute.xlu0 %2029
        %v2033 = vsel %vm1474, %v2028, 0
        %2035 = vmatprep.subr.bf16.mxu0 0
        %2036 = vmatpush1.bf16.msra.mxu0 %v2030
        %2037 = vmatprep.subr.bf16.mxu0 0
        %2038 = vmatpush1.bf16.msra.mxu0 0
        %2039 = vmatprep.subr.bf16.mxu0 0
        %2040 = vmatpush1.bf16.msra.mxu0 0
        %2041 = vmatprep.subr.bf16.mxu0 0
        %2042 = vmatpush1.bf16.msra.mxu0 0
        %2043 = vmatprep.subr.bf16.mxu0 0
        %2044 = vmatpush1.bf16.msra.mxu0 0
        %2045 = vmatprep.subr.bf16.mxu0 0
        %2046 = vmatpush1.bf16.msra.mxu0 0
        %2047 = vmatprep.subr.bf16.mxu0 0
        %2048 = vmatpush1.bf16.msra.mxu0 0
        %2049 = vmatprep.subr.bf16.mxu0 0
        %2050 = vmatpush1.bf16.msra.mxu0 0
        %2051 = vmatprep.subr.bf16.mxu0 0
        %2052 = vmatpush1.bf16.msra.mxu0 0
        %2053 = vmatprep.subr.bf16.mxu0 0
        %2054 = vmatpush1.bf16.msra.mxu0 0
        %2055 = vmatprep.subr.bf16.mxu0 0
        %2056 = vmatpush1.bf16.msra.mxu0 0
        %2057 = vmatprep.subr.bf16.mxu0 0
        %2058 = vmatpush1.bf16.msra.mxu0 0
        %2059 = vmatprep.subr.bf16.mxu0 0
        %2060 = vmatpush1.bf16.msra.mxu0 0
        %2061 = vmatprep.subr.bf16.mxu0 0
        %2062 = vmatpush1.bf16.msra.mxu0 0
        %2063 = vmatprep.subr.bf16.mxu0 0
        %2064 = vmatpush1.bf16.msra.mxu0 0
        %2065 = vmatprep.subr.bf16.mxu0 0
        %2066 = vmatpush1.bf16.msra.mxu0 0
        %2067 = vmatprep.mubr.bf16.mxu0 0
        %2068 = vmatmul.mubr.bf16.gmra.mrb[0].mxu0 %v2033
        %v2069 = vpop.f32.mrb[0].mxu0
        %v2070 = vadd.f32 0.0, %v2069
        %v2071 = vpop.f32.mrb[0].mxu0
        %v2072 = vpop.f32.mrb[0].mxu0
        %v2073 = vpop.f32.mrb[0].mxu0
        %2074 = vdwg.mxu0
        %2075 = vrot.lane.b32.xlu0 %v1860, 112
        %v2076 = vpop.permute.xlu0 %2075
        %2077 = vrot.lane.b32.xlu0 %v1859, 112
        %v2078 = vpop.permute.xlu0 %2077
        %v2080 = vsel %vm1410, %v2076, 0
        %v2083 = vsel %vm1410, %v2078, 0
        %2085 = vmatprep.subr.bf16.mxu0 0
        %2086 = vmatpush1.bf16.xpose.msra.mxu0 %v2083
        %2087 = vmatprep.subr.bf16.mxu0 0
        %2088 = vmatpush1.bf16.xpose.msra.mxu0 0
        %2089 = vmatprep.subr.bf16.mxu0 0
        %2090 = vmatpush1.bf16.xpose.msra.mxu0 0
        %2091 = vmatprep.subr.bf16.mxu0 0
        %2092 = vmatpush1.bf16.xpose.msra.mxu0 0
        %2093 = vmatprep.subr.bf16.mxu0 0
        %2094 = vmatpush1.bf16.xpose.msra.mxu0 0
        %2095 = vmatprep.subr.bf16.mxu0 0
        %2096 = vmatpush1.bf16.xpose.msra.mxu0 0
        %2097 = vmatprep.subr.bf16.mxu0 0
        %2098 = vmatpush1.bf16.xpose.msra.mxu0 0
        %2099 = vmatprep.subr.bf16.mxu0 0
        %2100 = vmatpush1.bf16.xpose.msra.mxu0 0
        %2101 = vmatprep.subr.bf16.mxu0 0
        %2102 = vmatpush1.bf16.xpose.msra.mxu0 0
        %2103 = vmatprep.subr.bf16.mxu0 0
        %2104 = vmatpush1.bf16.xpose.msra.mxu0 0
        %2105 = vmatprep.subr.bf16.mxu0 0
        %2106 = vmatpush1.bf16.xpose.msra.mxu0 0
        %2107 = vmatprep.subr.bf16.mxu0 0
        %2108 = vmatpush1.bf16.xpose.msra.mxu0 0
        %2109 = vmatprep.subr.bf16.mxu0 0
        %2110 = vmatpush1.bf16.xpose.msra.mxu0 0
        %2111 = vmatprep.subr.bf16.mxu0 0
        %2112 = vmatpush1.bf16.xpose.msra.mxu0 0
        %2113 = vmatprep.subr.bf16.mxu0 0
        %2114 = vmatpush1.bf16.xpose.msra.mxu0 0
        %2115 = vmatprep.subr.bf16.mxu0 0
        %2116 = vmatpush1.bf16.xpose.msra.mxu0 0
        %2117 = vmatprep.mubr.bf16.mxu0 0
        %2118 = vmatmul.mubr.bf16.gmra.mrb[0].mxu0 %v2080
        %v2119 = vpop.f32.mrb[0].mxu0
        %v2120 = vadd.f32 0.0, %v2119
        %v2121 = vpop.f32.mrb[0].mxu0
        %v2122 = vpop.f32.mrb[0].mxu0
        %v2123 = vpop.f32.mrb[0].mxu0
        %2124 = vdwg.mxu0
        %v2125 = vsel %vm1457, %v2120, -inf
        %2126 = vmax.xlane.f32.xlu0 %v2125
        %v2127 = vpop.xlane.xlu0 %2126
        %v2128 = vsub.f32 %v2120, %v2127
        %v2129 = vmul.f32 %v2128, 1.442695
        %v2130 = vpow.pop %v2129
        %v2131 = vsel %vm1457, %v2130, 0.0
        %2132 = vadd.xlane.f32.xlu0 %v2131
        %v2133 = vpop.xlane.xlu0 %2132
        %v2134 = vrcp.pop %v2133
        %v2135 = vmul.f32 %v2130, %v2134
        %v2136 = vpack.c.bf16 %v2135, %v2135
        %2137 = vrot.lane.b32.xlu0 %v1859, 80
        %v2138 = vpop.permute.xlu0 %2137
        %v2141 = vsel %vm1474, %v2136, 0
        %2143 = vmatprep.subr.bf16.mxu0 0
        %2144 = vmatpush1.bf16.msra.mxu0 %v2138
        %2145 = vmatprep.subr.bf16.mxu0 0
        %2146 = vmatpush1.bf16.msra.mxu0 0
        %2147 = vmatprep.subr.bf16.mxu0 0
        %2148 = vmatpush1.bf16.msra.mxu0 0
        %2149 = vmatprep.subr.bf16.mxu0 0
        %2150 = vmatpush1.bf16.msra.mxu0 0
        %2151 = vmatprep.subr.bf16.mxu0 0
        %2152 = vmatpush1.bf16.msra.mxu0 0
        %2153 = vmatprep.subr.bf16.mxu0 0
        %2154 = vmatpush1.bf16.msra.mxu0 0
        %2155 = vmatprep.subr.bf16.mxu0 0
        %2156 = vmatpush1.bf16.msra.mxu0 0
        %2157 = vmatprep.subr.bf16.mxu0 0
        %2158 = vmatpush1.bf16.msra.mxu0 0
        %2159 = vmatprep.subr.bf16.mxu0 0
        %2160 = vmatpush1.bf16.msra.mxu0 0
        %2161 = vmatprep.subr.bf16.mxu0 0
        %2162 = vmatpush1.bf16.msra.mxu0 0
        %2163 = vmatprep.subr.bf16.mxu0 0
        %2164 = vmatpush1.bf16.msra.mxu0 0
        %2165 = vmatprep.subr.bf16.mxu0 0
        %2166 = vmatpush1.bf16.msra.mxu0 0
        %2167 = vmatprep.subr.bf16.mxu0 0
        %2168 = vmatpush1.bf16.msra.mxu0 0
        %2169 = vmatprep.subr.bf16.mxu0 0
        %2170 = vmatpush1.bf16.msra.mxu0 0
        %2171 = vmatprep.subr.bf16.mxu0 0
        %2172 = vmatpush1.bf16.msra.mxu0 0
        %2173 = vmatprep.subr.bf16.mxu0 0
        %2174 = vmatpush1.bf16.msra.mxu0 0
        %2175 = vmatprep.mubr.bf16.mxu0 0
        %2176 = vmatmul.mubr.bf16.gmra.mrb[0].mxu0 %v2141
        %v2177 = vpop.f32.mrb[0].mxu0
        %v2178 = vadd.f32 0.0, %v2177
        %v2179 = vpop.f32.mrb[0].mxu0
        %v2180 = vpop.f32.mrb[0].mxu0
        %v2181 = vpop.f32.mrb[0].mxu0
        %2182 = vdwg.mxu0
        %2183 = vrot.lane.b32.xlu0 %v1860, 104
        %v2184 = vpop.permute.xlu0 %2183
        %2185 = vrot.lane.b32.xlu0 %v1859, 104
        %v2186 = vpop.permute.xlu0 %2185
        %v2188 = vsel %vm1410, %v2184, 0
        %v2191 = vsel %vm1410, %v2186, 0
        %2193 = vmatprep.subr.bf16.mxu0 0
        %2194 = vmatpush1.bf16.xpose.msra.mxu0 %v2191
        %2195 = vmatprep.subr.bf16.mxu0 0
        %2196 = vmatpush1.bf16.xpose.msra.mxu0 0
        %2197 = vmatprep.subr.bf16.mxu0 0
        %2198 = vmatpush1.bf16.xpose.msra.mxu0 0
        %2199 = vmatprep.subr.bf16.mxu0 0
        %2200 = vmatpush1.bf16.xpose.msra.mxu0 0
        %2201 = vmatprep.subr.bf16.mxu0 0
        %2202 = vmatpush1.bf16.xpose.msra.mxu0 0
        %2203 = vmatprep.subr.bf16.mxu0 0
        %2204 = vmatpush1.bf16.xpose.msra.mxu0 0
        %2205 = vmatprep.subr.bf16.mxu0 0
        %2206 = vmatpush1.bf16.xpose.msra.mxu0 0
        %2207 = vmatprep.subr.bf16.mxu0 0
        %2208 = vmatpush1.bf16.xpose.msra.mxu0 0
        %2209 = vmatprep.subr.bf16.mxu0 0
        %2210 = vmatpush1.bf16.xpose.msra.mxu0 0
        %2211 = vmatprep.subr.bf16.mxu0 0
        %2212 = vmatpush1.bf16.xpose.msra.mxu0 0
        %2213 = vmatprep.subr.bf16.mxu0 0
        %2214 = vmatpush1.bf16.xpose.msra.mxu0 0
        %2215 = vmatprep.subr.bf16.mxu0 0
        %2216 = vmatpush1.bf16.xpose.msra.mxu0 0
        %2217 = vmatprep.subr.bf16.mxu0 0
        %2218 = vmatpush1.bf16.xpose.msra.mxu0 0
        %2219 = vmatprep.subr.bf16.mxu0 0
        %2220 = vmatpush1.bf16.xpose.msra.mxu0 0
        %2221 = vmatprep.subr.bf16.mxu0 0
        %2222 = vmatpush1.bf16.xpose.msra.mxu0 0
        %2223 = vmatprep.subr.bf16.mxu0 0
        %2224 = vmatpush1.bf16.xpose.msra.mxu0 0
        %2225 = vmatprep.mubr.bf16.mxu0 0
        %2226 = vmatmul.mubr.bf16.gmra.mrb[0].mxu0 %v2188
        %v2227 = vpop.f32.mrb[0].mxu0
        %v2228 = vadd.f32 0.0, %v2227
        %v2229 = vpop.f32.mrb[0].mxu0
        %v2230 = vpop.f32.mrb[0].mxu0
        %v2231 = vpop.f32.mrb[0].mxu0
        %2232 = vdwg.mxu0
        %v2233 = vsel %vm1457, %v2228, -inf
        %2234 = vmax.xlane.f32.xlu0 %v2233
        %v2235 = vpop.xlane.xlu0 %2234
        %v2236 = vsub.f32 %v2228, %v2235
        %v2237 = vmul.f32 %v2236, 1.442695
        %v2238 = vpow.pop %v2237
        %v2239 = vsel %vm1457, %v2238, 0.0
        %2240 = vadd.xlane.f32.xlu0 %v2239
        %v2241 = vpop.xlane.xlu0 %2240
        %v2242 = vrcp.pop %v2241
        %v2243 = vmul.f32 %v2238, %v2242
        %v2244 = vpack.c.bf16 %v2243, %v2243
        %2245 = vrot.lane.b32.xlu0 %v1859, 72
        %v2246 = vpop.permute.xlu0 %2245
        %v2249 = vsel %vm1474, %v2244, 0
        %2251 = vmatprep.subr.bf16.mxu0 0
        %2252 = vmatpush1.bf16.msra.mxu0 %v2246
        %2253 = vmatprep.subr.bf16.mxu0 0
        %2254 = vmatpush1.bf16.msra.mxu0 0
        %2255 = vmatprep.subr.bf16.mxu0 0
        %2256 = vmatpush1.bf16.msra.mxu0 0
        %2257 = vmatprep.subr.bf16.mxu0 0
        %2258 = vmatpush1.bf16.msra.mxu0 0
        %2259 = vmatprep.subr.bf16.mxu0 0
        %2260 = vmatpush1.bf16.msra.mxu0 0
        %2261 = vmatprep.subr.bf16.mxu0 0
        %2262 = vmatpush1.bf16.msra.mxu0 0
        %2263 = vmatprep.subr.bf16.mxu0 0
        %2264 = vmatpush1.bf16.msra.mxu0 0
        %2265 = vmatprep.subr.bf16.mxu0 0
        %2266 = vmatpush1.bf16.msra.mxu0 0
        %2267 = vmatprep.subr.bf16.mxu0 0
        %2268 = vmatpush1.bf16.msra.mxu0 0
        %2269 = vmatprep.subr.bf16.mxu0 0
        %2270 = vmatpush1.bf16.msra.mxu0 0
        %2271 = vmatprep.subr.bf16.mxu0 0
        %2272 = vmatpush1.bf16.msra.mxu0 0
        %2273 = vmatprep.subr.bf16.mxu0 0
        %2274 = vmatpush1.bf16.msra.mxu0 0
        %2275 = vmatprep.subr.bf16.mxu0 0
        %2276 = vmatpush1.bf16.msra.mxu0 0
        %2277 = vmatprep.subr.bf16.mxu0 0
        %2278 = vmatpush1.bf16.msra.mxu0 0
        %2279 = vmatprep.subr.bf16.mxu0 0
        %2280 = vmatpush1.bf16.msra.mxu0 0
        %2281 = vmatprep.subr.bf16.mxu0 0
        %2282 = vmatpush1.bf16.msra.mxu0 0
        %2283 = vmatprep.mubr.bf16.mxu0 0
        %2284 = vmatmul.mubr.bf16.gmra.mrb[0].mxu0 %v2249
        %v2285 = vpop.f32.mrb[0].mxu0
        %v2286 = vadd.f32 0.0, %v2285
        %v2287 = vpop.f32.mrb[0].mxu0
        %v2288 = vpop.f32.mrb[0].mxu0
        %v2289 = vpop.f32.mrb[0].mxu0
        %2290 = vdwg.mxu0
        %2292 = vrot.lane.b32.xlu0 %v2070, 8
        %v2293 = vpop.permute.xlu0 %2292
        %2296 = vrot.lane.b32.xlu0 %v2178, 16
        %v2297 = vpop.permute.xlu0 %2296
        %2300 = vrot.lane.b32.xlu0 %v2286, 24
        %v2301 = vpop.permute.xlu0 %2300
        %v2303 = vsel %vm1410, %v1962, %v2293
        %v2304 = vsel %vm1474, %v2303, %v2297
        %v2305 = vsel %vm1857, %v2304, %v2301
        %v2307 = vrot.slane %v2305, 7
        %vm2309 = vcmask 1040384
        %v2310 = vsel %vm2309, %v1858, %v2307
        %v2311 = vpack.c.bf16 %v2310, %v2310
        %v2312 = vld [vmem:[%s1048] sm:$0xf]
        %v2313 = vld [vmem:[%s1048 + $0x4] sm:$0xf]
        %v2314 = vld [vmem:[%s1048 + $0x8] sm:$0xf]
        %v2315 = vld [vmem:[%s1048 + $0xc] sm:$0xf]
        %v2316 = vld [vmem:[%s1051] sm:$0x1]
        %v2318 = vlaneseq
        %v2319 = vshrl.u32 %v2318, 7
        %v2320 = vsub.s32 0, %v2319
        %v2321 = vrot.slane %v2316, %v2320
        %v2327 = vunpack.c.l.b16 %v2312
        %v2328 = vunpack.c.l.b16 %v2313
        %v2329 = vunpack.c.l.b16 %v2314
        %v2330 = vunpack.c.l.b16 %v2315
        %v2331 = vpack.c.b16 %v2328, %v2327
        %v2332 = vpack.c.b16 %v2330, %v2329
        %v2336 = vsel %vm1113, %v2311, 0
        %2338 = vmatprep.subr.bf16.mxu0 0
        %2339 = vmatpush1.bf16.msra.mxu0 %v2331
        %2340 = vmatprep.subr.bf16.mxu0 0
        %2341 = vmatpush1.bf16.msra.mxu0 %v2332
        %2342 = vmatprep.subr.bf16.mxu0 0
        %2343 = vmatpush1.bf16.msra.mxu0 0
        %2344 = vmatprep.subr.bf16.mxu0 0
        %2345 = vmatpush1.bf16.msra.mxu0 0
        %2346 = vmatprep.subr.bf16.mxu0 0
        %2347 = vmatpush1.bf16.msra.mxu0 0
        %2348 = vmatprep.subr.bf16.mxu0 0
        %2349 = vmatpush1.bf16.msra.mxu0 0
        %2350 = vmatprep.subr.bf16.mxu0 0
        %2351 = vmatpush1.bf16.msra.mxu0 0
        %2352 = vmatprep.subr.bf16.mxu0 0
        %2353 = vmatpush1.bf16.msra.mxu0 0
        %2354 = vmatprep.subr.bf16.mxu0 0
        %2355 = vmatpush1.bf16.msra.mxu0 0
        %2356 = vmatprep.subr.bf16.mxu0 0
        %2357 = vmatpush1.bf16.msra.mxu0 0
        %2358 = vmatprep.subr.bf16.mxu0 0
        %2359 = vmatpush1.bf16.msra.mxu0 0
        %2360 = vmatprep.subr.bf16.mxu0 0
        %2361 = vmatpush1.bf16.msra.mxu0 0
        %2362 = vmatprep.subr.bf16.mxu0 0
        %2363 = vmatpush1.bf16.msra.mxu0 0
        %2364 = vmatprep.subr.bf16.mxu0 0
        %2365 = vmatpush1.bf16.msra.mxu0 0
        %2366 = vmatprep.subr.bf16.mxu0 0
        %2367 = vmatpush1.bf16.msra.mxu0 0
        %2368 = vmatprep.subr.bf16.mxu0 0
        %2369 = vmatpush1.bf16.msra.mxu0 0
        %2370 = vmatprep.mubr.bf16.mxu0 0
        %2371 = vmatmul.mubr.bf16.gmra.mrb[0].mxu0 %v2336
        %v2372 = vpop.f32.mrb[0].mxu0
        %v2373 = vadd.f32 %v2321, %v2372
        %v2374 = vpop.f32.mrb[0].mxu0
        %v2375 = vpop.f32.mrb[0].mxu0
        %v2376 = vpop.f32.mrb[0].mxu0
        %2377 = vdwg.mxu0
        %v2378 = vadd.f32 %v1255, %v2373
        %v2379 = vld [vmem:[%s1054] sm:$0x1]
        %v2380 = vld [vmem:[%s1057] sm:$0x1]
        %v2381 = vsel %vm1227, %v2378, 0.0
        %2382 = vadd.xlane.f32.xlu0 %v2381
        %v2383 = vpop.xlane.xlu0 %2382
        %v2384 = vmul.f32 %v2383, %v1231
        %v2385 = vsub.f32 %v2378, %v2384
        %v2386 = vmul.f32 %v2385, %v2385
        %v2387 = vsel %vm1227, %v2386, 0.0
        %2388 = vadd.xlane.f32.xlu0 %v2387
        %v2389 = vpop.xlane.xlu0 %2388
        %v2390 = vmul.f32 %v2389, %v1231
        %v2391 = vadd.f32 %v2390, 1e-06
        %v2392 = vrsqrt.pop %v2391
        %v2393 = vmul.f32 %v2385, %v2392
        %v2395 = vlaneseq
        %v2396 = vshrl.u32 %v2395, 7
        %v2397 = vsub.s32 0, %v2396
        %v2398 = vrot.slane %v2379, %v2397
        %v2400 = vmul.f32 %v2393, %v2398
        %v2402 = vlaneseq
        %v2403 = vshrl.u32 %v2402, 7
        %v2404 = vsub.s32 0, %v2403
        %v2405 = vrot.slane %v2380, %v2404
        %v2407 = vadd.f32 %v2400, %v2405
        %v2408 = vpack.c.bf16 %v2407, %v2407
        %v2409 = vld [vmem:[%s1062] sm:$0xf]
        %v2410 = vld [vmem:[%s1062 + $0x4] sm:$0xf]
        %v2411 = vld [vmem:[%s1062 + $0x8] sm:$0xf]
        %v2412 = vld [vmem:[%s1062 + $0xc] sm:$0xf]
        %v2413 = vld [vmem:[%s1065] sm:$0x1]
        %v2415 = vlaneseq
        %v2416 = vshrl.u32 %v2415, 7
        %v2417 = vsub.s32 0, %v2416
        %v2418 = vrot.slane %v2413, %v2417
        %v2424 = vunpack.c.l.b16 %v2409
        %v2425 = vunpack.c.l.b16 %v2410
        %v2426 = vunpack.c.l.b16 %v2411
        %v2427 = vunpack.c.l.b16 %v2412
        %v2428 = vpack.c.b16 %v2425, %v2424
        %v2429 = vpack.c.b16 %v2427, %v2426
        %v2433 = vsel %vm1113, %v2408, 0
        %2435 = vmatprep.subr.bf16.mxu0 0
        %2436 = vmatpush1.bf16.msra.mxu0 %v2428
        %2437 = vmatprep.subr.bf16.mxu0 0
        %2438 = vmatpush1.bf16.msra.mxu0 %v2429
        %2439 = vmatprep.subr.bf16.mxu0 0
        %2440 = vmatpush1.bf16.msra.mxu0 0
        %2441 = vmatprep.subr.bf16.mxu0 0
        %2442 = vmatpush1.bf16.msra.mxu0 0
        %2443 = vmatprep.subr.bf16.mxu0 0
        %2444 = vmatpush1.bf16.msra.mxu0 0
        %2445 = vmatprep.subr.bf16.mxu0 0
        %2446 = vmatpush1.bf16.msra.mxu0 0
        %2447 = vmatprep.subr.bf16.mxu0 0
        %2448 = vmatpush1.bf16.msra.mxu0 0
        %2449 = vmatprep.subr.bf16.mxu0 0
        %2450 = vmatpush1.bf16.msra.mxu0 0
        %2451 = vmatprep.subr.bf16.mxu0 0
        %2452 = vmatpush1.bf16.msra.mxu0 0
        %2453 = vmatprep.subr.bf16.mxu0 0
        %2454 = vmatpush1.bf16.msra.mxu0 0
        %2455 = vmatprep.subr.bf16.mxu0 0
        %2456 = vmatpush1.bf16.msra.mxu0 0
        %2457 = vmatprep.subr.bf16.mxu0 0
        %2458 = vmatpush1.bf16.msra.mxu0 0
        %2459 = vmatprep.subr.bf16.mxu0 0
        %2460 = vmatpush1.bf16.msra.mxu0 0
        %2461 = vmatprep.subr.bf16.mxu0 0
        %2462 = vmatpush1.bf16.msra.mxu0 0
        %2463 = vmatprep.subr.bf16.mxu0 0
        %2464 = vmatpush1.bf16.msra.mxu0 0
        %2465 = vmatprep.subr.bf16.mxu0 0
        %2466 = vmatpush1.bf16.msra.mxu0 0
        %2467 = vmatprep.mubr.bf16.mxu0 0
        %2468 = vmatmul.mubr.bf16.gmra.mrb[0].mxu0 %v2433
        %v2469 = vpop.f32.mrb[0].mxu0
        %v2470 = vadd.f32 %v2418, %v2469
        %v2471 = vpop.f32.mrb[0].mxu0
        %v2472 = vpop.f32.mrb[0].mxu0
        %v2473 = vpop.f32.mrb[0].mxu0
        %2474 = vdwg.mxu0
        %v2475 = vmul.f32 %v2470, 0.5
        %v2476 = vmul.f32 %v2470, 0.70710677
        %v2477 = verf.f32.pop %v2476
        %v2478 = vadd.f32 %v2477, 1.0
        %v2479 = vmul.f32 %v2475, %v2478
        %v2480 = vpack.c.bf16 %v2479, %v2479
        %v2481 = vld [vmem:[%s1070] sm:$0xf]
        %v2482 = vld [vmem:[%s1070 + $0x4] sm:$0xf]
        %v2483 = vld [vmem:[%s1070 + $0x8] sm:$0xf]
        %v2484 = vld [vmem:[%s1070 + $0xc] sm:$0xf]
        %v2485 = vld [vmem:[%s1070 + $0x10] sm:$0xf]
        %v2486 = vld [vmem:[%s1070 + $0x14] sm:$0xf]
        %v2487 = vld [vmem:[%s1070 + $0x18] sm:$0xf]
        %v2488 = vld [vmem:[%s1070 + $0x1c] sm:$0xf]
        %v2489 = vld [vmem:[%s1073] sm:$0x1]
        %v2491 = vlaneseq
        %v2492 = vshrl.u32 %v2491, 7
        %v2493 = vsub.s32 0, %v2492
        %v2494 = vrot.slane %v2489, %v2493
        %v2504 = vunpack.c.l.b16 %v2481
        %v2505 = vunpack.c.l.b16 %v2482
        %v2506 = vunpack.c.l.b16 %v2483
        %v2507 = vunpack.c.l.b16 %v2484
        %v2508 = vunpack.c.l.b16 %v2485
        %v2509 = vunpack.c.l.b16 %v2486
        %v2510 = vunpack.c.l.b16 %v2487
        %v2511 = vunpack.c.l.b16 %v2488
        %v2512 = vpack.c.b16 %v2505, %v2504
        %v2513 = vpack.c.b16 %v2507, %v2506
        %v2514 = vpack.c.b16 %v2509, %v2508
        %v2515 = vpack.c.b16 %v2511, %v2510
        %vm2520 = vcmask 523264
        %v2522 = vsel %vm2520, %v2480, 0
        %2524 = vmatprep.subr.bf16.mxu0 0
        %2525 = vmatpush1.bf16.msra.mxu0 %v2512
        %2526 = vmatprep.subr.bf16.mxu0 0
        %2527 = vmatpush1.bf16.msra.mxu0 %v2513
        %2528 = vmatprep.subr.bf16.mxu0 0
        %2529 = vmatpush1.bf16.msra.mxu0 %v2514
        %2530 = vmatprep.subr.bf16.mxu0 0
        %2531 = vmatpush1.bf16.msra.mxu0 %v2515
        %2532 = vmatprep.subr.bf16.mxu0 0
        %2533 = vmatpush1.bf16.msra.mxu0 0
        %2534 = vmatprep.subr.bf16.mxu0 0
        %2535 = vmatpush1.bf16.msra.mxu0 0
        %2536 = vmatprep.subr.bf16.mxu0 0
        %2537 = vmatpush1.bf16.msra.mxu0 0
        %2538 = vmatprep.subr.bf16.mxu0 0
        %2539 = vmatpush1.bf16.msra.mxu0 0
        %2540 = vmatprep.subr.bf16.mxu0 0
        %2541 = vmatpush1.bf16.msra.mxu0 0
        %2542 = vmatprep.subr.bf16.mxu0 0
        %2543 = vmatpush1.bf16.msra.mxu0 0
        %2544 = vmatprep.subr.bf16.mxu0 0
        %2545 = vmatpush1.bf16.msra.mxu0 0
        %2546 = vmatprep.subr.bf16.mxu0 0
        %2547 = vmatpush1.bf16.msra.mxu0 0
        %2548 = vmatprep.subr.bf16.mxu0 0
        %2549 = vmatpush1.bf16.msra.mxu0 0
        %2550 = vmatprep.subr.bf16.mxu0 0
        %2551 = vmatpush1.bf16.msra.mxu0 0
        %2552 = vmatprep.subr.bf16.mxu0 0
        %2553 = vmatpush1.bf16.msra.mxu0 0
        %2554 = vmatprep.subr.bf16.mxu0 0
        %2555 = vmatpush1.bf16.msra.mxu0 0
        %2556 = vmatprep.mubr.bf16.mxu0 0
        %2557 = vmatmul.mubr.bf16.gmra.mrb[0].mxu0 %v2522
        %v2558 = vpop.f32.mrb[0].mxu0
        %v2559 = vadd.f32 %v2494, %v2558
        %v2560 = vpop.f32.mrb[0].mxu0
        %v2561 = vpop.f32.mrb[0].mxu0
        %v2562 = vpop.f32.mrb[0].mxu0
        %2563 = vdwg.mxu0
        %v2564 = vadd.f32 %v2407, %v2559
        %v2565 = vld [vmem:[%s1076] sm:$0x1]
        %v2566 = vld [vmem:[%s1079] sm:$0x1]
        %v2567 = vsel %vm1227, %v2564, 0.0
        %2568 = vadd.xlane.f32.xlu0 %v2567
        %v2569 = vpop.xlane.xlu0 %2568
        %v2570 = vmul.f32 %v2569, %v1231
        %v2571 = vsub.f32 %v2564, %v2570
        %v2572 = vmul.f32 %v2571, %v2571
        %v2573 = vsel %vm1227, %v2572, 0.0
        %2574 = vadd.xlane.f32.xlu0 %v2573
        %v2575 = vpop.xlane.xlu0 %2574
        %v2576 = vmul.f32 %v2575, %v1231
        %v2577 = vadd.f32 %v2576, 1e-06
        %v2578 = vrsqrt.pop %v2577
        %v2579 = vmul.f32 %v2571, %v2578
        %v2581 = vlaneseq
        %v2582 = vshrl.u32 %v2581, 7
        %v2583 = vsub.s32 0, %v2582
        %v2584 = vrot.slane %v2565, %v2583
        %v2586 = vmul.f32 %v2579, %v2584
        %v2588 = vlaneseq
        %v2589 = vshrl.u32 %v2588, 7
        %v2590 = vsub.s32 0, %v2589
        %v2591 = vrot.slane %v2566, %v2590
        %v2593 = vadd.f32 %v2586, %v2591
        %2594 = vst.msk [vmem:[#allocation2] sm:$0x3] %vm1227, %v2593
        %p2595 = scmp.eq.s32.totalorder %s38, 1
        // Predicated region
        $region129: #{transformer_forward.5} parent=123 // pred_check
          %p2596 = pneg %p2595
        $region130: #{transformer_forward.5} parent=123 // pred_check_branch
          %2598 = sbr.rel (%p2596) target = $region132
        $region131: #{transformer_forward.5} parent=123 // pred_region
          %v2599 = vld [vmem:[%s22] sm:$0x1]
          %v2600 = vld [vmem:[%s23] sm:$0x1]
          %v2601 = vsel %vm1227, %v2593, 0.0
          %2602 = vadd.xlane.f32.xlu0 %v2601
          %v2603 = vpop.xlane.xlu0 %2602
          %v2604 = vmul.f32 %v2603, %v1231
          %v2605 = vsub.f32 %v2593, %v2604
          %v2606 = vmul.f32 %v2605, %v2605
          %v2607 = vsel %vm1227, %v2606, 0.0
          %2608 = vadd.xlane.f32.xlu0 %v2607
          %v2609 = vpop.xlane.xlu0 %2608
          %v2610 = vmul.f32 %v2609, %v1231
          %v2611 = vadd.f32 %v2610, 1e-06
          %v2612 = vrsqrt.pop %v2611
          %v2613 = vmul.f32 %v2605, %v2612
          %v2615 = vlaneseq
          %v2616 = vshrl.u32 %v2615, 7
          %v2617 = vsub.s32 0, %v2616
          %v2618 = vrot.slane %v2599, %v2617
          %v2620 = vmul.f32 %v2613, %v2618
          %v2622 = vlaneseq
          %v2623 = vshrl.u32 %v2622, 7
          %v2624 = vsub.s32 0, %v2623
          %v2625 = vrot.slane %v2600, %v2624
          %v2627 = vadd.f32 %v2620, %v2625
          %v2628 = vpack.c.bf16 %v2627, %v2627
          %v2629 = vld [vmem:[%s24] sm:$0xf]
          %v2630 = vld [vmem:[%s24 + $0x4] sm:$0xf]
          %v2631 = vld [vmem:[%s24 + $0x8] sm:$0xf]
          %v2632 = vld [vmem:[%s24 + $0xc] sm:$0xf]
          %v2633 = vld [vmem:[%s25] sm:$0x1]
          %v2635 = vlaneseq
          %v2636 = vshrl.u32 %v2635, 7
          %v2637 = vsub.s32 0, %v2636
          %v2638 = vrot.slane %v2633, %v2637
          %v2644 = vunpack.c.l.b16 %v2629
          %v2645 = vunpack.c.l.b16 %v2630
          %v2646 = vunpack.c.l.b16 %v2631
          %v2647 = vunpack.c.l.b16 %v2632
          %v2648 = vpack.c.b16 %v2645, %v2644
          %v2649 = vpack.c.b16 %v2647, %v2646
          %v2653 = vsel %vm1113, %v2628, 0
          %2655 = vmatprep.subr.bf16.mxu0 0
          %2656 = vmatpush1.bf16.msra.mxu0 %v2648
          %2657 = vmatprep.subr.bf16.mxu0 0
          %2658 = vmatpush1.bf16.msra.mxu0 %v2649
          %2659 = vmatprep.subr.bf16.mxu0 0
          %2660 = vmatpush1.bf16.msra.mxu0 0
          %2661 = vmatprep.subr.bf16.mxu0 0
          %2662 = vmatpush1.bf16.msra.mxu0 0
          %2663 = vmatprep.subr.bf16.mxu0 0
          %2664 = vmatpush1.bf16.msra.mxu0 0
          %2665 = vmatprep.subr.bf16.mxu0 0
          %2666 = vmatpush1.bf16.msra.mxu0 0
          %2667 = vmatprep.subr.bf16.mxu0 0
          %2668 = vmatpush1.bf16.msra.mxu0 0
          %2669 = vmatprep.subr.bf16.mxu0 0
          %2670 = vmatpush1.bf16.msra.mxu0 0
          %2671 = vmatprep.subr.bf16.mxu0 0
          %2672 = vmatpush1.bf16.msra.mxu0 0
          %2673 = vmatprep.subr.bf16.mxu0 0
          %2674 = vmatpush1.bf16.msra.mxu0 0
          %2675 = vmatprep.subr.bf16.mxu0 0
          %2676 = vmatpush1.bf16.msra.mxu0 0
          %2677 = vmatprep.subr.bf16.mxu0 0
          %2678 = vmatpush1.bf16.msra.mxu0 0
          %2679 = vmatprep.subr.bf16.mxu0 0
          %2680 = vmatpush1.bf16.msra.mxu0 0
          %2681 = vmatprep.subr.bf16.mxu0 0
          %2682 = vmatpush1.bf16.msra.mxu0 0
          %2683 = vmatprep.subr.bf16.mxu0 0
          %2684 = vmatpush1.bf16.msra.mxu0 0
          %2685 = vmatprep.subr.bf16.mxu0 0
          %2686 = vmatpush1.bf16.msra.mxu0 0
          %2687 = vmatprep.mubr.bf16.mxu0 0
          %2688 = vmatmul.mubr.bf16.gmra.mrb[0].mxu0 %v2653
          %v2689 = vpop.f32.mrb[0].mxu0
          %v2690 = vadd.f32 %v2638, %v2689
          %v2691 = vpop.f32.mrb[0].mxu0
          %v2692 = vpop.f32.mrb[0].mxu0
          %v2693 = vpop.f32.mrb[0].mxu0
          %2694 = vdwg.mxu0
          %2695 = vst [vmem:[#allocation3] sm:$0x3] %v2690
        $region132: #{transformer_forward.5} parent=123 // pred_fallthru
          _
        // Predicated region
        $region133: #{transformer_forward.5} parent=123 // pred_check
          %p2696 = pneg %p697
        $region134: #{transformer_forward.5} parent=123 // pred_check_branch
          %2698 = sbr.rel (%p2696) target = $region136
        $region135: #{transformer_forward.5} parent=123 // pred_region
          %s2700 = ssub.s32 32, 32
          %2701 = vsyncadd [#allocation4], %s2700
          %s2703 = sshll.u32 [#allocation3], 4
          %s2704 = int_to_ptr.vmem [resolvable:$true] %s2703
          %2706 = dma.vmem_to_hbm [thread:$0]  %s2704, 32, %s26, [#allocation4]
        $region136: #{transformer_forward.5} parent=123 // pred_fallthru
          _
        // Predicated region
        $region137: #{transformer_forward.5} parent=123 // pred_check
          %p2707 = pneg %p697
        $region138: #{transformer_forward.5} parent=123 // pred_check_branch
          %2709 = sbr.rel (%p2707) target = $region140
        $region139: #{transformer_forward.5} parent=123 // pred_region
          %2710 = dma.done [#allocation4], 32
        $region140: #{transformer_forward.5} parent=123 // pred_fallthru
          _
      $region124: #{transformer_forward.5} parent=5 // pred_fallthru
        _
      %p2711 = scmp.le.s32.totalorder 2, %s33
      // Predicated region
      $region141: #{transformer_forward.5} parent=5 // pred_check
        %p2712 = pneg %p2711
      $region142: #{transformer_forward.5} parent=5 // pred_check_branch
        %2714 = sbr.rel (%p2712) target = $region144
      $region143: #{transformer_forward.5} parent=5 // pred_region
        %s2715 = ssub.s32 %s33, 2
      $region144: #{transformer_forward.5} parent=5 // pred_fallthru
        _
    $region6: #{transformer_forward.5} parent=1 // loop_footer
      %s37 = sadd.s32 1, %s33
    $region7: #{transformer_forward.5} parent=1 // loop_footer_branch
      %32 = sbr.rel target = $region3
    $region8: #{transformer_forward.5} parent=1 // loop_exit
      _
    %2716 = vsyncpa [#allocation4], 1
    %s2717 = scalar_lea.sflag [#allocation4], 1
    %2718 = vsyncpa %s2717, 1

</llo_original>
